<compile_context>
chip_gen: v7x
topology: tpu7x:2x2x1
jax: 0.10.0
libtpu: 0.0.40
codegen_flags: <defaults>
</compile_context>

<pallas_src>
import functools

import jax
import jax.numpy as jnp
from jax.experimental import pallas as pl
from jax.experimental.pallas import tpu as pltpu

# Matmul operand dtype.  bf16 operands + f32 accumulation: ~2-4x MXU
# throughput on v6e/v7x and half the weight DMA/VMEM bytes everywhere.
# Set to jnp.float32 to reproduce the f32 reference to ~1e-5.
_MATMUL_DTYPE = jnp.bfloat16

_PA_MIN_LANES = 128      # pad the PA bottleneck to at least this many lanes

_ROLL_NUMPY = "roll_np"      # pltpu.roll matches np.roll semantics
_ROLL_REVERSED = "roll_rev"  # pltpu.roll rotates the opposite way
_ROLL_CONCAT = "concat"      # fall back to slice+concat (always correct)

_roll_mode_cache = None


def _round_up(x, m):
    return (x + m - 1) // m * m


def _probe_roll_mode():
    """One-time probe of pltpu.roll's rotation direction (cached)."""
    global _roll_mode_cache
    if _roll_mode_cache is not None:
        return _roll_mode_cache
    try:
        def k(x_ref, o_ref):
            o_ref[...] = pltpu.roll(x_ref[...], 1, axis=0)
        x = jnp.arange(8 * 128, dtype=jnp.float32).reshape(8, 128)
        y = pl.pallas_call(
            k, out_shape=jax.ShapeDtypeStruct((8, 128), jnp.float32))(x)
        v = float(y[1, 0])
        if v == float(x[0, 0]):
            mode = _ROLL_NUMPY
        elif v == float(x[2, 0]):
            mode = _ROLL_REVERSED
        else:
            mode = _ROLL_CONCAT
    except Exception:  # pragma: no cover - keep the main kernel usable anyway
        mode = _ROLL_CONCAT
    _roll_mode_cache = mode
    return mode


# ---------------------------------------------------------------------------
# Fused Group kernel
# ---------------------------------------------------------------------------
def _group_kernel(x_ref,
                  t1_ref, b1_ref, t2_ref, b2_ref,
                  ca1_ref, cab1_ref, ca2_ref, cab2_ref,
                  pa1_ref, pab1_ref, pa2_ref, pab2_ref,
                  tf_ref,
                  o_ref, *, K, H, P_pad, pad_top, n_blocks, Bt, roll_mode):
    p = K // 2
    rows = Bt * P_pad
    WC = x_ref.shape[-1]

    # Interior-row mask (1 for real image rows, 0 for the zero halo rows).
    # Hoisted: built once, reused by every conv of every block.
    rid = jax.lax.broadcasted_iota(jnp.int32, (rows, 1), 0)
    loc = rid % P_pad
    interior = (loc >= pad_top) & (loc < pad_top + H)

    def shift_rows(a, s):
        """a[i] -> a[i - s] (np.roll semantics), direction-safe."""
        s = s % rows
        if s == 0:
            return a
        if roll_mode == _ROLL_NUMPY:
            return pltpu.roll(a, s, axis=0)
        if roll_mode == _ROLL_REVERSED:
            return pltpu.roll(a, (rows - s) % rows, axis=0)
        return jnp.concatenate([a[rows - s:, :], a[:rows - s, :]], axis=0)

    def conv_same(h, tap, bias):
        """SAME KxK conv of the stacked padded slab via K Toeplitz matmuls."""
        acc = None
        for ky in range(K):
            lhs = shift_rows(h, p - ky).astype(_MATMUL_DTYPE)
            d = jnp.dot(lhs, tap(ky), preferred_element_type=jnp.float32)
            acc = d if acc is None else acc + d
        if bias is not None:
            acc = acc + bias
        # Keep the halo rows exactly zero (required by the next conv's
        # implicit vertical zero-padding and by the per-image CA column sums).
        return jnp.where(interior, acc, 0.0)

    x0 = x_ref[...].astype(jnp.float32)            # (rows, WC), zero halos
    h = x0
    for blk in range(n_blocks):
        # conv1 -> ReLU -> + h
        r = conv_same(h, lambda ky, blk=blk: t1_ref[blk * K + ky], b1_ref[blk])
        r = jnp.maximum(r, 0.0) + h
        # conv2
        r = conv_same(r, lambda ky, blk=blk: t2_ref[blk * K + ky], b2_ref[blk])

        # CALayer: per-image global avg pool -> 1x1 -> ReLU -> 1x1 -> sigmoid
        # -> channel scale.  Kept entirely on the VPU/XLU (r is tiny); the
        # 1/(H*W) mean is folded into ca1 at pack time, halo rows are zero so
        # summing whole P_pad blocks equals summing the H real rows.
        gains = []
        for b in range(Bt):
            img = r[b * P_pad:(b + 1) * P_pad, :]
            colsum = jnp.sum(img, axis=0, keepdims=True)            # (1, WC)
            y = jnp.maximum(
                jnp.sum(colsum * ca1_ref[blk], axis=1, keepdims=True)
                + cab1_ref[blk], 0.0)                               # (r, 1)
            g = jax.nn.sigmoid(
                jnp.sum(y * ca2_ref[blk], axis=0, keepdims=True)
                + cab2_ref[blk])                                    # (1, WC)
            gains.append(jnp.broadcast_to(g, (P_pad, WC)))
        r = r * jnp.concatenate(gains, axis=0)

        # PALayer: per-pixel 1x1 convs via block-diagonal matrices; the r->1
        # projection + per-pixel C-wide broadcast is fused into pa2 and the
        # bottleneck is zero-padded to >=128 lanes (lane-dense intermediate).
        z = jnp.maximum(
            jnp.dot(r.astype(_MATMUL_DTYPE), pa1_ref[blk],
                    preferred_element_type=jnp.float32) + pab1_ref[blk], 0.0)
        gate = jax.nn.sigmoid(
            jnp.dot(z.astype(_MATMUL_DTYPE), pa2_ref[blk],
                    preferred_element_type=jnp.float32) + pab2_ref[blk])
        r = r * gate

        h = r + h

    # final (bias-free) conv of the Group + group residual
    out = conv_same(h, lambda ky: tf_ref[ky], None) + x0
    o_ref[...] = out.astype(o_ref.dtype)


# ---------------------------------------------------------------------------
# Host-side weight packing (runs ONCE per parameter set, outside the jitted
# per-call forward path)
# ---------------------------------------------------------------------------
def _toeplitz_conv_mats(w, W):
    """w: (K, K, Cin, Cout) HWIO -> (K, W*Cin, W*Cout) block-Toeplitz mats."""
    K, _, Ci, Co = w.shape
    p = K // 2
    xi = jnp.arange(W)[:, None]
    xo = jnp.arange(W)[None, :]
    kx = xi - xo + p                                   # (W, W)
    valid = ((kx >= 0) & (kx < K)).astype(w.dtype)
    t = w[:, jnp.clip(kx, 0, K - 1)]                   # (K, W, W, Ci, Co)
    t = t * valid[None, :, :, None, None]
    t = jnp.transpose(t, (0, 1, 3, 2, 4))              # (K, xi, ci, xo, co)
    return t.reshape(K, W * Ci, W * Co)


def pack_group_params(block_params, final_w, H, W):
    C = final_w.shape[2]
    inv_hw = 1.0 / float(H * W)
    md = _MATMUL_DTYPE
    r = block_params[0]['caw1'].shape[1]
    rp = max(r, -(-_PA_MIN_LANES // W))                # padded PA bottleneck
    eye_w = jnp.eye(W, dtype=jnp.float32)

    def pad_pa1(w):     # (C, r) -> (C, rp)
        return jnp.pad(w, ((0, 0), (0, rp - r)))

    def pad_pa1b(b):    # (r,) -> (rp,)
        return jnp.pad(b, (0, rp - r))

    def pad_pa2(w):     # (r, 1) -> (rp, C); padded rows are zero
        return jnp.pad(jnp.tile(w, (1, C)), ((0, rp - r), (0, 0)))

    t1 = jnp.concatenate([_toeplitz_conv_mats(p['w1'], W)
                          for p in block_params], axis=0).astype(md)
    t2 = jnp.concatenate([_toeplitz_conv_mats(p['w2'], W)
                          for p in block_params], axis=0).astype(md)
    b1 = jnp.stack([jnp.tile(p['b1'], W)[None, :] for p in block_params])
    b2 = jnp.stack([jnp.tile(p['b2'], W)[None, :] for p in block_params])

    # CA weights stay f32: they are applied on the VPU/XLU, not the MXU.
    ca1 = jnp.stack([jnp.tile(p['caw1'], (W, 1)).T * inv_hw
                     for p in block_params])                     # (NB, r, WC)
    cab1 = jnp.stack([p['cab1'][:, None] for p in block_params])  # (NB, r, 1)
    ca2 = jnp.stack([jnp.tile(p['caw2'], (1, W))
                     for p in block_params])                     # (NB, r, WC)
    cab2 = jnp.stack([jnp.tile(p['cab2'], W)[None, :]
                      for p in block_params])                    # (NB, 1, WC)

    pa1 = jnp.stack([jnp.kron(eye_w, pad_pa1(p['paw1']))
                     for p in block_params]).astype(md)          # (NB, WC, W*rp)
    pab1 = jnp.stack([jnp.tile(pad_pa1b(p['pab1']), W)[None, :]
                      for p in block_params])                    # (NB, 1, W*rp)
    pa2 = jnp.stack([jnp.kron(eye_w, pad_pa2(p['paw2']))
                     for p in block_params]).astype(md)          # (NB, W*rp, WC)
    pab2 = jnp.stack([p['pab2'].reshape(1, 1) for p in block_params])

    tf = _toeplitz_conv_mats(final_w, W).astype(md)              # (K, WC, WC)
    return (t1, b1, t2, b2, ca1, cab1, ca2, cab2, pa1, pab1, pa2, pab2, tf)


# ---------------------------------------------------------------------------
# Wrapper
# ---------------------------------------------------------------------------
def _pick_images_per_step(B, P_pad, target_rows=256):
    """Largest divisor of B with Bt*P_pad <= target_rows, keeping >=2 grid
    steps when the batch allows it (v7x megacore)."""
    divisors = [d for d in range(1, B + 1) if B % d == 0]
    cands = [d for d in divisors
             if d * P_pad <= target_rows and (B // d >= 2 or B == 1)]
    return max(cands) if cands else 1


def _group_forward_packed(x_nhwc, packed, *, H, W, C, K, n_blocks, P_pad,
                          pad_top, roll_mode, images_per_step):
    B = x_nhwc.shape[0]
    WC = W * C
    Bt = images_per_step or _pick_images_per_step(B, P_pad)
    if B % Bt:
        raise ValueError(f"batch {B} not divisible by images_per_step {Bt}")
    n_steps = B // Bt
    rows = Bt * P_pad

    # Lane-dense (rows, W*C) slabs with a zero halo of pad_top / bottom rows
    # around each image (implicit vertical SAME padding for every conv).
    x2 = x_nhwc.reshape(B, H, WC).astype(jnp.float32)
    xp = jnp.pad(x2, ((0, 0), (pad_top, P_pad - pad_top - H), (0, 0)))
    xp = xp.reshape(B * P_pad, WC)

    kernel = functools.partial(_group_kernel, K=K, H=H, P_pad=P_pad,
                               pad_top=pad_top, n_blocks=n_blocks, Bt=Bt,
                               roll_mode=roll_mode)
    img_spec = pl.BlockSpec((rows, WC), lambda i: (i, 0))

    def full_spec(a):
        # Weights are resident (constant index map).  For v7x-sized problems,
        # single-buffer these (pl.Buffered(1)) to halve resident weight VMEM.
        return pl.BlockSpec(a.shape, lambda i, _nd=a.ndim: (0,) * _nd)

    outp = pl.pallas_call(
        kernel,
        out_shape=jax.ShapeDtypeStruct((B * P_pad, WC), jnp.float32),
        grid_spec=pltpu.PrefetchScalarGridSpec(
            num_scalar_prefetch=0, grid=(n_steps,),
            in_specs=[img_spec] + [full_spec(a) for a in packed],
            out_specs=img_spec),
        compiler_params=pltpu.CompilerParams(
            dimension_semantics=("parallel",),   # independent image stacks
            vmem_limit_bytes=32 * 1024 * 1024),
    )(xp, *packed)

    out = outp.reshape(B, P_pad, WC)[:, pad_top:pad_top + H, :]
    return out.reshape(B, H, W, C)


def make_group_forward(block_params, final_w, H, W, K, images_per_step=None):
    """Pack weights ONCE and return a jitted NHWC forward function."""
    C = final_w.shape[2]
    n_blocks = len(block_params)
    p = K // 2
    P_pad = _round_up(H + 2 * p, 8)
    pad_top = (P_pad - H) // 2
    roll_mode = _probe_roll_mode()
    packed = pack_group_params(block_params, final_w, H, W)   # cached weights

    fwd_impl = jax.jit(functools.partial(
        _group_forward_packed, H=H, W=W, C=C, K=K, n_blocks=n_blocks,
        P_pad=P_pad, pad_top=pad_top, roll_mode=roll_mode,
        images_per_step=images_per_step))

    def fwd(x_nhwc):
        return fwd_impl(x_nhwc, packed)
    return fwd


# ---------------------------------------------------------------------------
# Deterministic parameter init (HWIO conv weights, per-channel biases)
# ---------------------------------------------------------------------------
def init_group_params(key, dim, K, blocks, reduction=8):
    r = dim // reduction
    params = []
    for _ in range(blocks):
        key, *ks = jax.random.split(key, 13)
        params.append({
            'w1':   0.1 * jax.random.normal(ks[0], (K, K, dim, dim), jnp.float32),
            'b1':   0.05 * jax.random.normal(ks[1], (dim,), jnp.float32),
            'w2':   0.1 * jax.random.normal(ks[2], (K, K, dim, dim), jnp.float32),
            'b2':   0.05 * jax.random.normal(ks[3], (dim,), jnp.float32),
            'caw1': 0.1 * jax.random.normal(ks[4], (dim, r), jnp.float32),
            'cab1': 0.05 * jax.random.normal(ks[5], (r,), jnp.float32),
            'caw2': 0.1 * jax.random.normal(ks[6], (r, dim), jnp.float32),
            'cab2': 0.05 * jax.random.normal(ks[7], (dim,), jnp.float32),
            'paw1': 0.1 * jax.random.normal(ks[8], (dim, r), jnp.float32),
            'pab1': 0.05 * jax.random.normal(ks[9], (r,), jnp.float32),
            'paw2': 0.1 * jax.random.normal(ks[10], (r, 1), jnp.float32),
            'pab2': 0.05 * jax.random.normal(ks[11], (1,), jnp.float32),
        })
    _, kf = jax.random.split(key)
    final_w = 0.1 * jax.random.normal(kf, (K, K, dim, dim), jnp.float32)
    return params, final_w


# ---------------------------------------------------------------------------
# Pure-JAX reference (NHWC) for correctness checking
# ---------------------------------------------------------------------------
_HI = jax.lax.Precision.HIGHEST


def _conv2d_ref(x, w, b, K):
    y = jax.lax.conv_general_dilated(x, w, (1, 1), 'SAME',
                                     dimension_numbers=('NHWC', 'HWIO', 'NHWC'),
                                     precision=_HI)
    if b is not None:
        y = y + b
    return y


def _fablock_ref(x, p, K):
    r = jax.nn.relu(_conv2d_ref(x, p['w1'], p['b1'], K)) + x
    r = _conv2d_ref(r, p['w2'], p['b2'], K)
    y = jnp.mean(r, axis=(1, 2), keepdims=True)
    y = jax.nn.relu(jnp.einsum('bijc,cr->bijr', y, p['caw1'], precision=_HI) + p['cab1'])
    y = jax.nn.sigmoid(jnp.einsum('bijr,rc->bijc', y, p['caw2'], precision=_HI) + p['cab2'])
    r = r * y
    z = jax.nn.relu(jnp.einsum('bhwc,cr->bhwr', r, p['paw1'], precision=_HI) + p['pab1'])
    z = jax.nn.sigmoid(jnp.einsum('bhwr,ro->bhwo', z, p['paw2'], precision=_HI) + p['pab2'])
    r = r * z
    return r + x


def _group_ref(x, block_params, final_w, K):
    h = x
    for p in block_params:
        h = _fablock_ref(h, p, K)
    return _conv2d_ref(h, final_w, None, K) + x


# ---------------------------------------------------------------------------
if __name__ == "__main__":
    B, DIM, H, W = 4, 16, 16, 16      # dim=16 so dim // reduction(=8) = 2
    K_SIZE, BLOCKS = 3, 2

    key = jax.random.PRNGKey(0)
    kx, kp = jax.random.split(key)
    # PyTorch-style NCHW input
    x_nchw = jax.random.normal(kx, (B, DIM, H, W), jnp.float32)
    block_params, final_w = init_group_params(kp, DIM, K_SIZE, BLOCKS)

    x_nhwc = jnp.transpose(x_nchw, (0, 2, 3, 1))
    fwd = make_group_forward(block_params, final_w, H, W, K_SIZE)  # packs once
    out_nhwc = fwd(x_nhwc)
    jax.block_until_ready(out_nhwc)
    out_nhwc = fwd(x_nhwc)            # reuses cached packed weights + kernel
    jax.block_until_ready(out_nhwc)
    out_nchw = jnp.transpose(out_nhwc, (0, 3, 1, 2))
    jax.block_until_ready(out_nchw)

    ref_nhwc = _group_ref(x_nhwc, block_params, final_w, K_SIZE)
    err = float(jnp.max(jnp.abs(out_nhwc - ref_nhwc)))
    scale = float(jnp.max(jnp.abs(ref_nhwc)))
    # bf16 matmul operands + f32 accumulation -> looser (scale-aware) bound.
    tol = 2e-3 if _MATMUL_DTYPE == jnp.float32 else 5e-2
    assert err <= tol * max(scale, 1.0), (err, scale)

    print("KERNEL_OK")
</pallas_src>

<mosaic_0001>
module attributes {stable_mosaic.version = 11 : i64} {
  func.func @k(%arg0: memref<8x128xf32, #tpu.memory_space<vmem>>, %arg1: memref<8x128xf32, #tpu.memory_space<vmem>>) attributes {dimension_semantics = [], scalar_prefetch = 0 : i64, scratch_operands = 0 : i64, tpu.core_type = #tpu.core_type<tc>} {
    %c0 = arith.constant 0 : index
    %c0_0 = arith.constant 0 : index
    %0 = vector.load %arg0[%c0, %c0_0] : memref<8x128xf32, #tpu.memory_space<vmem>>, vector<8x128xf32>
    %c1_i32 = arith.constant 1 : i32
    %1 = tpu.dynamic_rotate %0 by %c1_i32 dim 0 : vector<8x128xf32>, i32 -> vector<8x128xf32>
    %c0_1 = arith.constant 0 : index
    %c0_2 = arith.constant 0 : index
    %2 = vector.load %arg1[%c0_1, %c0_2] : memref<8x128xf32, #tpu.memory_space<vmem>>, vector<8x128xf32>
    tpu.vector_store %arg1[%c0_1, %c0_2], %1 {strides = array<i32>} : memref<8x128xf32, #tpu.memory_space<vmem>>, vector<8x128xf32>,
    return
  }
}

module attributes {stable_mosaic.version = 11 : i64} {
  func.func @_group_kernel(%arg0: i32, %arg1: memref<48x256xf32, #tpu.memory_space<vmem>>, %arg2: memref<6x256x256xbf16, #tpu.memory_space<vmem>>, %arg3: memref<2x1x256xf32, #tpu.memory_space<vmem>>, %arg4: memref<6x256x256xbf16, #tpu.memory_space<vmem>>, %arg5: memref<2x1x256xf32, #tpu.memory_space<vmem>>, %arg6: memref<2x2x256xf32, #tpu.memory_space<vmem>>, %arg7: memref<2x2x1xf32, #tpu.memory_space<vmem>>, %arg8: memref<2x2x256xf32, #tpu.memory_space<vmem>>, %arg9: memref<2x1x256xf32, #tpu.memory_space<vmem>>, %arg10: memref<2x256x128xbf16, #tpu.memory_space<vmem>>, %arg11: memref<2x1x128xf32, #tpu.memory_space<vmem>>, %arg12: memref<2x128x256xbf16, #tpu.memory_space<vmem>>, %arg13: memref<2x1x1xf32, #tpu.memory_space<vmem>>, %arg14: memref<3x256x256xbf16, #tpu.memory_space<vmem>>, %arg15: memref<48x256xf32, #tpu.memory_space<vmem>>) attributes {dimension_semantics = [#tpu.dimension_semantics<parallel>], iteration_bounds = array<i64: 2>, scalar_prefetch = 0 : i64, scratch_operands = 0 : i64, tpu.core_type = #tpu.core_type<tc>, window_params = [{transform_indices = @transform_0, window_bounds = array<i64: 48, 256>}, {pipeline_mode = #tpu.pipeline_mode<synchronous>, transform_indices = @transform_1, window_bounds = array<i64: 6, 256, 256>}, {pipeline_mode = #tpu.pipeline_mode<synchronous>, transform_indices = @transform_2, window_bounds = array<i64: 2, 1, 256>}, {pipeline_mode = #tpu.pipeline_mode<synchronous>, transform_indices = @transform_3, window_bounds = array<i64: 6, 256, 256>}, {pipeline_mode = #tpu.pipeline_mode<synchronous>, transform_indices = @transform_4, window_bounds = array<i64: 2, 1, 256>}, {pipeline_mode = #tpu.pipeline_mode<synchronous>, transform_indices = @transform_5, window_bounds = array<i64: 2, 2, 256>}, {pipeline_mode = #tpu.pipeline_mode<synchronous>, transform_indices = @transform_6, window_bounds = array<i64: 2, 2, 1>}, {pipeline_mode = #tpu.pipeline_mode<synchronous>, transform_indices = @transform_7, window_bounds = array<i64: 2, 2, 256>}, {pipeline_mode = #tpu.pipeline_mode<synchronous>, transform_indices = @transform_8, window_bounds = array<i64: 2, 1, 256>}, {pipeline_mode = #tpu.pipeline_mode<synchronous>, transform_indices = @transform_9, window_bounds = array<i64: 2, 256, 128>}, {pipeline_mode = #tpu.pipeline_mode<synchronous>, transform_indices = @transform_10, window_bounds = array<i64: 2, 1, 128>}, {pipeline_mode = #tpu.pipeline_mode<synchronous>, transform_indices = @transform_11, window_bounds = array<i64: 2, 128, 256>}, {pipeline_mode = #tpu.pipeline_mode<synchronous>, transform_indices = @transform_12, window_bounds = array<i64: 2, 1, 1>}, {pipeline_mode = #tpu.pipeline_mode<synchronous>, transform_indices = @transform_13, window_bounds = array<i64: 3, 256, 256>}, {transform_indices = @transform_14, window_bounds = array<i64: 48, 256>}]} {
    %0 = tpu.iota {dimensions = array<i32: 0>} : vector<48x1xi32>
    %c24_i32 = arith.constant 24 : i32
    %c0_i32 = arith.constant 0 : i32
    %1 = arith.cmpi eq, %c24_i32, %c0_i32 : i32
    %c1_i32 = arith.constant 1 : i32
    %2 = arith.select %1, %c1_i32, %c24_i32 : i32
    %3 = vector.broadcast %2 : i32 to vector<48x1xi32>
    %4 = arith.remsi %0, %3 : vector<48x1xi32>
    %c0_i32_0 = arith.constant 0 : i32
    %5 = vector.broadcast %c0_i32_0 : i32 to vector<48x1xi32>
    %6 = arith.cmpi ne, %4, %5 : vector<48x1xi32>
    %c0_i32_1 = arith.constant 0 : i32
    %7 = vector.broadcast %c0_i32_1 : i32 to vector<48x1xi32>
    %8 = arith.cmpi slt, %4, %7 : vector<48x1xi32>
    %c0_i32_2 = arith.constant 0 : i32
    %9 = arith.cmpi slt, %2, %c0_i32_2 : i32
    %10 = vector.broadcast %9 : i1 to vector<48x1xi1>
    %11 = vector.broadcast %10 : vector<48x1xi1> to vector<48x1xi1>
    %12 = arith.xori %8, %11 : vector<48x1xi1>
    %13 = arith.andi %12, %6 : vector<48x1xi1>
    %14 = vector.broadcast %2 : i32 to vector<48x1xi32>
    %15 = arith.addi %4, %14 : vector<48x1xi32>
    %16 = arith.select %13, %15, %4 : vector<48x1xi1>, vector<48x1xi32>
    %c4_i32 = arith.constant 4 : i32
    %17 = vector.broadcast %c4_i32 : i32 to vector<48x1xi32>
    %18 = arith.cmpi sge, %16, %17 : vector<48x1xi32>
    %c20_i32 = arith.constant 20 : i32
    %19 = vector.broadcast %c20_i32 : i32 to vector<48x1xi32>
    %20 = arith.cmpi slt, %16, %19 : vector<48x1xi32>
    %21 = arith.andi %18, %20 : vector<48x1xi1>
    %c0 = arith.constant 0 : index
    %c0_3 = arith.constant 0 : index
    %22 = vector.load %arg1[%c0, %c0_3] : memref<48x256xf32, #tpu.memory_space<vmem>>, vector<48x256xf32>
    %c0_4 = arith.constant 0 : index
    %c0_5 = arith.constant 0 : index
    %c0_6 = arith.constant 0 : index
    %23 = vector.load %arg3[%c0_4, %c0_5, %c0_6] : memref<2x1x256xf32, #tpu.memory_space<vmem>>, vector<1x1x256xf32>
    %24 = vector.shape_cast %23 : vector<1x1x256xf32> to vector<1x256xf32>
    %25 = vector.extract_strided_slice %22 {offsets = [47, 0], sizes = [1, 256], strides = [1, 1]} : vector<48x256xf32> to vector<1x256xf32>
    %26 = vector.extract_strided_slice %22 {offsets = [0, 0], sizes = [47, 256], strides = [1, 1]} : vector<48x256xf32> to vector<47x256xf32>
    %27 = tpu.concatenate %25, %26 in 0 : vector<1x256xf32>, vector<47x256xf32> -> vector<48x256xf32>
    %28 = arith.truncf %27 : vector<48x256xf32> to vector<48x256xbf16>
    %c0_7 = arith.constant 0 : index
    %c0_8 = arith.constant 0 : index
    %c0_9 = arith.constant 0 : index
    %29 = vector.load %arg2[%c0_7, %c0_8, %c0_9] : memref<6x256x256xbf16, #tpu.memory_space<vmem>>, vector<1x256x256xbf16>
    %30 = vector.shape_cast %29 : vector<1x256x256xbf16> to vector<256x256xbf16>
    %cst = arith.constant dense<0.000000e+00> : vector<48x256xf32>
    %31 = tpu.matmul %28, %30, %cst {dimension_numbers = #tpu.dot_dimension_numbers<[1], [0], [0], [1], [0, 0, 1, 1], [], []>} : vector<48x256xbf16>, vector<256x256xbf16>, vector<48x256xf32> -> vector<48x256xf32>
    %32 = arith.truncf %22 : vector<48x256xf32> to vector<48x256xbf16>
    %c1 = arith.constant 1 : index
    %c0_10 = arith.constant 0 : index
    %c0_11 = arith.constant 0 : index
    %33 = vector.load %arg2[%c1, %c0_10, %c0_11] : memref<6x256x256xbf16, #tpu.memory_space<vmem>>, vector<1x256x256xbf16>
    %34 = vector.shape_cast %33 : vector<1x256x256xbf16> to vector<256x256xbf16>
    %cst_12 = arith.constant dense<0.000000e+00> : vector<48x256xf32>
    %35 = tpu.matmul %32, %34, %cst_12 {dimension_numbers = #tpu.dot_dimension_numbers<[1], [0], [0], [1], [0, 0, 1, 1], [], []>} : vector<48x256xbf16>, vector<256x256xbf16>, vector<48x256xf32> -> vector<48x256xf32>
    %36 = arith.addf %31, %35 : vector<48x256xf32>
    %37 = vector.extract_strided_slice %22 {offsets = [1, 0], sizes = [47, 256], strides = [1, 1]} : vector<48x256xf32> to vector<47x256xf32>
    %38 = vector.extract_strided_slice %22 {offsets = [0, 0], sizes = [1, 256], strides = [1, 1]} : vector<48x256xf32> to vector<1x256xf32>
    %39 = tpu.concatenate %37, %38 in 0 : vector<47x256xf32>, vector<1x256xf32> -> vector<48x256xf32>
    %40 = arith.truncf %39 : vector<48x256xf32> to vector<48x256xbf16>
    %c2 = arith.constant 2 : index
    %c0_13 = arith.constant 0 : index
    %c0_14 = arith.constant 0 : index
    %41 = vector.load %arg2[%c2, %c0_13, %c0_14] : memref<6x256x256xbf16, #tpu.memory_space<vmem>>, vector<1x256x256xbf16>
    %42 = vector.shape_cast %41 : vector<1x256x256xbf16> to vector<256x256xbf16>
    %cst_15 = arith.constant dense<0.000000e+00> : vector<48x256xf32>
    %43 = tpu.matmul %40, %42, %cst_15 {dimension_numbers = #tpu.dot_dimension_numbers<[1], [0], [0], [1], [0, 0, 1, 1], [], []>} : vector<48x256xbf16>, vector<256x256xbf16>, vector<48x256xf32> -> vector<48x256xf32>
    %44 = arith.addf %36, %43 : vector<48x256xf32>
    %45 = vector.broadcast %24 : vector<1x256xf32> to vector<48x256xf32>
    %46 = arith.addf %44, %45 : vector<48x256xf32>
    %cst_16 = arith.constant 0.000000e+00 : f32
    %47 = vector.shape_cast %21 : vector<48x1xi1> to vector<48x1xi1>
    %48 = vector.broadcast %47 : vector<48x1xi1> to vector<48x256xi1>
    %49 = vector.broadcast %cst_16 : f32 to vector<48x256xf32>
    %50 = arith.select %48, %46, %49 : vector<48x256xi1>, vector<48x256xf32>
    %cst_17 = arith.constant 0.000000e+00 : f32
    %51 = vector.broadcast %cst_17 : f32 to vector<48x256xf32>
    %52 = arith.maximumf %50, %51 : vector<48x256xf32>
    %53 = arith.addf %52, %22 : vector<48x256xf32>
    %c0_18 = arith.constant 0 : index
    %c0_19 = arith.constant 0 : index
    %c0_20 = arith.constant 0 : index
    %54 = vector.load %arg5[%c0_18, %c0_19, %c0_20] : memref<2x1x256xf32, #tpu.memory_space<vmem>>, vector<1x1x256xf32>
    %55 = vector.shape_cast %54 : vector<1x1x256xf32> to vector<1x256xf32>
    %56 = vector.extract_strided_slice %53 {offsets = [47, 0], sizes = [1, 256], strides = [1, 1]} : vector<48x256xf32> to vector<1x256xf32>
    %57 = vector.extract_strided_slice %53 {offsets = [0, 0], sizes = [47, 256], strides = [1, 1]} : vector<48x256xf32> to vector<47x256xf32>
    %58 = tpu.concatenate %56, %57 in 0 : vector<1x256xf32>, vector<47x256xf32> -> vector<48x256xf32>
    %59 = arith.truncf %58 : vector<48x256xf32> to vector<48x256xbf16>
    %c0_21 = arith.constant 0 : index
    %c0_22 = arith.constant 0 : index
    %c0_23 = arith.constant 0 : index
    %60 = vector.load %arg4[%c0_21, %c0_22, %c0_23] : memref<6x256x256xbf16, #tpu.memory_space<vmem>>, vector<1x256x256xbf16>
    %61 = vector.shape_cast %60 : vector<1x256x256xbf16> to vector<256x256xbf16>
    %cst_24 = arith.constant dense<0.000000e+00> : vector<48x256xf32>
    %62 = tpu.matmul %59, %61, %cst_24 {dimension_numbers = #tpu.dot_dimension_numbers<[1], [0], [0], [1], [0, 0, 1, 1], [], []>} : vector<48x256xbf16>, vector<256x256xbf16>, vector<48x256xf32> -> vector<48x256xf32>
    %63 = arith.truncf %53 : vector<48x256xf32> to vector<48x256xbf16>
    %c1_25 = arith.constant 1 : index
    %c0_26 = arith.constant 0 : index
    %c0_27 = arith.constant 0 : index
    %64 = vector.load %arg4[%c1_25, %c0_26, %c0_27] : memref<6x256x256xbf16, #tpu.memory_space<vmem>>, vector<1x256x256xbf16>
    %65 = vector.shape_cast %64 : vector<1x256x256xbf16> to vector<256x256xbf16>
    %cst_28 = arith.constant dense<0.000000e+00> : vector<48x256xf32>
    %66 = tpu.matmul %63, %65, %cst_28 {dimension_numbers = #tpu.dot_dimension_numbers<[1], [0], [0], [1], [0, 0, 1, 1], [], []>} : vector<48x256xbf16>, vector<256x256xbf16>, vector<48x256xf32> -> vector<48x256xf32>
    %67 = arith.addf %62, %66 : vector<48x256xf32>
    %68 = vector.extract_strided_slice %53 {offsets = [1, 0], sizes = [47, 256], strides = [1, 1]} : vector<48x256xf32> to vector<47x256xf32>
    %69 = vector.extract_strided_slice %53 {offsets = [0, 0], sizes = [1, 256], strides = [1, 1]} : vector<48x256xf32> to vector<1x256xf32>
    %70 = tpu.concatenate %68, %69 in 0 : vector<47x256xf32>, vector<1x256xf32> -> vector<48x256xf32>
    %71 = arith.truncf %70 : vector<48x256xf32> to vector<48x256xbf16>
    %c2_29 = arith.constant 2 : index
    %c0_30 = arith.constant 0 : index
    %c0_31 = arith.constant 0 : index
    %72 = vector.load %arg4[%c2_29, %c0_30, %c0_31] : memref<6x256x256xbf16, #tpu.memory_space<vmem>>, vector<1x256x256xbf16>
    %73 = vector.shape_cast %72 : vector<1x256x256xbf16> to vector<256x256xbf16>
    %cst_32 = arith.constant dense<0.000000e+00> : vector<48x256xf32>
    %74 = tpu.matmul %71, %73, %cst_32 {dimension_numbers = #tpu.dot_dimension_numbers<[1], [0], [0], [1], [0, 0, 1, 1], [], []>} : vector<48x256xbf16>, vector<256x256xbf16>, vector<48x256xf32> -> vector<48x256xf32>
    %75 = arith.addf %67, %74 : vector<48x256xf32>
    %76 = vector.broadcast %55 : vector<1x256xf32> to vector<48x256xf32>
    %77 = arith.addf %75, %76 : vector<48x256xf32>
    %cst_33 = arith.constant 0.000000e+00 : f32
    %78 = vector.shape_cast %21 : vector<48x1xi1> to vector<48x1xi1>
    %79 = vector.broadcast %78 : vector<48x1xi1> to vector<48x256xi1>
    %80 = vector.broadcast %cst_33 : f32 to vector<48x256xf32>
    %81 = arith.select %79, %77, %80 : vector<48x256xi1>, vector<48x256xf32>
    %82 = vector.extract_strided_slice %81 {offsets = [0, 0], sizes = [24, 256], strides = [1, 1]} : vector<48x256xf32> to vector<24x256xf32>
    %cst_34 = arith.constant dense<0.000000e+00> : vector<256xf32>
    %83 = vector.multi_reduction <add>, %82, %cst_34 [0] : vector<24x256xf32> to vector<256xf32>
    %84 = vector.shape_cast %83 : vector<256xf32> to vector<1x256xf32>
    %c0_35 = arith.constant 0 : index
    %c0_36 = arith.constant 0 : index
    %c0_37 = arith.constant 0 : index
    %85 = vector.load %arg6[%c0_35, %c0_36, %c0_37] : memref<2x2x256xf32, #tpu.memory_space<vmem>>, vector<1x2x256xf32>
    %86 = vector.shape_cast %85 : vector<1x2x256xf32> to vector<2x256xf32>
    %87 = vector.broadcast %84 : vector<1x256xf32> to vector<2x256xf32>
    %88 = arith.mulf %87, %86 : vector<2x256xf32>
    %cst_38 = arith.constant dense<0.000000e+00> : vector<2xf32>
    %89 = vector.multi_reduction <add>, %88, %cst_38 [1] : vector<2x256xf32> to vector<2xf32>
    %90 = vector.shape_cast %89 : vector<2xf32> to vector<2x1xf32>
    %c0_39 = arith.constant 0 : index
    %c0_40 = arith.constant 0 : index
    %c0_41 = arith.constant 0 : index
    %91 = vector.load %arg7[%c0_39, %c0_40, %c0_41] : memref<2x2x1xf32, #tpu.memory_space<vmem>>, vector<1x2x1xf32>
    %92 = vector.shape_cast %91 : vector<1x2x1xf32> to vector<2x1xf32>
    %93 = arith.addf %90, %92 : vector<2x1xf32>
    %cst_42 = arith.constant 0.000000e+00 : f32
    %94 = vector.broadcast %cst_42 : f32 to vector<2x1xf32>
    %95 = arith.maximumf %93, %94 : vector<2x1xf32>
    %c0_43 = arith.constant 0 : index
    %c0_44 = arith.constant 0 : index
    %c0_45 = arith.constant 0 : index
    %96 = vector.load %arg8[%c0_43, %c0_44, %c0_45] : memref<2x2x256xf32, #tpu.memory_space<vmem>>, vector<1x2x256xf32>
    %97 = vector.shape_cast %96 : vector<1x2x256xf32> to vector<2x256xf32>
    %98 = vector.broadcast %95 : vector<2x1xf32> to vector<2x256xf32>
    %99 = arith.mulf %98, %97 : vector<2x256xf32>
    %cst_46 = arith.constant dense<0.000000e+00> : vector<256xf32>
    %100 = vector.multi_reduction <add>, %99, %cst_46 [0] : vector<2x256xf32> to vector<256xf32>
    %101 = vector.shape_cast %100 : vector<256xf32> to vector<1x256xf32>
    %c0_47 = arith.constant 0 : index
    %c0_48 = arith.constant 0 : index
    %c0_49 = arith.constant 0 : index
    %102 = vector.load %arg9[%c0_47, %c0_48, %c0_49] : memref<2x1x256xf32, #tpu.memory_space<vmem>>, vector<1x1x256xf32>
    %103 = vector.shape_cast %102 : vector<1x1x256xf32> to vector<1x256xf32>
    %104 = arith.addf %101, %103 : vector<1x256xf32>
    %105 = arith.negf %104 : vector<1x256xf32>
    %106 = math.exp %105 : vector<1x256xf32>
    %cst_50 = arith.constant 1.000000e+00 : f32
    %107 = vector.broadcast %cst_50 : f32 to vector<1x256xf32>
    %108 = arith.addf %107, %106 : vector<1x256xf32>
    %109 = arith.divf %107, %108 : vector<1x256xf32>
    %110 = vector.shape_cast %109 : vector<1x256xf32> to vector<1x256xf32>
    %111 = vector.broadcast %110 : vector<1x256xf32> to vector<24x256xf32>
    %112 = vector.extract_strided_slice %81 {offsets = [24, 0], sizes = [24, 256], strides = [1, 1]} : vector<48x256xf32> to vector<24x256xf32>
    %cst_51 = arith.constant dense<0.000000e+00> : vector<256xf32>
    %113 = vector.multi_reduction <add>, %112, %cst_51 [0] : vector<24x256xf32> to vector<256xf32>
    %114 = vector.shape_cast %113 : vector<256xf32> to vector<1x256xf32>
    %c0_52 = arith.constant 0 : index
    %c0_53 = arith.constant 0 : index
    %c0_54 = arith.constant 0 : index
    %115 = vector.load %arg6[%c0_52, %c0_53, %c0_54] : memref<2x2x256xf32, #tpu.memory_space<vmem>>, vector<1x2x256xf32>
    %116 = vector.shape_cast %115 : vector<1x2x256xf32> to vector<2x256xf32>
    %117 = vector.broadcast %114 : vector<1x256xf32> to vector<2x256xf32>
    %118 = arith.mulf %117, %116 : vector<2x256xf32>
    %cst_55 = arith.constant dense<0.000000e+00> : vector<2xf32>
    %119 = vector.multi_reduction <add>, %118, %cst_55 [1] : vector<2x256xf32> to vector<2xf32>
    %120 = vector.shape_cast %119 : vector<2xf32> to vector<2x1xf32>
    %c0_56 = arith.constant 0 : index
    %c0_57 = arith.constant 0 : index
    %c0_58 = arith.constant 0 : index
    %121 = vector.load %arg7[%c0_56, %c0_57, %c0_58] : memref<2x2x1xf32, #tpu.memory_space<vmem>>, vector<1x2x1xf32>
    %122 = vector.shape_cast %121 : vector<1x2x1xf32> to vector<2x1xf32>
    %123 = arith.addf %120, %122 : vector<2x1xf32>
    %cst_59 = arith.constant 0.000000e+00 : f32
    %124 = vector.broadcast %cst_59 : f32 to vector<2x1xf32>
    %125 = arith.maximumf %123, %124 : vector<2x1xf32>
    %c0_60 = arith.constant 0 : index
    %c0_61 = arith.constant 0 : index
    %c0_62 = arith.constant 0 : index
    %126 = vector.load %arg8[%c0_60, %c0_61, %c0_62] : memref<2x2x256xf32, #tpu.memory_space<vmem>>, vector<1x2x256xf32>
    %127 = vector.shape_cast %126 : vector<1x2x256xf32> to vector<2x256xf32>
    %128 = vector.broadcast %125 : vector<2x1xf32> to vector<2x256xf32>
    %129 = arith.mulf %128, %127 : vector<2x256xf32>
    %cst_63 = arith.constant dense<0.000000e+00> : vector<256xf32>
    %130 = vector.multi_reduction <add>, %129, %cst_63 [0] : vector<2x256xf32> to vector<256xf32>
    %131 = vector.shape_cast %130 : vector<256xf32> to vector<1x256xf32>
    %c0_64 = arith.constant 0 : index
    %c0_65 = arith.constant 0 : index
    %c0_66 = arith.constant 0 : index
    %132 = vector.load %arg9[%c0_64, %c0_65, %c0_66] : memref<2x1x256xf32, #tpu.memory_space<vmem>>, vector<1x1x256xf32>
    %133 = vector.shape_cast %132 : vector<1x1x256xf32> to vector<1x256xf32>
    %134 = arith.addf %131, %133 : vector<1x256xf32>
    %135 = arith.negf %134 : vector<1x256xf32>
    %136 = math.exp %135 : vector<1x256xf32>
    %cst_67 = arith.constant 1.000000e+00 : f32
    %137 = vector.broadcast %cst_67 : f32 to vector<1x256xf32>
    %138 = arith.addf %137, %136 : vector<1x256xf32>
    %139 = arith.divf %137, %138 : vector<1x256xf32>
    %140 = vector.shape_cast %139 : vector<1x256xf32> to vector<1x256xf32>
    %141 = vector.broadcast %140 : vector<1x256xf32> to vector<24x256xf32>
    %142 = tpu.concatenate %111, %141 in 0 : vector<24x256xf32>, vector<24x256xf32> -> vector<48x256xf32>
    %143 = arith.mulf %81, %142 : vector<48x256xf32>
    %144 = arith.truncf %143 : vector<48x256xf32> to vector<48x256xbf16>
    %c0_68 = arith.constant 0 : index
    %c0_69 = arith.constant 0 : index
    %c0_70 = arith.constant 0 : index
    %145 = vector.load %arg10[%c0_68, %c0_69, %c0_70] : memref<2x256x128xbf16, #tpu.memory_space<vmem>>, vector<1x256x128xbf16>
    %146 = vector.shape_cast %145 : vector<1x256x128xbf16> to vector<256x128xbf16>
    %cst_71 = arith.constant dense<0.000000e+00> : vector<48x128xf32>
    %147 = tpu.matmul %144, %146, %cst_71 {dimension_numbers = #tpu.dot_dimension_numbers<[1], [0], [0], [1], [0, 0, 1, 1], [], []>} : vector<48x256xbf16>, vector<256x128xbf16>, vector<48x128xf32> -> vector<48x128xf32>
    %c0_72 = arith.constant 0 : index
    %c0_73 = arith.constant 0 : index
    %c0_74 = arith.constant 0 : index
    %148 = vector.load %arg11[%c0_72, %c0_73, %c0_74] : memref<2x1x128xf32, #tpu.memory_space<vmem>>, vector<1x1x128xf32>
    %149 = vector.shape_cast %148 : vector<1x1x128xf32> to vector<1x128xf32>
    %150 = vector.broadcast %149 : vector<1x128xf32> to vector<48x128xf32>
    %151 = arith.addf %147, %150 : vector<48x128xf32>
    %cst_75 = arith.constant 0.000000e+00 : f32
    %152 = vector.broadcast %cst_75 : f32 to vector<48x128xf32>
    %153 = arith.maximumf %151, %152 : vector<48x128xf32>
    %154 = arith.truncf %153 : vector<48x128xf32> to vector<48x128xbf16>
    %c0_76 = arith.constant 0 : index
    %c0_77 = arith.constant 0 : index
    %c0_78 = arith.constant 0 : index
    %155 = vector.load %arg12[%c0_76, %c0_77, %c0_78] : memref<2x128x256xbf16, #tpu.memory_space<vmem>>, vector<1x128x256xbf16>
    %156 = vector.shape_cast %155 : vector<1x128x256xbf16> to vector<128x256xbf16>
    %cst_79 = arith.constant dense<0.000000e+00> : vector<48x256xf32>
    %157 = tpu.matmul %154, %156, %cst_79 {dimension_numbers = #tpu.dot_dimension_numbers<[1], [0], [0], [1], [0, 0, 1, 1], [], []>} : vector<48x128xbf16>, vector<128x256xbf16>, vector<48x256xf32> -> vector<48x256xf32>
    %c0_80 = arith.constant 0 : index
    %c0_81 = arith.constant 0 : index
    %c0_82 = arith.constant 0 : index
    %158 = vector.load %arg13[%c0_80, %c0_81, %c0_82] : memref<2x1x1xf32, #tpu.memory_space<vmem>>, vector<1x1x1xf32>
    %159 = vector.shape_cast %158 : vector<1x1x1xf32> to vector<1x1xf32>
    %160 = vector.broadcast %159 : vector<1x1xf32> to vector<48x256xf32>
    %161 = arith.addf %157, %160 : vector<48x256xf32>
    %162 = arith.negf %161 : vector<48x256xf32>
    %163 = math.exp %162 : vector<48x256xf32>
    %cst_83 = arith.constant 1.000000e+00 : f32
    %164 = vector.broadcast %cst_83 : f32 to vector<48x256xf32>
    %165 = arith.addf %164, %163 : vector<48x256xf32>
    %166 = arith.divf %164, %165 : vector<48x256xf32>
    %167 = arith.mulf %143, %166 : vector<48x256xf32>
    %168 = arith.addf %167, %22 : vector<48x256xf32>
    %c1_84 = arith.constant 1 : index
    %c0_85 = arith.constant 0 : index
    %c0_86 = arith.constant 0 : index
    %169 = vector.load %arg3[%c1_84, %c0_85, %c0_86] : memref<2x1x256xf32, #tpu.memory_space<vmem>>, vector<1x1x256xf32>
    %170 = vector.shape_cast %169 : vector<1x1x256xf32> to vector<1x256xf32>
    %171 = vector.extract_strided_slice %168 {offsets = [47, 0], sizes = [1, 256], strides = [1, 1]} : vector<48x256xf32> to vector<1x256xf32>
    %172 = vector.extract_strided_slice %168 {offsets = [0, 0], sizes = [47, 256], strides = [1, 1]} : vector<48x256xf32> to vector<47x256xf32>
    %173 = tpu.concatenate %171, %172 in 0 : vector<1x256xf32>, vector<47x256xf32> -> vector<48x256xf32>
    %174 = arith.truncf %173 : vector<48x256xf32> to vector<48x256xbf16>
    %c3 = arith.constant 3 : index
    %c0_87 = arith.constant 0 : index
    %c0_88 = arith.constant 0 : index
    %175 = vector.load %arg2[%c3, %c0_87, %c0_88] : memref<6x256x256xbf16, #tpu.memory_space<vmem>>, vector<1x256x256xbf16>
    %176 = vector.shape_cast %175 : vector<1x256x256xbf16> to vector<256x256xbf16>
    %cst_89 = arith.constant dense<0.000000e+00> : vector<48x256xf32>
    %177 = tpu.matmul %174, %176, %cst_89 {dimension_numbers = #tpu.dot_dimension_numbers<[1], [0], [0], [1], [0, 0, 1, 1], [], []>} : vector<48x256xbf16>, vector<256x256xbf16>, vector<48x256xf32> -> vector<48x256xf32>
    %178 = arith.truncf %168 : vector<48x256xf32> to vector<48x256xbf16>
    %c4 = arith.constant 4 : index
    %c0_90 = arith.constant 0 : index
    %c0_91 = arith.constant 0 : index
    %179 = vector.load %arg2[%c4, %c0_90, %c0_91] : memref<6x256x256xbf16, #tpu.memory_space<vmem>>, vector<1x256x256xbf16>
    %180 = vector.shape_cast %179 : vector<1x256x256xbf16> to vector<256x256xbf16>
    %cst_92 = arith.constant dense<0.000000e+00> : vector<48x256xf32>
    %181 = tpu.matmul %178, %180, %cst_92 {dimension_numbers = #tpu.dot_dimension_numbers<[1], [0], [0], [1], [0, 0, 1, 1], [], []>} : vector<48x256xbf16>, vector<256x256xbf16>, vector<48x256xf32> -> vector<48x256xf32>
    %182 = arith.addf %177, %181 : vector<48x256xf32>
    %183 = vector.extract_strided_slice %168 {offsets = [1, 0], sizes = [47, 256], strides = [1, 1]} : vector<48x256xf32> to vector<47x256xf32>
    %184 = vector.extract_strided_slice %168 {offsets = [0, 0], sizes = [1, 256], strides = [1, 1]} : vector<48x256xf32> to vector<1x256xf32>
    %185 = tpu.concatenate %183, %184 in 0 : vector<47x256xf32>, vector<1x256xf32> -> vector<48x256xf32>
    %186 = arith.truncf %185 : vector<48x256xf32> to vector<48x256xbf16>
    %c5 = arith.constant 5 : index
    %c0_93 = arith.constant 0 : index
    %c0_94 = arith.constant 0 : index
    %187 = vector.load %arg2[%c5, %c0_93, %c0_94] : memref<6x256x256xbf16, #tpu.memory_space<vmem>>, vector<1x256x256xbf16>
    %188 = vector.shape_cast %187 : vector<1x256x256xbf16> to vector<256x256xbf16>
    %cst_95 = arith.constant dense<0.000000e+00> : vector<48x256xf32>
    %189 = tpu.matmul %186, %188, %cst_95 {dimension_numbers = #tpu.dot_dimension_numbers<[1], [0], [0], [1], [0, 0, 1, 1], [], []>} : vector<48x256xbf16>, vector<256x256xbf16>, vector<48x256xf32> -> vector<48x256xf32>
    %190 = arith.addf %182, %189 : vector<48x256xf32>
    %191 = vector.broadcast %170 : vector<1x256xf32> to vector<48x256xf32>
    %192 = arith.addf %190, %191 : vector<48x256xf32>
    %cst_96 = arith.constant 0.000000e+00 : f32
    %193 = vector.shape_cast %21 : vector<48x1xi1> to vector<48x1xi1>
    %194 = vector.broadcast %193 : vector<48x1xi1> to vector<48x256xi1>
    %195 = vector.broadcast %cst_96 : f32 to vector<48x256xf32>
    %196 = arith.select %194, %192, %195 : vector<48x256xi1>, vector<48x256xf32>
    %cst_97 = arith.constant 0.000000e+00 : f32
    %197 = vector.broadcast %cst_97 : f32 to vector<48x256xf32>
    %198 = arith.maximumf %196, %197 : vector<48x256xf32>
    %199 = arith.addf %198, %168 : vector<48x256xf32>
    %c1_98 = arith.constant 1 : index
    %c0_99 = arith.constant 0 : index
    %c0_100 = arith.constant 0 : index
    %200 = vector.load %arg5[%c1_98, %c0_99, %c0_100] : memref<2x1x256xf32, #tpu.memory_space<vmem>>, vector<1x1x256xf32>
    %201 = vector.shape_cast %200 : vector<1x1x256xf32> to vector<1x256xf32>
    %202 = vector.extract_strided_slice %199 {offsets = [47, 0], sizes = [1, 256], strides = [1, 1]} : vector<48x256xf32> to vector<1x256xf32>
    %203 = vector.extract_strided_slice %199 {offsets = [0, 0], sizes = [47, 256], strides = [1, 1]} : vector<48x256xf32> to vector<47x256xf32>
    %204 = tpu.concatenate %202, %203 in 0 : vector<1x256xf32>, vector<47x256xf32> -> vector<48x256xf32>
    %205 = arith.truncf %204 : vector<48x256xf32> to vector<48x256xbf16>
    %c3_101 = arith.constant 3 : index
    %c0_102 = arith.constant 0 : index
    %c0_103 = arith.constant 0 : index
    %206 = vector.load %arg4[%c3_101, %c0_102, %c0_103] : memref<6x256x256xbf16, #tpu.memory_space<vmem>>, vector<1x256x256xbf16>
    %207 = vector.shape_cast %206 : vector<1x256x256xbf16> to vector<256x256xbf16>
    %cst_104 = arith.constant dense<0.000000e+00> : vector<48x256xf32>
    %208 = tpu.matmul %205, %207, %cst_104 {dimension_numbers = #tpu.dot_dimension_numbers<[1], [0], [0], [1], [0, 0, 1, 1], [], []>} : vector<48x256xbf16>, vector<256x256xbf16>, vector<48x256xf32> -> vector<48x256xf32>
    %209 = arith.truncf %199 : vector<48x256xf32> to vector<48x256xbf16>
    %c4_105 = arith.constant 4 : index
    %c0_106 = arith.constant 0 : index
    %c0_107 = arith.constant 0 : index
    %210 = vector.load %arg4[%c4_105, %c0_106, %c0_107] : memref<6x256x256xbf16, #tpu.memory_space<vmem>>, vector<1x256x256xbf16>
    %211 = vector.shape_cast %210 : vector<1x256x256xbf16> to vector<256x256xbf16>
    %cst_108 = arith.constant dense<0.000000e+00> : vector<48x256xf32>
    %212 = tpu.matmul %209, %211, %cst_108 {dimension_numbers = #tpu.dot_dimension_numbers<[1], [0], [0], [1], [0, 0, 1, 1], [], []>} : vector<48x256xbf16>, vector<256x256xbf16>, vector<48x256xf32> -> vector<48x256xf32>
    %213 = arith.addf %208, %212 : vector<48x256xf32>
    %214 = vector.extract_strided_slice %199 {offsets = [1, 0], sizes = [47, 256], strides = [1, 1]} : vector<48x256xf32> to vector<47x256xf32>
    %215 = vector.extract_strided_slice %199 {offsets = [0, 0], sizes = [1, 256], strides = [1, 1]} : vector<48x256xf32> to vector<1x256xf32>
    %216 = tpu.concatenate %214, %215 in 0 : vector<47x256xf32>, vector<1x256xf32> -> vector<48x256xf32>
    %217 = arith.truncf %216 : vector<48x256xf32> to vector<48x256xbf16>
    %c5_109 = arith.constant 5 : index
    %c0_110 = arith.constant 0 : index
    %c0_111 = arith.constant 0 : index
    %218 = vector.load %arg4[%c5_109, %c0_110, %c0_111] : memref<6x256x256xbf16, #tpu.memory_space<vmem>>, vector<1x256x256xbf16>
    %219 = vector.shape_cast %218 : vector<1x256x256xbf16> to vector<256x256xbf16>
    %cst_112 = arith.constant dense<0.000000e+00> : vector<48x256xf32>
    %220 = tpu.matmul %217, %219, %cst_112 {dimension_numbers = #tpu.dot_dimension_numbers<[1], [0], [0], [1], [0, 0, 1, 1], [], []>} : vector<48x256xbf16>, vector<256x256xbf16>, vector<48x256xf32> -> vector<48x256xf32>
    %221 = arith.addf %213, %220 : vector<48x256xf32>
    %222 = vector.broadcast %201 : vector<1x256xf32> to vector<48x256xf32>
    %223 = arith.addf %221, %222 : vector<48x256xf32>
    %cst_113 = arith.constant 0.000000e+00 : f32
    %224 = vector.shape_cast %21 : vector<48x1xi1> to vector<48x1xi1>
    %225 = vector.broadcast %224 : vector<48x1xi1> to vector<48x256xi1>
    %226 = vector.broadcast %cst_113 : f32 to vector<48x256xf32>
    %227 = arith.select %225, %223, %226 : vector<48x256xi1>, vector<48x256xf32>
    %228 = vector.extract_strided_slice %227 {offsets = [0, 0], sizes = [24, 256], strides = [1, 1]} : vector<48x256xf32> to vector<24x256xf32>
    %cst_114 = arith.constant dense<0.000000e+00> : vector<256xf32>
    %229 = vector.multi_reduction <add>, %228, %cst_114 [0] : vector<24x256xf32> to vector<256xf32>
    %230 = vector.shape_cast %229 : vector<256xf32> to vector<1x256xf32>
    %c1_115 = arith.constant 1 : index
    %c0_116 = arith.constant 0 : index
    %c0_117 = arith.constant 0 : index
    %231 = vector.load %arg6[%c1_115, %c0_116, %c0_117] : memref<2x2x256xf32, #tpu.memory_space<vmem>>, vector<1x2x256xf32>
    %232 = vector.shape_cast %231 : vector<1x2x256xf32> to vector<2x256xf32>
    %233 = vector.broadcast %230 : vector<1x256xf32> to vector<2x256xf32>
    %234 = arith.mulf %233, %232 : vector<2x256xf32>
    %cst_118 = arith.constant dense<0.000000e+00> : vector<2xf32>
    %235 = vector.multi_reduction <add>, %234, %cst_118 [1] : vector<2x256xf32> to vector<2xf32>
    %236 = vector.shape_cast %235 : vector<2xf32> to vector<2x1xf32>
    %c1_119 = arith.constant 1 : index
    %c0_120 = arith.constant 0 : index
    %c0_121 = arith.constant 0 : index
    %237 = vector.load %arg7[%c1_119, %c0_120, %c0_121] : memref<2x2x1xf32, #tpu.memory_space<vmem>>, vector<1x2x1xf32>
    %238 = vector.shape_cast %237 : vector<1x2x1xf32> to vector<2x1xf32>
    %239 = arith.addf %236, %238 : vector<2x1xf32>
    %cst_122 = arith.constant 0.000000e+00 : f32
    %240 = vector.broadcast %cst_122 : f32 to vector<2x1xf32>
    %241 = arith.maximumf %239, %240 : vector<2x1xf32>
    %c1_123 = arith.constant 1 : index
    %c0_124 = arith.constant 0 : index
    %c0_125 = arith.constant 0 : index
    %242 = vector.load %arg8[%c1_123, %c0_124, %c0_125] : memref<2x2x256xf32, #tpu.memory_space<vmem>>, vector<1x2x256xf32>
    %243 = vector.shape_cast %242 : vector<1x2x256xf32> to vector<2x256xf32>
    %244 = vector.broadcast %241 : vector<2x1xf32> to vector<2x256xf32>
    %245 = arith.mulf %244, %243 : vector<2x256xf32>
    %cst_126 = arith.constant dense<0.000000e+00> : vector<256xf32>
    %246 = vector.multi_reduction <add>, %245, %cst_126 [0] : vector<2x256xf32> to vector<256xf32>
    %247 = vector.shape_cast %246 : vector<256xf32> to vector<1x256xf32>
    %c1_127 = arith.constant 1 : index
    %c0_128 = arith.constant 0 : index
    %c0_129 = arith.constant 0 : index
    %248 = vector.load %arg9[%c1_127, %c0_128, %c0_129] : memref<2x1x256xf32, #tpu.memory_space<vmem>>, vector<1x1x256xf32>
    %249 = vector.shape_cast %248 : vector<1x1x256xf32> to vector<1x256xf32>
    %250 = arith.addf %247, %249 : vector<1x256xf32>
    %251 = arith.negf %250 : vector<1x256xf32>
    %252 = math.exp %251 : vector<1x256xf32>
    %cst_130 = arith.constant 1.000000e+00 : f32
    %253 = vector.broadcast %cst_130 : f32 to vector<1x256xf32>
    %254 = arith.addf %253, %252 : vector<1x256xf32>
    %255 = arith.divf %253, %254 : vector<1x256xf32>
    %256 = vector.shape_cast %255 : vector<1x256xf32> to vector<1x256xf32>
    %257 = vector.broadcast %256 : vector<1x256xf32> to vector<24x256xf32>
    %258 = vector.extract_strided_slice %227 {offsets = [24, 0], sizes = [24, 256], strides = [1, 1]} : vector<48x256xf32> to vector<24x256xf32>
    %cst_131 = arith.constant dense<0.000000e+00> : vector<256xf32>
    %259 = vector.multi_reduction <add>, %258, %cst_131 [0] : vector<24x256xf32> to vector<256xf32>
    %260 = vector.shape_cast %259 : vector<256xf32> to vector<1x256xf32>
    %c1_132 = arith.constant 1 : index
    %c0_133 = arith.constant 0 : index
    %c0_134 = arith.constant 0 : index
    %261 = vector.load %arg6[%c1_132, %c0_133, %c0_134] : memref<2x2x256xf32, #tpu.memory_space<vmem>>, vector<1x2x256xf32>
    %262 = vector.shape_cast %261 : vector<1x2x256xf32> to vector<2x256xf32>
    %263 = vector.broadcast %260 : vector<1x256xf32> to vector<2x256xf32>
    %264 = arith.mulf %263, %262 : vector<2x256xf32>
    %cst_135 = arith.constant dense<0.000000e+00> : vector<2xf32>
    %265 = vector.multi_reduction <add>, %264, %cst_135 [1] : vector<2x256xf32> to vector<2xf32>
    %266 = vector.shape_cast %265 : vector<2xf32> to vector<2x1xf32>
    %c1_136 = arith.constant 1 : index
    %c0_137 = arith.constant 0 : index
    %c0_138 = arith.constant 0 : index
    %267 = vector.load %arg7[%c1_136, %c0_137, %c0_138] : memref<2x2x1xf32, #tpu.memory_space<vmem>>, vector<1x2x1xf32>
    %268 = vector.shape_cast %267 : vector<1x2x1xf32> to vector<2x1xf32>
    %269 = arith.addf %266, %268 : vector<2x1xf32>
    %cst_139 = arith.constant 0.000000e+00 : f32
    %270 = vector.broadcast %cst_139 : f32 to vector<2x1xf32>
    %271 = arith.maximumf %269, %270 : vector<2x1xf32>
    %c1_140 = arith.constant 1 : index
    %c0_141 = arith.constant 0 : index
    %c0_142 = arith.constant 0 : index
    %272 = vector.load %arg8[%c1_140, %c0_141, %c0_142] : memref<2x2x256xf32, #tpu.memory_space<vmem>>, vector<1x2x256xf32>
    %273 = vector.shape_cast %272 : vector<1x2x256xf32> to vector<2x256xf32>
    %274 = vector.broadcast %271 : vector<2x1xf32> to vector<2x256xf32>
    %275 = arith.mulf %274, %273 : vector<2x256xf32>
    %cst_143 = arith.constant dense<0.000000e+00> : vector<256xf32>
    %276 = vector.multi_reduction <add>, %275, %cst_143 [0] : vector<2x256xf32> to vector<256xf32>
    %277 = vector.shape_cast %276 : vector<256xf32> to vector<1x256xf32>
    %c1_144 = arith.constant 1 : index
    %c0_145 = arith.constant 0 : index
    %c0_146 = arith.constant 0 : index
    %278 = vector.load %arg9[%c1_144, %c0_145, %c0_146] : memref<2x1x256xf32, #tpu.memory_space<vmem>>, vector<1x1x256xf32>
    %279 = vector.shape_cast %278 : vector<1x1x256xf32> to vector<1x256xf32>
    %280 = arith.addf %277, %279 : vector<1x256xf32>
    %281 = arith.negf %280 : vector<1x256xf32>
    %282 = math.exp %281 : vector<1x256xf32>
    %cst_147 = arith.constant 1.000000e+00 : f32
    %283 = vector.broadcast %cst_147 : f32 to vector<1x256xf32>
    %284 = arith.addf %283, %282 : vector<1x256xf32>
    %285 = arith.divf %283, %284 : vector<1x256xf32>
    %286 = vector.shape_cast %285 : vector<1x256xf32> to vector<1x256xf32>
    %287 = vector.broadcast %286 : vector<1x256xf32> to vector<24x256xf32>
    %288 = tpu.concatenate %257, %287 in 0 : vector<24x256xf32>, vector<24x256xf32> -> vector<48x256xf32>
    %289 = arith.mulf %227, %288 : vector<48x256xf32>
    %290 = arith.truncf %289 : vector<48x256xf32> to vector<48x256xbf16>
    %c1_148 = arith.constant 1 : index
    %c0_149 = arith.constant 0 : index
    %c0_150 = arith.constant 0 : index
    %291 = vector.load %arg10[%c1_148, %c0_149, %c0_150] : memref<2x256x128xbf16, #tpu.memory_space<vmem>>, vector<1x256x128xbf16>
    %292 = vector.shape_cast %291 : vector<1x256x128xbf16> to vector<256x128xbf16>
    %cst_151 = arith.constant dense<0.000000e+00> : vector<48x128xf32>
    %293 = tpu.matmul %290, %292, %cst_151 {dimension_numbers = #tpu.dot_dimension_numbers<[1], [0], [0], [1], [0, 0, 1, 1], [], []>} : vector<48x256xbf16>, vector<256x128xbf16>, vector<48x128xf32> -> vector<48x128xf32>
    %c1_152 = arith.constant 1 : index
    %c0_153 = arith.constant 0 : index
    %c0_154 = arith.constant 0 : index
    %294 = vector.load %arg11[%c1_152, %c0_153, %c0_154] : memref<2x1x128xf32, #tpu.memory_space<vmem>>, vector<1x1x128xf32>
    %295 = vector.shape_cast %294 : vector<1x1x128xf32> to vector<1x128xf32>
    %296 = vector.broadcast %295 : vector<1x128xf32> to vector<48x128xf32>
    %297 = arith.addf %293, %296 : vector<48x128xf32>
    %cst_155 = arith.constant 0.000000e+00 : f32
    %298 = vector.broadcast %cst_155 : f32 to vector<48x128xf32>
    %299 = arith.maximumf %297, %298 : vector<48x128xf32>
    %300 = arith.truncf %299 : vector<48x128xf32> to vector<48x128xbf16>
    %c1_156 = arith.constant 1 : index
    %c0_157 = arith.constant 0 : index
    %c0_158 = arith.constant 0 : index
    %301 = vector.load %arg12[%c1_156, %c0_157, %c0_158] : memref<2x128x256xbf16, #tpu.memory_space<vmem>>, vector<1x128x256xbf16>
    %302 = vector.shape_cast %301 : vector<1x128x256xbf16> to vector<128x256xbf16>
    %cst_159 = arith.constant dense<0.000000e+00> : vector<48x256xf32>
    %303 = tpu.matmul %300, %302, %cst_159 {dimension_numbers = #tpu.dot_dimension_numbers<[1], [0], [0], [1], [0, 0, 1, 1], [], []>} : vector<48x128xbf16>, vector<128x256xbf16>, vector<48x256xf32> -> vector<48x256xf32>
    %c1_160 = arith.constant 1 : index
    %c0_161 = arith.constant 0 : index
    %c0_162 = arith.constant 0 : index
    %304 = vector.load %arg13[%c1_160, %c0_161, %c0_162] : memref<2x1x1xf32, #tpu.memory_space<vmem>>, vector<1x1x1xf32>
    %305 = vector.shape_cast %304 : vector<1x1x1xf32> to vector<1x1xf32>
    %306 = vector.broadcast %305 : vector<1x1xf32> to vector<48x256xf32>
    %307 = arith.addf %303, %306 : vector<48x256xf32>
    %308 = arith.negf %307 : vector<48x256xf32>
    %309 = math.exp %308 : vector<48x256xf32>
    %cst_163 = arith.constant 1.000000e+00 : f32
    %310 = vector.broadcast %cst_163 : f32 to vector<48x256xf32>
    %311 = arith.addf %310, %309 : vector<48x256xf32>
    %312 = arith.divf %310, %311 : vector<48x256xf32>
    %313 = arith.mulf %289, %312 : vector<48x256xf32>
    %314 = arith.addf %313, %168 : vector<48x256xf32>
    %315 = vector.extract_strided_slice %314 {offsets = [47, 0], sizes = [1, 256], strides = [1, 1]} : vector<48x256xf32> to vector<1x256xf32>
    %316 = vector.extract_strided_slice %314 {offsets = [0, 0], sizes = [47, 256], strides = [1, 1]} : vector<48x256xf32> to vector<47x256xf32>
    %317 = tpu.concatenate %315, %316 in 0 : vector<1x256xf32>, vector<47x256xf32> -> vector<48x256xf32>
    %318 = arith.truncf %317 : vector<48x256xf32> to vector<48x256xbf16>
    %c0_164 = arith.constant 0 : index
    %c0_165 = arith.constant 0 : index
    %c0_166 = arith.constant 0 : index
    %319 = vector.load %arg14[%c0_164, %c0_165, %c0_166] : memref<3x256x256xbf16, #tpu.memory_space<vmem>>, vector<1x256x256xbf16>
    %320 = vector.shape_cast %319 : vector<1x256x256xbf16> to vector<256x256xbf16>
    %cst_167 = arith.constant dense<0.000000e+00> : vector<48x256xf32>
    %321 = tpu.matmul %318, %320, %cst_167 {dimension_numbers = #tpu.dot_dimension_numbers<[1], [0], [0], [1], [0, 0, 1, 1], [], []>} : vector<48x256xbf16>, vector<256x256xbf16>, vector<48x256xf32> -> vector<48x256xf32>
    %322 = arith.truncf %314 : vector<48x256xf32> to vector<48x256xbf16>
    %c1_168 = arith.constant 1 : index
    %c0_169 = arith.constant 0 : index
    %c0_170 = arith.constant 0 : index
    %323 = vector.load %arg14[%c1_168, %c0_169, %c0_170] : memref<3x256x256xbf16, #tpu.memory_space<vmem>>, vector<1x256x256xbf16>
    %324 = vector.shape_cast %323 : vector<1x256x256xbf16> to vector<256x256xbf16>
    %cst_171 = arith.constant dense<0.000000e+00> : vector<48x256xf32>
    %325 = tpu.matmul %322, %324, %cst_171 {dimension_numbers = #tpu.dot_dimension_numbers<[1], [0], [0], [1], [0, 0, 1, 1], [], []>} : vector<48x256xbf16>, vector<256x256xbf16>, vector<48x256xf32> -> vector<48x256xf32>
    %326 = arith.addf %321, %325 : vector<48x256xf32>
    %327 = vector.extract_strided_slice %314 {offsets = [1, 0], sizes = [47, 256], strides = [1, 1]} : vector<48x256xf32> to vector<47x256xf32>
    %328 = vector.extract_strided_slice %314 {offsets = [0, 0], sizes = [1, 256], strides = [1, 1]} : vector<48x256xf32> to vector<1x256xf32>
    %329 = tpu.concatenate %327, %328 in 0 : vector<47x256xf32>, vector<1x256xf32> -> vector<48x256xf32>
    %330 = arith.truncf %329 : vector<48x256xf32> to vector<48x256xbf16>
    %c2_172 = arith.constant 2 : index
    %c0_173 = arith.constant 0 : index
    %c0_174 = arith.constant 0 : index
    %331 = vector.load %arg14[%c2_172, %c0_173, %c0_174] : memref<3x256x256xbf16, #tpu.memory_space<vmem>>, vector<1x256x256xbf16>
    %332 = vector.shape_cast %331 : vector<1x256x256xbf16> to vector<256x256xbf16>
    %cst_175 = arith.constant dense<0.000000e+00> : vector<48x256xf32>
    %333 = tpu.matmul %330, %332, %cst_175 {dimension_numbers = #tpu.dot_dimension_numbers<[1], [0], [0], [1], [0, 0, 1, 1], [], []>} : vector<48x256xbf16>, vector<256x256xbf16>, vector<48x256xf32> -> vector<48x256xf32>
    %334 = arith.addf %326, %333 : vector<48x256xf32>
    %cst_176 = arith.constant 0.000000e+00 : f32
    %335 = vector.shape_cast %21 : vector<48x1xi1> to vector<48x1xi1>
    %336 = vector.broadcast %335 : vector<48x1xi1> to vector<48x256xi1>
    %337 = vector.broadcast %cst_176 : f32 to vector<48x256xf32>
    %338 = arith.select %336, %334, %337 : vector<48x256xi1>, vector<48x256xf32>
    %339 = arith.addf %338, %22 : vector<48x256xf32>
    %c0_177 = arith.constant 0 : index
    %c0_178 = arith.constant 0 : index
    %340 = vector.load %arg15[%c0_177, %c0_178] : memref<48x256xf32, #tpu.memory_space<vmem>>, vector<48x256xf32>
    tpu.vector_store %arg15[%c0_177, %c0_178], %339 {strides = array<i32>} : memref<48x256xf32, #tpu.memory_space<vmem>>, vector<48x256xf32>,
    return
  }
  func.func @transform_0(%arg0: i32) -> (i32, i32) {
    %c0_i32 = arith.constant 0 : i32
    %c0_i32_0 = arith.constant 0 : i32
    return %arg0, %c0_i32 : i32, i32
  }
  func.func @transform_1(%arg0: i32) -> (i32, i32, i32) {
    %c0_i32 = arith.constant 0 : i32
    %c0_i32_0 = arith.constant 0 : i32
    %c0_i32_1 = arith.constant 0 : i32
    %c0_i32_2 = arith.constant 0 : i32
    return %c0_i32, %c0_i32_0, %c0_i32_1 : i32, i32, i32
  }
  func.func @transform_2(%arg0: i32) -> (i32, i32, i32) {
    %c0_i32 = arith.constant 0 : i32
    %c0_i32_0 = arith.constant 0 : i32
    %c0_i32_1 = arith.constant 0 : i32
    %c0_i32_2 = arith.constant 0 : i32
    return %c0_i32, %c0_i32_0, %c0_i32_1 : i32, i32, i32
  }
  func.func @transform_3(%arg0: i32) -> (i32, i32, i32) {
    %c0_i32 = arith.constant 0 : i32
    %c0_i32_0 = arith.constant 0 : i32
    %c0_i32_1 = arith.constant 0 : i32
    %c0_i32_2 = arith.constant 0 : i32
    return %c0_i32, %c0_i32_0, %c0_i32_1 : i32, i32, i32
  }
  func.func @transform_4(%arg0: i32) -> (i32, i32, i32) {
    %c0_i32 = arith.constant 0 : i32
    %c0_i32_0 = arith.constant 0 : i32
    %c0_i32_1 = arith.constant 0 : i32
    %c0_i32_2 = arith.constant 0 : i32
    return %c0_i32, %c0_i32_0, %c0_i32_1 : i32, i32, i32
  }
  func.func @transform_5(%arg0: i32) -> (i32, i32, i32) {
    %c0_i32 = arith.constant 0 : i32
    %c0_i32_0 = arith.constant 0 : i32
    %c0_i32_1 = arith.constant 0 : i32
    %c0_i32_2 = arith.constant 0 : i32
    return %c0_i32, %c0_i32_0, %c0_i32_1 : i32, i32, i32
  }
  func.func @transform_6(%arg0: i32) -> (i32, i32, i32) {
    %c0_i32 = arith.constant 0 : i32
    %c0_i32_0 = arith.constant 0 : i32
    %c0_i32_1 = arith.constant 0 : i32
    %c0_i32_2 = arith.constant 0 : i32
    return %c0_i32, %c0_i32_0, %c0_i32_1 : i32, i32, i32
  }
  func.func @transform_7(%arg0: i32) -> (i32, i32, i32) {
    %c0_i32 = arith.constant 0 : i32
    %c0_i32_0 = arith.constant 0 : i32
    %c0_i32_1 = arith.constant 0 : i32
    %c0_i32_2 = arith.constant 0 : i32
    return %c0_i32, %c0_i32_0, %c0_i32_1 : i32, i32, i32
  }
  func.func @transform_8(%arg0: i32) -> (i32, i32, i32) {
    %c0_i32 = arith.constant 0 : i32
    %c0_i32_0 = arith.constant 0 : i32
    %c0_i32_1 = arith.constant 0 : i32
    %c0_i32_2 = arith.constant 0 : i32
    return %c0_i32, %c0_i32_0, %c0_i32_1 : i32, i32, i32
  }
  func.func @transform_9(%arg0: i32) -> (i32, i32, i32) {
    %c0_i32 = arith.constant 0 : i32
    %c0_i32_0 = arith.constant 0 : i32
    %c0_i32_1 = arith.constant 0 : i32
    %c0_i32_2 = arith.constant 0 : i32
    return %c0_i32, %c0_i32_0, %c0_i32_1 : i32, i32, i32
  }
  func.func @transform_10(%arg0: i32) -> (i32, i32, i32) {
    %c0_i32 = arith.constant 0 : i32
    %c0_i32_0 = arith.constant 0 : i32
    %c0_i32_1 = arith.constant 0 : i32
    %c0_i32_2 = arith.constant 0 : i32
    return %c0_i32, %c0_i32_0, %c0_i32_1 : i32, i32, i32
  }
  func.func @transform_11(%arg0: i32) -> (i32, i32, i32) {
    %c0_i32 = arith.constant 0 : i32
    %c0_i32_0 = arith.constant 0 : i32
    %c0_i32_1 = arith.constant 0 : i32
    %c0_i32_2 = arith.constant 0 : i32
    return %c0_i32, %c0_i32_0, %c0_i32_1 : i32, i32, i32
  }
  func.func @transform_12(%arg0: i32) -> (i32, i32, i32) {
    %c0_i32 = arith.constant 0 : i32
    %c0_i32_0 = arith.constant 0 : i32
    %c0_i32_1 = arith.constant 0 : i32
    %c0_i32_2 = arith.constant 0 : i32
    return %c0_i32, %c0_i32_0, %c0_i32_1 : i32, i32, i32
  }
  func.func @transform_13(%arg0: i32) -> (i32, i32, i32) {
    %c0_i32 = arith.constant 0 : i32
    %c0_i32_0 = arith.constant 0 : i32
    %c0_i32_1 = arith.constant 0 : i32
    %c0_i32_2 = arith.constant 0 : i32
    return %c0_i32, %c0_i32_0, %c0_i32_1 : i32, i32, i32
  }
  func.func @transform_14(%arg0: i32) -> (i32, i32) {
    %c0_i32 = arith.constant 0 : i32
    %c0_i32_0 = arith.constant 0 : i32
    return %arg0, %c0_i32 : i32, i32
  }
}

</mosaic_0001>

<llo_original>
// kernel: tpu_custom_call.1
$region0: #{tpu_custom_call.1}
  #allocation0 [shape = 'u32[]', space=smem, size = 0x4, offset = 0x4, fixed_abs, tag = 'smem constant byte address 0x4 - core index']
  #allocation1 [shape = 'u32[144,128]{1,0:T(1,128)}', space=vmem, size = 0x12000, scoped, tag = 'internal scratch']
  %s0 = inlined_call_operand.hbm [shape: f32[8,128], index: 0, kind: input, shape index: {}]
  %s1 = inlined_call_operand.hbm [shape: f32[8,128], index: 1, kind: output, shape index: {}]
  %s2 = sld [smem:[#allocation0]]
  $region18: #{tpu_custom_call.1} parent=0
    _
  %s4 = ssub.s32 1, %s2
  %s5 = scalar_select 0, %s4, %s2
  $region1: #{tpu_custom_call.1} parent=0
    #allocation2 [shape = 'u8[4096]{0}', space=vmem, size = 0x1000, scoped, tag = 'input window, operand 0, single buffered']
    #allocation3 [shape = 's32[1]{0}', space=sflag, size = 0x4, scoped, tag = 'scoped memory for tpu_custom_call.1']
    #allocation4 [shape = 's32[1]{0}', space=sflag, size = 0x4, scoped, tag = 'scoped memory for tpu_custom_call.1']
    #allocation5 [shape = 'u8[4096]{0}', space=vmem, size = 0x1000, scoped, tag = 'output window, operand 0, single buffered']
    %6 = vsyncpa [#allocation3], 0
    %7 = vsyncpa [#allocation4], 0
    // Predicated region
    $region2: #{tpu_custom_call.1} parent=1 // pred_check
      _
    $region3: #{tpu_custom_call.1} parent=1 // pred_check_branch
      %9 = sbr.rel (0) target = $region5
    $region4: #{tpu_custom_call.1} parent=1 // pred_region
      %s11 = ssub.s32 128, 128
      %12 = vsyncadd [#allocation3], %s11
      %s14 = sshll.u32 [#allocation2], 4
      %s15 = int_to_ptr.vmem [resolvable:$true] %s14
      %17 = dma.hbm_to_vmem [thread:$0]  %s0, 128, %s15, [#allocation3]
    $region5: #{tpu_custom_call.1} parent=1 // pred_fallthru
      _
    // Predicated region
    $region6: #{tpu_custom_call.1} parent=1 // pred_check
      _
    $region7: #{tpu_custom_call.1} parent=1 // pred_check_branch
      %19 = sbr.rel (0) target = $region9
    $region8: #{tpu_custom_call.1} parent=1 // pred_region
      %20 = dma.done [#allocation3], 128
    $region9: #{tpu_custom_call.1} parent=1 // pred_fallthru
      _
    %v21 = vld [vmem:[#allocation2] sm:$0xff]
    %v22 = vrot.slane %v21, 7
    %23 = vst [vmem:[#allocation5] sm:$0xff] %v22
    // Predicated region
    $region10: #{tpu_custom_call.1} parent=1 // pred_check
      _
    $region11: #{tpu_custom_call.1} parent=1 // pred_check_branch
      %25 = sbr.rel (0) target = $region13
    $region12: #{tpu_custom_call.1} parent=1 // pred_region
      %s27 = ssub.s32 128, 128
      %28 = vsyncadd [#allocation4], %s27
      %s30 = sshll.u32 [#allocation5], 4
      %s31 = int_to_ptr.vmem [resolvable:$true] %s30
      %33 = dma.vmem_to_hbm [thread:$0]  %s31, 128, %s1, [#allocation4]
    $region13: #{tpu_custom_call.1} parent=1 // pred_fallthru
      _
    // Predicated region
    $region14: #{tpu_custom_call.1} parent=1 // pred_check
      _
    $region15: #{tpu_custom_call.1} parent=1 // pred_check_branch
      %35 = sbr.rel (0) target = $region17
    $region16: #{tpu_custom_call.1} parent=1 // pred_region
      %36 = dma.done [#allocation4], 128
    $region17: #{tpu_custom_call.1} parent=1 // pred_fallthru
      _
    %37 = vsyncpa [#allocation3], 1
    %38 = vsyncpa [#allocation4], 1

// kernel: _group_forward_packed.1
$region0: #{_group_forward_packed.1}
  #allocation0 [shape = 'u32[]', space=smem, size = 0x4, offset = 0x4, fixed_abs, tag = 'smem constant byte address 0x4 - core index']
  #allocation1 [shape = 'u32[144,128]{1,0:T(1,128)}', space=vmem, size = 0x12000, scoped, tag = 'internal scratch']
  %s0 = inlined_call_operand.vmem [shape: f32[96,256], index: 0, kind: input, shape index: {}]
  %s1 = inlined_call_operand.hbm [shape: bf16[6,256,256], index: 1, kind: input, shape index: {}]
  %s2 = inlined_call_operand.vmem [shape: f32[2,1,256], index: 2, kind: input, shape index: {}]
  %s3 = inlined_call_operand.hbm [shape: bf16[6,256,256], index: 3, kind: input, shape index: {}]
  %s4 = inlined_call_operand.vmem [shape: f32[2,1,256], index: 4, kind: input, shape index: {}]
  %s5 = inlined_call_operand.vmem [shape: f32[2,2,256], index: 5, kind: input, shape index: {}]
  %s6 = inlined_call_operand.vmem [shape: f32[2,2,1], index: 6, kind: input, shape index: {}]
  %s7 = inlined_call_operand.vmem [shape: f32[2,2,256], index: 7, kind: input, shape index: {}]
  %s8 = inlined_call_operand.vmem [shape: f32[2,1,256], index: 8, kind: input, shape index: {}]
  %s9 = inlined_call_operand.vmem [shape: bf16[2,256,128], index: 9, kind: input, shape index: {}]
  %s10 = inlined_call_operand.vmem [shape: f32[2,1,128], index: 10, kind: input, shape index: {}]
  %s11 = inlined_call_operand.vmem [shape: bf16[2,128,256], index: 11, kind: input, shape index: {}]
  %s12 = inlined_call_operand.vmem [shape: f32[2,1,1], index: 12, kind: input, shape index: {}]
  %s13 = inlined_call_operand.vmem [shape: bf16[3,256,256], index: 13, kind: input, shape index: {}]
  %s14 = inlined_call_operand.vmem [shape: f32[96,256], index: 14, kind: output, shape index: {}]
  %s15 = sld [smem:[#allocation0]]
  $region97: #{_group_forward_packed.1} parent=0
    _
  %s17 = ssub.s32 1, %s15
  %s18 = scalar_select 0, %s17, %s15
  $region1: #{_group_forward_packed.1} parent=0
    #allocation2 [shape = 'u8[786432]{0}', space=vmem, size = 0xc0000, scoped, tag = 'input window, operand 1, single buffered']
    #allocation3 [shape = 's32[2]{0}', space=sflag, size = 0x8, scoped, tag = 'scoped memory for _group_forward_packed.1']
    #allocation4 [shape = 'u8[786432]{0}', space=vmem, size = 0xc0000, scoped, tag = 'input window, operand 3, single buffered']
    #allocation5 [shape = 's32[1]{0}', space=sflag, size = 0x4, scoped, tag = 'scoped memory for _group_forward_packed.1']
    %19 = vsyncpa [#allocation3], 0
    %20 = vsyncpa [#allocation5], 0
    loop: start=0, step=1, limit=4
    $region2: #{_group_forward_packed.1} parent=1 // loop_pre_header
      _
    $region3: #{_group_forward_packed.1} parent=1 // loop_header
      %s22 = sphi 0, %s26
      %p23 = scmp.ge.s32.totalorder %s22, 4
      %s32 = sphi 0, %s34
      %s35 = sphi 0, %s32
      %s36 = sphi 0, %s35
      %s52 = sphi 0, %s36
      %s56 = sphi 0, %s56
      %s58 = sphi 0, %s56
      %s59 = sphi 0, %s58
      %s73 = sphi 0, %s59
      %s77 = sphi 0, %s77
      %s79 = sphi 0, %s77
      %s80 = sphi 0, %s79
      %s94 = sphi 0, %s80
      %s98 = sphi 0, %s98
      %s100 = sphi 0, %s98
      %s101 = sphi 0, %s100
      %s115 = sphi 0, %s101
      %s119 = sphi 0, %s119
      %s121 = sphi 0, %s119
      %s122 = sphi 0, %s121
      %s136 = sphi 0, %s122
      %s140 = sphi 0, %s140
      %s142 = sphi 0, %s140
      %s143 = sphi 0, %s142
      %s157 = sphi 0, %s143
      %s161 = sphi 0, %s161
      %s163 = sphi 0, %s161
      %s164 = sphi 0, %s163
      %s178 = sphi 0, %s164
      %s182 = sphi 0, %s182
      %s184 = sphi 0, %s182
      %s185 = sphi 0, %s184
      %s199 = sphi 0, %s185
      %s203 = sphi 0, %s203
      %s205 = sphi 0, %s203
      %s206 = sphi 0, %s205
      %s220 = sphi 0, %s206
      %s224 = sphi 0, %s224
      %s226 = sphi 0, %s224
      %s227 = sphi 0, %s226
      %s241 = sphi 0, %s227
      %s245 = sphi 0, %s245
      %s247 = sphi 0, %s245
      %s248 = sphi 0, %s247
      %s262 = sphi 0, %s248
      %s266 = sphi 0, %s266
      %s268 = sphi 0, %s266
      %s269 = sphi 0, %s268
      %s283 = sphi 0, %s269
      %s287 = sphi 0, %s287
      %s289 = sphi 0, %s287
      %s290 = sphi 0, %s289
      %s304 = sphi 0, %s290
      %s308 = sphi 0, %s308
      %s310 = sphi 0, %s308
      %s311 = sphi 0, %s310
      %s325 = sphi 0, %s311
      %s331 = sphi 0, %s333
      %s334 = sphi 0, %s331
      %s335 = sphi 0, %s334
      %s351 = sphi 0, %s335
    $region4: #{_group_forward_packed.1} parent=1 // loop_header_branch
      %25 = sbr.rel (%p23) target = $region8
    $region5: #{_group_forward_packed.1} parent=1 // loop_body
      %s27 = ssub.s32 %s22, 1
      %s28 = ssub.s32 %s22, 2
      %s29 = sadd.s32 %s22, 1
      %s30 = ssub.s32 %s22, %s29
      %p31 = scmp.eq.s32.totalorder %s30, 0
      %s33 = sadd.s32 %s32, 1
      %s34 = scalar_select %p31, %s32, %s33
      %p37 = pneg %p31
      %p38 = scmp.eq.s32.totalorder %s22, 1
      %p39 = por %p37, %p38
      %p40 = scmp.ne.s32.totalorder %s32, %s35
      %p41 = scmp.eq.s32.totalorder %s22, 0
      %p42 = por %p40, %p41
      %p43 = scmp.ne.s32.totalorder %s32, %s35
      %p44 = scmp.eq.s32.totalorder %s27, 1
      %p45 = por %p43, %p44
      %p46 = scmp.ne.s32.totalorder %s35, %s36
      %p47 = scmp.eq.s32.totalorder %s27, 0
      %p48 = por %p46, %p47
      %p49 = scmp.ne.s32.totalorder %s35, %s36
      %p50 = scmp.eq.s32.totalorder %s28, 1
      %p51 = por %p49, %p50
      %p53 = scmp.ne.s32.totalorder %s36, %s52
      %p54 = scmp.eq.s32.totalorder %s28, 0
      %p55 = por %p53, %p54
      %s57 = sadd.s32 %s56, 1
      %p60 = scmp.eq.s32.totalorder %s22, 1
      %p61 = scmp.ne.s32.totalorder %s56, %s58
      %p62 = scmp.eq.s32.totalorder %s22, 0
      %p63 = por %p61, %p62
      %p64 = scmp.ne.s32.totalorder %s56, %s58
      %p65 = scmp.eq.s32.totalorder %s27, 1
      %p66 = por %p64, %p65
      %p67 = scmp.ne.s32.totalorder %s58, %s59
      %p68 = scmp.eq.s32.totalorder %s27, 0
      %p69 = por %p67, %p68
      %p70 = scmp.ne.s32.totalorder %s58, %s59
      %p71 = scmp.eq.s32.totalorder %s28, 1
      %p72 = por %p70, %p71
      %p74 = scmp.ne.s32.totalorder %s59, %s73
      %p75 = scmp.eq.s32.totalorder %s28, 0
      %p76 = por %p74, %p75
      %s78 = sadd.s32 %s77, 1
      %p81 = scmp.eq.s32.totalorder %s22, 1
      %p82 = scmp.ne.s32.totalorder %s77, %s79
      %p83 = scmp.eq.s32.totalorder %s22, 0
      %p84 = por %p82, %p83
      %p85 = scmp.ne.s32.totalorder %s77, %s79
      %p86 = scmp.eq.s32.totalorder %s27, 1
      %p87 = por %p85, %p86
      %p88 = scmp.ne.s32.totalorder %s79, %s80
      %p89 = scmp.eq.s32.totalorder %s27, 0
      %p90 = por %p88, %p89
      %p91 = scmp.ne.s32.totalorder %s79, %s80
      %p92 = scmp.eq.s32.totalorder %s28, 1
      %p93 = por %p91, %p92
      %p95 = scmp.ne.s32.totalorder %s80, %s94
      %p96 = scmp.eq.s32.totalorder %s28, 0
      %p97 = por %p95, %p96
      %s99 = sadd.s32 %s98, 1
      %p102 = scmp.eq.s32.totalorder %s22, 1
      %p103 = scmp.ne.s32.totalorder %s98, %s100
      %p104 = scmp.eq.s32.totalorder %s22, 0
      %p105 = por %p103, %p104
      %p106 = scmp.ne.s32.totalorder %s98, %s100
      %p107 = scmp.eq.s32.totalorder %s27, 1
      %p108 = por %p106, %p107
      %p109 = scmp.ne.s32.totalorder %s100, %s101
      %p110 = scmp.eq.s32.totalorder %s27, 0
      %p111 = por %p109, %p110
      %p112 = scmp.ne.s32.totalorder %s100, %s101
      %p113 = scmp.eq.s32.totalorder %s28, 1
      %p114 = por %p112, %p113
      %p116 = scmp.ne.s32.totalorder %s101, %s115
      %p117 = scmp.eq.s32.totalorder %s28, 0
      %p118 = por %p116, %p117
      %s120 = sadd.s32 %s119, 1
      %p123 = scmp.eq.s32.totalorder %s22, 1
      %p124 = scmp.ne.s32.totalorder %s119, %s121
      %p125 = scmp.eq.s32.totalorder %s22, 0
      %p126 = por %p124, %p125
      %p127 = scmp.ne.s32.totalorder %s119, %s121
      %p128 = scmp.eq.s32.totalorder %s27, 1
      %p129 = por %p127, %p128
      %p130 = scmp.ne.s32.totalorder %s121, %s122
      %p131 = scmp.eq.s32.totalorder %s27, 0
      %p132 = por %p130, %p131
      %p133 = scmp.ne.s32.totalorder %s121, %s122
      %p134 = scmp.eq.s32.totalorder %s28, 1
      %p135 = por %p133, %p134
      %p137 = scmp.ne.s32.totalorder %s122, %s136
      %p138 = scmp.eq.s32.totalorder %s28, 0
      %p139 = por %p137, %p138
      %s141 = sadd.s32 %s140, 1
      %p144 = scmp.eq.s32.totalorder %s22, 1
      %p145 = scmp.ne.s32.totalorder %s140, %s142
      %p146 = scmp.eq.s32.totalorder %s22, 0
      %p147 = por %p145, %p146
      %p148 = scmp.ne.s32.totalorder %s140, %s142
      %p149 = scmp.eq.s32.totalorder %s27, 1
      %p150 = por %p148, %p149
      %p151 = scmp.ne.s32.totalorder %s142, %s143
      %p152 = scmp.eq.s32.totalorder %s27, 0
      %p153 = por %p151, %p152
      %p154 = scmp.ne.s32.totalorder %s142, %s143
      %p155 = scmp.eq.s32.totalorder %s28, 1
      %p156 = por %p154, %p155
      %p158 = scmp.ne.s32.totalorder %s143, %s157
      %p159 = scmp.eq.s32.totalorder %s28, 0
      %p160 = por %p158, %p159
      %s162 = sadd.s32 %s161, 1
      %p165 = scmp.eq.s32.totalorder %s22, 1
      %p166 = scmp.ne.s32.totalorder %s161, %s163
      %p167 = scmp.eq.s32.totalorder %s22, 0
      %p168 = por %p166, %p167
      %p169 = scmp.ne.s32.totalorder %s161, %s163
      %p170 = scmp.eq.s32.totalorder %s27, 1
      %p171 = por %p169, %p170
      %p172 = scmp.ne.s32.totalorder %s163, %s164
      %p173 = scmp.eq.s32.totalorder %s27, 0
      %p174 = por %p172, %p173
      %p175 = scmp.ne.s32.totalorder %s163, %s164
      %p176 = scmp.eq.s32.totalorder %s28, 1
      %p177 = por %p175, %p176
      %p179 = scmp.ne.s32.totalorder %s164, %s178
      %p180 = scmp.eq.s32.totalorder %s28, 0
      %p181 = por %p179, %p180
      %s183 = sadd.s32 %s182, 1
      %p186 = scmp.eq.s32.totalorder %s22, 1
      %p187 = scmp.ne.s32.totalorder %s182, %s184
      %p188 = scmp.eq.s32.totalorder %s22, 0
      %p189 = por %p187, %p188
      %p190 = scmp.ne.s32.totalorder %s182, %s184
      %p191 = scmp.eq.s32.totalorder %s27, 1
      %p192 = por %p190, %p191
      %p193 = scmp.ne.s32.totalorder %s184, %s185
      %p194 = scmp.eq.s32.totalorder %s27, 0
      %p195 = por %p193, %p194
      %p196 = scmp.ne.s32.totalorder %s184, %s185
      %p197 = scmp.eq.s32.totalorder %s28, 1
      %p198 = por %p196, %p197
      %p200 = scmp.ne.s32.totalorder %s185, %s199
      %p201 = scmp.eq.s32.totalorder %s28, 0
      %p202 = por %p200, %p201
      %s204 = sadd.s32 %s203, 1
      %p207 = scmp.eq.s32.totalorder %s22, 1
      %p208 = scmp.ne.s32.totalorder %s203, %s205
      %p209 = scmp.eq.s32.totalorder %s22, 0
      %p210 = por %p208, %p209
      %p211 = scmp.ne.s32.totalorder %s203, %s205
      %p212 = scmp.eq.s32.totalorder %s27, 1
      %p213 = por %p211, %p212
      %p214 = scmp.ne.s32.totalorder %s205, %s206
      %p215 = scmp.eq.s32.totalorder %s27, 0
      %p216 = por %p214, %p215
      %p217 = scmp.ne.s32.totalorder %s205, %s206
      %p218 = scmp.eq.s32.totalorder %s28, 1
      %p219 = por %p217, %p218
      %p221 = scmp.ne.s32.totalorder %s206, %s220
      %p222 = scmp.eq.s32.totalorder %s28, 0
      %p223 = por %p221, %p222
      %s225 = sadd.s32 %s224, 1
      %p228 = scmp.eq.s32.totalorder %s22, 1
      %p229 = scmp.ne.s32.totalorder %s224, %s226
      %p230 = scmp.eq.s32.totalorder %s22, 0
      %p231 = por %p229, %p230
      %p232 = scmp.ne.s32.totalorder %s224, %s226
      %p233 = scmp.eq.s32.totalorder %s27, 1
      %p234 = por %p232, %p233
      %p235 = scmp.ne.s32.totalorder %s226, %s227
      %p236 = scmp.eq.s32.totalorder %s27, 0
      %p237 = por %p235, %p236
      %p238 = scmp.ne.s32.totalorder %s226, %s227
      %p239 = scmp.eq.s32.totalorder %s28, 1
      %p240 = por %p238, %p239
      %p242 = scmp.ne.s32.totalorder %s227, %s241
      %p243 = scmp.eq.s32.totalorder %s28, 0
      %p244 = por %p242, %p243
      %s246 = sadd.s32 %s245, 1
      %p249 = scmp.eq.s32.totalorder %s22, 1
      %p250 = scmp.ne.s32.totalorder %s245, %s247
      %p251 = scmp.eq.s32.totalorder %s22, 0
      %p252 = por %p250, %p251
      %p253 = scmp.ne.s32.totalorder %s245, %s247
      %p254 = scmp.eq.s32.totalorder %s27, 1
      %p255 = por %p253, %p254
      %p256 = scmp.ne.s32.totalorder %s247, %s248
      %p257 = scmp.eq.s32.totalorder %s27, 0
      %p258 = por %p256, %p257
      %p259 = scmp.ne.s32.totalorder %s247, %s248
      %p260 = scmp.eq.s32.totalorder %s28, 1
      %p261 = por %p259, %p260
      %p263 = scmp.ne.s32.totalorder %s248, %s262
      %p264 = scmp.eq.s32.totalorder %s28, 0
      %p265 = por %p263, %p264
      %s267 = sadd.s32 %s266, 1
      %p270 = scmp.eq.s32.totalorder %s22, 1
      %p271 = scmp.ne.s32.totalorder %s266, %s268
      %p272 = scmp.eq.s32.totalorder %s22, 0
      %p273 = por %p271, %p272
      %p274 = scmp.ne.s32.totalorder %s266, %s268
      %p275 = scmp.eq.s32.totalorder %s27, 1
      %p276 = por %p274, %p275
      %p277 = scmp.ne.s32.totalorder %s268, %s269
      %p278 = scmp.eq.s32.totalorder %s27, 0
      %p279 = por %p277, %p278
      %p280 = scmp.ne.s32.totalorder %s268, %s269
      %p281 = scmp.eq.s32.totalorder %s28, 1
      %p282 = por %p280, %p281
      %p284 = scmp.ne.s32.totalorder %s269, %s283
      %p285 = scmp.eq.s32.totalorder %s28, 0
      %p286 = por %p284, %p285
      %s288 = sadd.s32 %s287, 1
      %p291 = scmp.eq.s32.totalorder %s22, 1
      %p292 = scmp.ne.s32.totalorder %s287, %s289
      %p293 = scmp.eq.s32.totalorder %s22, 0
      %p294 = por %p292, %p293
      %p295 = scmp.ne.s32.totalorder %s287, %s289
      %p296 = scmp.eq.s32.totalorder %s27, 1
      %p297 = por %p295, %p296
      %p298 = scmp.ne.s32.totalorder %s289, %s290
      %p299 = scmp.eq.s32.totalorder %s27, 0
      %p300 = por %p298, %p299
      %p301 = scmp.ne.s32.totalorder %s289, %s290
      %p302 = scmp.eq.s32.totalorder %s28, 1
      %p303 = por %p301, %p302
      %p305 = scmp.ne.s32.totalorder %s290, %s304
      %p306 = scmp.eq.s32.totalorder %s28, 0
      %p307 = por %p305, %p306
      %s309 = sadd.s32 %s308, 1
      %p312 = scmp.eq.s32.totalorder %s22, 1
      %p313 = scmp.ne.s32.totalorder %s308, %s310
      %p314 = scmp.eq.s32.totalorder %s22, 0
      %p315 = por %p313, %p314
      %p316 = scmp.ne.s32.totalorder %s308, %s310
      %p317 = scmp.eq.s32.totalorder %s27, 1
      %p318 = por %p316, %p317
      %p319 = scmp.ne.s32.totalorder %s310, %s311
      %p320 = scmp.eq.s32.totalorder %s27, 0
      %p321 = por %p319, %p320
      %p322 = scmp.ne.s32.totalorder %s310, %s311
      %p323 = scmp.eq.s32.totalorder %s28, 1
      %p324 = por %p322, %p323
      %p326 = scmp.ne.s32.totalorder %s311, %s325
      %p327 = scmp.eq.s32.totalorder %s28, 0
      %p328 = por %p326, %p327
      %s329 = ssub.s32 %s22, %s29
      %p330 = scmp.eq.s32.totalorder %s329, 0
      %s332 = sadd.s32 %s331, 1
      %s333 = scalar_select %p330, %s331, %s332
      %p336 = pneg %p330
      %p337 = scmp.eq.s32.totalorder %s22, 1
      %p338 = por %p336, %p337
      %p339 = scmp.ne.s32.totalorder %s331, %s334
      %p340 = scmp.eq.s32.totalorder %s22, 0
      %p341 = por %p339, %p340
      %p342 = scmp.ne.s32.totalorder %s331, %s334
      %p343 = scmp.eq.s32.totalorder %s27, 1
      %p344 = por %p342, %p343
      %p345 = scmp.ne.s32.totalorder %s334, %s335
      %p346 = scmp.eq.s32.totalorder %s27, 0
      %p347 = por %p345, %p346
      %p348 = scmp.ne.s32.totalorder %s334, %s335
      %p349 = scmp.eq.s32.totalorder %s28, 1
      %p350 = por %p348, %p349
      %p352 = scmp.ne.s32.totalorder %s335, %s351
      %p353 = scmp.eq.s32.totalorder %s28, 0
      %p354 = por %p352, %p353
      %p355 = scmp.le.s32.totalorder 1, %s22
      %p356 = scmp.lt.s32.totalorder %s22, 3
      %p357 = pnand %p355, %p356
      %p358 = pneg %p357
      // Predicated region
      $region9: #{_group_forward_packed.1} parent=5 // pred_check
        _
      $region10: #{_group_forward_packed.1} parent=5 // pred_check_branch
        %360 = sbr.rel (%p357) target = $region12
      $region11: #{_group_forward_packed.1} parent=5 // pred_region
        %s361 = ssub.s32 %s22, 1
        // Predicated region
        $region13: #{_group_forward_packed.1} parent=11 // pred_check
          %p362 = pneg %p69
        $region14: #{_group_forward_packed.1} parent=11 // pred_check_branch
          %364 = sbr.rel (%p362) target = $region16
        $region15: #{_group_forward_packed.1} parent=11 // pred_region
          %s366 = ssub.s32 24576, 24576
          %367 = vsyncadd [#allocation3], %s366
          %s368 = sshll.u32 [#allocation2], 4
          %s369 = int_to_ptr.vmem [resolvable:$true] %s368
          %374 = dma.hbm_to_vmem [thread:$0]  %s1, 24576, %s369, [#allocation3], 128, 128, 8
        $region16: #{_group_forward_packed.1} parent=11 // pred_fallthru
          _
        // Predicated region
        $region17: #{_group_forward_packed.1} parent=11 // pred_check
          %p375 = pneg %p90
        $region18: #{_group_forward_packed.1} parent=11 // pred_check_branch
          %377 = sbr.rel (%p375) target = $region20
        $region19: #{_group_forward_packed.1} parent=11 // pred_region
          _
        $region20: #{_group_forward_packed.1} parent=11 // pred_fallthru
          _
        // Predicated region
        $region21: #{_group_forward_packed.1} parent=11 // pred_check
          %p378 = pneg %p111
        $region22: #{_group_forward_packed.1} parent=11 // pred_check_branch
          %380 = sbr.rel (%p378) target = $region24
        $region23: #{_group_forward_packed.1} parent=11 // pred_region
          %s382 = ssub.s32 24576, 24576
          %383 = vsyncadd [#allocation5], %s382
          %s384 = sshll.u32 [#allocation4], 4
          %s385 = int_to_ptr.vmem [resolvable:$true] %s384
          %390 = dma.hbm_to_vmem [thread:$0]  %s3, 24576, %s385, [#allocation5], 128, 128, 8
        $region24: #{_group_forward_packed.1} parent=11 // pred_fallthru
          _
        // Predicated region
        $region25: #{_group_forward_packed.1} parent=11 // pred_check
          %p391 = pneg %p132
        $region26: #{_group_forward_packed.1} parent=11 // pred_check_branch
          %393 = sbr.rel (%p391) target = $region28
        $region27: #{_group_forward_packed.1} parent=11 // pred_region
          _
        $region28: #{_group_forward_packed.1} parent=11 // pred_fallthru
          _
        // Predicated region
        $region29: #{_group_forward_packed.1} parent=11 // pred_check
          %p394 = pneg %p153
        $region30: #{_group_forward_packed.1} parent=11 // pred_check_branch
          %396 = sbr.rel (%p394) target = $region32
        $region31: #{_group_forward_packed.1} parent=11 // pred_region
          _
        $region32: #{_group_forward_packed.1} parent=11 // pred_fallthru
          _
        // Predicated region
        $region33: #{_group_forward_packed.1} parent=11 // pred_check
          %p397 = pneg %p174
        $region34: #{_group_forward_packed.1} parent=11 // pred_check_branch
          %399 = sbr.rel (%p397) target = $region36
        $region35: #{_group_forward_packed.1} parent=11 // pred_region
          _
        $region36: #{_group_forward_packed.1} parent=11 // pred_fallthru
          _
        // Predicated region
        $region37: #{_group_forward_packed.1} parent=11 // pred_check
          %p400 = pneg %p195
        $region38: #{_group_forward_packed.1} parent=11 // pred_check_branch
          %402 = sbr.rel (%p400) target = $region40
        $region39: #{_group_forward_packed.1} parent=11 // pred_region
          _
        $region40: #{_group_forward_packed.1} parent=11 // pred_fallthru
          _
        // Predicated region
        $region41: #{_group_forward_packed.1} parent=11 // pred_check
          %p403 = pneg %p216
        $region42: #{_group_forward_packed.1} parent=11 // pred_check_branch
          %405 = sbr.rel (%p403) target = $region44
        $region43: #{_group_forward_packed.1} parent=11 // pred_region
          _
        $region44: #{_group_forward_packed.1} parent=11 // pred_fallthru
          _
        // Predicated region
        $region45: #{_group_forward_packed.1} parent=11 // pred_check
          %p406 = pneg %p237
        $region46: #{_group_forward_packed.1} parent=11 // pred_check_branch
          %408 = sbr.rel (%p406) target = $region48
        $region47: #{_group_forward_packed.1} parent=11 // pred_region
          _
        $region48: #{_group_forward_packed.1} parent=11 // pred_fallthru
          _
        // Predicated region
        $region49: #{_group_forward_packed.1} parent=11 // pred_check
          %p409 = pneg %p258
        $region50: #{_group_forward_packed.1} parent=11 // pred_check_branch
          %411 = sbr.rel (%p409) target = $region52
        $region51: #{_group_forward_packed.1} parent=11 // pred_region
          _
        $region52: #{_group_forward_packed.1} parent=11 // pred_fallthru
          _
        // Predicated region
        $region53: #{_group_forward_packed.1} parent=11 // pred_check
          %p412 = pneg %p279
        $region54: #{_group_forward_packed.1} parent=11 // pred_check_branch
          %414 = sbr.rel (%p412) target = $region56
        $region55: #{_group_forward_packed.1} parent=11 // pred_region
          _
        $region56: #{_group_forward_packed.1} parent=11 // pred_fallthru
          _
        // Predicated region
        $region57: #{_group_forward_packed.1} parent=11 // pred_check
          %p415 = pneg %p300
        $region58: #{_group_forward_packed.1} parent=11 // pred_check_branch
          %417 = sbr.rel (%p415) target = $region60
        $region59: #{_group_forward_packed.1} parent=11 // pred_region
          _
        $region60: #{_group_forward_packed.1} parent=11 // pred_fallthru
          _
        // Predicated region
        $region61: #{_group_forward_packed.1} parent=11 // pred_check
          %p418 = pneg %p321
        $region62: #{_group_forward_packed.1} parent=11 // pred_check_branch
          %420 = sbr.rel (%p418) target = $region64
        $region63: #{_group_forward_packed.1} parent=11 // pred_region
          _
        $region64: #{_group_forward_packed.1} parent=11 // pred_fallthru
          _
      $region12: #{_group_forward_packed.1} parent=5 // pred_fallthru
        _
      %p421 = scmp.lt.s32.totalorder %s22, 2
      // Predicated region
      $region65: #{_group_forward_packed.1} parent=5 // pred_check
        %p422 = pneg %p421
      $region66: #{_group_forward_packed.1} parent=5 // pred_check_branch
        %424 = sbr.rel (%p422) target = $region68
      $region67: #{_group_forward_packed.1} parent=5 // pred_region
        // Predicated region
        $region69: #{_group_forward_packed.1} parent=67 // pred_check
          %p425 = pneg %p42
        $region70: #{_group_forward_packed.1} parent=67 // pred_check_branch
          %427 = sbr.rel (%p425) target = $region72
        $region71: #{_group_forward_packed.1} parent=67 // pred_region
          %s428 = smul.u32 6, %s22
          %p429 = scmp.lt.s32.totalorder %s428, 11
          %s430 = scalar_select %p429, %s428, 11
          %s431 = smul.addr %s430, 2
          %s432 = smul.addr %s431, 8
          %s433 = scalar_lea.vmem %s0, %s432
          %s434 = smul.u32 6, %s22
        $region72: #{_group_forward_packed.1} parent=67 // pred_fallthru
          _
      $region68: #{_group_forward_packed.1} parent=5 // pred_fallthru
        _
      %p435 = scmp.le.s32.totalorder 1, %s22
      %p436 = scmp.lt.s32.totalorder %s22, 3
      %p437 = pnand %p435, %p436
      %p438 = pneg %p437
      // Predicated region
      $region73: #{_group_forward_packed.1} parent=5 // pred_check
        _
      $region74: #{_group_forward_packed.1} parent=5 // pred_check_branch
        %440 = sbr.rel (%p437) target = $region76
      $region75: #{_group_forward_packed.1} parent=5 // pred_region
        %s441 = ssub.s32 %s22, 1
        // Predicated region
        $region77: #{_group_forward_packed.1} parent=75 // pred_check
          %p442 = pneg %p69
        $region78: #{_group_forward_packed.1} parent=75 // pred_check_branch
          %444 = sbr.rel (%p442) target = $region80
        $region79: #{_group_forward_packed.1} parent=75 // pred_region
          %445 = dma.done [#allocation3], 24576
        $region80: #{_group_forward_packed.1} parent=75 // pred_fallthru
          _
        // Predicated region
        $region81: #{_group_forward_packed.1} parent=75 // pred_check
          %p446 = pneg %p111
        $region82: #{_group_forward_packed.1} parent=75 // pred_check_branch
          %448 = sbr.rel (%p446) target = $region84
        $region83: #{_group_forward_packed.1} parent=75 // pred_region
          %449 = dma.done [#allocation5], 24576
        $region84: #{_group_forward_packed.1} parent=75 // pred_fallthru
          _
        %s450 = smul.u32 6, %s27
        %p451 = scmp.lt.s32.totalorder %s450, 11
        %s452 = scalar_select %p451, %s450, 11
        %s453 = smul.addr %s452, 2
        %s454 = smul.addr %s453, 8
        %s455 = scalar_lea.vmem %s0, %s454
        %p456 = pneg %p48
        %p457 = pneg %p45
        %p458 = pneg %p69
        %p459 = pneg %p66
        %p460 = pneg %p90
        %p461 = pneg %p87
        %p462 = pneg %p111
        %p463 = pneg %p108
        %p464 = pneg %p132
        %p465 = pneg %p129
        %p466 = pneg %p153
        %p467 = pneg %p150
        %p468 = pneg %p174
        %p469 = pneg %p171
        %p470 = pneg %p195
        %p471 = pneg %p192
        %p472 = pneg %p216
        %p473 = pneg %p213
        %p474 = pneg %p237
        %p475 = pneg %p234
        %p476 = pneg %p258
        %p477 = pneg %p255
        %p478 = pneg %p279
        %p479 = pneg %p276
        %p480 = pneg %p300
        %p481 = pneg %p297
        %p482 = pneg %p321
        %p483 = pneg %p318
        %p484 = pneg %p347
        %p485 = pneg %p344
        %s486 = smul.u32 6, %s27
        %p487 = scmp.lt.s32.totalorder %s486, 11
        %s488 = scalar_select %p487, %s486, 11
        %s489 = smul.addr %s488, 2
        %s490 = smul.addr %s489, 8
        %s491 = scalar_lea.vmem %s14, %s490
        %s492 = smul.u32 6, %s27
        %p493 = scmp.lt.s32.totalorder %s492, 11
        %s494 = scalar_select %p493, %s492, 11
        %s495 = smul.addr %s494, 2
        %s496 = smul.addr %s495, 8
        %s497 = scalar_lea.vmem %s0, %s496
        %s498 = smul.u32 6, %s27
        %s499 = smul.u32 6, %s27
        %p500 = scmp.lt.s32.totalorder %s499, 11
        %s501 = scalar_select %p500, %s499, 11
        %s502 = smul.addr %s501, 2
        %s503 = smul.addr %s502, 8
        %s504 = scalar_lea.vmem %s14, %s503
        %s505 = smul.u32 6, %s27
        %v507 = vlaneseq
        %v508 = vshrl.u32 %v507, 7
        %v509 = vadd.s32 %v508, 8
        %v510 = vadd.s32 %v508, 16
        %v511 = vadd.s32 %v508, 24
        %v512 = vadd.s32 %v508, 32
        %v513 = vadd.s32 %v508, 40
        %vm514 = vcmp.lt.s32.totalorder %v508, 0
        %v515 = vsub.s32 0, %v508
        %v516 = vsel %vm514, %v515, %v508
        %v517 = vmul.u32.u64.compose %v516, 2863311531
        %v518 = vextract.low.u32 %v517
        %v519 = vextract.high.u32 %v517
        %v520 = vshrl.u32 %v519, 4
        %v521 = vmul.u32 %v520, 24
        %v522 = vsub.s32 %v516, %v521
        %v523 = vsub.s32 0, %v522
        %v524 = vsel %vm514, %v523, %v522
        %vm525 = vcmp.lt.s32.totalorder %v509, 0
        %v526 = vsub.s32 0, %v509
        %v527 = vsel %vm525, %v526, %v509
        %v528 = vmul.u32.u64.compose %v527, 2863311531
        %v529 = vextract.low.u32 %v528
        %v530 = vextract.high.u32 %v528
        %v531 = vshrl.u32 %v530, 4
        %v532 = vmul.u32 %v531, 24
        %v533 = vsub.s32 %v527, %v532
        %v534 = vsub.s32 0, %v533
        %v535 = vsel %vm525, %v534, %v533
        %vm536 = vcmp.lt.s32.totalorder %v510, 0
        %v537 = vsub.s32 0, %v510
        %v538 = vsel %vm536, %v537, %v510
        %v539 = vmul.u32.u64.compose %v538, 2863311531
        %v540 = vextract.low.u32 %v539
        %v541 = vextract.high.u32 %v539
        %v542 = vshrl.u32 %v541, 4
        %v543 = vmul.u32 %v542, 24
        %v544 = vsub.s32 %v538, %v543
        %v545 = vsub.s32 0, %v544
        %v546 = vsel %vm536, %v545, %v544
        %vm547 = vcmp.lt.s32.totalorder %v511, 0
        %v548 = vsub.s32 0, %v511
        %v549 = vsel %vm547, %v548, %v511
        %v550 = vmul.u32.u64.compose %v549, 2863311531
        %v551 = vextract.low.u32 %v550
        %v552 = vextract.high.u32 %v550
        %v553 = vshrl.u32 %v552, 4
        %v554 = vmul.u32 %v553, 24
        %v555 = vsub.s32 %v549, %v554
        %v556 = vsub.s32 0, %v555
        %v557 = vsel %vm547, %v556, %v555
        %vm558 = vcmp.lt.s32.totalorder %v512, 0
        %v559 = vsub.s32 0, %v512
        %v560 = vsel %vm558, %v559, %v512
        %v561 = vmul.u32.u64.compose %v560, 2863311531
        %v562 = vextract.low.u32 %v561
        %v563 = vextract.high.u32 %v561
        %v564 = vshrl.u32 %v563, 4
        %v565 = vmul.u32 %v564, 24
        %v566 = vsub.s32 %v560, %v565
        %v567 = vsub.s32 0, %v566
        %v568 = vsel %vm558, %v567, %v566
        %vm569 = vcmp.lt.s32.totalorder %v513, 0
        %v570 = vsub.s32 0, %v513
        %v571 = vsel %vm569, %v570, %v513
        %v572 = vmul.u32.u64.compose %v571, 2863311531
        %v573 = vextract.low.u32 %v572
        %v574 = vextract.high.u32 %v572
        %v575 = vshrl.u32 %v574, 4
        %v576 = vmul.u32 %v575, 24
        %v577 = vsub.s32 %v571, %v576
        %v578 = vsub.s32 0, %v577
        %v579 = vsel %vm569, %v578, %v577
        %vm580 = vcmp.ne.s32.totalorder %v524, 0
        %vm581 = vcmp.ne.s32.totalorder %v535, 0
        %vm582 = vcmp.ne.s32.totalorder %v546, 0
        %vm583 = vcmp.ne.s32.totalorder %v557, 0
        %vm584 = vcmp.ne.s32.totalorder %v568, 0
        %vm585 = vcmp.ne.s32.totalorder %v579, 0
        %vm586 = vcmp.lt.s32.totalorder %v524, 0
        %vm587 = vcmp.lt.s32.totalorder %v535, 0
        %vm588 = vcmp.lt.s32.totalorder %v546, 0
        %vm589 = vcmp.lt.s32.totalorder %v557, 0
        %vm590 = vcmp.lt.s32.totalorder %v568, 0
        %vm591 = vcmp.lt.s32.totalorder %v579, 0
        %vm592 = vmand %vm586, %vm580
        %vm593 = vmand %vm587, %vm581
        %vm594 = vmand %vm588, %vm582
        %vm595 = vmand %vm589, %vm583
        %vm596 = vmand %vm590, %vm584
        %vm597 = vmand %vm591, %vm585
        %v598 = vadd.s32 %v524, 24
        %v599 = vadd.s32 %v535, 24
        %v600 = vadd.s32 %v546, 24
        %v601 = vadd.s32 %v557, 24
        %v602 = vadd.s32 %v568, 24
        %v603 = vadd.s32 %v579, 24
        %v604 = vsel %vm592, %v598, %v524
        %v605 = vsel %vm593, %v599, %v535
        %v606 = vsel %vm594, %v600, %v546
        %v607 = vsel %vm595, %v601, %v557
        %v608 = vsel %vm596, %v602, %v568
        %v609 = vsel %vm597, %v603, %v579
        %vm610 = vcmp.ge.s32.totalorder %v604, 4
        %vm611 = vcmp.ge.s32.totalorder %v605, 4
        %vm612 = vcmp.ge.s32.totalorder %v606, 4
        %vm613 = vcmp.ge.s32.totalorder %v607, 4
        %vm614 = vcmp.ge.s32.totalorder %v608, 4
        %vm615 = vcmp.ge.s32.totalorder %v609, 4
        %vm616 = vcmp.lt.s32.totalorder %v604, 20
        %vm617 = vcmp.lt.s32.totalorder %v605, 20
        %vm618 = vcmp.lt.s32.totalorder %v606, 20
        %vm619 = vcmp.lt.s32.totalorder %v607, 20
        %vm620 = vcmp.lt.s32.totalorder %v608, 20
        %vm621 = vcmp.lt.s32.totalorder %v609, 20
        %vm622 = vmand %vm610, %vm616
        %vm623 = vmand %vm611, %vm617
        %vm624 = vmand %vm612, %vm618
        %vm625 = vmand %vm613, %vm619
        %vm626 = vmand %vm614, %vm620
        %vm627 = vmand %vm615, %vm621
        %v628 = vld [vmem:[%s497] sm:$0xff]
        %v629 = vld [vmem:[%s497 + $0x8] sm:$0xff]
        %v630 = vld [vmem:[%s497 + $0x10] sm:$0xff]
        %v631 = vld [vmem:[%s497 + $0x18] sm:$0xff]
        %v632 = vld [vmem:[%s497 + $0x20] sm:$0xff]
        %v633 = vld [vmem:[%s497 + $0x28] sm:$0xff]
        %v634 = vld [vmem:[%s497 + $0x30] sm:$0xff]
        %v635 = vld [vmem:[%s497 + $0x38] sm:$0xff]
        %v636 = vld [vmem:[%s497 + $0x40] sm:$0xff]
        %v637 = vld [vmem:[%s497 + $0x48] sm:$0xff]
        %v638 = vld [vmem:[%s497 + $0x50] sm:$0xff]
        %v639 = vld [vmem:[%s497 + $0x58] sm:$0xff]
        %v640 = vld [vmem:[%s2] sm:$0x3]
        %v643 = vrot.slane %v638, 7
        %v644 = vrot.slane %v639, 7
        %vm657 = vcmask 1040384
        %v658 = vrot.slane %v628, 7
        %v659 = vrot.slane %v629, 7
        %v660 = vrot.slane %v630, 7
        %v661 = vsel %vm657, %v658, %v660
        %v662 = vrot.slane %v631, 7
        %v663 = vsel %vm657, %v659, %v662
        %v664 = vrot.slane %v632, 7
        %v665 = vsel %vm657, %v660, %v664
        %v666 = vrot.slane %v633, 7
        %v667 = vsel %vm657, %v662, %v666
        %v668 = vrot.slane %v634, 7
        %v669 = vsel %vm657, %v664, %v668
        %v670 = vrot.slane %v635, 7
        %v671 = vsel %vm657, %v666, %v670
        %v672 = vrot.slane %v636, 7
        %v673 = vsel %vm657, %v668, %v672
        %v674 = vrot.slane %v637, 7
        %v675 = vsel %vm657, %v670, %v674
        %v676 = vsel %vm657, %v672, %v643
        %v677 = vsel %vm657, %v674, %v644
        %v690 = vsel %vm657, %v643, %v658
        %v691 = vsel %vm657, %v644, %v659
        %v692 = vpack.c.bf16 %v661, %v690
        %v693 = vpack.c.bf16 %v663, %v691
        %v694 = vpack.c.bf16 %v669, %v665
        %v695 = vpack.c.bf16 %v671, %v667
        %v696 = vpack.c.bf16 %v676, %v673
        %v697 = vpack.c.bf16 %v677, %v675
        %v698 = vld [vmem:[#allocation2] sm:$0xff]
        %v699 = vld [vmem:[#allocation2 + $0x8] sm:$0xff]
        %v700 = vld [vmem:[#allocation2 + $0x10] sm:$0xff]
        %v701 = vld [vmem:[#allocation2 + $0x18] sm:$0xff]
        %v702 = vld [vmem:[#allocation2 + $0x20] sm:$0xff]
        %v703 = vld [vmem:[#allocation2 + $0x28] sm:$0xff]
        %v704 = vld [vmem:[#allocation2 + $0x30] sm:$0xff]
        %v705 = vld [vmem:[#allocation2 + $0x38] sm:$0xff]
        %v706 = vld [vmem:[#allocation2 + $0x40] sm:$0xff]
        %v707 = vld [vmem:[#allocation2 + $0x48] sm:$0xff]
        %v708 = vld [vmem:[#allocation2 + $0x50] sm:$0xff]
        %v709 = vld [vmem:[#allocation2 + $0x58] sm:$0xff]
        %v710 = vld [vmem:[#allocation2 + $0x60] sm:$0xff]
        %v711 = vld [vmem:[#allocation2 + $0x68] sm:$0xff]
        %v712 = vld [vmem:[#allocation2 + $0x70] sm:$0xff]
        %v713 = vld [vmem:[#allocation2 + $0x78] sm:$0xff]
        %v714 = vld [vmem:[#allocation2 + $0x80] sm:$0xff]
        %v715 = vld [vmem:[#allocation2 + $0x88] sm:$0xff]
        %v716 = vld [vmem:[#allocation2 + $0x90] sm:$0xff]
        %v717 = vld [vmem:[#allocation2 + $0x98] sm:$0xff]
        %v718 = vld [vmem:[#allocation2 + $0xa0] sm:$0xff]
        %v719 = vld [vmem:[#allocation2 + $0xa8] sm:$0xff]
        %v720 = vld [vmem:[#allocation2 + $0xb0] sm:$0xff]
        %v721 = vld [vmem:[#allocation2 + $0xb8] sm:$0xff]
        %v722 = vld [vmem:[#allocation2 + $0xc0] sm:$0xff]
        %v723 = vld [vmem:[#allocation2 + $0xc8] sm:$0xff]
        %v724 = vld [vmem:[#allocation2 + $0xd0] sm:$0xff]
        %v725 = vld [vmem:[#allocation2 + $0xd8] sm:$0xff]
        %v726 = vld [vmem:[#allocation2 + $0xe0] sm:$0xff]
        %v727 = vld [vmem:[#allocation2 + $0xe8] sm:$0xff]
        %v728 = vld [vmem:[#allocation2 + $0xf0] sm:$0xff]
        %v729 = vld [vmem:[#allocation2 + $0xf8] sm:$0xff]
        %v730 = vpack.c.bf16 %v630, %v628
        %v731 = vpack.c.bf16 %v631, %v629
        %v732 = vpack.c.bf16 %v634, %v632
        %v733 = vpack.c.bf16 %v635, %v633
        %v734 = vpack.c.bf16 %v638, %v636
        %v735 = vpack.c.bf16 %v639, %v637
        %s736 = scalar_lea.vmem [#allocation2], 256
        %v737 = vld [vmem:[%s736] sm:$0xff]
        %v738 = vld [vmem:[%s736 + $0x8] sm:$0xff]
        %v739 = vld [vmem:[%s736 + $0x10] sm:$0xff]
        %v740 = vld [vmem:[%s736 + $0x18] sm:$0xff]
        %v741 = vld [vmem:[%s736 + $0x20] sm:$0xff]
        %v742 = vld [vmem:[%s736 + $0x28] sm:$0xff]
        %v743 = vld [vmem:[%s736 + $0x30] sm:$0xff]
        %v744 = vld [vmem:[%s736 + $0x38] sm:$0xff]
        %v745 = vld [vmem:[%s736 + $0x40] sm:$0xff]
        %v746 = vld [vmem:[%s736 + $0x48] sm:$0xff]
        %v747 = vld [vmem:[%s736 + $0x50] sm:$0xff]
        %v748 = vld [vmem:[%s736 + $0x58] sm:$0xff]
        %v749 = vld [vmem:[%s736 + $0x60] sm:$0xff]
        %v750 = vld [vmem:[%s736 + $0x68] sm:$0xff]
        %v751 = vld [vmem:[%s736 + $0x70] sm:$0xff]
        %v752 = vld [vmem:[%s736 + $0x78] sm:$0xff]
        %v753 = vld [vmem:[%s736 + $0x80] sm:$0xff]
        %v754 = vld [vmem:[%s736 + $0x88] sm:$0xff]
        %v755 = vld [vmem:[%s736 + $0x90] sm:$0xff]
        %v756 = vld [vmem:[%s736 + $0x98] sm:$0xff]
        %v757 = vld [vmem:[%s736 + $0xa0] sm:$0xff]
        %v758 = vld [vmem:[%s736 + $0xa8] sm:$0xff]
        %v759 = vld [vmem:[%s736 + $0xb0] sm:$0xff]
        %v760 = vld [vmem:[%s736 + $0xb8] sm:$0xff]
        %v761 = vld [vmem:[%s736 + $0xc0] sm:$0xff]
        %v762 = vld [vmem:[%s736 + $0xc8] sm:$0xff]
        %v763 = vld [vmem:[%s736 + $0xd0] sm:$0xff]
        %v764 = vld [vmem:[%s736 + $0xd8] sm:$0xff]
        %v765 = vld [vmem:[%s736 + $0xe0] sm:$0xff]
        %v766 = vld [vmem:[%s736 + $0xe8] sm:$0xff]
        %v767 = vld [vmem:[%s736 + $0xf0] sm:$0xff]
        %v768 = vld [vmem:[%s736 + $0xf8] sm:$0xff]
        %v801 = vunpack.c.l.b16 %v737
        %v802 = vunpack.c.h.b16 %v737
        %v803 = vunpack.c.l.b16 %v738
        %v804 = vunpack.c.h.b16 %v738
        %v805 = vunpack.c.l.b16 %v739
        %v806 = vunpack.c.h.b16 %v739
        %v807 = vunpack.c.l.b16 %v740
        %v808 = vunpack.c.h.b16 %v740
        %v809 = vunpack.c.l.b16 %v741
        %v810 = vunpack.c.h.b16 %v741
        %v811 = vunpack.c.l.b16 %v742
        %v812 = vunpack.c.h.b16 %v742
        %v813 = vunpack.c.l.b16 %v743
        %v814 = vunpack.c.h.b16 %v743
        %v815 = vunpack.c.l.b16 %v744
        %v816 = vunpack.c.h.b16 %v744
        %v817 = vunpack.c.l.b16 %v745
        %v818 = vunpack.c.h.b16 %v745
        %v819 = vunpack.c.l.b16 %v746
        %v820 = vunpack.c.h.b16 %v746
        %v821 = vunpack.c.l.b16 %v747
        %v822 = vunpack.c.h.b16 %v747
        %v823 = vunpack.c.l.b16 %v748
        %v824 = vunpack.c.h.b16 %v748
        %v825 = vunpack.c.l.b16 %v749
        %v826 = vunpack.c.h.b16 %v749
        %v827 = vunpack.c.l.b16 %v750
        %v828 = vunpack.c.h.b16 %v750
        %v829 = vunpack.c.l.b16 %v751
        %v830 = vunpack.c.h.b16 %v751
        %v831 = vunpack.c.l.b16 %v752
        %v832 = vunpack.c.h.b16 %v752
        %v833 = vunpack.c.l.b16 %v753
        %v834 = vunpack.c.h.b16 %v753
        %v835 = vunpack.c.l.b16 %v754
        %v836 = vunpack.c.h.b16 %v754
        %v837 = vunpack.c.l.b16 %v755
        %v838 = vunpack.c.h.b16 %v755
        %v839 = vunpack.c.l.b16 %v756
        %v840 = vunpack.c.h.b16 %v756
        %v841 = vunpack.c.l.b16 %v757
        %v842 = vunpack.c.h.b16 %v757
        %v843 = vunpack.c.l.b16 %v758
        %v844 = vunpack.c.h.b16 %v758
        %v845 = vunpack.c.l.b16 %v759
        %v846 = vunpack.c.h.b16 %v759
        %v847 = vunpack.c.l.b16 %v760
        %v848 = vunpack.c.h.b16 %v760
        %v849 = vunpack.c.l.b16 %v761
        %v850 = vunpack.c.h.b16 %v761
        %v851 = vunpack.c.l.b16 %v762
        %v852 = vunpack.c.h.b16 %v762
        %v853 = vunpack.c.l.b16 %v763
        %v854 = vunpack.c.h.b16 %v763
        %v855 = vunpack.c.l.b16 %v764
        %v856 = vunpack.c.h.b16 %v764
        %v857 = vunpack.c.l.b16 %v765
        %v858 = vunpack.c.h.b16 %v765
        %v859 = vunpack.c.l.b16 %v766
        %v860 = vunpack.c.h.b16 %v766
        %v861 = vunpack.c.l.b16 %v767
        %v862 = vunpack.c.h.b16 %v767
        %v863 = vunpack.c.l.b16 %v768
        %v864 = vunpack.c.h.b16 %v768
        %v865 = vpack.c.b16 %v803, %v801
        %v866 = vpack.c.b16 %v804, %v802
        %v867 = vpack.c.b16 %v807, %v805
        %v868 = vpack.c.b16 %v808, %v806
        %v869 = vpack.c.b16 %v811, %v809
        %v870 = vpack.c.b16 %v812, %v810
        %v871 = vpack.c.b16 %v815, %v813
        %v872 = vpack.c.b16 %v816, %v814
        %v873 = vpack.c.b16 %v819, %v817
        %v874 = vpack.c.b16 %v820, %v818
        %v875 = vpack.c.b16 %v823, %v821
        %v876 = vpack.c.b16 %v824, %v822
        %v877 = vpack.c.b16 %v827, %v825
        %v878 = vpack.c.b16 %v828, %v826
        %v879 = vpack.c.b16 %v831, %v829
        %v880 = vpack.c.b16 %v832, %v830
        %v881 = vpack.c.b16 %v835, %v833
        %v882 = vpack.c.b16 %v836, %v834
        %v883 = vpack.c.b16 %v839, %v837
        %v884 = vpack.c.b16 %v840, %v838
        %v885 = vpack.c.b16 %v843, %v841
        %v886 = vpack.c.b16 %v844, %v842
        %v887 = vpack.c.b16 %v847, %v845
        %v888 = vpack.c.b16 %v848, %v846
        %v889 = vpack.c.b16 %v851, %v849
        %v890 = vpack.c.b16 %v852, %v850
        %v891 = vpack.c.b16 %v855, %v853
        %v892 = vpack.c.b16 %v856, %v854
        %v893 = vpack.c.b16 %v859, %v857
        %v894 = vpack.c.b16 %v860, %v858
        %v895 = vpack.c.b16 %v863, %v861
        %v896 = vpack.c.b16 %v864, %v862
        %929 = vmatprep.subr.bf16.mxu0 %v866
        %930 = vmatpush1.bf16.msra.mxu0 %v865
        %931 = vmatprep.subr.bf16.mxu0 %v868
        %932 = vmatpush1.bf16.msra.mxu0 %v867
        %933 = vmatprep.subr.bf16.mxu0 %v870
        %934 = vmatpush1.bf16.msra.mxu0 %v869
        %935 = vmatprep.subr.bf16.mxu0 %v872
        %936 = vmatpush1.bf16.msra.mxu0 %v871
        %937 = vmatprep.subr.bf16.mxu0 %v874
        %938 = vmatpush1.bf16.msra.mxu0 %v873
        %939 = vmatprep.subr.bf16.mxu0 %v876
        %940 = vmatpush1.bf16.msra.mxu0 %v875
        %941 = vmatprep.subr.bf16.mxu0 %v878
        %942 = vmatpush1.bf16.msra.mxu0 %v877
        %943 = vmatprep.subr.bf16.mxu0 %v880
        %944 = vmatpush1.bf16.msra.mxu0 %v879
        %945 = vmatprep.subr.bf16.mxu0 %v882
        %946 = vmatpush1.bf16.msra.mxu0 %v881
        %947 = vmatprep.subr.bf16.mxu0 %v884
        %948 = vmatpush1.bf16.msra.mxu0 %v883
        %949 = vmatprep.subr.bf16.mxu0 %v886
        %950 = vmatpush1.bf16.msra.mxu0 %v885
        %951 = vmatprep.subr.bf16.mxu0 %v888
        %952 = vmatpush1.bf16.msra.mxu0 %v887
        %953 = vmatprep.subr.bf16.mxu0 %v890
        %954 = vmatpush1.bf16.msra.mxu0 %v889
        %955 = vmatprep.subr.bf16.mxu0 %v892
        %956 = vmatpush1.bf16.msra.mxu0 %v891
        %957 = vmatprep.subr.bf16.mxu0 %v894
        %958 = vmatpush1.bf16.msra.mxu0 %v893
        %959 = vmatprep.subr.bf16.mxu0 %v896
        %960 = vmatpush1.bf16.msra.mxu0 %v895
        %961 = vmatprep.mubr.bf16.mxu0 %v731
        %962 = vmatmul.mubr.bf16.gmra.mrb[0].mxu0 %v730
        %v963 = vpop.f32.mrb[0].mxu0
        %v964 = vadd.f32 0.0, %v963
        %v965 = vpop.f32.mrb[0].mxu0
        %v966 = vadd.f32 0.0, %v965
        %v967 = vpop.f32.mrb[0].mxu0
        %v968 = vadd.f32 0.0, %v967
        %v969 = vpop.f32.mrb[0].mxu0
        %v970 = vadd.f32 0.0, %v969
        %971 = vmatprep.mubr.bf16.mxu0 %v733
        %972 = vmatmul.mubr.bf16.gmra.mrb[0].mxu0 %v732
        %v973 = vpop.f32.mrb[0].mxu0
        %v974 = vadd.f32 0.0, %v973
        %v975 = vpop.f32.mrb[0].mxu0
        %v976 = vadd.f32 0.0, %v975
        %v977 = vpop.f32.mrb[0].mxu0
        %v978 = vadd.f32 0.0, %v977
        %v979 = vpop.f32.mrb[0].mxu0
        %v980 = vadd.f32 0.0, %v979
        %981 = vmatprep.mubr.bf16.mxu0 %v735
        %982 = vmatmul.mubr.bf16.gmra.mrb[0].mxu0 %v734
        %v983 = vpop.f32.mrb[0].mxu0
        %v984 = vadd.f32 0.0, %v983
        %v985 = vpop.f32.mrb[0].mxu0
        %v986 = vadd.f32 0.0, %v985
        %v987 = vpop.f32.mrb[0].mxu0
        %v988 = vadd.f32 0.0, %v987
        %v989 = vpop.f32.mrb[0].mxu0
        %v990 = vadd.f32 0.0, %v989
        %991 = vdwg.mxu0
        %v1024 = vunpack.c.l.b16 %v698
        %v1025 = vunpack.c.h.b16 %v698
        %v1026 = vunpack.c.l.b16 %v699
        %v1027 = vunpack.c.h.b16 %v699
        %v1028 = vunpack.c.l.b16 %v700
        %v1029 = vunpack.c.h.b16 %v700
        %v1030 = vunpack.c.l.b16 %v701
        %v1031 = vunpack.c.h.b16 %v701
        %v1032 = vunpack.c.l.b16 %v702
        %v1033 = vunpack.c.h.b16 %v702
        %v1034 = vunpack.c.l.b16 %v703
        %v1035 = vunpack.c.h.b16 %v703
        %v1036 = vunpack.c.l.b16 %v704
        %v1037 = vunpack.c.h.b16 %v704
        %v1038 = vunpack.c.l.b16 %v705
        %v1039 = vunpack.c.h.b16 %v705
        %v1040 = vunpack.c.l.b16 %v706
        %v1041 = vunpack.c.h.b16 %v706
        %v1042 = vunpack.c.l.b16 %v707
        %v1043 = vunpack.c.h.b16 %v707
        %v1044 = vunpack.c.l.b16 %v708
        %v1045 = vunpack.c.h.b16 %v708
        %v1046 = vunpack.c.l.b16 %v709
        %v1047 = vunpack.c.h.b16 %v709
        %v1048 = vunpack.c.l.b16 %v710
        %v1049 = vunpack.c.h.b16 %v710
        %v1050 = vunpack.c.l.b16 %v711
        %v1051 = vunpack.c.h.b16 %v711
        %v1052 = vunpack.c.l.b16 %v712
        %v1053 = vunpack.c.h.b16 %v712
        %v1054 = vunpack.c.l.b16 %v713
        %v1055 = vunpack.c.h.b16 %v713
        %v1056 = vunpack.c.l.b16 %v714
        %v1057 = vunpack.c.h.b16 %v714
        %v1058 = vunpack.c.l.b16 %v715
        %v1059 = vunpack.c.h.b16 %v715
        %v1060 = vunpack.c.l.b16 %v716
        %v1061 = vunpack.c.h.b16 %v716
        %v1062 = vunpack.c.l.b16 %v717
        %v1063 = vunpack.c.h.b16 %v717
        %v1064 = vunpack.c.l.b16 %v718
        %v1065 = vunpack.c.h.b16 %v718
        %v1066 = vunpack.c.l.b16 %v719
        %v1067 = vunpack.c.h.b16 %v719
        %v1068 = vunpack.c.l.b16 %v720
        %v1069 = vunpack.c.h.b16 %v720
        %v1070 = vunpack.c.l.b16 %v721
        %v1071 = vunpack.c.h.b16 %v721
        %v1072 = vunpack.c.l.b16 %v722
        %v1073 = vunpack.c.h.b16 %v722
        %v1074 = vunpack.c.l.b16 %v723
        %v1075 = vunpack.c.h.b16 %v723
        %v1076 = vunpack.c.l.b16 %v724
        %v1077 = vunpack.c.h.b16 %v724
        %v1078 = vunpack.c.l.b16 %v725
        %v1079 = vunpack.c.h.b16 %v725
        %v1080 = vunpack.c.l.b16 %v726
        %v1081 = vunpack.c.h.b16 %v726
        %v1082 = vunpack.c.l.b16 %v727
        %v1083 = vunpack.c.h.b16 %v727
        %v1084 = vunpack.c.l.b16 %v728
        %v1085 = vunpack.c.h.b16 %v728
        %v1086 = vunpack.c.l.b16 %v729
        %v1087 = vunpack.c.h.b16 %v729
        %v1088 = vpack.c.b16 %v1026, %v1024
        %v1089 = vpack.c.b16 %v1027, %v1025
        %v1090 = vpack.c.b16 %v1030, %v1028
        %v1091 = vpack.c.b16 %v1031, %v1029
        %v1092 = vpack.c.b16 %v1034, %v1032
        %v1093 = vpack.c.b16 %v1035, %v1033
        %v1094 = vpack.c.b16 %v1038, %v1036
        %v1095 = vpack.c.b16 %v1039, %v1037
        %v1096 = vpack.c.b16 %v1042, %v1040
        %v1097 = vpack.c.b16 %v1043, %v1041
        %v1098 = vpack.c.b16 %v1046, %v1044
        %v1099 = vpack.c.b16 %v1047, %v1045
        %v1100 = vpack.c.b16 %v1050, %v1048
        %v1101 = vpack.c.b16 %v1051, %v1049
        %v1102 = vpack.c.b16 %v1054, %v1052
        %v1103 = vpack.c.b16 %v1055, %v1053
        %v1104 = vpack.c.b16 %v1058, %v1056
        %v1105 = vpack.c.b16 %v1059, %v1057
        %v1106 = vpack.c.b16 %v1062, %v1060
        %v1107 = vpack.c.b16 %v1063, %v1061
        %v1108 = vpack.c.b16 %v1066, %v1064
        %v1109 = vpack.c.b16 %v1067, %v1065
        %v1110 = vpack.c.b16 %v1070, %v1068
        %v1111 = vpack.c.b16 %v1071, %v1069
        %v1112 = vpack.c.b16 %v1074, %v1072
        %v1113 = vpack.c.b16 %v1075, %v1073
        %v1114 = vpack.c.b16 %v1078, %v1076
        %v1115 = vpack.c.b16 %v1079, %v1077
        %v1116 = vpack.c.b16 %v1082, %v1080
        %v1117 = vpack.c.b16 %v1083, %v1081
        %v1118 = vpack.c.b16 %v1086, %v1084
        %v1119 = vpack.c.b16 %v1087, %v1085
        %1152 = vmatprep.subr.bf16.mxu0 %v1089
        %1153 = vmatpush1.bf16.msra.mxu0 %v1088
        %1154 = vmatprep.subr.bf16.mxu0 %v1091
        %1155 = vmatpush1.bf16.msra.mxu0 %v1090
        %1156 = vmatprep.subr.bf16.mxu0 %v1093
        %1157 = vmatpush1.bf16.msra.mxu0 %v1092
        %1158 = vmatprep.subr.bf16.mxu0 %v1095
        %1159 = vmatpush1.bf16.msra.mxu0 %v1094
        %1160 = vmatprep.subr.bf16.mxu0 %v1097
        %1161 = vmatpush1.bf16.msra.mxu0 %v1096
        %1162 = vmatprep.subr.bf16.mxu0 %v1099
        %1163 = vmatpush1.bf16.msra.mxu0 %v1098
        %1164 = vmatprep.subr.bf16.mxu0 %v1101
        %1165 = vmatpush1.bf16.msra.mxu0 %v1100
        %1166 = vmatprep.subr.bf16.mxu0 %v1103
        %1167 = vmatpush1.bf16.msra.mxu0 %v1102
        %1168 = vmatprep.subr.bf16.mxu0 %v1105
        %1169 = vmatpush1.bf16.msra.mxu0 %v1104
        %1170 = vmatprep.subr.bf16.mxu0 %v1107
        %1171 = vmatpush1.bf16.msra.mxu0 %v1106
        %1172 = vmatprep.subr.bf16.mxu0 %v1109
        %1173 = vmatpush1.bf16.msra.mxu0 %v1108
        %1174 = vmatprep.subr.bf16.mxu0 %v1111
        %1175 = vmatpush1.bf16.msra.mxu0 %v1110
        %1176 = vmatprep.subr.bf16.mxu0 %v1113
        %1177 = vmatpush1.bf16.msra.mxu0 %v1112
        %1178 = vmatprep.subr.bf16.mxu0 %v1115
        %1179 = vmatpush1.bf16.msra.mxu0 %v1114
        %1180 = vmatprep.subr.bf16.mxu0 %v1117
        %1181 = vmatpush1.bf16.msra.mxu0 %v1116
        %1182 = vmatprep.subr.bf16.mxu0 %v1119
        %1183 = vmatpush1.bf16.msra.mxu0 %v1118
        %1184 = vmatprep.mubr.bf16.mxu0 %v693
        %1185 = vmatmul.mubr.bf16.gmra.mrb[0].mxu0 %v692
        %v1186 = vpop.f32.mrb[0].mxu0
        %v1187 = vadd.f32 %v964, %v1186
        %v1188 = vpop.f32.mrb[0].mxu0
        %v1189 = vadd.f32 %v966, %v1188
        %v1190 = vpop.f32.mrb[0].mxu0
        %v1191 = vadd.f32 %v968, %v1190
        %v1192 = vpop.f32.mrb[0].mxu0
        %v1193 = vadd.f32 %v970, %v1192
        %1194 = vmatprep.mubr.bf16.mxu0 %v695
        %1195 = vmatmul.mubr.bf16.gmra.mrb[0].mxu0 %v694
        %v1196 = vpop.f32.mrb[0].mxu0
        %v1197 = vadd.f32 %v974, %v1196
        %v1198 = vpop.f32.mrb[0].mxu0
        %v1199 = vadd.f32 %v976, %v1198
        %v1200 = vpop.f32.mrb[0].mxu0
        %v1201 = vadd.f32 %v978, %v1200
        %v1202 = vpop.f32.mrb[0].mxu0
        %v1203 = vadd.f32 %v980, %v1202
        %1204 = vmatprep.mubr.bf16.mxu0 %v697
        %1205 = vmatmul.mubr.bf16.gmra.mrb[0].mxu0 %v696
        %v1206 = vpop.f32.mrb[0].mxu0
        %v1207 = vadd.f32 %v984, %v1206
        %v1208 = vpop.f32.mrb[0].mxu0
        %v1209 = vadd.f32 %v986, %v1208
        %v1210 = vpop.f32.mrb[0].mxu0
        %v1211 = vadd.f32 %v988, %v1210
        %v1212 = vpop.f32.mrb[0].mxu0
        %v1213 = vadd.f32 %v990, %v1212
        %1214 = vdwg.mxu0
        %vm1215 = vcmask 1046528
        %v1216 = vrot.slane %v628, 1
        %v1217 = vrot.slane %v630, 1
        %v1218 = vsel %vm1215, %v1216, %v1217
        %v1219 = vrot.slane %v629, 1
        %v1220 = vrot.slane %v631, 1
        %v1221 = vsel %vm1215, %v1219, %v1220
        %v1222 = vrot.slane %v632, 1
        %v1223 = vsel %vm1215, %v1217, %v1222
        %v1224 = vrot.slane %v633, 1
        %v1225 = vsel %vm1215, %v1220, %v1224
        %v1226 = vrot.slane %v634, 1
        %v1227 = vsel %vm1215, %v1222, %v1226
        %v1228 = vrot.slane %v635, 1
        %v1229 = vsel %vm1215, %v1224, %v1228
        %v1230 = vrot.slane %v636, 1
        %v1231 = vsel %vm1215, %v1226, %v1230
        %v1232 = vrot.slane %v637, 1
        %v1233 = vsel %vm1215, %v1228, %v1232
        %v1234 = vrot.slane %v638, 1
        %v1235 = vsel %vm1215, %v1230, %v1234
        %v1236 = vrot.slane %v639, 1
        %v1237 = vsel %vm1215, %v1232, %v1236
        %v1252 = vsel %vm1215, %v1234, %v1216
        %v1253 = vsel %vm1215, %v1236, %v1219
        %v1254 = vpack.c.bf16 %v1223, %v1218
        %v1255 = vpack.c.bf16 %v1225, %v1221
        %v1256 = vpack.c.bf16 %v1231, %v1227
        %v1257 = vpack.c.bf16 %v1233, %v1229
        %v1258 = vpack.c.bf16 %v1252, %v1235
        %v1259 = vpack.c.bf16 %v1253, %v1237
        %s1260 = scalar_lea.vmem [#allocation2], 512
        %v1261 = vld [vmem:[%s1260] sm:$0xff]
        %v1262 = vld [vmem:[%s1260 + $0x8] sm:$0xff]
        %v1263 = vld [vmem:[%s1260 + $0x10] sm:$0xff]
        %v1264 = vld [vmem:[%s1260 + $0x18] sm:$0xff]
        %v1265 = vld [vmem:[%s1260 + $0x20] sm:$0xff]
        %v1266 = vld [vmem:[%s1260 + $0x28] sm:$0xff]
        %v1267 = vld [vmem:[%s1260 + $0x30] sm:$0xff]
        %v1268 = vld [vmem:[%s1260 + $0x38] sm:$0xff]
        %v1269 = vld [vmem:[%s1260 + $0x40] sm:$0xff]
        %v1270 = vld [vmem:[%s1260 + $0x48] sm:$0xff]
        %v1271 = vld [vmem:[%s1260 + $0x50] sm:$0xff]
        %v1272 = vld [vmem:[%s1260 + $0x58] sm:$0xff]
        %v1273 = vld [vmem:[%s1260 + $0x60] sm:$0xff]
        %v1274 = vld [vmem:[%s1260 + $0x68] sm:$0xff]
        %v1275 = vld [vmem:[%s1260 + $0x70] sm:$0xff]
        %v1276 = vld [vmem:[%s1260 + $0x78] sm:$0xff]
        %v1277 = vld [vmem:[%s1260 + $0x80] sm:$0xff]
        %v1278 = vld [vmem:[%s1260 + $0x88] sm:$0xff]
        %v1279 = vld [vmem:[%s1260 + $0x90] sm:$0xff]
        %v1280 = vld [vmem:[%s1260 + $0x98] sm:$0xff]
        %v1281 = vld [vmem:[%s1260 + $0xa0] sm:$0xff]
        %v1282 = vld [vmem:[%s1260 + $0xa8] sm:$0xff]
        %v1283 = vld [vmem:[%s1260 + $0xb0] sm:$0xff]
        %v1284 = vld [vmem:[%s1260 + $0xb8] sm:$0xff]
        %v1285 = vld [vmem:[%s1260 + $0xc0] sm:$0xff]
        %v1286 = vld [vmem:[%s1260 + $0xc8] sm:$0xff]
        %v1287 = vld [vmem:[%s1260 + $0xd0] sm:$0xff]
        %v1288 = vld [vmem:[%s1260 + $0xd8] sm:$0xff]
        %v1289 = vld [vmem:[%s1260 + $0xe0] sm:$0xff]
        %v1290 = vld [vmem:[%s1260 + $0xe8] sm:$0xff]
        %v1291 = vld [vmem:[%s1260 + $0xf0] sm:$0xff]
        %v1292 = vld [vmem:[%s1260 + $0xf8] sm:$0xff]
        %v1325 = vunpack.c.l.b16 %v1261
        %v1326 = vunpack.c.h.b16 %v1261
        %v1327 = vunpack.c.l.b16 %v1262
        %v1328 = vunpack.c.h.b16 %v1262
        %v1329 = vunpack.c.l.b16 %v1263
        %v1330 = vunpack.c.h.b16 %v1263
        %v1331 = vunpack.c.l.b16 %v1264
        %v1332 = vunpack.c.h.b16 %v1264
        %v1333 = vunpack.c.l.b16 %v1265
        %v1334 = vunpack.c.h.b16 %v1265
        %v1335 = vunpack.c.l.b16 %v1266
        %v1336 = vunpack.c.h.b16 %v1266
        %v1337 = vunpack.c.l.b16 %v1267
        %v1338 = vunpack.c.h.b16 %v1267
        %v1339 = vunpack.c.l.b16 %v1268
        %v1340 = vunpack.c.h.b16 %v1268
        %v1341 = vunpack.c.l.b16 %v1269
        %v1342 = vunpack.c.h.b16 %v1269
        %v1343 = vunpack.c.l.b16 %v1270
        %v1344 = vunpack.c.h.b16 %v1270
        %v1345 = vunpack.c.l.b16 %v1271
        %v1346 = vunpack.c.h.b16 %v1271
        %v1347 = vunpack.c.l.b16 %v1272
        %v1348 = vunpack.c.h.b16 %v1272
        %v1349 = vunpack.c.l.b16 %v1273
        %v1350 = vunpack.c.h.b16 %v1273
        %v1351 = vunpack.c.l.b16 %v1274
        %v1352 = vunpack.c.h.b16 %v1274
        %v1353 = vunpack.c.l.b16 %v1275
        %v1354 = vunpack.c.h.b16 %v1275
        %v1355 = vunpack.c.l.b16 %v1276
        %v1356 = vunpack.c.h.b16 %v1276
        %v1357 = vunpack.c.l.b16 %v1277
        %v1358 = vunpack.c.h.b16 %v1277
        %v1359 = vunpack.c.l.b16 %v1278
        %v1360 = vunpack.c.h.b16 %v1278
        %v1361 = vunpack.c.l.b16 %v1279
        %v1362 = vunpack.c.h.b16 %v1279
        %v1363 = vunpack.c.l.b16 %v1280
        %v1364 = vunpack.c.h.b16 %v1280
        %v1365 = vunpack.c.l.b16 %v1281
        %v1366 = vunpack.c.h.b16 %v1281
        %v1367 = vunpack.c.l.b16 %v1282
        %v1368 = vunpack.c.h.b16 %v1282
        %v1369 = vunpack.c.l.b16 %v1283
        %v1370 = vunpack.c.h.b16 %v1283
        %v1371 = vunpack.c.l.b16 %v1284
        %v1372 = vunpack.c.h.b16 %v1284
        %v1373 = vunpack.c.l.b16 %v1285
        %v1374 = vunpack.c.h.b16 %v1285
        %v1375 = vunpack.c.l.b16 %v1286
        %v1376 = vunpack.c.h.b16 %v1286
        %v1377 = vunpack.c.l.b16 %v1287
        %v1378 = vunpack.c.h.b16 %v1287
        %v1379 = vunpack.c.l.b16 %v1288
        %v1380 = vunpack.c.h.b16 %v1288
        %v1381 = vunpack.c.l.b16 %v1289
        %v1382 = vunpack.c.h.b16 %v1289
        %v1383 = vunpack.c.l.b16 %v1290
        %v1384 = vunpack.c.h.b16 %v1290
        %v1385 = vunpack.c.l.b16 %v1291
        %v1386 = vunpack.c.h.b16 %v1291
        %v1387 = vunpack.c.l.b16 %v1292
        %v1388 = vunpack.c.h.b16 %v1292
        %v1389 = vpack.c.b16 %v1327, %v1325
        %v1390 = vpack.c.b16 %v1328, %v1326
        %v1391 = vpack.c.b16 %v1331, %v1329
        %v1392 = vpack.c.b16 %v1332, %v1330
        %v1393 = vpack.c.b16 %v1335, %v1333
        %v1394 = vpack.c.b16 %v1336, %v1334
        %v1395 = vpack.c.b16 %v1339, %v1337
        %v1396 = vpack.c.b16 %v1340, %v1338
        %v1397 = vpack.c.b16 %v1343, %v1341
        %v1398 = vpack.c.b16 %v1344, %v1342
        %v1399 = vpack.c.b16 %v1347, %v1345
        %v1400 = vpack.c.b16 %v1348, %v1346
        %v1401 = vpack.c.b16 %v1351, %v1349
        %v1402 = vpack.c.b16 %v1352, %v1350
        %v1403 = vpack.c.b16 %v1355, %v1353
        %v1404 = vpack.c.b16 %v1356, %v1354
        %v1405 = vpack.c.b16 %v1359, %v1357
        %v1406 = vpack.c.b16 %v1360, %v1358
        %v1407 = vpack.c.b16 %v1363, %v1361
        %v1408 = vpack.c.b16 %v1364, %v1362
        %v1409 = vpack.c.b16 %v1367, %v1365
        %v1410 = vpack.c.b16 %v1368, %v1366
        %v1411 = vpack.c.b16 %v1371, %v1369
        %v1412 = vpack.c.b16 %v1372, %v1370
        %v1413 = vpack.c.b16 %v1375, %v1373
        %v1414 = vpack.c.b16 %v1376, %v1374
        %v1415 = vpack.c.b16 %v1379, %v1377
        %v1416 = vpack.c.b16 %v1380, %v1378
        %v1417 = vpack.c.b16 %v1383, %v1381
        %v1418 = vpack.c.b16 %v1384, %v1382
        %v1419 = vpack.c.b16 %v1387, %v1385
        %v1420 = vpack.c.b16 %v1388, %v1386
        %1453 = vmatprep.subr.bf16.mxu0 %v1390
        %1454 = vmatpush1.bf16.msra.mxu0 %v1389
        %1455 = vmatprep.subr.bf16.mxu0 %v1392
        %1456 = vmatpush1.bf16.msra.mxu0 %v1391
        %1457 = vmatprep.subr.bf16.mxu0 %v1394
        %1458 = vmatpush1.bf16.msra.mxu0 %v1393
        %1459 = vmatprep.subr.bf16.mxu0 %v1396
        %1460 = vmatpush1.bf16.msra.mxu0 %v1395
        %1461 = vmatprep.subr.bf16.mxu0 %v1398
        %1462 = vmatpush1.bf16.msra.mxu0 %v1397
        %1463 = vmatprep.subr.bf16.mxu0 %v1400
        %1464 = vmatpush1.bf16.msra.mxu0 %v1399
        %1465 = vmatprep.subr.bf16.mxu0 %v1402
        %1466 = vmatpush1.bf16.msra.mxu0 %v1401
        %1467 = vmatprep.subr.bf16.mxu0 %v1404
        %1468 = vmatpush1.bf16.msra.mxu0 %v1403
        %1469 = vmatprep.subr.bf16.mxu0 %v1406
        %1470 = vmatpush1.bf16.msra.mxu0 %v1405
        %1471 = vmatprep.subr.bf16.mxu0 %v1408
        %1472 = vmatpush1.bf16.msra.mxu0 %v1407
        %1473 = vmatprep.subr.bf16.mxu0 %v1410
        %1474 = vmatpush1.bf16.msra.mxu0 %v1409
        %1475 = vmatprep.subr.bf16.mxu0 %v1412
        %1476 = vmatpush1.bf16.msra.mxu0 %v1411
        %1477 = vmatprep.subr.bf16.mxu0 %v1414
        %1478 = vmatpush1.bf16.msra.mxu0 %v1413
        %1479 = vmatprep.subr.bf16.mxu0 %v1416
        %1480 = vmatpush1.bf16.msra.mxu0 %v1415
        %1481 = vmatprep.subr.bf16.mxu0 %v1418
        %1482 = vmatpush1.bf16.msra.mxu0 %v1417
        %1483 = vmatprep.subr.bf16.mxu0 %v1420
        %1484 = vmatpush1.bf16.msra.mxu0 %v1419
        %1485 = vmatprep.mubr.bf16.mxu0 %v1255
        %1486 = vmatmul.mubr.bf16.gmra.mrb[0].mxu0 %v1254
        %v1487 = vpop.f32.mrb[0].mxu0
        %v1488 = vadd.f32 0.0, %v1487
        %v1489 = vpop.f32.mrb[0].mxu0
        %v1490 = vadd.f32 0.0, %v1489
        %v1491 = vpop.f32.mrb[0].mxu0
        %v1492 = vadd.f32 0.0, %v1491
        %v1493 = vpop.f32.mrb[0].mxu0
        %v1494 = vadd.f32 0.0, %v1493
        %1495 = vmatprep.mubr.bf16.mxu0 %v1257
        %1496 = vmatmul.mubr.bf16.gmra.mrb[0].mxu0 %v1256
        %v1497 = vpop.f32.mrb[0].mxu0
        %v1498 = vadd.f32 0.0, %v1497
        %v1499 = vpop.f32.mrb[0].mxu0
        %v1500 = vadd.f32 0.0, %v1499
        %v1501 = vpop.f32.mrb[0].mxu0
        %v1502 = vadd.f32 0.0, %v1501
        %v1503 = vpop.f32.mrb[0].mxu0
        %v1504 = vadd.f32 0.0, %v1503
        %1505 = vmatprep.mubr.bf16.mxu0 %v1259
        %1506 = vmatmul.mubr.bf16.gmra.mrb[0].mxu0 %v1258
        %v1507 = vpop.f32.mrb[0].mxu0
        %v1508 = vadd.f32 0.0, %v1507
        %v1509 = vpop.f32.mrb[0].mxu0
        %v1510 = vadd.f32 0.0, %v1509
        %v1511 = vpop.f32.mrb[0].mxu0
        %v1512 = vadd.f32 0.0, %v1511
        %v1513 = vpop.f32.mrb[0].mxu0
        %v1514 = vadd.f32 0.0, %v1513
        %1515 = vdwg.mxu0
        %v1516 = vadd.f32 %v1187, %v1488
        %v1517 = vadd.f32 %v1189, %v1490
        %v1518 = vadd.f32 %v1191, %v1492
        %v1519 = vadd.f32 %v1193, %v1494
        %v1520 = vadd.f32 %v1197, %v1498
        %v1521 = vadd.f32 %v1199, %v1500
        %v1522 = vadd.f32 %v1201, %v1502
        %v1523 = vadd.f32 %v1203, %v1504
        %v1524 = vadd.f32 %v1207, %v1508
        %v1525 = vadd.f32 %v1209, %v1510
        %v1526 = vadd.f32 %v1211, %v1512
        %v1527 = vadd.f32 %v1213, %v1514
        %v1529 = vlaneseq
        %v1530 = vshrl.u32 %v1529, 7
        %v1531 = vsub.s32 0, %v1530
        %v1532 = vrot.slane %v640, %v1531
        %v1533 = vlaneseq
        %v1534 = vshrl.u32 %v1533, 7
        %v1535 = vsub.s32 1, %v1534
        %v1536 = vrot.slane %v640, %v1535
        %v1539 = vadd.f32 %v1516, %v1532
        %v1540 = vadd.f32 %v1517, %v1536
        %v1541 = vadd.f32 %v1518, %v1532
        %v1542 = vadd.f32 %v1519, %v1536
        %v1543 = vadd.f32 %v1520, %v1532
        %v1544 = vadd.f32 %v1521, %v1536
        %v1545 = vadd.f32 %v1522, %v1532
        %v1546 = vadd.f32 %v1523, %v1536
        %v1547 = vadd.f32 %v1524, %v1532
        %v1548 = vadd.f32 %v1525, %v1536
        %v1549 = vadd.f32 %v1526, %v1532
        %v1550 = vadd.f32 %v1527, %v1536
        %v1551 = vsel %vm622, 1, 0
        %v1552 = vsel %vm623, 1, 0
        %v1553 = vsel %vm624, 1, 0
        %v1554 = vsel %vm625, 1, 0
        %v1555 = vsel %vm626, 1, 0
        %v1556 = vsel %vm627, 1, 0
        %vm1557 = vcmp.eq.s32.totalorder %v1551, 1
        %vm1558 = vcmp.eq.s32.totalorder %v1552, 1
        %vm1559 = vcmp.eq.s32.totalorder %v1553, 1
        %vm1560 = vcmp.eq.s32.totalorder %v1554, 1
        %vm1561 = vcmp.eq.s32.totalorder %v1555, 1
        %vm1562 = vcmp.eq.s32.totalorder %v1556, 1
        %v1563 = vsel %vm1557, %v1539, 0.0
        %v1564 = vsel %vm1557, %v1540, 0.0
        %v1565 = vsel %vm1558, %v1541, 0.0
        %v1566 = vsel %vm1558, %v1542, 0.0
        %v1567 = vsel %vm1559, %v1543, 0.0
        %v1568 = vsel %vm1559, %v1544, 0.0
        %v1569 = vsel %vm1560, %v1545, 0.0
        %v1570 = vsel %vm1560, %v1546, 0.0
        %v1571 = vsel %vm1561, %v1547, 0.0
        %v1572 = vsel %vm1561, %v1548, 0.0
        %v1573 = vsel %vm1562, %v1549, 0.0
        %v1574 = vsel %vm1562, %v1550, 0.0
        %v1575 = vmax.f32 %v1563, 0.0
        %v1576 = vmax.f32 %v1564, 0.0
        %v1577 = vmax.f32 %v1565, 0.0
        %v1578 = vmax.f32 %v1566, 0.0
        %v1579 = vmax.f32 %v1567, 0.0
        %v1580 = vmax.f32 %v1568, 0.0
        %v1581 = vmax.f32 %v1569, 0.0
        %v1582 = vmax.f32 %v1570, 0.0
        %v1583 = vmax.f32 %v1571, 0.0
        %v1584 = vmax.f32 %v1572, 0.0
        %v1585 = vmax.f32 %v1573, 0.0
        %v1586 = vmax.f32 %v1574, 0.0
        %v1587 = vadd.f32 %v1575, %v628
        %v1588 = vadd.f32 %v1576, %v629
        %v1589 = vadd.f32 %v1577, %v630
        %v1590 = vadd.f32 %v1578, %v631
        %v1591 = vadd.f32 %v1579, %v632
        %v1592 = vadd.f32 %v1580, %v633
        %v1593 = vadd.f32 %v1581, %v634
        %v1594 = vadd.f32 %v1582, %v635
        %v1595 = vadd.f32 %v1583, %v636
        %v1596 = vadd.f32 %v1584, %v637
        %v1597 = vadd.f32 %v1585, %v638
        %v1598 = vadd.f32 %v1586, %v639
        %v1599 = vld [vmem:[%s4] sm:$0x3]
        %v1602 = vrot.slane %v1597, 7
        %v1603 = vrot.slane %v1598, 7
        %v1616 = vrot.slane %v1587, 7
        %v1617 = vrot.slane %v1588, 7
        %v1618 = vrot.slane %v1589, 7
        %v1619 = vsel %vm657, %v1616, %v1618
        %v1620 = vrot.slane %v1590, 7
        %v1621 = vsel %vm657, %v1617, %v1620
        %v1622 = vrot.slane %v1591, 7
        %v1623 = vsel %vm657, %v1618, %v1622
        %v1624 = vrot.slane %v1592, 7
        %v1625 = vsel %vm657, %v1620, %v1624
        %v1626 = vrot.slane %v1593, 7
        %v1627 = vsel %vm657, %v1622, %v1626
        %v1628 = vrot.slane %v1594, 7
        %v1629 = vsel %vm657, %v1624, %v1628
        %v1630 = vrot.slane %v1595, 7
        %v1631 = vsel %vm657, %v1626, %v1630
        %v1632 = vrot.slane %v1596, 7
        %v1633 = vsel %vm657, %v1628, %v1632
        %v1634 = vsel %vm657, %v1630, %v1602
        %v1635 = vsel %vm657, %v1632, %v1603
        %v1648 = vsel %vm657, %v1602, %v1616
        %v1649 = vsel %vm657, %v1603, %v1617
        %v1650 = vpack.c.bf16 %v1619, %v1648
        %v1651 = vpack.c.bf16 %v1621, %v1649
        %v1652 = vpack.c.bf16 %v1627, %v1623
        %v1653 = vpack.c.bf16 %v1629, %v1625
        %v1654 = vpack.c.bf16 %v1634, %v1631
        %v1655 = vpack.c.bf16 %v1635, %v1633
        %v1656 = vld [vmem:[#allocation4] sm:$0xff]
        %v1657 = vld [vmem:[#allocation4 + $0x8] sm:$0xff]
        %v1658 = vld [vmem:[#allocation4 + $0x10] sm:$0xff]
        %v1659 = vld [vmem:[#allocation4 + $0x18] sm:$0xff]
        %v1660 = vld [vmem:[#allocation4 + $0x20] sm:$0xff]
        %v1661 = vld [vmem:[#allocation4 + $0x28] sm:$0xff]
        %v1662 = vld [vmem:[#allocation4 + $0x30] sm:$0xff]
        %v1663 = vld [vmem:[#allocation4 + $0x38] sm:$0xff]
        %v1664 = vld [vmem:[#allocation4 + $0x40] sm:$0xff]
        %v1665 = vld [vmem:[#allocation4 + $0x48] sm:$0xff]
        %v1666 = vld [vmem:[#allocation4 + $0x50] sm:$0xff]
        %v1667 = vld [vmem:[#allocation4 + $0x58] sm:$0xff]
        %v1668 = vld [vmem:[#allocation4 + $0x60] sm:$0xff]
        %v1669 = vld [vmem:[#allocation4 + $0x68] sm:$0xff]
        %v1670 = vld [vmem:[#allocation4 + $0x70] sm:$0xff]
        %v1671 = vld [vmem:[#allocation4 + $0x78] sm:$0xff]
        %v1672 = vld [vmem:[#allocation4 + $0x80] sm:$0xff]
        %v1673 = vld [vmem:[#allocation4 + $0x88] sm:$0xff]
        %v1674 = vld [vmem:[#allocation4 + $0x90] sm:$0xff]
        %v1675 = vld [vmem:[#allocation4 + $0x98] sm:$0xff]
        %v1676 = vld [vmem:[#allocation4 + $0xa0] sm:$0xff]
        %v1677 = vld [vmem:[#allocation4 + $0xa8] sm:$0xff]
        %v1678 = vld [vmem:[#allocation4 + $0xb0] sm:$0xff]
        %v1679 = vld [vmem:[#allocation4 + $0xb8] sm:$0xff]
        %v1680 = vld [vmem:[#allocation4 + $0xc0] sm:$0xff]
        %v1681 = vld [vmem:[#allocation4 + $0xc8] sm:$0xff]
        %v1682 = vld [vmem:[#allocation4 + $0xd0] sm:$0xff]
        %v1683 = vld [vmem:[#allocation4 + $0xd8] sm:$0xff]
        %v1684 = vld [vmem:[#allocation4 + $0xe0] sm:$0xff]
        %v1685 = vld [vmem:[#allocation4 + $0xe8] sm:$0xff]
        %v1686 = vld [vmem:[#allocation4 + $0xf0] sm:$0xff]
        %v1687 = vld [vmem:[#allocation4 + $0xf8] sm:$0xff]
        %v1688 = vpack.c.bf16 %v1589, %v1587
        %v1689 = vpack.c.bf16 %v1590, %v1588
        %v1690 = vpack.c.bf16 %v1593, %v1591
        %v1691 = vpack.c.bf16 %v1594, %v1592
        %v1692 = vpack.c.bf16 %v1597, %v1595
        %v1693 = vpack.c.bf16 %v1598, %v1596
        %s1694 = scalar_lea.vmem [#allocation4], 256
        %v1695 = vld [vmem:[%s1694] sm:$0xff]
        %v1696 = vld [vmem:[%s1694 + $0x8] sm:$0xff]
        %v1697 = vld [vmem:[%s1694 + $0x10] sm:$0xff]
        %v1698 = vld [vmem:[%s1694 + $0x18] sm:$0xff]
        %v1699 = vld [vmem:[%s1694 + $0x20] sm:$0xff]
        %v1700 = vld [vmem:[%s1694 + $0x28] sm:$0xff]
        %v1701 = vld [vmem:[%s1694 + $0x30] sm:$0xff]
        %v1702 = vld [vmem:[%s1694 + $0x38] sm:$0xff]
        %v1703 = vld [vmem:[%s1694 + $0x40] sm:$0xff]
        %v1704 = vld [vmem:[%s1694 + $0x48] sm:$0xff]
        %v1705 = vld [vmem:[%s1694 + $0x50] sm:$0xff]
        %v1706 = vld [vmem:[%s1694 + $0x58] sm:$0xff]
        %v1707 = vld [vmem:[%s1694 + $0x60] sm:$0xff]
        %v1708 = vld [vmem:[%s1694 + $0x68] sm:$0xff]
        %v1709 = vld [vmem:[%s1694 + $0x70] sm:$0xff]
        %v1710 = vld [vmem:[%s1694 + $0x78] sm:$0xff]
        %v1711 = vld [vmem:[%s1694 + $0x80] sm:$0xff]
        %v1712 = vld [vmem:[%s1694 + $0x88] sm:$0xff]
        %v1713 = vld [vmem:[%s1694 + $0x90] sm:$0xff]
        %v1714 = vld [vmem:[%s1694 + $0x98] sm:$0xff]
        %v1715 = vld [vmem:[%s1694 + $0xa0] sm:$0xff]
        %v1716 = vld [vmem:[%s1694 + $0xa8] sm:$0xff]
        %v1717 = vld [vmem:[%s1694 + $0xb0] sm:$0xff]
        %v1718 = vld [vmem:[%s1694 + $0xb8] sm:$0xff]
        %v1719 = vld [vmem:[%s1694 + $0xc0] sm:$0xff]
        %v1720 = vld [vmem:[%s1694 + $0xc8] sm:$0xff]
        %v1721 = vld [vmem:[%s1694 + $0xd0] sm:$0xff]
        %v1722 = vld [vmem:[%s1694 + $0xd8] sm:$0xff]
        %v1723 = vld [vmem:[%s1694 + $0xe0] sm:$0xff]
        %v1724 = vld [vmem:[%s1694 + $0xe8] sm:$0xff]
        %v1725 = vld [vmem:[%s1694 + $0xf0] sm:$0xff]
        %v1726 = vld [vmem:[%s1694 + $0xf8] sm:$0xff]
        %v1759 = vunpack.c.l.b16 %v1695
        %v1760 = vunpack.c.h.b16 %v1695
        %v1761 = vunpack.c.l.b16 %v1696
        %v1762 = vunpack.c.h.b16 %v1696
        %v1763 = vunpack.c.l.b16 %v1697
        %v1764 = vunpack.c.h.b16 %v1697
        %v1765 = vunpack.c.l.b16 %v1698
        %v1766 = vunpack.c.h.b16 %v1698
        %v1767 = vunpack.c.l.b16 %v1699
        %v1768 = vunpack.c.h.b16 %v1699
        %v1769 = vunpack.c.l.b16 %v1700
        %v1770 = vunpack.c.h.b16 %v1700
        %v1771 = vunpack.c.l.b16 %v1701
        %v1772 = vunpack.c.h.b16 %v1701
        %v1773 = vunpack.c.l.b16 %v1702
        %v1774 = vunpack.c.h.b16 %v1702
        %v1775 = vunpack.c.l.b16 %v1703
        %v1776 = vunpack.c.h.b16 %v1703
        %v1777 = vunpack.c.l.b16 %v1704
        %v1778 = vunpack.c.h.b16 %v1704
        %v1779 = vunpack.c.l.b16 %v1705
        %v1780 = vunpack.c.h.b16 %v1705
        %v1781 = vunpack.c.l.b16 %v1706
        %v1782 = vunpack.c.h.b16 %v1706
        %v1783 = vunpack.c.l.b16 %v1707
        %v1784 = vunpack.c.h.b16 %v1707
        %v1785 = vunpack.c.l.b16 %v1708
        %v1786 = vunpack.c.h.b16 %v1708
        %v1787 = vunpack.c.l.b16 %v1709
        %v1788 = vunpack.c.h.b16 %v1709
        %v1789 = vunpack.c.l.b16 %v1710
        %v1790 = vunpack.c.h.b16 %v1710
        %v1791 = vunpack.c.l.b16 %v1711
        %v1792 = vunpack.c.h.b16 %v1711
        %v1793 = vunpack.c.l.b16 %v1712
        %v1794 = vunpack.c.h.b16 %v1712
        %v1795 = vunpack.c.l.b16 %v1713
        %v1796 = vunpack.c.h.b16 %v1713
        %v1797 = vunpack.c.l.b16 %v1714
        %v1798 = vunpack.c.h.b16 %v1714
        %v1799 = vunpack.c.l.b16 %v1715
        %v1800 = vunpack.c.h.b16 %v1715
        %v1801 = vunpack.c.l.b16 %v1716
        %v1802 = vunpack.c.h.b16 %v1716
        %v1803 = vunpack.c.l.b16 %v1717
        %v1804 = vunpack.c.h.b16 %v1717
        %v1805 = vunpack.c.l.b16 %v1718
        %v1806 = vunpack.c.h.b16 %v1718
        %v1807 = vunpack.c.l.b16 %v1719
        %v1808 = vunpack.c.h.b16 %v1719
        %v1809 = vunpack.c.l.b16 %v1720
        %v1810 = vunpack.c.h.b16 %v1720
        %v1811 = vunpack.c.l.b16 %v1721
        %v1812 = vunpack.c.h.b16 %v1721
        %v1813 = vunpack.c.l.b16 %v1722
        %v1814 = vunpack.c.h.b16 %v1722
        %v1815 = vunpack.c.l.b16 %v1723
        %v1816 = vunpack.c.h.b16 %v1723
        %v1817 = vunpack.c.l.b16 %v1724
        %v1818 = vunpack.c.h.b16 %v1724
        %v1819 = vunpack.c.l.b16 %v1725
        %v1820 = vunpack.c.h.b16 %v1725
        %v1821 = vunpack.c.l.b16 %v1726
        %v1822 = vunpack.c.h.b16 %v1726
        %v1823 = vpack.c.b16 %v1761, %v1759
        %v1824 = vpack.c.b16 %v1762, %v1760
        %v1825 = vpack.c.b16 %v1765, %v1763
        %v1826 = vpack.c.b16 %v1766, %v1764
        %v1827 = vpack.c.b16 %v1769, %v1767
        %v1828 = vpack.c.b16 %v1770, %v1768
        %v1829 = vpack.c.b16 %v1773, %v1771
        %v1830 = vpack.c.b16 %v1774, %v1772
        %v1831 = vpack.c.b16 %v1777, %v1775
        %v1832 = vpack.c.b16 %v1778, %v1776
        %v1833 = vpack.c.b16 %v1781, %v1779
        %v1834 = vpack.c.b16 %v1782, %v1780
        %v1835 = vpack.c.b16 %v1785, %v1783
        %v1836 = vpack.c.b16 %v1786, %v1784
        %v1837 = vpack.c.b16 %v1789, %v1787
        %v1838 = vpack.c.b16 %v1790, %v1788
        %v1839 = vpack.c.b16 %v1793, %v1791
        %v1840 = vpack.c.b16 %v1794, %v1792
        %v1841 = vpack.c.b16 %v1797, %v1795
        %v1842 = vpack.c.b16 %v1798, %v1796
        %v1843 = vpack.c.b16 %v1801, %v1799
        %v1844 = vpack.c.b16 %v1802, %v1800
        %v1845 = vpack.c.b16 %v1805, %v1803
        %v1846 = vpack.c.b16 %v1806, %v1804
        %v1847 = vpack.c.b16 %v1809, %v1807
        %v1848 = vpack.c.b16 %v1810, %v1808
        %v1849 = vpack.c.b16 %v1813, %v1811
        %v1850 = vpack.c.b16 %v1814, %v1812
        %v1851 = vpack.c.b16 %v1817, %v1815
        %v1852 = vpack.c.b16 %v1818, %v1816
        %v1853 = vpack.c.b16 %v1821, %v1819
        %v1854 = vpack.c.b16 %v1822, %v1820
        %1887 = vmatprep.subr.bf16.mxu0 %v1824
        %1888 = vmatpush1.bf16.msra.mxu0 %v1823
        %1889 = vmatprep.subr.bf16.mxu0 %v1826
        %1890 = vmatpush1.bf16.msra.mxu0 %v1825
        %1891 = vmatprep.subr.bf16.mxu0 %v1828
        %1892 = vmatpush1.bf16.msra.mxu0 %v1827
        %1893 = vmatprep.subr.bf16.mxu0 %v1830
        %1894 = vmatpush1.bf16.msra.mxu0 %v1829
        %1895 = vmatprep.subr.bf16.mxu0 %v1832
        %1896 = vmatpush1.bf16.msra.mxu0 %v1831
        %1897 = vmatprep.subr.bf16.mxu0 %v1834
        %1898 = vmatpush1.bf16.msra.mxu0 %v1833
        %1899 = vmatprep.subr.bf16.mxu0 %v1836
        %1900 = vmatpush1.bf16.msra.mxu0 %v1835
        %1901 = vmatprep.subr.bf16.mxu0 %v1838
        %1902 = vmatpush1.bf16.msra.mxu0 %v1837
        %1903 = vmatprep.subr.bf16.mxu0 %v1840
        %1904 = vmatpush1.bf16.msra.mxu0 %v1839
        %1905 = vmatprep.subr.bf16.mxu0 %v1842
        %1906 = vmatpush1.bf16.msra.mxu0 %v1841
        %1907 = vmatprep.subr.bf16.mxu0 %v1844
        %1908 = vmatpush1.bf16.msra.mxu0 %v1843
        %1909 = vmatprep.subr.bf16.mxu0 %v1846
        %1910 = vmatpush1.bf16.msra.mxu0 %v1845
        %1911 = vmatprep.subr.bf16.mxu0 %v1848
        %1912 = vmatpush1.bf16.msra.mxu0 %v1847
        %1913 = vmatprep.subr.bf16.mxu0 %v1850
        %1914 = vmatpush1.bf16.msra.mxu0 %v1849
        %1915 = vmatprep.subr.bf16.mxu0 %v1852
        %1916 = vmatpush1.bf16.msra.mxu0 %v1851
        %1917 = vmatprep.subr.bf16.mxu0 %v1854
        %1918 = vmatpush1.bf16.msra.mxu0 %v1853
        %1919 = vmatprep.mubr.bf16.mxu0 %v1689
        %1920 = vmatmul.mubr.bf16.gmra.mrb[0].mxu0 %v1688
        %v1921 = vpop.f32.mrb[0].mxu0
        %v1922 = vadd.f32 0.0, %v1921
        %v1923 = vpop.f32.mrb[0].mxu0
        %v1924 = vadd.f32 0.0, %v1923
        %v1925 = vpop.f32.mrb[0].mxu0
        %v1926 = vadd.f32 0.0, %v1925
        %v1927 = vpop.f32.mrb[0].mxu0
        %v1928 = vadd.f32 0.0, %v1927
        %1929 = vmatprep.mubr.bf16.mxu0 %v1691
        %1930 = vmatmul.mubr.bf16.gmra.mrb[0].mxu0 %v1690
        %v1931 = vpop.f32.mrb[0].mxu0
        %v1932 = vadd.f32 0.0, %v1931
        %v1933 = vpop.f32.mrb[0].mxu0
        %v1934 = vadd.f32 0.0, %v1933
        %v1935 = vpop.f32.mrb[0].mxu0
        %v1936 = vadd.f32 0.0, %v1935
        %v1937 = vpop.f32.mrb[0].mxu0
        %v1938 = vadd.f32 0.0, %v1937
        %1939 = vmatprep.mubr.bf16.mxu0 %v1693
        %1940 = vmatmul.mubr.bf16.gmra.mrb[0].mxu0 %v1692
        %v1941 = vpop.f32.mrb[0].mxu0
        %v1942 = vadd.f32 0.0, %v1941
        %v1943 = vpop.f32.mrb[0].mxu0
        %v1944 = vadd.f32 0.0, %v1943
        %v1945 = vpop.f32.mrb[0].mxu0
        %v1946 = vadd.f32 0.0, %v1945
        %v1947 = vpop.f32.mrb[0].mxu0
        %v1948 = vadd.f32 0.0, %v1947
        %1949 = vdwg.mxu0
        %v1982 = vunpack.c.l.b16 %v1656
        %v1983 = vunpack.c.h.b16 %v1656
        %v1984 = vunpack.c.l.b16 %v1657
        %v1985 = vunpack.c.h.b16 %v1657
        %v1986 = vunpack.c.l.b16 %v1658
        %v1987 = vunpack.c.h.b16 %v1658
        %v1988 = vunpack.c.l.b16 %v1659
        %v1989 = vunpack.c.h.b16 %v1659
        %v1990 = vunpack.c.l.b16 %v1660
        %v1991 = vunpack.c.h.b16 %v1660
        %v1992 = vunpack.c.l.b16 %v1661
        %v1993 = vunpack.c.h.b16 %v1661
        %v1994 = vunpack.c.l.b16 %v1662
        %v1995 = vunpack.c.h.b16 %v1662
        %v1996 = vunpack.c.l.b16 %v1663
        %v1997 = vunpack.c.h.b16 %v1663
        %v1998 = vunpack.c.l.b16 %v1664
        %v1999 = vunpack.c.h.b16 %v1664
        %v2000 = vunpack.c.l.b16 %v1665
        %v2001 = vunpack.c.h.b16 %v1665
        %v2002 = vunpack.c.l.b16 %v1666
        %v2003 = vunpack.c.h.b16 %v1666
        %v2004 = vunpack.c.l.b16 %v1667
        %v2005 = vunpack.c.h.b16 %v1667
        %v2006 = vunpack.c.l.b16 %v1668
        %v2007 = vunpack.c.h.b16 %v1668
        %v2008 = vunpack.c.l.b16 %v1669
        %v2009 = vunpack.c.h.b16 %v1669
        %v2010 = vunpack.c.l.b16 %v1670
        %v2011 = vunpack.c.h.b16 %v1670
        %v2012 = vunpack.c.l.b16 %v1671
        %v2013 = vunpack.c.h.b16 %v1671
        %v2014 = vunpack.c.l.b16 %v1672
        %v2015 = vunpack.c.h.b16 %v1672
        %v2016 = vunpack.c.l.b16 %v1673
        %v2017 = vunpack.c.h.b16 %v1673
        %v2018 = vunpack.c.l.b16 %v1674
        %v2019 = vunpack.c.h.b16 %v1674
        %v2020 = vunpack.c.l.b16 %v1675
        %v2021 = vunpack.c.h.b16 %v1675
        %v2022 = vunpack.c.l.b16 %v1676
        %v2023 = vunpack.c.h.b16 %v1676
        %v2024 = vunpack.c.l.b16 %v1677
        %v2025 = vunpack.c.h.b16 %v1677
        %v2026 = vunpack.c.l.b16 %v1678
        %v2027 = vunpack.c.h.b16 %v1678
        %v2028 = vunpack.c.l.b16 %v1679
        %v2029 = vunpack.c.h.b16 %v1679
        %v2030 = vunpack.c.l.b16 %v1680
        %v2031 = vunpack.c.h.b16 %v1680
        %v2032 = vunpack.c.l.b16 %v1681
        %v2033 = vunpack.c.h.b16 %v1681
        %v2034 = vunpack.c.l.b16 %v1682
        %v2035 = vunpack.c.h.b16 %v1682
        %v2036 = vunpack.c.l.b16 %v1683
        %v2037 = vunpack.c.h.b16 %v1683
        %v2038 = vunpack.c.l.b16 %v1684
        %v2039 = vunpack.c.h.b16 %v1684
        %v2040 = vunpack.c.l.b16 %v1685
        %v2041 = vunpack.c.h.b16 %v1685
        %v2042 = vunpack.c.l.b16 %v1686
        %v2043 = vunpack.c.h.b16 %v1686
        %v2044 = vunpack.c.l.b16 %v1687
        %v2045 = vunpack.c.h.b16 %v1687
        %v2046 = vpack.c.b16 %v1984, %v1982
        %v2047 = vpack.c.b16 %v1985, %v1983
        %v2048 = vpack.c.b16 %v1988, %v1986
        %v2049 = vpack.c.b16 %v1989, %v1987
        %v2050 = vpack.c.b16 %v1992, %v1990
        %v2051 = vpack.c.b16 %v1993, %v1991
        %v2052 = vpack.c.b16 %v1996, %v1994
        %v2053 = vpack.c.b16 %v1997, %v1995
        %v2054 = vpack.c.b16 %v2000, %v1998
        %v2055 = vpack.c.b16 %v2001, %v1999
        %v2056 = vpack.c.b16 %v2004, %v2002
        %v2057 = vpack.c.b16 %v2005, %v2003
        %v2058 = vpack.c.b16 %v2008, %v2006
        %v2059 = vpack.c.b16 %v2009, %v2007
        %v2060 = vpack.c.b16 %v2012, %v2010
        %v2061 = vpack.c.b16 %v2013, %v2011
        %v2062 = vpack.c.b16 %v2016, %v2014
        %v2063 = vpack.c.b16 %v2017, %v2015
        %v2064 = vpack.c.b16 %v2020, %v2018
        %v2065 = vpack.c.b16 %v2021, %v2019
        %v2066 = vpack.c.b16 %v2024, %v2022
        %v2067 = vpack.c.b16 %v2025, %v2023
        %v2068 = vpack.c.b16 %v2028, %v2026
        %v2069 = vpack.c.b16 %v2029, %v2027
        %v2070 = vpack.c.b16 %v2032, %v2030
        %v2071 = vpack.c.b16 %v2033, %v2031
        %v2072 = vpack.c.b16 %v2036, %v2034
        %v2073 = vpack.c.b16 %v2037, %v2035
        %v2074 = vpack.c.b16 %v2040, %v2038
        %v2075 = vpack.c.b16 %v2041, %v2039
        %v2076 = vpack.c.b16 %v2044, %v2042
        %v2077 = vpack.c.b16 %v2045, %v2043
        %2110 = vmatprep.subr.bf16.mxu0 %v2047
        %2111 = vmatpush1.bf16.msra.mxu0 %v2046
        %2112 = vmatprep.subr.bf16.mxu0 %v2049
        %2113 = vmatpush1.bf16.msra.mxu0 %v2048
        %2114 = vmatprep.subr.bf16.mxu0 %v2051
        %2115 = vmatpush1.bf16.msra.mxu0 %v2050
        %2116 = vmatprep.subr.bf16.mxu0 %v2053
        %2117 = vmatpush1.bf16.msra.mxu0 %v2052
        %2118 = vmatprep.subr.bf16.mxu0 %v2055
        %2119 = vmatpush1.bf16.msra.mxu0 %v2054
        %2120 = vmatprep.subr.bf16.mxu0 %v2057
        %2121 = vmatpush1.bf16.msra.mxu0 %v2056
        %2122 = vmatprep.subr.bf16.mxu0 %v2059
        %2123 = vmatpush1.bf16.msra.mxu0 %v2058
        %2124 = vmatprep.subr.bf16.mxu0 %v2061
        %2125 = vmatpush1.bf16.msra.mxu0 %v2060
        %2126 = vmatprep.subr.bf16.mxu0 %v2063
        %2127 = vmatpush1.bf16.msra.mxu0 %v2062
        %2128 = vmatprep.subr.bf16.mxu0 %v2065
        %2129 = vmatpush1.bf16.msra.mxu0 %v2064
        %2130 = vmatprep.subr.bf16.mxu0 %v2067
        %2131 = vmatpush1.bf16.msra.mxu0 %v2066
        %2132 = vmatprep.subr.bf16.mxu0 %v2069
        %2133 = vmatpush1.bf16.msra.mxu0 %v2068
        %2134 = vmatprep.subr.bf16.mxu0 %v2071
        %2135 = vmatpush1.bf16.msra.mxu0 %v2070
        %2136 = vmatprep.subr.bf16.mxu0 %v2073
        %2137 = vmatpush1.bf16.msra.mxu0 %v2072
        %2138 = vmatprep.subr.bf16.mxu0 %v2075
        %2139 = vmatpush1.bf16.msra.mxu0 %v2074
        %2140 = vmatprep.subr.bf16.mxu0 %v2077
        %2141 = vmatpush1.bf16.msra.mxu0 %v2076
        %2142 = vmatprep.mubr.bf16.mxu0 %v1651
        %2143 = vmatmul.mubr.bf16.gmra.mrb[0].mxu0 %v1650
        %v2144 = vpop.f32.mrb[0].mxu0
        %v2145 = vadd.f32 %v1922, %v2144
        %v2146 = vpop.f32.mrb[0].mxu0
        %v2147 = vadd.f32 %v1924, %v2146
        %v2148 = vpop.f32.mrb[0].mxu0
        %v2149 = vadd.f32 %v1926, %v2148
        %v2150 = vpop.f32.mrb[0].mxu0
        %v2151 = vadd.f32 %v1928, %v2150
        %2152 = vmatprep.mubr.bf16.mxu0 %v1653
        %2153 = vmatmul.mubr.bf16.gmra.mrb[0].mxu0 %v1652
        %v2154 = vpop.f32.mrb[0].mxu0
        %v2155 = vadd.f32 %v1932, %v2154
        %v2156 = vpop.f32.mrb[0].mxu0
        %v2157 = vadd.f32 %v1934, %v2156
        %v2158 = vpop.f32.mrb[0].mxu0
        %v2159 = vadd.f32 %v1936, %v2158
        %v2160 = vpop.f32.mrb[0].mxu0
        %v2161 = vadd.f32 %v1938, %v2160
        %2162 = vmatprep.mubr.bf16.mxu0 %v1655
        %2163 = vmatmul.mubr.bf16.gmra.mrb[0].mxu0 %v1654
        %v2164 = vpop.f32.mrb[0].mxu0
        %v2165 = vadd.f32 %v1942, %v2164
        %v2166 = vpop.f32.mrb[0].mxu0
        %v2167 = vadd.f32 %v1944, %v2166
        %v2168 = vpop.f32.mrb[0].mxu0
        %v2169 = vadd.f32 %v1946, %v2168
        %v2170 = vpop.f32.mrb[0].mxu0
        %v2171 = vadd.f32 %v1948, %v2170
        %2172 = vdwg.mxu0
        %v2173 = vrot.slane %v1587, 1
        %v2174 = vrot.slane %v1589, 1
        %v2175 = vsel %vm1215, %v2173, %v2174
        %v2176 = vrot.slane %v1588, 1
        %v2177 = vrot.slane %v1590, 1
        %v2178 = vsel %vm1215, %v2176, %v2177
        %v2179 = vrot.slane %v1591, 1
        %v2180 = vsel %vm1215, %v2174, %v2179
        %v2181 = vrot.slane %v1592, 1
        %v2182 = vsel %vm1215, %v2177, %v2181
        %v2183 = vrot.slane %v1593, 1
        %v2184 = vsel %vm1215, %v2179, %v2183
        %v2185 = vrot.slane %v1594, 1
        %v2186 = vsel %vm1215, %v2181, %v2185
        %v2187 = vrot.slane %v1595, 1
        %v2188 = vsel %vm1215, %v2183, %v2187
        %v2189 = vrot.slane %v1596, 1
        %v2190 = vsel %vm1215, %v2185, %v2189
        %v2191 = vrot.slane %v1597, 1
        %v2192 = vsel %vm1215, %v2187, %v2191
        %v2193 = vrot.slane %v1598, 1
        %v2194 = vsel %vm1215, %v2189, %v2193
        %v2209 = vsel %vm1215, %v2191, %v2173
        %v2210 = vsel %vm1215, %v2193, %v2176
        %v2211 = vpack.c.bf16 %v2180, %v2175
        %v2212 = vpack.c.bf16 %v2182, %v2178
        %v2213 = vpack.c.bf16 %v2188, %v2184
        %v2214 = vpack.c.bf16 %v2190, %v2186
        %v2215 = vpack.c.bf16 %v2209, %v2192
        %v2216 = vpack.c.bf16 %v2210, %v2194
        %s2217 = scalar_lea.vmem [#allocation4], 512
        %v2218 = vld [vmem:[%s2217] sm:$0xff]
        %v2219 = vld [vmem:[%s2217 + $0x8] sm:$0xff]
        %v2220 = vld [vmem:[%s2217 + $0x10] sm:$0xff]
        %v2221 = vld [vmem:[%s2217 + $0x18] sm:$0xff]
        %v2222 = vld [vmem:[%s2217 + $0x20] sm:$0xff]
        %v2223 = vld [vmem:[%s2217 + $0x28] sm:$0xff]
        %v2224 = vld [vmem:[%s2217 + $0x30] sm:$0xff]
        %v2225 = vld [vmem:[%s2217 + $0x38] sm:$0xff]
        %v2226 = vld [vmem:[%s2217 + $0x40] sm:$0xff]
        %v2227 = vld [vmem:[%s2217 + $0x48] sm:$0xff]
        %v2228 = vld [vmem:[%s2217 + $0x50] sm:$0xff]
        %v2229 = vld [vmem:[%s2217 + $0x58] sm:$0xff]
        %v2230 = vld [vmem:[%s2217 + $0x60] sm:$0xff]
        %v2231 = vld [vmem:[%s2217 + $0x68] sm:$0xff]
        %v2232 = vld [vmem:[%s2217 + $0x70] sm:$0xff]
        %v2233 = vld [vmem:[%s2217 + $0x78] sm:$0xff]
        %v2234 = vld [vmem:[%s2217 + $0x80] sm:$0xff]
        %v2235 = vld [vmem:[%s2217 + $0x88] sm:$0xff]
        %v2236 = vld [vmem:[%s2217 + $0x90] sm:$0xff]
        %v2237 = vld [vmem:[%s2217 + $0x98] sm:$0xff]
        %v2238 = vld [vmem:[%s2217 + $0xa0] sm:$0xff]
        %v2239 = vld [vmem:[%s2217 + $0xa8] sm:$0xff]
        %v2240 = vld [vmem:[%s2217 + $0xb0] sm:$0xff]
        %v2241 = vld [vmem:[%s2217 + $0xb8] sm:$0xff]
        %v2242 = vld [vmem:[%s2217 + $0xc0] sm:$0xff]
        %v2243 = vld [vmem:[%s2217 + $0xc8] sm:$0xff]
        %v2244 = vld [vmem:[%s2217 + $0xd0] sm:$0xff]
        %v2245 = vld [vmem:[%s2217 + $0xd8] sm:$0xff]
        %v2246 = vld [vmem:[%s2217 + $0xe0] sm:$0xff]
        %v2247 = vld [vmem:[%s2217 + $0xe8] sm:$0xff]
        %v2248 = vld [vmem:[%s2217 + $0xf0] sm:$0xff]
        %v2249 = vld [vmem:[%s2217 + $0xf8] sm:$0xff]
        %v2282 = vunpack.c.l.b16 %v2218
        %v2283 = vunpack.c.h.b16 %v2218
        %v2284 = vunpack.c.l.b16 %v2219
        %v2285 = vunpack.c.h.b16 %v2219
        %v2286 = vunpack.c.l.b16 %v2220
        %v2287 = vunpack.c.h.b16 %v2220
        %v2288 = vunpack.c.l.b16 %v2221
        %v2289 = vunpack.c.h.b16 %v2221
        %v2290 = vunpack.c.l.b16 %v2222
        %v2291 = vunpack.c.h.b16 %v2222
        %v2292 = vunpack.c.l.b16 %v2223
        %v2293 = vunpack.c.h.b16 %v2223
        %v2294 = vunpack.c.l.b16 %v2224
        %v2295 = vunpack.c.h.b16 %v2224
        %v2296 = vunpack.c.l.b16 %v2225
        %v2297 = vunpack.c.h.b16 %v2225
        %v2298 = vunpack.c.l.b16 %v2226
        %v2299 = vunpack.c.h.b16 %v2226
        %v2300 = vunpack.c.l.b16 %v2227
        %v2301 = vunpack.c.h.b16 %v2227
        %v2302 = vunpack.c.l.b16 %v2228
        %v2303 = vunpack.c.h.b16 %v2228
        %v2304 = vunpack.c.l.b16 %v2229
        %v2305 = vunpack.c.h.b16 %v2229
        %v2306 = vunpack.c.l.b16 %v2230
        %v2307 = vunpack.c.h.b16 %v2230
        %v2308 = vunpack.c.l.b16 %v2231
        %v2309 = vunpack.c.h.b16 %v2231
        %v2310 = vunpack.c.l.b16 %v2232
        %v2311 = vunpack.c.h.b16 %v2232
        %v2312 = vunpack.c.l.b16 %v2233
        %v2313 = vunpack.c.h.b16 %v2233
        %v2314 = vunpack.c.l.b16 %v2234
        %v2315 = vunpack.c.h.b16 %v2234
        %v2316 = vunpack.c.l.b16 %v2235
        %v2317 = vunpack.c.h.b16 %v2235
        %v2318 = vunpack.c.l.b16 %v2236
        %v2319 = vunpack.c.h.b16 %v2236
        %v2320 = vunpack.c.l.b16 %v2237
        %v2321 = vunpack.c.h.b16 %v2237
        %v2322 = vunpack.c.l.b16 %v2238
        %v2323 = vunpack.c.h.b16 %v2238
        %v2324 = vunpack.c.l.b16 %v2239
        %v2325 = vunpack.c.h.b16 %v2239
        %v2326 = vunpack.c.l.b16 %v2240
        %v2327 = vunpack.c.h.b16 %v2240
        %v2328 = vunpack.c.l.b16 %v2241
        %v2329 = vunpack.c.h.b16 %v2241
        %v2330 = vunpack.c.l.b16 %v2242
        %v2331 = vunpack.c.h.b16 %v2242
        %v2332 = vunpack.c.l.b16 %v2243
        %v2333 = vunpack.c.h.b16 %v2243
        %v2334 = vunpack.c.l.b16 %v2244
        %v2335 = vunpack.c.h.b16 %v2244
        %v2336 = vunpack.c.l.b16 %v2245
        %v2337 = vunpack.c.h.b16 %v2245
        %v2338 = vunpack.c.l.b16 %v2246
        %v2339 = vunpack.c.h.b16 %v2246
        %v2340 = vunpack.c.l.b16 %v2247
        %v2341 = vunpack.c.h.b16 %v2247
        %v2342 = vunpack.c.l.b16 %v2248
        %v2343 = vunpack.c.h.b16 %v2248
        %v2344 = vunpack.c.l.b16 %v2249
        %v2345 = vunpack.c.h.b16 %v2249
        %v2346 = vpack.c.b16 %v2284, %v2282
        %v2347 = vpack.c.b16 %v2285, %v2283
        %v2348 = vpack.c.b16 %v2288, %v2286
        %v2349 = vpack.c.b16 %v2289, %v2287
        %v2350 = vpack.c.b16 %v2292, %v2290
        %v2351 = vpack.c.b16 %v2293, %v2291
        %v2352 = vpack.c.b16 %v2296, %v2294
        %v2353 = vpack.c.b16 %v2297, %v2295
        %v2354 = vpack.c.b16 %v2300, %v2298
        %v2355 = vpack.c.b16 %v2301, %v2299
        %v2356 = vpack.c.b16 %v2304, %v2302
        %v2357 = vpack.c.b16 %v2305, %v2303
        %v2358 = vpack.c.b16 %v2308, %v2306
        %v2359 = vpack.c.b16 %v2309, %v2307
        %v2360 = vpack.c.b16 %v2312, %v2310
        %v2361 = vpack.c.b16 %v2313, %v2311
        %v2362 = vpack.c.b16 %v2316, %v2314
        %v2363 = vpack.c.b16 %v2317, %v2315
        %v2364 = vpack.c.b16 %v2320, %v2318
        %v2365 = vpack.c.b16 %v2321, %v2319
        %v2366 = vpack.c.b16 %v2324, %v2322
        %v2367 = vpack.c.b16 %v2325, %v2323
        %v2368 = vpack.c.b16 %v2328, %v2326
        %v2369 = vpack.c.b16 %v2329, %v2327
        %v2370 = vpack.c.b16 %v2332, %v2330
        %v2371 = vpack.c.b16 %v2333, %v2331
        %v2372 = vpack.c.b16 %v2336, %v2334
        %v2373 = vpack.c.b16 %v2337, %v2335
        %v2374 = vpack.c.b16 %v2340, %v2338
        %v2375 = vpack.c.b16 %v2341, %v2339
        %v2376 = vpack.c.b16 %v2344, %v2342
        %v2377 = vpack.c.b16 %v2345, %v2343
        %2410 = vmatprep.subr.bf16.mxu0 %v2347
        %2411 = vmatpush1.bf16.msra.mxu0 %v2346
        %2412 = vmatprep.subr.bf16.mxu0 %v2349
        %2413 = vmatpush1.bf16.msra.mxu0 %v2348
        %2414 = vmatprep.subr.bf16.mxu0 %v2351
        %2415 = vmatpush1.bf16.msra.mxu0 %v2350
        %2416 = vmatprep.subr.bf16.mxu0 %v2353
        %2417 = vmatpush1.bf16.msra.mxu0 %v2352
        %2418 = vmatprep.subr.bf16.mxu0 %v2355
        %2419 = vmatpush1.bf16.msra.mxu0 %v2354
        %2420 = vmatprep.subr.bf16.mxu0 %v2357
        %2421 = vmatpush1.bf16.msra.mxu0 %v2356
        %2422 = vmatprep.subr.bf16.mxu0 %v2359
        %2423 = vmatpush1.bf16.msra.mxu0 %v2358
        %2424 = vmatprep.subr.bf16.mxu0 %v2361
        %2425 = vmatpush1.bf16.msra.mxu0 %v2360
        %2426 = vmatprep.subr.bf16.mxu0 %v2363
        %2427 = vmatpush1.bf16.msra.mxu0 %v2362
        %2428 = vmatprep.subr.bf16.mxu0 %v2365
        %2429 = vmatpush1.bf16.msra.mxu0 %v2364
        %2430 = vmatprep.subr.bf16.mxu0 %v2367
        %2431 = vmatpush1.bf16.msra.mxu0 %v2366
        %2432 = vmatprep.subr.bf16.mxu0 %v2369
        %2433 = vmatpush1.bf16.msra.mxu0 %v2368
        %2434 = vmatprep.subr.bf16.mxu0 %v2371
        %2435 = vmatpush1.bf16.msra.mxu0 %v2370
        %2436 = vmatprep.subr.bf16.mxu0 %v2373
        %2437 = vmatpush1.bf16.msra.mxu0 %v2372
        %2438 = vmatprep.subr.bf16.mxu0 %v2375
        %2439 = vmatpush1.bf16.msra.mxu0 %v2374
        %2440 = vmatprep.subr.bf16.mxu0 %v2377
        %2441 = vmatpush1.bf16.msra.mxu0 %v2376
        %2442 = vmatprep.mubr.bf16.mxu0 %v2212
        %2443 = vmatmul.mubr.bf16.gmra.mrb[0].mxu0 %v2211
        %v2444 = vpop.f32.mrb[0].mxu0
        %v2445 = vadd.f32 0.0, %v2444
        %v2446 = vpop.f32.mrb[0].mxu0
        %v2447 = vadd.f32 0.0, %v2446
        %v2448 = vpop.f32.mrb[0].mxu0
        %v2449 = vadd.f32 0.0, %v2448
        %v2450 = vpop.f32.mrb[0].mxu0
        %v2451 = vadd.f32 0.0, %v2450
        %2452 = vmatprep.mubr.bf16.mxu0 %v2214
        %2453 = vmatmul.mubr.bf16.gmra.mrb[0].mxu0 %v2213
        %v2454 = vpop.f32.mrb[0].mxu0
        %v2455 = vadd.f32 0.0, %v2454
        %v2456 = vpop.f32.mrb[0].mxu0
        %v2457 = vadd.f32 0.0, %v2456
        %v2458 = vpop.f32.mrb[0].mxu0
        %v2459 = vadd.f32 0.0, %v2458
        %v2460 = vpop.f32.mrb[0].mxu0
        %v2461 = vadd.f32 0.0, %v2460
        %2462 = vmatprep.mubr.bf16.mxu0 %v2216
        %2463 = vmatmul.mubr.bf16.gmra.mrb[0].mxu0 %v2215
        %v2464 = vpop.f32.mrb[0].mxu0
        %v2465 = vadd.f32 0.0, %v2464
        %v2466 = vpop.f32.mrb[0].mxu0
        %v2467 = vadd.f32 0.0, %v2466
        %v2468 = vpop.f32.mrb[0].mxu0
        %v2469 = vadd.f32 0.0, %v2468
        %v2470 = vpop.f32.mrb[0].mxu0
        %v2471 = vadd.f32 0.0, %v2470
        %2472 = vdwg.mxu0
        %v2473 = vadd.f32 %v2145, %v2445
        %v2474 = vadd.f32 %v2147, %v2447
        %v2475 = vadd.f32 %v2149, %v2449
        %v2476 = vadd.f32 %v2151, %v2451
        %v2477 = vadd.f32 %v2155, %v2455
        %v2478 = vadd.f32 %v2157, %v2457
        %v2479 = vadd.f32 %v2159, %v2459
        %v2480 = vadd.f32 %v2161, %v2461
        %v2481 = vadd.f32 %v2165, %v2465
        %v2482 = vadd.f32 %v2167, %v2467
        %v2483 = vadd.f32 %v2169, %v2469
        %v2484 = vadd.f32 %v2171, %v2471
        %v2486 = vlaneseq
        %v2487 = vshrl.u32 %v2486, 7
        %v2488 = vsub.s32 0, %v2487
        %v2489 = vrot.slane %v1599, %v2488
        %v2490 = vlaneseq
        %v2491 = vshrl.u32 %v2490, 7
        %v2492 = vsub.s32 1, %v2491
        %v2493 = vrot.slane %v1599, %v2492
        %v2496 = vadd.f32 %v2473, %v2489
        %v2497 = vadd.f32 %v2474, %v2493
        %v2498 = vadd.f32 %v2475, %v2489
        %v2499 = vadd.f32 %v2476, %v2493
        %v2500 = vadd.f32 %v2477, %v2489
        %v2501 = vadd.f32 %v2478, %v2493
        %v2502 = vadd.f32 %v2479, %v2489
        %v2503 = vadd.f32 %v2480, %v2493
        %v2504 = vadd.f32 %v2481, %v2489
        %v2505 = vadd.f32 %v2482, %v2493
        %v2506 = vadd.f32 %v2483, %v2489
        %v2507 = vadd.f32 %v2484, %v2493
        %v2508 = vsel %vm1557, %v2496, 0.0
        %v2509 = vsel %vm1557, %v2497, 0.0
        %v2510 = vsel %vm1558, %v2498, 0.0
        %v2511 = vsel %vm1558, %v2499, 0.0
        %v2512 = vsel %vm1559, %v2500, 0.0
        %v2513 = vsel %vm1559, %v2501, 0.0
        %v2514 = vsel %vm1560, %v2502, 0.0
        %v2515 = vsel %vm1560, %v2503, 0.0
        %v2516 = vsel %vm1561, %v2504, 0.0
        %v2517 = vsel %vm1561, %v2505, 0.0
        %v2518 = vsel %vm1562, %v2506, 0.0
        %v2519 = vsel %vm1562, %v2507, 0.0
        %v2520 = vadd.f32 %v2508, %v2510
        %v2521 = vadd.f32 %v2520, %v2512
        %v2522 = vrot.slane %v2521, 4
        %v2523 = vadd.f32 %v2521, %v2522
        %v2524 = vrot.slane %v2523, 2
        %v2525 = vadd.f32 %v2523, %v2524
        %v2526 = vrot.slane %v2525, 1
        %v2527 = vadd.f32 %v2525, %v2526
        %v2528 = vadd.f32 %v2509, %v2511
        %v2529 = vadd.f32 %v2528, %v2513
        %v2530 = vrot.slane %v2529, 4
        %v2531 = vadd.f32 %v2529, %v2530
        %v2532 = vrot.slane %v2531, 2
        %v2533 = vadd.f32 %v2531, %v2532
        %v2534 = vrot.slane %v2533, 1
        %v2535 = vadd.f32 %v2533, %v2534
        %v2536 = vld [vmem:[%s5] sm:$0xf]
        %v2539 = vunpack.c.l.s4 1983009808
        %v2540 = vunpack.c.0.s8 %v2539
        %v2541 = vlaneseq
        %v2542 = vshrl.u32 %v2541, 7
        %v2543 = vsub.s32 %v2540, %v2542
        %v2544 = vrot.slane %v2536, %v2543
        %v2545 = vcombine.high %v2544, %v2544
        %v2548 = vmul.f32 %v2527, %v2544
        %v2549 = vmul.f32 %v2535, %v2545
        %vm2550 = vcmask 1041408
        %v2551 = vsel %vm2550, %v2548, 0.0
        %v2552 = vsel %vm2550, %v2549, 0.0
        %v2553 = vadd.f32 %v2551, %v2552
        %2554 = vadd.xlane.f32.xlu0 %v2553
        %v2555 = vpop.xlane.xlu0 %2554
        %v2556 = vld [vmem:[%s6] sm:$0x3]
        %v2557 = vadd.f32 %v2555, %v2556
        %v2558 = vmax.f32 %v2557, 0.0
        %v2559 = vld [vmem:[%s7] sm:$0xf]
        %2561 = vset.pattern.permute.xlu0 0
        %2562 = vperm.xlu0 %2561, %v2558
        %v2563 = vpop.permute.xlu0 %2562
        %v2567 = vunpack.c.l.s4 1983009808
        %v2568 = vunpack.c.0.s8 %v2567
        %v2569 = vlaneseq
        %v2570 = vshrl.u32 %v2569, 7
        %v2571 = vsub.s32 %v2568, %v2570
        %v2572 = vrot.slane %v2559, %v2571
        %v2573 = vcombine.high %v2572, %v2572
        %v2576 = vmul.f32 %v2563, %v2572
        %v2577 = vmul.f32 %v2563, %v2573
        %v2578 = vsel %vm2550, %v2576, 0.0
        %v2579 = vrot.slane %v2578, 4
        %v2580 = vadd.f32 %v2578, %v2579
        %v2581 = vrot.slane %v2580, 2
        %v2582 = vadd.f32 %v2580, %v2581
        %v2583 = vrot.slane %v2582, 1
        %v2584 = vadd.f32 %v2582, %v2583
        %v2585 = vsel %vm2550, %v2577, 0.0
        %v2586 = vrot.slane %v2585, 4
        %v2587 = vadd.f32 %v2585, %v2586
        %v2588 = vrot.slane %v2587, 2
        %v2589 = vadd.f32 %v2587, %v2588
        %v2590 = vrot.slane %v2589, 1
        %v2591 = vadd.f32 %v2589, %v2590
        %v2592 = vld [vmem:[%s8] sm:$0x3]
        %v2594 = vlaneseq
        %v2595 = vshrl.u32 %v2594, 7
        %v2596 = vsub.s32 0, %v2595
        %v2597 = vrot.slane %v2592, %v2596
        %v2598 = vlaneseq
        %v2599 = vshrl.u32 %v2598, 7
        %v2600 = vsub.s32 1, %v2599
        %v2601 = vrot.slane %v2592, %v2600
        %v2604 = vadd.f32 %v2584, %v2597
        %v2605 = vadd.f32 %v2591, %v2601
        %v2606 = vxor.u32 %v2604, 2147483648
        %v2607 = vxor.u32 %v2605, 2147483648
        %v2608 = vmul.f32 %v2606, 1.442695
        %v2609 = vpow.pop %v2608
        %v2610 = vmul.f32 %v2607, 1.442695
        %v2611 = vpow.pop %v2610
        %v2612 = vadd.f32 %v2609, 1.0
        %v2613 = vadd.f32 %v2611, 1.0
        %v2614 = vrcp.pop %v2612
        %v2615 = vmul.f32 1.0, %v2614
        %v2616 = vrcp.pop %v2613
        %v2617 = vmul.f32 1.0, %v2616
        %v2618 = vlaneseq
        %v2619 = vshrl.u32 %v2618, 7
        %v2620 = vsub.s32 0, %v2619
        %v2621 = vrot.slane %v2615, %v2620
        %v2622 = vlaneseq
        %v2623 = vshrl.u32 %v2622, 7
        %v2624 = vsub.s32 0, %v2623
        %v2625 = vrot.slane %v2617, %v2624
        %v2626 = vadd.f32 %v2514, %v2516
        %v2627 = vadd.f32 %v2626, %v2518
        %v2628 = vrot.slane %v2627, 4
        %v2629 = vadd.f32 %v2627, %v2628
        %v2630 = vrot.slane %v2629, 2
        %v2631 = vadd.f32 %v2629, %v2630
        %v2632 = vrot.slane %v2631, 1
        %v2633 = vadd.f32 %v2631, %v2632
        %v2634 = vadd.f32 %v2515, %v2517
        %v2635 = vadd.f32 %v2634, %v2519
        %v2636 = vrot.slane %v2635, 4
        %v2637 = vadd.f32 %v2635, %v2636
        %v2638 = vrot.slane %v2637, 2
        %v2639 = vadd.f32 %v2637, %v2638
        %v2640 = vrot.slane %v2639, 1
        %v2641 = vadd.f32 %v2639, %v2640
        %v2642 = vmul.f32 %v2633, %v2544
        %v2643 = vmul.f32 %v2641, %v2545
        %v2644 = vsel %vm2550, %v2642, 0.0
        %v2645 = vsel %vm2550, %v2643, 0.0
        %v2646 = vadd.f32 %v2644, %v2645
        %2647 = vadd.xlane.f32.xlu0 %v2646
        %v2648 = vpop.xlane.xlu0 %2647
        %v2649 = vadd.f32 %v2648, %v2556
        %v2650 = vmax.f32 %v2649, 0.0
        %2652 = vset.pattern.permute.xlu0 0
        %2653 = vperm.xlu0 %2652, %v2650
        %v2654 = vpop.permute.xlu0 %2653
        %v2656 = vmul.f32 %v2654, %v2572
        %v2657 = vmul.f32 %v2654, %v2573
        %v2658 = vsel %vm2550, %v2656, 0.0
        %v2659 = vrot.slane %v2658, 4
        %v2660 = vadd.f32 %v2658, %v2659
        %v2661 = vrot.slane %v2660, 2
        %v2662 = vadd.f32 %v2660, %v2661
        %v2663 = vrot.slane %v2662, 1
        %v2664 = vadd.f32 %v2662, %v2663
        %v2665 = vsel %vm2550, %v2657, 0.0
        %v2666 = vrot.slane %v2665, 4
        %v2667 = vadd.f32 %v2665, %v2666
        %v2668 = vrot.slane %v2667, 2
        %v2669 = vadd.f32 %v2667, %v2668
        %v2670 = vrot.slane %v2669, 1
        %v2671 = vadd.f32 %v2669, %v2670
        %v2672 = vadd.f32 %v2664, %v2597
        %v2673 = vadd.f32 %v2671, %v2601
        %v2674 = vxor.u32 %v2672, 2147483648
        %v2675 = vxor.u32 %v2673, 2147483648
        %v2676 = vmul.f32 %v2674, 1.442695
        %v2677 = vpow.pop %v2676
        %v2678 = vmul.f32 %v2675, 1.442695
        %v2679 = vpow.pop %v2678
        %v2680 = vadd.f32 %v2677, 1.0
        %v2681 = vadd.f32 %v2679, 1.0
        %v2682 = vrcp.pop %v2680
        %v2683 = vmul.f32 1.0, %v2682
        %v2684 = vrcp.pop %v2681
        %v2685 = vmul.f32 1.0, %v2684
        %v2686 = vlaneseq
        %v2687 = vshrl.u32 %v2686, 7
        %v2688 = vsub.s32 0, %v2687
        %v2689 = vrot.slane %v2683, %v2688
        %v2690 = vlaneseq
        %v2691 = vshrl.u32 %v2690, 7
        %v2692 = vsub.s32 0, %v2691
        %v2693 = vrot.slane %v2685, %v2692
        %v2694 = vmul.f32 %v2508, %v2621
        %v2695 = vmul.f32 %v2509, %v2625
        %v2696 = vmul.f32 %v2510, %v2621
        %v2697 = vmul.f32 %v2511, %v2625
        %v2698 = vmul.f32 %v2512, %v2621
        %v2699 = vmul.f32 %v2513, %v2625
        %v2700 = vmul.f32 %v2514, %v2689
        %v2701 = vmul.f32 %v2515, %v2693
        %v2702 = vmul.f32 %v2516, %v2689
        %v2703 = vmul.f32 %v2517, %v2693
        %v2704 = vmul.f32 %v2518, %v2689
        %v2705 = vmul.f32 %v2519, %v2693
        %v2706 = vpack.c.bf16 %v2696, %v2694
        %v2707 = vpack.c.bf16 %v2697, %v2695
        %v2708 = vpack.c.bf16 %v2700, %v2698
        %v2709 = vpack.c.bf16 %v2701, %v2699
        %v2710 = vpack.c.bf16 %v2704, %v2702
        %v2711 = vpack.c.bf16 %v2705, %v2703
        %v2712 = vld [vmem:[%s9] sm:$0xf]
        %v2713 = vld [vmem:[%s9 + $0x4] sm:$0xf]
        %v2714 = vld [vmem:[%s9 + $0x8] sm:$0xf]
        %v2715 = vld [vmem:[%s9 + $0xc] sm:$0xf]
        %v2716 = vld [vmem:[%s9 + $0x10] sm:$0xf]
        %v2717 = vld [vmem:[%s9 + $0x14] sm:$0xf]
        %v2718 = vld [vmem:[%s9 + $0x18] sm:$0xf]
        %v2719 = vld [vmem:[%s9 + $0x1c] sm:$0xf]
        %v2720 = vld [vmem:[%s9 + $0x20] sm:$0xf]
        %v2721 = vld [vmem:[%s9 + $0x24] sm:$0xf]
        %v2722 = vld [vmem:[%s9 + $0x28] sm:$0xf]
        %v2723 = vld [vmem:[%s9 + $0x2c] sm:$0xf]
        %v2724 = vld [vmem:[%s9 + $0x30] sm:$0xf]
        %v2725 = vld [vmem:[%s9 + $0x34] sm:$0xf]
        %v2726 = vld [vmem:[%s9 + $0x38] sm:$0xf]
        %v2727 = vld [vmem:[%s9 + $0x3c] sm:$0xf]
        %v2728 = vld [vmem:[%s9 + $0x40] sm:$0xf]
        %v2729 = vld [vmem:[%s9 + $0x44] sm:$0xf]
        %v2730 = vld [vmem:[%s9 + $0x48] sm:$0xf]
        %v2731 = vld [vmem:[%s9 + $0x4c] sm:$0xf]
        %v2732 = vld [vmem:[%s9 + $0x50] sm:$0xf]
        %v2733 = vld [vmem:[%s9 + $0x54] sm:$0xf]
        %v2734 = vld [vmem:[%s9 + $0x58] sm:$0xf]
        %v2735 = vld [vmem:[%s9 + $0x5c] sm:$0xf]
        %v2736 = vld [vmem:[%s9 + $0x60] sm:$0xf]
        %v2737 = vld [vmem:[%s9 + $0x64] sm:$0xf]
        %v2738 = vld [vmem:[%s9 + $0x68] sm:$0xf]
        %v2739 = vld [vmem:[%s9 + $0x6c] sm:$0xf]
        %v2740 = vld [vmem:[%s9 + $0x70] sm:$0xf]
        %v2741 = vld [vmem:[%s9 + $0x74] sm:$0xf]
        %v2742 = vld [vmem:[%s9 + $0x78] sm:$0xf]
        %v2743 = vld [vmem:[%s9 + $0x7c] sm:$0xf]
        %v2744 = vld [vmem:[%s10] sm:$0x1]
        %v2746 = vlaneseq
        %v2747 = vshrl.u32 %v2746, 7
        %v2748 = vsub.s32 0, %v2747
        %v2749 = vrot.slane %v2744, %v2748
        %v2783 = vunpack.c.l.b16 %v2712
        %v2784 = vunpack.c.l.b16 %v2713
        %v2785 = vunpack.c.l.b16 %v2714
        %v2786 = vunpack.c.l.b16 %v2715
        %v2787 = vunpack.c.l.b16 %v2716
        %v2788 = vunpack.c.l.b16 %v2717
        %v2789 = vunpack.c.l.b16 %v2718
        %v2790 = vunpack.c.l.b16 %v2719
        %v2791 = vunpack.c.l.b16 %v2720
        %v2792 = vunpack.c.l.b16 %v2721
        %v2793 = vunpack.c.l.b16 %v2722
        %v2794 = vunpack.c.l.b16 %v2723
        %v2795 = vunpack.c.l.b16 %v2724
        %v2796 = vunpack.c.l.b16 %v2725
        %v2797 = vunpack.c.l.b16 %v2726
        %v2798 = vunpack.c.l.b16 %v2727
        %v2799 = vunpack.c.l.b16 %v2728
        %v2800 = vunpack.c.l.b16 %v2729
        %v2801 = vunpack.c.l.b16 %v2730
        %v2802 = vunpack.c.l.b16 %v2731
        %v2803 = vunpack.c.l.b16 %v2732
        %v2804 = vunpack.c.l.b16 %v2733
        %v2805 = vunpack.c.l.b16 %v2734
        %v2806 = vunpack.c.l.b16 %v2735
        %v2807 = vunpack.c.l.b16 %v2736
        %v2808 = vunpack.c.l.b16 %v2737
        %v2809 = vunpack.c.l.b16 %v2738
        %v2810 = vunpack.c.l.b16 %v2739
        %v2811 = vunpack.c.l.b16 %v2740
        %v2812 = vunpack.c.l.b16 %v2741
        %v2813 = vunpack.c.l.b16 %v2742
        %v2814 = vunpack.c.l.b16 %v2743
        %v2815 = vpack.c.b16 %v2784, %v2783
        %v2816 = vpack.c.b16 %v2786, %v2785
        %v2817 = vpack.c.b16 %v2788, %v2787
        %v2818 = vpack.c.b16 %v2790, %v2789
        %v2819 = vpack.c.b16 %v2792, %v2791
        %v2820 = vpack.c.b16 %v2794, %v2793
        %v2821 = vpack.c.b16 %v2796, %v2795
        %v2822 = vpack.c.b16 %v2798, %v2797
        %v2823 = vpack.c.b16 %v2800, %v2799
        %v2824 = vpack.c.b16 %v2802, %v2801
        %v2825 = vpack.c.b16 %v2804, %v2803
        %v2826 = vpack.c.b16 %v2806, %v2805
        %v2827 = vpack.c.b16 %v2808, %v2807
        %v2828 = vpack.c.b16 %v2810, %v2809
        %v2829 = vpack.c.b16 %v2812, %v2811
        %v2830 = vpack.c.b16 %v2814, %v2813
        %2847 = vmatprep.subr.bf16.mxu0 0
        %2848 = vmatpush1.bf16.msra.mxu0 %v2815
        %2849 = vmatprep.subr.bf16.mxu0 0
        %2850 = vmatpush1.bf16.msra.mxu0 %v2816
        %2851 = vmatprep.subr.bf16.mxu0 0
        %2852 = vmatpush1.bf16.msra.mxu0 %v2817
        %2853 = vmatprep.subr.bf16.mxu0 0
        %2854 = vmatpush1.bf16.msra.mxu0 %v2818
        %2855 = vmatprep.subr.bf16.mxu0 0
        %2856 = vmatpush1.bf16.msra.mxu0 %v2819
        %2857 = vmatprep.subr.bf16.mxu0 0
        %2858 = vmatpush1.bf16.msra.mxu0 %v2820
        %2859 = vmatprep.subr.bf16.mxu0 0
        %2860 = vmatpush1.bf16.msra.mxu0 %v2821
        %2861 = vmatprep.subr.bf16.mxu0 0
        %2862 = vmatpush1.bf16.msra.mxu0 %v2822
        %2863 = vmatprep.subr.bf16.mxu0 0
        %2864 = vmatpush1.bf16.msra.mxu0 %v2823
        %2865 = vmatprep.subr.bf16.mxu0 0
        %2866 = vmatpush1.bf16.msra.mxu0 %v2824
        %2867 = vmatprep.subr.bf16.mxu0 0
        %2868 = vmatpush1.bf16.msra.mxu0 %v2825
        %2869 = vmatprep.subr.bf16.mxu0 0
        %2870 = vmatpush1.bf16.msra.mxu0 %v2826
        %2871 = vmatprep.subr.bf16.mxu0 0
        %2872 = vmatpush1.bf16.msra.mxu0 %v2827
        %2873 = vmatprep.subr.bf16.mxu0 0
        %2874 = vmatpush1.bf16.msra.mxu0 %v2828
        %2875 = vmatprep.subr.bf16.mxu0 0
        %2876 = vmatpush1.bf16.msra.mxu0 %v2829
        %2877 = vmatprep.subr.bf16.mxu0 0
        %2878 = vmatpush1.bf16.msra.mxu0 %v2830
        %2879 = vmatprep.mubr.bf16.mxu0 %v2707
        %2880 = vmatmul.mubr.bf16.gmra.mrb[0].mxu0 %v2706
        %v2881 = vpop.f32.mrb[0].mxu0
        %v2882 = vadd.f32 %v2749, %v2881
        %v2883 = vpop.f32.mrb[0].mxu0
        %v2884 = vpop.f32.mrb[0].mxu0
        %v2885 = vadd.f32 %v2749, %v2884
        %v2886 = vpop.f32.mrb[0].mxu0
        %2887 = vmatprep.mubr.bf16.mxu0 %v2709
        %2888 = vmatmul.mubr.bf16.gmra.mrb[0].mxu0 %v2708
        %v2889 = vpop.f32.mrb[0].mxu0
        %v2890 = vadd.f32 %v2749, %v2889
        %v2891 = vpop.f32.mrb[0].mxu0
        %v2892 = vpop.f32.mrb[0].mxu0
        %v2893 = vadd.f32 %v2749, %v2892
        %v2894 = vpop.f32.mrb[0].mxu0
        %2895 = vmatprep.mubr.bf16.mxu0 %v2711
        %2896 = vmatmul.mubr.bf16.gmra.mrb[0].mxu0 %v2710
        %v2897 = vpop.f32.mrb[0].mxu0
        %v2898 = vadd.f32 %v2749, %v2897
        %v2899 = vpop.f32.mrb[0].mxu0
        %v2900 = vpop.f32.mrb[0].mxu0
        %v2901 = vadd.f32 %v2749, %v2900
        %v2902 = vpop.f32.mrb[0].mxu0
        %2903 = vdwg.mxu0
        %v2904 = vmax.f32 %v2882, 0.0
        %v2905 = vmax.f32 %v2885, 0.0
        %v2906 = vmax.f32 %v2890, 0.0
        %v2907 = vmax.f32 %v2893, 0.0
        %v2908 = vmax.f32 %v2898, 0.0
        %v2909 = vmax.f32 %v2901, 0.0
        %v2910 = vpack.c.bf16 %v2905, %v2904
        %v2911 = vpack.c.bf16 %v2907, %v2906
        %v2912 = vpack.c.bf16 %v2909, %v2908
        %v2913 = vld [vmem:[%s11] sm:$0xff]
        %v2914 = vld [vmem:[%s11 + $0x8] sm:$0xff]
        %v2915 = vld [vmem:[%s11 + $0x10] sm:$0xff]
        %v2916 = vld [vmem:[%s11 + $0x18] sm:$0xff]
        %v2917 = vld [vmem:[%s11 + $0x20] sm:$0xff]
        %v2918 = vld [vmem:[%s11 + $0x28] sm:$0xff]
        %v2919 = vld [vmem:[%s11 + $0x30] sm:$0xff]
        %v2920 = vld [vmem:[%s11 + $0x38] sm:$0xff]
        %v2921 = vld [vmem:[%s11 + $0x40] sm:$0xff]
        %v2922 = vld [vmem:[%s11 + $0x48] sm:$0xff]
        %v2923 = vld [vmem:[%s11 + $0x50] sm:$0xff]
        %v2924 = vld [vmem:[%s11 + $0x58] sm:$0xff]
        %v2925 = vld [vmem:[%s11 + $0x60] sm:$0xff]
        %v2926 = vld [vmem:[%s11 + $0x68] sm:$0xff]
        %v2927 = vld [vmem:[%s11 + $0x70] sm:$0xff]
        %v2928 = vld [vmem:[%s11 + $0x78] sm:$0xff]
        %v2929 = vld [vmem:[%s12] sm:$0x1]
        %v2931 = vlaneseq
        %v2932 = vshrl.u32 %v2931, 7
        %v2933 = vsub.s32 0, %v2932
        %v2934 = vrot.slane %v2929, %v2933
        %2935 = vset.pattern.permute.xlu0 0
        %2936 = vperm.xlu0 %2935, %v2934
        %v2937 = vpop.permute.xlu0 %2936
        %v2955 = vunpack.c.l.b16 %v2913
        %v2956 = vunpack.c.h.b16 %v2913
        %v2957 = vunpack.c.l.b16 %v2914
        %v2958 = vunpack.c.h.b16 %v2914
        %v2959 = vunpack.c.l.b16 %v2915
        %v2960 = vunpack.c.h.b16 %v2915
        %v2961 = vunpack.c.l.b16 %v2916
        %v2962 = vunpack.c.h.b16 %v2916
        %v2963 = vunpack.c.l.b16 %v2917
        %v2964 = vunpack.c.h.b16 %v2917
        %v2965 = vunpack.c.l.b16 %v2918
        %v2966 = vunpack.c.h.b16 %v2918
        %v2967 = vunpack.c.l.b16 %v2919
        %v2968 = vunpack.c.h.b16 %v2919
        %v2969 = vunpack.c.l.b16 %v2920
        %v2970 = vunpack.c.h.b16 %v2920
        %v2971 = vunpack.c.l.b16 %v2921
        %v2972 = vunpack.c.h.b16 %v2921
        %v2973 = vunpack.c.l.b16 %v2922
        %v2974 = vunpack.c.h.b16 %v2922
        %v2975 = vunpack.c.l.b16 %v2923
        %v2976 = vunpack.c.h.b16 %v2923
        %v2977 = vunpack.c.l.b16 %v2924
        %v2978 = vunpack.c.h.b16 %v2924
        %v2979 = vunpack.c.l.b16 %v2925
        %v2980 = vunpack.c.h.b16 %v2925
        %v2981 = vunpack.c.l.b16 %v2926
        %v2982 = vunpack.c.h.b16 %v2926
        %v2983 = vunpack.c.l.b16 %v2927
        %v2984 = vunpack.c.h.b16 %v2927
        %v2985 = vunpack.c.l.b16 %v2928
        %v2986 = vunpack.c.h.b16 %v2928
        %v2987 = vpack.c.b16 %v2957, %v2955
        %v2988 = vpack.c.b16 %v2958, %v2956
        %v2989 = vpack.c.b16 %v2961, %v2959
        %v2990 = vpack.c.b16 %v2962, %v2960
        %v2991 = vpack.c.b16 %v2965, %v2963
        %v2992 = vpack.c.b16 %v2966, %v2964
        %v2993 = vpack.c.b16 %v2969, %v2967
        %v2994 = vpack.c.b16 %v2970, %v2968
        %v2995 = vpack.c.b16 %v2973, %v2971
        %v2996 = vpack.c.b16 %v2974, %v2972
        %v2997 = vpack.c.b16 %v2977, %v2975
        %v2998 = vpack.c.b16 %v2978, %v2976
        %v2999 = vpack.c.b16 %v2981, %v2979
        %v3000 = vpack.c.b16 %v2982, %v2980
        %v3001 = vpack.c.b16 %v2985, %v2983
        %v3002 = vpack.c.b16 %v2986, %v2984
        %3019 = vmatprep.subr.bf16.mxu0 %v2988
        %3020 = vmatpush1.bf16.msra.mxu0 %v2987
        %3021 = vmatprep.subr.bf16.mxu0 %v2990
        %3022 = vmatpush1.bf16.msra.mxu0 %v2989
        %3023 = vmatprep.subr.bf16.mxu0 %v2992
        %3024 = vmatpush1.bf16.msra.mxu0 %v2991
        %3025 = vmatprep.subr.bf16.mxu0 %v2994
        %3026 = vmatpush1.bf16.msra.mxu0 %v2993
        %3027 = vmatprep.subr.bf16.mxu0 %v2996
        %3028 = vmatpush1.bf16.msra.mxu0 %v2995
        %3029 = vmatprep.subr.bf16.mxu0 %v2998
        %3030 = vmatpush1.bf16.msra.mxu0 %v2997
        %3031 = vmatprep.subr.bf16.mxu0 %v3000
        %3032 = vmatpush1.bf16.msra.mxu0 %v2999
        %3033 = vmatprep.subr.bf16.mxu0 %v3002
        %3034 = vmatpush1.bf16.msra.mxu0 %v3001
        %3035 = vmatprep.subr.bf16.mxu0 0
        %3036 = vmatpush1.bf16.msra.mxu0 0
        %3037 = vmatprep.subr.bf16.mxu0 0
        %3038 = vmatpush1.bf16.msra.mxu0 0
        %3039 = vmatprep.subr.bf16.mxu0 0
        %3040 = vmatpush1.bf16.msra.mxu0 0
        %3041 = vmatprep.subr.bf16.mxu0 0
        %3042 = vmatpush1.bf16.msra.mxu0 0
        %3043 = vmatprep.subr.bf16.mxu0 0
        %3044 = vmatpush1.bf16.msra.mxu0 0
        %3045 = vmatprep.subr.bf16.mxu0 0
        %3046 = vmatpush1.bf16.msra.mxu0 0
        %3047 = vmatprep.subr.bf16.mxu0 0
        %3048 = vmatpush1.bf16.msra.mxu0 0
        %3049 = vmatprep.subr.bf16.mxu0 0
        %3050 = vmatpush1.bf16.msra.mxu0 0
        %3051 = vmatprep.mubr.bf16.mxu0 0
        %3052 = vmatmul.mubr.bf16.gmra.mrb[0].mxu0 %v2910
        %v3053 = vpop.f32.mrb[0].mxu0
        %v3054 = vadd.f32 %v2937, %v3053
        %v3055 = vpop.f32.mrb[0].mxu0
        %v3056 = vadd.f32 %v2937, %v3055
        %v3057 = vpop.f32.mrb[0].mxu0
        %v3058 = vadd.f32 %v2937, %v3057
        %v3059 = vpop.f32.mrb[0].mxu0
        %v3060 = vadd.f32 %v2937, %v3059
        %3061 = vmatprep.mubr.bf16.mxu0 0
        %3062 = vmatmul.mubr.bf16.gmra.mrb[0].mxu0 %v2911
        %v3063 = vpop.f32.mrb[0].mxu0
        %v3064 = vadd.f32 %v2937, %v3063
        %v3065 = vpop.f32.mrb[0].mxu0
        %v3066 = vadd.f32 %v2937, %v3065
        %v3067 = vpop.f32.mrb[0].mxu0
        %v3068 = vadd.f32 %v2937, %v3067
        %v3069 = vpop.f32.mrb[0].mxu0
        %v3070 = vadd.f32 %v2937, %v3069
        %3071 = vmatprep.mubr.bf16.mxu0 0
        %3072 = vmatmul.mubr.bf16.gmra.mrb[0].mxu0 %v2912
        %v3073 = vpop.f32.mrb[0].mxu0
        %v3074 = vadd.f32 %v2937, %v3073
        %v3075 = vpop.f32.mrb[0].mxu0
        %v3076 = vadd.f32 %v2937, %v3075
        %v3077 = vpop.f32.mrb[0].mxu0
        %v3078 = vadd.f32 %v2937, %v3077
        %v3079 = vpop.f32.mrb[0].mxu0
        %v3080 = vadd.f32 %v2937, %v3079
        %3081 = vdwg.mxu0
        %v3082 = vxor.u32 %v3054, 2147483648
        %v3083 = vxor.u32 %v3056, 2147483648
        %v3084 = vxor.u32 %v3058, 2147483648
        %v3085 = vxor.u32 %v3060, 2147483648
        %v3086 = vxor.u32 %v3064, 2147483648
        %v3087 = vxor.u32 %v3066, 2147483648
        %v3088 = vxor.u32 %v3068, 2147483648
        %v3089 = vxor.u32 %v3070, 2147483648
        %v3090 = vxor.u32 %v3074, 2147483648
        %v3091 = vxor.u32 %v3076, 2147483648
        %v3092 = vxor.u32 %v3078, 2147483648
        %v3093 = vxor.u32 %v3080, 2147483648
        %v3094 = vmul.f32 %v3082, 1.442695
        %v3095 = vpow.pop %v3094
        %v3096 = vmul.f32 %v3083, 1.442695
        %v3097 = vpow.pop %v3096
        %v3098 = vmul.f32 %v3084, 1.442695
        %v3099 = vpow.pop %v3098
        %v3100 = vmul.f32 %v3085, 1.442695
        %v3101 = vpow.pop %v3100
        %v3102 = vmul.f32 %v3086, 1.442695
        %v3103 = vpow.pop %v3102
        %v3104 = vmul.f32 %v3087, 1.442695
        %v3105 = vpow.pop %v3104
        %v3106 = vmul.f32 %v3088, 1.442695
        %v3107 = vpow.pop %v3106
        %v3108 = vmul.f32 %v3089, 1.442695
        %v3109 = vpow.pop %v3108
        %v3110 = vmul.f32 %v3090, 1.442695
        %v3111 = vpow.pop %v3110
        %v3112 = vmul.f32 %v3091, 1.442695
        %v3113 = vpow.pop %v3112
        %v3114 = vmul.f32 %v3092, 1.442695
        %v3115 = vpow.pop %v3114
        %v3116 = vmul.f32 %v3093, 1.442695
        %v3117 = vpow.pop %v3116
        %v3118 = vadd.f32 %v3095, 1.0
        %v3119 = vadd.f32 %v3097, 1.0
        %v3120 = vadd.f32 %v3099, 1.0
        %v3121 = vadd.f32 %v3101, 1.0
        %v3122 = vadd.f32 %v3103, 1.0
        %v3123 = vadd.f32 %v3105, 1.0
        %v3124 = vadd.f32 %v3107, 1.0
        %v3125 = vadd.f32 %v3109, 1.0
        %v3126 = vadd.f32 %v3111, 1.0
        %v3127 = vadd.f32 %v3113, 1.0
        %v3128 = vadd.f32 %v3115, 1.0
        %v3129 = vadd.f32 %v3117, 1.0
        %v3130 = vrcp.pop %v3118
        %v3131 = vmul.f32 1.0, %v3130
        %v3132 = vrcp.pop %v3119
        %v3133 = vmul.f32 1.0, %v3132
        %v3134 = vrcp.pop %v3120
        %v3135 = vmul.f32 1.0, %v3134
        %v3136 = vrcp.pop %v3121
        %v3137 = vmul.f32 1.0, %v3136
        %v3138 = vrcp.pop %v3122
        %v3139 = vmul.f32 1.0, %v3138
        %v3140 = vrcp.pop %v3123
        %v3141 = vmul.f32 1.0, %v3140
        %v3142 = vrcp.pop %v3124
        %v3143 = vmul.f32 1.0, %v3142
        %v3144 = vrcp.pop %v3125
        %v3145 = vmul.f32 1.0, %v3144
        %v3146 = vrcp.pop %v3126
        %v3147 = vmul.f32 1.0, %v3146
        %v3148 = vrcp.pop %v3127
        %v3149 = vmul.f32 1.0, %v3148
        %v3150 = vrcp.pop %v3128
        %v3151 = vmul.f32 1.0, %v3150
        %v3152 = vrcp.pop %v3129
        %v3153 = vmul.f32 1.0, %v3152
        %v3154 = vmul.f32 %v2694, %v3131
        %v3155 = vmul.f32 %v2695, %v3133
        %v3156 = vmul.f32 %v2696, %v3135
        %v3157 = vmul.f32 %v2697, %v3137
        %v3158 = vmul.f32 %v2698, %v3139
        %v3159 = vmul.f32 %v2699, %v3141
        %v3160 = vmul.f32 %v2700, %v3143
        %v3161 = vmul.f32 %v2701, %v3145
        %v3162 = vmul.f32 %v2702, %v3147
        %v3163 = vmul.f32 %v2703, %v3149
        %v3164 = vmul.f32 %v2704, %v3151
        %v3165 = vmul.f32 %v2705, %v3153
        %v3166 = vadd.f32 %v3154, %v628
        %v3167 = vadd.f32 %v3155, %v629
        %v3168 = vadd.f32 %v3156, %v630
        %v3169 = vadd.f32 %v3157, %v631
        %v3170 = vadd.f32 %v3158, %v632
        %v3171 = vadd.f32 %v3159, %v633
        %v3172 = vadd.f32 %v3160, %v634
        %v3173 = vadd.f32 %v3161, %v635
        %v3174 = vadd.f32 %v3162, %v636
        %v3175 = vadd.f32 %v3163, %v637
        %v3176 = vadd.f32 %v3164, %v638
        %v3177 = vadd.f32 %v3165, %v639
        %s3178 = scalar_lea.vmem %s2, 2
        %v3179 = vld [vmem:[%s3178] sm:$0x3]
        %v3182 = vrot.slane %v3176, 7
        %v3183 = vrot.slane %v3177, 7
        %v3196 = vrot.slane %v3166, 7
        %v3197 = vrot.slane %v3167, 7
        %v3198 = vrot.slane %v3168, 7
        %v3199 = vsel %vm657, %v3196, %v3198
        %v3200 = vrot.slane %v3169, 7
        %v3201 = vsel %vm657, %v3197, %v3200
        %v3202 = vrot.slane %v3170, 7
        %v3203 = vsel %vm657, %v3198, %v3202
        %v3204 = vrot.slane %v3171, 7
        %v3205 = vsel %vm657, %v3200, %v3204
        %v3206 = vrot.slane %v3172, 7
        %v3207 = vsel %vm657, %v3202, %v3206
        %v3208 = vrot.slane %v3173, 7
        %v3209 = vsel %vm657, %v3204, %v3208
        %v3210 = vrot.slane %v3174, 7
        %v3211 = vsel %vm657, %v3206, %v3210
        %v3212 = vrot.slane %v3175, 7
        %v3213 = vsel %vm657, %v3208, %v3212
        %v3214 = vsel %vm657, %v3210, %v3182
        %v3215 = vsel %vm657, %v3212, %v3183
        %v3228 = vsel %vm657, %v3182, %v3196
        %v3229 = vsel %vm657, %v3183, %v3197
        %v3230 = vpack.c.bf16 %v3199, %v3228
        %v3231 = vpack.c.bf16 %v3201, %v3229
        %v3232 = vpack.c.bf16 %v3207, %v3203
        %v3233 = vpack.c.bf16 %v3209, %v3205
        %v3234 = vpack.c.bf16 %v3214, %v3211
        %v3235 = vpack.c.bf16 %v3215, %v3213
        %s3236 = scalar_lea.vmem [#allocation2], 768
        %v3237 = vld [vmem:[%s3236] sm:$0xff]
        %v3238 = vld [vmem:[%s3236 + $0x8] sm:$0xff]
        %v3239 = vld [vmem:[%s3236 + $0x10] sm:$0xff]
        %v3240 = vld [vmem:[%s3236 + $0x18] sm:$0xff]
        %v3241 = vld [vmem:[%s3236 + $0x20] sm:$0xff]
        %v3242 = vld [vmem:[%s3236 + $0x28] sm:$0xff]
        %v3243 = vld [vmem:[%s3236 + $0x30] sm:$0xff]
        %v3244 = vld [vmem:[%s3236 + $0x38] sm:$0xff]
        %v3245 = vld [vmem:[%s3236 + $0x40] sm:$0xff]
        %v3246 = vld [vmem:[%s3236 + $0x48] sm:$0xff]
        %v3247 = vld [vmem:[%s3236 + $0x50] sm:$0xff]
        %v3248 = vld [vmem:[%s3236 + $0x58] sm:$0xff]
        %v3249 = vld [vmem:[%s3236 + $0x60] sm:$0xff]
        %v3250 = vld [vmem:[%s3236 + $0x68] sm:$0xff]
        %v3251 = vld [vmem:[%s3236 + $0x70] sm:$0xff]
        %v3252 = vld [vmem:[%s3236 + $0x78] sm:$0xff]
        %v3253 = vld [vmem:[%s3236 + $0x80] sm:$0xff]
        %v3254 = vld [vmem:[%s3236 + $0x88] sm:$0xff]
        %v3255 = vld [vmem:[%s3236 + $0x90] sm:$0xff]
        %v3256 = vld [vmem:[%s3236 + $0x98] sm:$0xff]
        %v3257 = vld [vmem:[%s3236 + $0xa0] sm:$0xff]
        %v3258 = vld [vmem:[%s3236 + $0xa8] sm:$0xff]
        %v3259 = vld [vmem:[%s3236 + $0xb0] sm:$0xff]
        %v3260 = vld [vmem:[%s3236 + $0xb8] sm:$0xff]
        %v3261 = vld [vmem:[%s3236 + $0xc0] sm:$0xff]
        %v3262 = vld [vmem:[%s3236 + $0xc8] sm:$0xff]
        %v3263 = vld [vmem:[%s3236 + $0xd0] sm:$0xff]
        %v3264 = vld [vmem:[%s3236 + $0xd8] sm:$0xff]
        %v3265 = vld [vmem:[%s3236 + $0xe0] sm:$0xff]
        %v3266 = vld [vmem:[%s3236 + $0xe8] sm:$0xff]
        %v3267 = vld [vmem:[%s3236 + $0xf0] sm:$0xff]
        %v3268 = vld [vmem:[%s3236 + $0xf8] sm:$0xff]
        %v3269 = vpack.c.bf16 %v3168, %v3166
        %v3270 = vpack.c.bf16 %v3169, %v3167
        %v3271 = vpack.c.bf16 %v3172, %v3170
        %v3272 = vpack.c.bf16 %v3173, %v3171
        %v3273 = vpack.c.bf16 %v3176, %v3174
        %v3274 = vpack.c.bf16 %v3177, %v3175
        %s3275 = scalar_lea.vmem [#allocation2], 1024
        %v3276 = vld [vmem:[%s3275] sm:$0xff]
        %v3277 = vld [vmem:[%s3275 + $0x8] sm:$0xff]
        %v3278 = vld [vmem:[%s3275 + $0x10] sm:$0xff]
        %v3279 = vld [vmem:[%s3275 + $0x18] sm:$0xff]
        %v3280 = vld [vmem:[%s3275 + $0x20] sm:$0xff]
        %v3281 = vld [vmem:[%s3275 + $0x28] sm:$0xff]
        %v3282 = vld [vmem:[%s3275 + $0x30] sm:$0xff]
        %v3283 = vld [vmem:[%s3275 + $0x38] sm:$0xff]
        %v3284 = vld [vmem:[%s3275 + $0x40] sm:$0xff]
        %v3285 = vld [vmem:[%s3275 + $0x48] sm:$0xff]
        %v3286 = vld [vmem:[%s3275 + $0x50] sm:$0xff]
        %v3287 = vld [vmem:[%s3275 + $0x58] sm:$0xff]
        %v3288 = vld [vmem:[%s3275 + $0x60] sm:$0xff]
        %v3289 = vld [vmem:[%s3275 + $0x68] sm:$0xff]
        %v3290 = vld [vmem:[%s3275 + $0x70] sm:$0xff]
        %v3291 = vld [vmem:[%s3275 + $0x78] sm:$0xff]
        %v3292 = vld [vmem:[%s3275 + $0x80] sm:$0xff]
        %v3293 = vld [vmem:[%s3275 + $0x88] sm:$0xff]
        %v3294 = vld [vmem:[%s3275 + $0x90] sm:$0xff]
        %v3295 = vld [vmem:[%s3275 + $0x98] sm:$0xff]
        %v3296 = vld [vmem:[%s3275 + $0xa0] sm:$0xff]
        %v3297 = vld [vmem:[%s3275 + $0xa8] sm:$0xff]
        %v3298 = vld [vmem:[%s3275 + $0xb0] sm:$0xff]
        %v3299 = vld [vmem:[%s3275 + $0xb8] sm:$0xff]
        %v3300 = vld [vmem:[%s3275 + $0xc0] sm:$0xff]
        %v3301 = vld [vmem:[%s3275 + $0xc8] sm:$0xff]
        %v3302 = vld [vmem:[%s3275 + $0xd0] sm:$0xff]
        %v3303 = vld [vmem:[%s3275 + $0xd8] sm:$0xff]
        %v3304 = vld [vmem:[%s3275 + $0xe0] sm:$0xff]
        %v3305 = vld [vmem:[%s3275 + $0xe8] sm:$0xff]
        %v3306 = vld [vmem:[%s3275 + $0xf0] sm:$0xff]
        %v3307 = vld [vmem:[%s3275 + $0xf8] sm:$0xff]
        %v3340 = vunpack.c.l.b16 %v3276
        %v3341 = vunpack.c.h.b16 %v3276
        %v3342 = vunpack.c.l.b16 %v3277
        %v3343 = vunpack.c.h.b16 %v3277
        %v3344 = vunpack.c.l.b16 %v3278
        %v3345 = vunpack.c.h.b16 %v3278
        %v3346 = vunpack.c.l.b16 %v3279
        %v3347 = vunpack.c.h.b16 %v3279
        %v3348 = vunpack.c.l.b16 %v3280
        %v3349 = vunpack.c.h.b16 %v3280
        %v3350 = vunpack.c.l.b16 %v3281
        %v3351 = vunpack.c.h.b16 %v3281
        %v3352 = vunpack.c.l.b16 %v3282
        %v3353 = vunpack.c.h.b16 %v3282
        %v3354 = vunpack.c.l.b16 %v3283
        %v3355 = vunpack.c.h.b16 %v3283
        %v3356 = vunpack.c.l.b16 %v3284
        %v3357 = vunpack.c.h.b16 %v3284
        %v3358 = vunpack.c.l.b16 %v3285
        %v3359 = vunpack.c.h.b16 %v3285
        %v3360 = vunpack.c.l.b16 %v3286
        %v3361 = vunpack.c.h.b16 %v3286
        %v3362 = vunpack.c.l.b16 %v3287
        %v3363 = vunpack.c.h.b16 %v3287
        %v3364 = vunpack.c.l.b16 %v3288
        %v3365 = vunpack.c.h.b16 %v3288
        %v3366 = vunpack.c.l.b16 %v3289
        %v3367 = vunpack.c.h.b16 %v3289
        %v3368 = vunpack.c.l.b16 %v3290
        %v3369 = vunpack.c.h.b16 %v3290
        %v3370 = vunpack.c.l.b16 %v3291
        %v3371 = vunpack.c.h.b16 %v3291
        %v3372 = vunpack.c.l.b16 %v3292
        %v3373 = vunpack.c.h.b16 %v3292
        %v3374 = vunpack.c.l.b16 %v3293
        %v3375 = vunpack.c.h.b16 %v3293
        %v3376 = vunpack.c.l.b16 %v3294
        %v3377 = vunpack.c.h.b16 %v3294
        %v3378 = vunpack.c.l.b16 %v3295
        %v3379 = vunpack.c.h.b16 %v3295
        %v3380 = vunpack.c.l.b16 %v3296
        %v3381 = vunpack.c.h.b16 %v3296
        %v3382 = vunpack.c.l.b16 %v3297
        %v3383 = vunpack.c.h.b16 %v3297
        %v3384 = vunpack.c.l.b16 %v3298
        %v3385 = vunpack.c.h.b16 %v3298
        %v3386 = vunpack.c.l.b16 %v3299
        %v3387 = vunpack.c.h.b16 %v3299
        %v3388 = vunpack.c.l.b16 %v3300
        %v3389 = vunpack.c.h.b16 %v3300
        %v3390 = vunpack.c.l.b16 %v3301
        %v3391 = vunpack.c.h.b16 %v3301
        %v3392 = vunpack.c.l.b16 %v3302
        %v3393 = vunpack.c.h.b16 %v3302
        %v3394 = vunpack.c.l.b16 %v3303
        %v3395 = vunpack.c.h.b16 %v3303
        %v3396 = vunpack.c.l.b16 %v3304
        %v3397 = vunpack.c.h.b16 %v3304
        %v3398 = vunpack.c.l.b16 %v3305
        %v3399 = vunpack.c.h.b16 %v3305
        %v3400 = vunpack.c.l.b16 %v3306
        %v3401 = vunpack.c.h.b16 %v3306
        %v3402 = vunpack.c.l.b16 %v3307
        %v3403 = vunpack.c.h.b16 %v3307
        %v3404 = vpack.c.b16 %v3342, %v3340
        %v3405 = vpack.c.b16 %v3343, %v3341
        %v3406 = vpack.c.b16 %v3346, %v3344
        %v3407 = vpack.c.b16 %v3347, %v3345
        %v3408 = vpack.c.b16 %v3350, %v3348
        %v3409 = vpack.c.b16 %v3351, %v3349
        %v3410 = vpack.c.b16 %v3354, %v3352
        %v3411 = vpack.c.b16 %v3355, %v3353
        %v3412 = vpack.c.b16 %v3358, %v3356
        %v3413 = vpack.c.b16 %v3359, %v3357
        %v3414 = vpack.c.b16 %v3362, %v3360
        %v3415 = vpack.c.b16 %v3363, %v3361
        %v3416 = vpack.c.b16 %v3366, %v3364
        %v3417 = vpack.c.b16 %v3367, %v3365
        %v3418 = vpack.c.b16 %v3370, %v3368
        %v3419 = vpack.c.b16 %v3371, %v3369
        %v3420 = vpack.c.b16 %v3374, %v3372
        %v3421 = vpack.c.b16 %v3375, %v3373
        %v3422 = vpack.c.b16 %v3378, %v3376
        %v3423 = vpack.c.b16 %v3379, %v3377
        %v3424 = vpack.c.b16 %v3382, %v3380
        %v3425 = vpack.c.b16 %v3383, %v3381
        %v3426 = vpack.c.b16 %v3386, %v3384
        %v3427 = vpack.c.b16 %v3387, %v3385
        %v3428 = vpack.c.b16 %v3390, %v3388
        %v3429 = vpack.c.b16 %v3391, %v3389
        %v3430 = vpack.c.b16 %v3394, %v3392
        %v3431 = vpack.c.b16 %v3395, %v3393
        %v3432 = vpack.c.b16 %v3398, %v3396
        %v3433 = vpack.c.b16 %v3399, %v3397
        %v3434 = vpack.c.b16 %v3402, %v3400
        %v3435 = vpack.c.b16 %v3403, %v3401
        %3468 = vmatprep.subr.bf16.mxu0 %v3405
        %3469 = vmatpush1.bf16.msra.mxu0 %v3404
        %3470 = vmatprep.subr.bf16.mxu0 %v3407
        %3471 = vmatpush1.bf16.msra.mxu0 %v3406
        %3472 = vmatprep.subr.bf16.mxu0 %v3409
        %3473 = vmatpush1.bf16.msra.mxu0 %v3408
        %3474 = vmatprep.subr.bf16.mxu0 %v3411
        %3475 = vmatpush1.bf16.msra.mxu0 %v3410
        %3476 = vmatprep.subr.bf16.mxu0 %v3413
        %3477 = vmatpush1.bf16.msra.mxu0 %v3412
        %3478 = vmatprep.subr.bf16.mxu0 %v3415
        %3479 = vmatpush1.bf16.msra.mxu0 %v3414
        %3480 = vmatprep.subr.bf16.mxu0 %v3417
        %3481 = vmatpush1.bf16.msra.mxu0 %v3416
        %3482 = vmatprep.subr.bf16.mxu0 %v3419
        %3483 = vmatpush1.bf16.msra.mxu0 %v3418
        %3484 = vmatprep.subr.bf16.mxu0 %v3421
        %3485 = vmatpush1.bf16.msra.mxu0 %v3420
        %3486 = vmatprep.subr.bf16.mxu0 %v3423
        %3487 = vmatpush1.bf16.msra.mxu0 %v3422
        %3488 = vmatprep.subr.bf16.mxu0 %v3425
        %3489 = vmatpush1.bf16.msra.mxu0 %v3424
        %3490 = vmatprep.subr.bf16.mxu0 %v3427
        %3491 = vmatpush1.bf16.msra.mxu0 %v3426
        %3492 = vmatprep.subr.bf16.mxu0 %v3429
        %3493 = vmatpush1.bf16.msra.mxu0 %v3428
        %3494 = vmatprep.subr.bf16.mxu0 %v3431
        %3495 = vmatpush1.bf16.msra.mxu0 %v3430
        %3496 = vmatprep.subr.bf16.mxu0 %v3433
        %3497 = vmatpush1.bf16.msra.mxu0 %v3432
        %3498 = vmatprep.subr.bf16.mxu0 %v3435
        %3499 = vmatpush1.bf16.msra.mxu0 %v3434
        %3500 = vmatprep.mubr.bf16.mxu0 %v3270
        %3501 = vmatmul.mubr.bf16.gmra.mrb[0].mxu0 %v3269
        %v3502 = vpop.f32.mrb[0].mxu0
        %v3503 = vadd.f32 0.0, %v3502
        %v3504 = vpop.f32.mrb[0].mxu0
        %v3505 = vadd.f32 0.0, %v3504
        %v3506 = vpop.f32.mrb[0].mxu0
        %v3507 = vadd.f32 0.0, %v3506
        %v3508 = vpop.f32.mrb[0].mxu0
        %v3509 = vadd.f32 0.0, %v3508
        %3510 = vmatprep.mubr.bf16.mxu0 %v3272
        %3511 = vmatmul.mubr.bf16.gmra.mrb[0].mxu0 %v3271
        %v3512 = vpop.f32.mrb[0].mxu0
        %v3513 = vadd.f32 0.0, %v3512
        %v3514 = vpop.f32.mrb[0].mxu0
        %v3515 = vadd.f32 0.0, %v3514
        %v3516 = vpop.f32.mrb[0].mxu0
        %v3517 = vadd.f32 0.0, %v3516
        %v3518 = vpop.f32.mrb[0].mxu0
        %v3519 = vadd.f32 0.0, %v3518
        %3520 = vmatprep.mubr.bf16.mxu0 %v3274
        %3521 = vmatmul.mubr.bf16.gmra.mrb[0].mxu0 %v3273
        %v3522 = vpop.f32.mrb[0].mxu0
        %v3523 = vadd.f32 0.0, %v3522
        %v3524 = vpop.f32.mrb[0].mxu0
        %v3525 = vadd.f32 0.0, %v3524
        %v3526 = vpop.f32.mrb[0].mxu0
        %v3527 = vadd.f32 0.0, %v3526
        %v3528 = vpop.f32.mrb[0].mxu0
        %v3529 = vadd.f32 0.0, %v3528
        %3530 = vdwg.mxu0
        %v3563 = vunpack.c.l.b16 %v3237
        %v3564 = vunpack.c.h.b16 %v3237
        %v3565 = vunpack.c.l.b16 %v3238
        %v3566 = vunpack.c.h.b16 %v3238
        %v3567 = vunpack.c.l.b16 %v3239
        %v3568 = vunpack.c.h.b16 %v3239
        %v3569 = vunpack.c.l.b16 %v3240
        %v3570 = vunpack.c.h.b16 %v3240
        %v3571 = vunpack.c.l.b16 %v3241
        %v3572 = vunpack.c.h.b16 %v3241
        %v3573 = vunpack.c.l.b16 %v3242
        %v3574 = vunpack.c.h.b16 %v3242
        %v3575 = vunpack.c.l.b16 %v3243
        %v3576 = vunpack.c.h.b16 %v3243
        %v3577 = vunpack.c.l.b16 %v3244
        %v3578 = vunpack.c.h.b16 %v3244
        %v3579 = vunpack.c.l.b16 %v3245
        %v3580 = vunpack.c.h.b16 %v3245
        %v3581 = vunpack.c.l.b16 %v3246
        %v3582 = vunpack.c.h.b16 %v3246
        %v3583 = vunpack.c.l.b16 %v3247
        %v3584 = vunpack.c.h.b16 %v3247
        %v3585 = vunpack.c.l.b16 %v3248
        %v3586 = vunpack.c.h.b16 %v3248
        %v3587 = vunpack.c.l.b16 %v3249
        %v3588 = vunpack.c.h.b16 %v3249
        %v3589 = vunpack.c.l.b16 %v3250
        %v3590 = vunpack.c.h.b16 %v3250
        %v3591 = vunpack.c.l.b16 %v3251
        %v3592 = vunpack.c.h.b16 %v3251
        %v3593 = vunpack.c.l.b16 %v3252
        %v3594 = vunpack.c.h.b16 %v3252
        %v3595 = vunpack.c.l.b16 %v3253
        %v3596 = vunpack.c.h.b16 %v3253
        %v3597 = vunpack.c.l.b16 %v3254
        %v3598 = vunpack.c.h.b16 %v3254
        %v3599 = vunpack.c.l.b16 %v3255
        %v3600 = vunpack.c.h.b16 %v3255
        %v3601 = vunpack.c.l.b16 %v3256
        %v3602 = vunpack.c.h.b16 %v3256
        %v3603 = vunpack.c.l.b16 %v3257
        %v3604 = vunpack.c.h.b16 %v3257
        %v3605 = vunpack.c.l.b16 %v3258
        %v3606 = vunpack.c.h.b16 %v3258
        %v3607 = vunpack.c.l.b16 %v3259
        %v3608 = vunpack.c.h.b16 %v3259
        %v3609 = vunpack.c.l.b16 %v3260
        %v3610 = vunpack.c.h.b16 %v3260
        %v3611 = vunpack.c.l.b16 %v3261
        %v3612 = vunpack.c.h.b16 %v3261
        %v3613 = vunpack.c.l.b16 %v3262
        %v3614 = vunpack.c.h.b16 %v3262
        %v3615 = vunpack.c.l.b16 %v3263
        %v3616 = vunpack.c.h.b16 %v3263
        %v3617 = vunpack.c.l.b16 %v3264
        %v3618 = vunpack.c.h.b16 %v3264
        %v3619 = vunpack.c.l.b16 %v3265
        %v3620 = vunpack.c.h.b16 %v3265
        %v3621 = vunpack.c.l.b16 %v3266
        %v3622 = vunpack.c.h.b16 %v3266
        %v3623 = vunpack.c.l.b16 %v3267
        %v3624 = vunpack.c.h.b16 %v3267
        %v3625 = vunpack.c.l.b16 %v3268
        %v3626 = vunpack.c.h.b16 %v3268
        %v3627 = vpack.c.b16 %v3565, %v3563
        %v3628 = vpack.c.b16 %v3566, %v3564
        %v3629 = vpack.c.b16 %v3569, %v3567
        %v3630 = vpack.c.b16 %v3570, %v3568
        %v3631 = vpack.c.b16 %v3573, %v3571
        %v3632 = vpack.c.b16 %v3574, %v3572
        %v3633 = vpack.c.b16 %v3577, %v3575
        %v3634 = vpack.c.b16 %v3578, %v3576
        %v3635 = vpack.c.b16 %v3581, %v3579
        %v3636 = vpack.c.b16 %v3582, %v3580
        %v3637 = vpack.c.b16 %v3585, %v3583
        %v3638 = vpack.c.b16 %v3586, %v3584
        %v3639 = vpack.c.b16 %v3589, %v3587
        %v3640 = vpack.c.b16 %v3590, %v3588
        %v3641 = vpack.c.b16 %v3593, %v3591
        %v3642 = vpack.c.b16 %v3594, %v3592
        %v3643 = vpack.c.b16 %v3597, %v3595
        %v3644 = vpack.c.b16 %v3598, %v3596
        %v3645 = vpack.c.b16 %v3601, %v3599
        %v3646 = vpack.c.b16 %v3602, %v3600
        %v3647 = vpack.c.b16 %v3605, %v3603
        %v3648 = vpack.c.b16 %v3606, %v3604
        %v3649 = vpack.c.b16 %v3609, %v3607
        %v3650 = vpack.c.b16 %v3610, %v3608
        %v3651 = vpack.c.b16 %v3613, %v3611
        %v3652 = vpack.c.b16 %v3614, %v3612
        %v3653 = vpack.c.b16 %v3617, %v3615
        %v3654 = vpack.c.b16 %v3618, %v3616
        %v3655 = vpack.c.b16 %v3621, %v3619
        %v3656 = vpack.c.b16 %v3622, %v3620
        %v3657 = vpack.c.b16 %v3625, %v3623
        %v3658 = vpack.c.b16 %v3626, %v3624
        %3691 = vmatprep.subr.bf16.mxu0 %v3628
        %3692 = vmatpush1.bf16.msra.mxu0 %v3627
        %3693 = vmatprep.subr.bf16.mxu0 %v3630
        %3694 = vmatpush1.bf16.msra.mxu0 %v3629
        %3695 = vmatprep.subr.bf16.mxu0 %v3632
        %3696 = vmatpush1.bf16.msra.mxu0 %v3631
        %3697 = vmatprep.subr.bf16.mxu0 %v3634
        %3698 = vmatpush1.bf16.msra.mxu0 %v3633
        %3699 = vmatprep.subr.bf16.mxu0 %v3636
        %3700 = vmatpush1.bf16.msra.mxu0 %v3635
        %3701 = vmatprep.subr.bf16.mxu0 %v3638
        %3702 = vmatpush1.bf16.msra.mxu0 %v3637
        %3703 = vmatprep.subr.bf16.mxu0 %v3640
        %3704 = vmatpush1.bf16.msra.mxu0 %v3639
        %3705 = vmatprep.subr.bf16.mxu0 %v3642
        %3706 = vmatpush1.bf16.msra.mxu0 %v3641
        %3707 = vmatprep.subr.bf16.mxu0 %v3644
        %3708 = vmatpush1.bf16.msra.mxu0 %v3643
        %3709 = vmatprep.subr.bf16.mxu0 %v3646
        %3710 = vmatpush1.bf16.msra.mxu0 %v3645
        %3711 = vmatprep.subr.bf16.mxu0 %v3648
        %3712 = vmatpush1.bf16.msra.mxu0 %v3647
        %3713 = vmatprep.subr.bf16.mxu0 %v3650
        %3714 = vmatpush1.bf16.msra.mxu0 %v3649
        %3715 = vmatprep.subr.bf16.mxu0 %v3652
        %3716 = vmatpush1.bf16.msra.mxu0 %v3651
        %3717 = vmatprep.subr.bf16.mxu0 %v3654
        %3718 = vmatpush1.bf16.msra.mxu0 %v3653
        %3719 = vmatprep.subr.bf16.mxu0 %v3656
        %3720 = vmatpush1.bf16.msra.mxu0 %v3655
        %3721 = vmatprep.subr.bf16.mxu0 %v3658
        %3722 = vmatpush1.bf16.msra.mxu0 %v3657
        %3723 = vmatprep.mubr.bf16.mxu0 %v3231
        %3724 = vmatmul.mubr.bf16.gmra.mrb[0].mxu0 %v3230
        %v3725 = vpop.f32.mrb[0].mxu0
        %v3726 = vadd.f32 %v3503, %v3725
        %v3727 = vpop.f32.mrb[0].mxu0
        %v3728 = vadd.f32 %v3505, %v3727
        %v3729 = vpop.f32.mrb[0].mxu0
        %v3730 = vadd.f32 %v3507, %v3729
        %v3731 = vpop.f32.mrb[0].mxu0
        %v3732 = vadd.f32 %v3509, %v3731
        %3733 = vmatprep.mubr.bf16.mxu0 %v3233
        %3734 = vmatmul.mubr.bf16.gmra.mrb[0].mxu0 %v3232
        %v3735 = vpop.f32.mrb[0].mxu0
        %v3736 = vadd.f32 %v3513, %v3735
        %v3737 = vpop.f32.mrb[0].mxu0
        %v3738 = vadd.f32 %v3515, %v3737
        %v3739 = vpop.f32.mrb[0].mxu0
        %v3740 = vadd.f32 %v3517, %v3739
        %v3741 = vpop.f32.mrb[0].mxu0
        %v3742 = vadd.f32 %v3519, %v3741
        %3743 = vmatprep.mubr.bf16.mxu0 %v3235
        %3744 = vmatmul.mubr.bf16.gmra.mrb[0].mxu0 %v3234
        %v3745 = vpop.f32.mrb[0].mxu0
        %v3746 = vadd.f32 %v3523, %v3745
        %v3747 = vpop.f32.mrb[0].mxu0
        %v3748 = vadd.f32 %v3525, %v3747
        %v3749 = vpop.f32.mrb[0].mxu0
        %v3750 = vadd.f32 %v3527, %v3749
        %v3751 = vpop.f32.mrb[0].mxu0
        %v3752 = vadd.f32 %v3529, %v3751
        %3753 = vdwg.mxu0
        %v3754 = vrot.slane %v3166, 1
        %v3755 = vrot.slane %v3168, 1
        %v3756 = vsel %vm1215, %v3754, %v3755
        %v3757 = vrot.slane %v3167, 1
        %v3758 = vrot.slane %v3169, 1
        %v3759 = vsel %vm1215, %v3757, %v3758
        %v3760 = vrot.slane %v3170, 1
        %v3761 = vsel %vm1215, %v3755, %v3760
        %v3762 = vrot.slane %v3171, 1
        %v3763 = vsel %vm1215, %v3758, %v3762
        %v3764 = vrot.slane %v3172, 1
        %v3765 = vsel %vm1215, %v3760, %v3764
        %v3766 = vrot.slane %v3173, 1
        %v3767 = vsel %vm1215, %v3762, %v3766
        %v3768 = vrot.slane %v3174, 1
        %v3769 = vsel %vm1215, %v3764, %v3768
        %v3770 = vrot.slane %v3175, 1
        %v3771 = vsel %vm1215, %v3766, %v3770
        %v3772 = vrot.slane %v3176, 1
        %v3773 = vsel %vm1215, %v3768, %v3772
        %v3774 = vrot.slane %v3177, 1
        %v3775 = vsel %vm1215, %v3770, %v3774
        %v3790 = vsel %vm1215, %v3772, %v3754
        %v3791 = vsel %vm1215, %v3774, %v3757
        %v3792 = vpack.c.bf16 %v3761, %v3756
        %v3793 = vpack.c.bf16 %v3763, %v3759
        %v3794 = vpack.c.bf16 %v3769, %v3765
        %v3795 = vpack.c.bf16 %v3771, %v3767
        %v3796 = vpack.c.bf16 %v3790, %v3773
        %v3797 = vpack.c.bf16 %v3791, %v3775
        %s3798 = scalar_lea.vmem [#allocation2], 1280
        %v3799 = vld [vmem:[%s3798] sm:$0xff]
        %v3800 = vld [vmem:[%s3798 + $0x8] sm:$0xff]
        %v3801 = vld [vmem:[%s3798 + $0x10] sm:$0xff]
        %v3802 = vld [vmem:[%s3798 + $0x18] sm:$0xff]
        %v3803 = vld [vmem:[%s3798 + $0x20] sm:$0xff]
        %v3804 = vld [vmem:[%s3798 + $0x28] sm:$0xff]
        %v3805 = vld [vmem:[%s3798 + $0x30] sm:$0xff]
        %v3806 = vld [vmem:[%s3798 + $0x38] sm:$0xff]
        %v3807 = vld [vmem:[%s3798 + $0x40] sm:$0xff]
        %v3808 = vld [vmem:[%s3798 + $0x48] sm:$0xff]
        %v3809 = vld [vmem:[%s3798 + $0x50] sm:$0xff]
        %v3810 = vld [vmem:[%s3798 + $0x58] sm:$0xff]
        %v3811 = vld [vmem:[%s3798 + $0x60] sm:$0xff]
        %v3812 = vld [vmem:[%s3798 + $0x68] sm:$0xff]
        %v3813 = vld [vmem:[%s3798 + $0x70] sm:$0xff]
        %v3814 = vld [vmem:[%s3798 + $0x78] sm:$0xff]
        %v3815 = vld [vmem:[%s3798 + $0x80] sm:$0xff]
        %v3816 = vld [vmem:[%s3798 + $0x88] sm:$0xff]
        %v3817 = vld [vmem:[%s3798 + $0x90] sm:$0xff]
        %v3818 = vld [vmem:[%s3798 + $0x98] sm:$0xff]
        %v3819 = vld [vmem:[%s3798 + $0xa0] sm:$0xff]
        %v3820 = vld [vmem:[%s3798 + $0xa8] sm:$0xff]
        %v3821 = vld [vmem:[%s3798 + $0xb0] sm:$0xff]
        %v3822 = vld [vmem:[%s3798 + $0xb8] sm:$0xff]
        %v3823 = vld [vmem:[%s3798 + $0xc0] sm:$0xff]
        %v3824 = vld [vmem:[%s3798 + $0xc8] sm:$0xff]
        %v3825 = vld [vmem:[%s3798 + $0xd0] sm:$0xff]
        %v3826 = vld [vmem:[%s3798 + $0xd8] sm:$0xff]
        %v3827 = vld [vmem:[%s3798 + $0xe0] sm:$0xff]
        %v3828 = vld [vmem:[%s3798 + $0xe8] sm:$0xff]
        %v3829 = vld [vmem:[%s3798 + $0xf0] sm:$0xff]
        %v3830 = vld [vmem:[%s3798 + $0xf8] sm:$0xff]
        %v3863 = vunpack.c.l.b16 %v3799
        %v3864 = vunpack.c.h.b16 %v3799
        %v3865 = vunpack.c.l.b16 %v3800
        %v3866 = vunpack.c.h.b16 %v3800
        %v3867 = vunpack.c.l.b16 %v3801
        %v3868 = vunpack.c.h.b16 %v3801
        %v3869 = vunpack.c.l.b16 %v3802
        %v3870 = vunpack.c.h.b16 %v3802
        %v3871 = vunpack.c.l.b16 %v3803
        %v3872 = vunpack.c.h.b16 %v3803
        %v3873 = vunpack.c.l.b16 %v3804
        %v3874 = vunpack.c.h.b16 %v3804
        %v3875 = vunpack.c.l.b16 %v3805
        %v3876 = vunpack.c.h.b16 %v3805
        %v3877 = vunpack.c.l.b16 %v3806
        %v3878 = vunpack.c.h.b16 %v3806
        %v3879 = vunpack.c.l.b16 %v3807
        %v3880 = vunpack.c.h.b16 %v3807
        %v3881 = vunpack.c.l.b16 %v3808
        %v3882 = vunpack.c.h.b16 %v3808
        %v3883 = vunpack.c.l.b16 %v3809
        %v3884 = vunpack.c.h.b16 %v3809
        %v3885 = vunpack.c.l.b16 %v3810
        %v3886 = vunpack.c.h.b16 %v3810
        %v3887 = vunpack.c.l.b16 %v3811
        %v3888 = vunpack.c.h.b16 %v3811
        %v3889 = vunpack.c.l.b16 %v3812
        %v3890 = vunpack.c.h.b16 %v3812
        %v3891 = vunpack.c.l.b16 %v3813
        %v3892 = vunpack.c.h.b16 %v3813
        %v3893 = vunpack.c.l.b16 %v3814
        %v3894 = vunpack.c.h.b16 %v3814
        %v3895 = vunpack.c.l.b16 %v3815
        %v3896 = vunpack.c.h.b16 %v3815
        %v3897 = vunpack.c.l.b16 %v3816
        %v3898 = vunpack.c.h.b16 %v3816
        %v3899 = vunpack.c.l.b16 %v3817
        %v3900 = vunpack.c.h.b16 %v3817
        %v3901 = vunpack.c.l.b16 %v3818
        %v3902 = vunpack.c.h.b16 %v3818
        %v3903 = vunpack.c.l.b16 %v3819
        %v3904 = vunpack.c.h.b16 %v3819
        %v3905 = vunpack.c.l.b16 %v3820
        %v3906 = vunpack.c.h.b16 %v3820
        %v3907 = vunpack.c.l.b16 %v3821
        %v3908 = vunpack.c.h.b16 %v3821
        %v3909 = vunpack.c.l.b16 %v3822
        %v3910 = vunpack.c.h.b16 %v3822
        %v3911 = vunpack.c.l.b16 %v3823
        %v3912 = vunpack.c.h.b16 %v3823
        %v3913 = vunpack.c.l.b16 %v3824
        %v3914 = vunpack.c.h.b16 %v3824
        %v3915 = vunpack.c.l.b16 %v3825
        %v3916 = vunpack.c.h.b16 %v3825
        %v3917 = vunpack.c.l.b16 %v3826
        %v3918 = vunpack.c.h.b16 %v3826
        %v3919 = vunpack.c.l.b16 %v3827
        %v3920 = vunpack.c.h.b16 %v3827
        %v3921 = vunpack.c.l.b16 %v3828
        %v3922 = vunpack.c.h.b16 %v3828
        %v3923 = vunpack.c.l.b16 %v3829
        %v3924 = vunpack.c.h.b16 %v3829
        %v3925 = vunpack.c.l.b16 %v3830
        %v3926 = vunpack.c.h.b16 %v3830
        %v3927 = vpack.c.b16 %v3865, %v3863
        %v3928 = vpack.c.b16 %v3866, %v3864
        %v3929 = vpack.c.b16 %v3869, %v3867
        %v3930 = vpack.c.b16 %v3870, %v3868
        %v3931 = vpack.c.b16 %v3873, %v3871
        %v3932 = vpack.c.b16 %v3874, %v3872
        %v3933 = vpack.c.b16 %v3877, %v3875
        %v3934 = vpack.c.b16 %v3878, %v3876
        %v3935 = vpack.c.b16 %v3881, %v3879
        %v3936 = vpack.c.b16 %v3882, %v3880
        %v3937 = vpack.c.b16 %v3885, %v3883
        %v3938 = vpack.c.b16 %v3886, %v3884
        %v3939 = vpack.c.b16 %v3889, %v3887
        %v3940 = vpack.c.b16 %v3890, %v3888
        %v3941 = vpack.c.b16 %v3893, %v3891
        %v3942 = vpack.c.b16 %v3894, %v3892
        %v3943 = vpack.c.b16 %v3897, %v3895
        %v3944 = vpack.c.b16 %v3898, %v3896
        %v3945 = vpack.c.b16 %v3901, %v3899
        %v3946 = vpack.c.b16 %v3902, %v3900
        %v3947 = vpack.c.b16 %v3905, %v3903
        %v3948 = vpack.c.b16 %v3906, %v3904
        %v3949 = vpack.c.b16 %v3909, %v3907
        %v3950 = vpack.c.b16 %v3910, %v3908
        %v3951 = vpack.c.b16 %v3913, %v3911
        %v3952 = vpack.c.b16 %v3914, %v3912
        %v3953 = vpack.c.b16 %v3917, %v3915
        %v3954 = vpack.c.b16 %v3918, %v3916
        %v3955 = vpack.c.b16 %v3921, %v3919
        %v3956 = vpack.c.b16 %v3922, %v3920
        %v3957 = vpack.c.b16 %v3925, %v3923
        %v3958 = vpack.c.b16 %v3926, %v3924
        %3991 = vmatprep.subr.bf16.mxu0 %v3928
        %3992 = vmatpush1.bf16.msra.mxu0 %v3927
        %3993 = vmatprep.subr.bf16.mxu0 %v3930
        %3994 = vmatpush1.bf16.msra.mxu0 %v3929
        %3995 = vmatprep.subr.bf16.mxu0 %v3932
        %3996 = vmatpush1.bf16.msra.mxu0 %v3931
        %3997 = vmatprep.subr.bf16.mxu0 %v3934
        %3998 = vmatpush1.bf16.msra.mxu0 %v3933
        %3999 = vmatprep.subr.bf16.mxu0 %v3936
        %4000 = vmatpush1.bf16.msra.mxu0 %v3935
        %4001 = vmatprep.subr.bf16.mxu0 %v3938
        %4002 = vmatpush1.bf16.msra.mxu0 %v3937
        %4003 = vmatprep.subr.bf16.mxu0 %v3940
        %4004 = vmatpush1.bf16.msra.mxu0 %v3939
        %4005 = vmatprep.subr.bf16.mxu0 %v3942
        %4006 = vmatpush1.bf16.msra.mxu0 %v3941
        %4007 = vmatprep.subr.bf16.mxu0 %v3944
        %4008 = vmatpush1.bf16.msra.mxu0 %v3943
        %4009 = vmatprep.subr.bf16.mxu0 %v3946
        %4010 = vmatpush1.bf16.msra.mxu0 %v3945
        %4011 = vmatprep.subr.bf16.mxu0 %v3948
        %4012 = vmatpush1.bf16.msra.mxu0 %v3947
        %4013 = vmatprep.subr.bf16.mxu0 %v3950
        %4014 = vmatpush1.bf16.msra.mxu0 %v3949
        %4015 = vmatprep.subr.bf16.mxu0 %v3952
        %4016 = vmatpush1.bf16.msra.mxu0 %v3951
        %4017 = vmatprep.subr.bf16.mxu0 %v3954
        %4018 = vmatpush1.bf16.msra.mxu0 %v3953
        %4019 = vmatprep.subr.bf16.mxu0 %v3956
        %4020 = vmatpush1.bf16.msra.mxu0 %v3955
        %4021 = vmatprep.subr.bf16.mxu0 %v3958
        %4022 = vmatpush1.bf16.msra.mxu0 %v3957
        %4023 = vmatprep.mubr.bf16.mxu0 %v3793
        %4024 = vmatmul.mubr.bf16.gmra.mrb[0].mxu0 %v3792
        %v4025 = vpop.f32.mrb[0].mxu0
        %v4026 = vadd.f32 0.0, %v4025
        %v4027 = vpop.f32.mrb[0].mxu0
        %v4028 = vadd.f32 0.0, %v4027
        %v4029 = vpop.f32.mrb[0].mxu0
        %v4030 = vadd.f32 0.0, %v4029
        %v4031 = vpop.f32.mrb[0].mxu0
        %v4032 = vadd.f32 0.0, %v4031
        %4033 = vmatprep.mubr.bf16.mxu0 %v3795
        %4034 = vmatmul.mubr.bf16.gmra.mrb[0].mxu0 %v3794
        %v4035 = vpop.f32.mrb[0].mxu0
        %v4036 = vadd.f32 0.0, %v4035
        %v4037 = vpop.f32.mrb[0].mxu0
        %v4038 = vadd.f32 0.0, %v4037
        %v4039 = vpop.f32.mrb[0].mxu0
        %v4040 = vadd.f32 0.0, %v4039
        %v4041 = vpop.f32.mrb[0].mxu0
        %v4042 = vadd.f32 0.0, %v4041
        %4043 = vmatprep.mubr.bf16.mxu0 %v3797
        %4044 = vmatmul.mubr.bf16.gmra.mrb[0].mxu0 %v3796
        %v4045 = vpop.f32.mrb[0].mxu0
        %v4046 = vadd.f32 0.0, %v4045
        %v4047 = vpop.f32.mrb[0].mxu0
        %v4048 = vadd.f32 0.0, %v4047
        %v4049 = vpop.f32.mrb[0].mxu0
        %v4050 = vadd.f32 0.0, %v4049
        %v4051 = vpop.f32.mrb[0].mxu0
        %v4052 = vadd.f32 0.0, %v4051
        %4053 = vdwg.mxu0
        %v4054 = vadd.f32 %v3726, %v4026
        %v4055 = vadd.f32 %v3728, %v4028
        %v4056 = vadd.f32 %v3730, %v4030
        %v4057 = vadd.f32 %v3732, %v4032
        %v4058 = vadd.f32 %v3736, %v4036
        %v4059 = vadd.f32 %v3738, %v4038
        %v4060 = vadd.f32 %v3740, %v4040
        %v4061 = vadd.f32 %v3742, %v4042
        %v4062 = vadd.f32 %v3746, %v4046
        %v4063 = vadd.f32 %v3748, %v4048
        %v4064 = vadd.f32 %v3750, %v4050
        %v4065 = vadd.f32 %v3752, %v4052
        %v4067 = vlaneseq
        %v4068 = vshrl.u32 %v4067, 7
        %v4069 = vsub.s32 0, %v4068
        %v4070 = vrot.slane %v3179, %v4069
        %v4071 = vlaneseq
        %v4072 = vshrl.u32 %v4071, 7
        %v4073 = vsub.s32 1, %v4072
        %v4074 = vrot.slane %v3179, %v4073
        %v4077 = vadd.f32 %v4054, %v4070
        %v4078 = vadd.f32 %v4055, %v4074
        %v4079 = vadd.f32 %v4056, %v4070
        %v4080 = vadd.f32 %v4057, %v4074
        %v4081 = vadd.f32 %v4058, %v4070
        %v4082 = vadd.f32 %v4059, %v4074
        %v4083 = vadd.f32 %v4060, %v4070
        %v4084 = vadd.f32 %v4061, %v4074
        %v4085 = vadd.f32 %v4062, %v4070
        %v4086 = vadd.f32 %v4063, %v4074
        %v4087 = vadd.f32 %v4064, %v4070
        %v4088 = vadd.f32 %v4065, %v4074
        %v4089 = vsel %vm1557, %v4077, 0.0
        %v4090 = vsel %vm1557, %v4078, 0.0
        %v4091 = vsel %vm1558, %v4079, 0.0
        %v4092 = vsel %vm1558, %v4080, 0.0
        %v4093 = vsel %vm1559, %v4081, 0.0
        %v4094 = vsel %vm1559, %v4082, 0.0
        %v4095 = vsel %vm1560, %v4083, 0.0
        %v4096 = vsel %vm1560, %v4084, 0.0
        %v4097 = vsel %vm1561, %v4085, 0.0
        %v4098 = vsel %vm1561, %v4086, 0.0
        %v4099 = vsel %vm1562, %v4087, 0.0
        %v4100 = vsel %vm1562, %v4088, 0.0
        %v4101 = vmax.f32 %v4089, 0.0
        %v4102 = vmax.f32 %v4090, 0.0
        %v4103 = vmax.f32 %v4091, 0.0
        %v4104 = vmax.f32 %v4092, 0.0
        %v4105 = vmax.f32 %v4093, 0.0
        %v4106 = vmax.f32 %v4094, 0.0
        %v4107 = vmax.f32 %v4095, 0.0
        %v4108 = vmax.f32 %v4096, 0.0
        %v4109 = vmax.f32 %v4097, 0.0
        %v4110 = vmax.f32 %v4098, 0.0
        %v4111 = vmax.f32 %v4099, 0.0
        %v4112 = vmax.f32 %v4100, 0.0
        %v4113 = vadd.f32 %v4101, %v3166
        %v4114 = vadd.f32 %v4102, %v3167
        %v4115 = vadd.f32 %v4103, %v3168
        %v4116 = vadd.f32 %v4104, %v3169
        %v4117 = vadd.f32 %v4105, %v3170
        %v4118 = vadd.f32 %v4106, %v3171
        %v4119 = vadd.f32 %v4107, %v3172
        %v4120 = vadd.f32 %v4108, %v3173
        %v4121 = vadd.f32 %v4109, %v3174
        %v4122 = vadd.f32 %v4110, %v3175
        %v4123 = vadd.f32 %v4111, %v3176
        %v4124 = vadd.f32 %v4112, %v3177
        %s4125 = scalar_lea.vmem %s4, 2
        %v4126 = vld [vmem:[%s4125] sm:$0x3]
        %v4129 = vrot.slane %v4123, 7
        %v4130 = vrot.slane %v4124, 7
        %v4143 = vrot.slane %v4113, 7
        %v4144 = vrot.slane %v4114, 7
        %v4145 = vrot.slane %v4115, 7
        %v4146 = vsel %vm657, %v4143, %v4145
        %v4147 = vrot.slane %v4116, 7
        %v4148 = vsel %vm657, %v4144, %v4147
        %v4149 = vrot.slane %v4117, 7
        %v4150 = vsel %vm657, %v4145, %v4149
        %v4151 = vrot.slane %v4118, 7
        %v4152 = vsel %vm657, %v4147, %v4151
        %v4153 = vrot.slane %v4119, 7
        %v4154 = vsel %vm657, %v4149, %v4153
        %v4155 = vrot.slane %v4120, 7
        %v4156 = vsel %vm657, %v4151, %v4155
        %v4157 = vrot.slane %v4121, 7
        %v4158 = vsel %vm657, %v4153, %v4157
        %v4159 = vrot.slane %v4122, 7
        %v4160 = vsel %vm657, %v4155, %v4159
        %v4161 = vsel %vm657, %v4157, %v4129
        %v4162 = vsel %vm657, %v4159, %v4130
        %v4175 = vsel %vm657, %v4129, %v4143
        %v4176 = vsel %vm657, %v4130, %v4144
        %v4177 = vpack.c.bf16 %v4146, %v4175
        %v4178 = vpack.c.bf16 %v4148, %v4176
        %v4179 = vpack.c.bf16 %v4154, %v4150
        %v4180 = vpack.c.bf16 %v4156, %v4152
        %v4181 = vpack.c.bf16 %v4161, %v4158
        %v4182 = vpack.c.bf16 %v4162, %v4160
        %s4183 = scalar_lea.vmem [#allocation4], 768
        %v4184 = vld [vmem:[%s4183] sm:$0xff]
        %v4185 = vld [vmem:[%s4183 + $0x8] sm:$0xff]
        %v4186 = vld [vmem:[%s4183 + $0x10] sm:$0xff]
        %v4187 = vld [vmem:[%s4183 + $0x18] sm:$0xff]
        %v4188 = vld [vmem:[%s4183 + $0x20] sm:$0xff]
        %v4189 = vld [vmem:[%s4183 + $0x28] sm:$0xff]
        %v4190 = vld [vmem:[%s4183 + $0x30] sm:$0xff]
        %v4191 = vld [vmem:[%s4183 + $0x38] sm:$0xff]
        %v4192 = vld [vmem:[%s4183 + $0x40] sm:$0xff]
        %v4193 = vld [vmem:[%s4183 + $0x48] sm:$0xff]
        %v4194 = vld [vmem:[%s4183 + $0x50] sm:$0xff]
        %v4195 = vld [vmem:[%s4183 + $0x58] sm:$0xff]
        %v4196 = vld [vmem:[%s4183 + $0x60] sm:$0xff]
        %v4197 = vld [vmem:[%s4183 + $0x68] sm:$0xff]
        %v4198 = vld [vmem:[%s4183 + $0x70] sm:$0xff]
        %v4199 = vld [vmem:[%s4183 + $0x78] sm:$0xff]
        %v4200 = vld [vmem:[%s4183 + $0x80] sm:$0xff]
        %v4201 = vld [vmem:[%s4183 + $0x88] sm:$0xff]
        %v4202 = vld [vmem:[%s4183 + $0x90] sm:$0xff]
        %v4203 = vld [vmem:[%s4183 + $0x98] sm:$0xff]
        %v4204 = vld [vmem:[%s4183 + $0xa0] sm:$0xff]
        %v4205 = vld [vmem:[%s4183 + $0xa8] sm:$0xff]
        %v4206 = vld [vmem:[%s4183 + $0xb0] sm:$0xff]
        %v4207 = vld [vmem:[%s4183 + $0xb8] sm:$0xff]
        %v4208 = vld [vmem:[%s4183 + $0xc0] sm:$0xff]
        %v4209 = vld [vmem:[%s4183 + $0xc8] sm:$0xff]
        %v4210 = vld [vmem:[%s4183 + $0xd0] sm:$0xff]
        %v4211 = vld [vmem:[%s4183 + $0xd8] sm:$0xff]
        %v4212 = vld [vmem:[%s4183 + $0xe0] sm:$0xff]
        %v4213 = vld [vmem:[%s4183 + $0xe8] sm:$0xff]
        %v4214 = vld [vmem:[%s4183 + $0xf0] sm:$0xff]
        %v4215 = vld [vmem:[%s4183 + $0xf8] sm:$0xff]
        %v4216 = vpack.c.bf16 %v4115, %v4113
        %v4217 = vpack.c.bf16 %v4116, %v4114
        %v4218 = vpack.c.bf16 %v4119, %v4117
        %v4219 = vpack.c.bf16 %v4120, %v4118
        %v4220 = vpack.c.bf16 %v4123, %v4121
        %v4221 = vpack.c.bf16 %v4124, %v4122
        %s4222 = scalar_lea.vmem [#allocation4], 1024
        %v4223 = vld [vmem:[%s4222] sm:$0xff]
        %v4224 = vld [vmem:[%s4222 + $0x8] sm:$0xff]
        %v4225 = vld [vmem:[%s4222 + $0x10] sm:$0xff]
        %v4226 = vld [vmem:[%s4222 + $0x18] sm:$0xff]
        %v4227 = vld [vmem:[%s4222 + $0x20] sm:$0xff]
        %v4228 = vld [vmem:[%s4222 + $0x28] sm:$0xff]
        %v4229 = vld [vmem:[%s4222 + $0x30] sm:$0xff]
        %v4230 = vld [vmem:[%s4222 + $0x38] sm:$0xff]
        %v4231 = vld [vmem:[%s4222 + $0x40] sm:$0xff]
        %v4232 = vld [vmem:[%s4222 + $0x48] sm:$0xff]
        %v4233 = vld [vmem:[%s4222 + $0x50] sm:$0xff]
        %v4234 = vld [vmem:[%s4222 + $0x58] sm:$0xff]
        %v4235 = vld [vmem:[%s4222 + $0x60] sm:$0xff]
        %v4236 = vld [vmem:[%s4222 + $0x68] sm:$0xff]
        %v4237 = vld [vmem:[%s4222 + $0x70] sm:$0xff]
        %v4238 = vld [vmem:[%s4222 + $0x78] sm:$0xff]
        %v4239 = vld [vmem:[%s4222 + $0x80] sm:$0xff]
        %v4240 = vld [vmem:[%s4222 + $0x88] sm:$0xff]
        %v4241 = vld [vmem:[%s4222 + $0x90] sm:$0xff]
        %v4242 = vld [vmem:[%s4222 + $0x98] sm:$0xff]
        %v4243 = vld [vmem:[%s4222 + $0xa0] sm:$0xff]
        %v4244 = vld [vmem:[%s4222 + $0xa8] sm:$0xff]
        %v4245 = vld [vmem:[%s4222 + $0xb0] sm:$0xff]
        %v4246 = vld [vmem:[%s4222 + $0xb8] sm:$0xff]
        %v4247 = vld [vmem:[%s4222 + $0xc0] sm:$0xff]
        %v4248 = vld [vmem:[%s4222 + $0xc8] sm:$0xff]
        %v4249 = vld [vmem:[%s4222 + $0xd0] sm:$0xff]
        %v4250 = vld [vmem:[%s4222 + $0xd8] sm:$0xff]
        %v4251 = vld [vmem:[%s4222 + $0xe0] sm:$0xff]
        %v4252 = vld [vmem:[%s4222 + $0xe8] sm:$0xff]
        %v4253 = vld [vmem:[%s4222 + $0xf0] sm:$0xff]
        %v4254 = vld [vmem:[%s4222 + $0xf8] sm:$0xff]
        %v4287 = vunpack.c.l.b16 %v4223
        %v4288 = vunpack.c.h.b16 %v4223
        %v4289 = vunpack.c.l.b16 %v4224
        %v4290 = vunpack.c.h.b16 %v4224
        %v4291 = vunpack.c.l.b16 %v4225
        %v4292 = vunpack.c.h.b16 %v4225
        %v4293 = vunpack.c.l.b16 %v4226
        %v4294 = vunpack.c.h.b16 %v4226
        %v4295 = vunpack.c.l.b16 %v4227
        %v4296 = vunpack.c.h.b16 %v4227
        %v4297 = vunpack.c.l.b16 %v4228
        %v4298 = vunpack.c.h.b16 %v4228
        %v4299 = vunpack.c.l.b16 %v4229
        %v4300 = vunpack.c.h.b16 %v4229
        %v4301 = vunpack.c.l.b16 %v4230
        %v4302 = vunpack.c.h.b16 %v4230
        %v4303 = vunpack.c.l.b16 %v4231
        %v4304 = vunpack.c.h.b16 %v4231
        %v4305 = vunpack.c.l.b16 %v4232
        %v4306 = vunpack.c.h.b16 %v4232
        %v4307 = vunpack.c.l.b16 %v4233
        %v4308 = vunpack.c.h.b16 %v4233
        %v4309 = vunpack.c.l.b16 %v4234
        %v4310 = vunpack.c.h.b16 %v4234
        %v4311 = vunpack.c.l.b16 %v4235
        %v4312 = vunpack.c.h.b16 %v4235
        %v4313 = vunpack.c.l.b16 %v4236
        %v4314 = vunpack.c.h.b16 %v4236
        %v4315 = vunpack.c.l.b16 %v4237
        %v4316 = vunpack.c.h.b16 %v4237
        %v4317 = vunpack.c.l.b16 %v4238
        %v4318 = vunpack.c.h.b16 %v4238
        %v4319 = vunpack.c.l.b16 %v4239
        %v4320 = vunpack.c.h.b16 %v4239
        %v4321 = vunpack.c.l.b16 %v4240
        %v4322 = vunpack.c.h.b16 %v4240
        %v4323 = vunpack.c.l.b16 %v4241
        %v4324 = vunpack.c.h.b16 %v4241
        %v4325 = vunpack.c.l.b16 %v4242
        %v4326 = vunpack.c.h.b16 %v4242
        %v4327 = vunpack.c.l.b16 %v4243
        %v4328 = vunpack.c.h.b16 %v4243
        %v4329 = vunpack.c.l.b16 %v4244
        %v4330 = vunpack.c.h.b16 %v4244
        %v4331 = vunpack.c.l.b16 %v4245
        %v4332 = vunpack.c.h.b16 %v4245
        %v4333 = vunpack.c.l.b16 %v4246
        %v4334 = vunpack.c.h.b16 %v4246
        %v4335 = vunpack.c.l.b16 %v4247
        %v4336 = vunpack.c.h.b16 %v4247
        %v4337 = vunpack.c.l.b16 %v4248
        %v4338 = vunpack.c.h.b16 %v4248
        %v4339 = vunpack.c.l.b16 %v4249
        %v4340 = vunpack.c.h.b16 %v4249
        %v4341 = vunpack.c.l.b16 %v4250
        %v4342 = vunpack.c.h.b16 %v4250
        %v4343 = vunpack.c.l.b16 %v4251
        %v4344 = vunpack.c.h.b16 %v4251
        %v4345 = vunpack.c.l.b16 %v4252
        %v4346 = vunpack.c.h.b16 %v4252
        %v4347 = vunpack.c.l.b16 %v4253
        %v4348 = vunpack.c.h.b16 %v4253
        %v4349 = vunpack.c.l.b16 %v4254
        %v4350 = vunpack.c.h.b16 %v4254
        %v4351 = vpack.c.b16 %v4289, %v4287
        %v4352 = vpack.c.b16 %v4290, %v4288
        %v4353 = vpack.c.b16 %v4293, %v4291
        %v4354 = vpack.c.b16 %v4294, %v4292
        %v4355 = vpack.c.b16 %v4297, %v4295
        %v4356 = vpack.c.b16 %v4298, %v4296
        %v4357 = vpack.c.b16 %v4301, %v4299
        %v4358 = vpack.c.b16 %v4302, %v4300
        %v4359 = vpack.c.b16 %v4305, %v4303
        %v4360 = vpack.c.b16 %v4306, %v4304
        %v4361 = vpack.c.b16 %v4309, %v4307
        %v4362 = vpack.c.b16 %v4310, %v4308
        %v4363 = vpack.c.b16 %v4313, %v4311
        %v4364 = vpack.c.b16 %v4314, %v4312
        %v4365 = vpack.c.b16 %v4317, %v4315
        %v4366 = vpack.c.b16 %v4318, %v4316
        %v4367 = vpack.c.b16 %v4321, %v4319
        %v4368 = vpack.c.b16 %v4322, %v4320
        %v4369 = vpack.c.b16 %v4325, %v4323
        %v4370 = vpack.c.b16 %v4326, %v4324
        %v4371 = vpack.c.b16 %v4329, %v4327
        %v4372 = vpack.c.b16 %v4330, %v4328
        %v4373 = vpack.c.b16 %v4333, %v4331
        %v4374 = vpack.c.b16 %v4334, %v4332
        %v4375 = vpack.c.b16 %v4337, %v4335
        %v4376 = vpack.c.b16 %v4338, %v4336
        %v4377 = vpack.c.b16 %v4341, %v4339
        %v4378 = vpack.c.b16 %v4342, %v4340
        %v4379 = vpack.c.b16 %v4345, %v4343
        %v4380 = vpack.c.b16 %v4346, %v4344
        %v4381 = vpack.c.b16 %v4349, %v4347
        %v4382 = vpack.c.b16 %v4350, %v4348
        %4415 = vmatprep.subr.bf16.mxu0 %v4352
        %4416 = vmatpush1.bf16.msra.mxu0 %v4351
        %4417 = vmatprep.subr.bf16.mxu0 %v4354
        %4418 = vmatpush1.bf16.msra.mxu0 %v4353
        %4419 = vmatprep.subr.bf16.mxu0 %v4356
        %4420 = vmatpush1.bf16.msra.mxu0 %v4355
        %4421 = vmatprep.subr.bf16.mxu0 %v4358
        %4422 = vmatpush1.bf16.msra.mxu0 %v4357
        %4423 = vmatprep.subr.bf16.mxu0 %v4360
        %4424 = vmatpush1.bf16.msra.mxu0 %v4359
        %4425 = vmatprep.subr.bf16.mxu0 %v4362
        %4426 = vmatpush1.bf16.msra.mxu0 %v4361
        %4427 = vmatprep.subr.bf16.mxu0 %v4364
        %4428 = vmatpush1.bf16.msra.mxu0 %v4363
        %4429 = vmatprep.subr.bf16.mxu0 %v4366
        %4430 = vmatpush1.bf16.msra.mxu0 %v4365
        %4431 = vmatprep.subr.bf16.mxu0 %v4368
        %4432 = vmatpush1.bf16.msra.mxu0 %v4367
        %4433 = vmatprep.subr.bf16.mxu0 %v4370
        %4434 = vmatpush1.bf16.msra.mxu0 %v4369
        %4435 = vmatprep.subr.bf16.mxu0 %v4372
        %4436 = vmatpush1.bf16.msra.mxu0 %v4371
        %4437 = vmatprep.subr.bf16.mxu0 %v4374
        %4438 = vmatpush1.bf16.msra.mxu0 %v4373
        %4439 = vmatprep.subr.bf16.mxu0 %v4376
        %4440 = vmatpush1.bf16.msra.mxu0 %v4375
        %4441 = vmatprep.subr.bf16.mxu0 %v4378
        %4442 = vmatpush1.bf16.msra.mxu0 %v4377
        %4443 = vmatprep.subr.bf16.mxu0 %v4380
        %4444 = vmatpush1.bf16.msra.mxu0 %v4379
        %4445 = vmatprep.subr.bf16.mxu0 %v4382
        %4446 = vmatpush1.bf16.msra.mxu0 %v4381
        %4447 = vmatprep.mubr.bf16.mxu0 %v4217
        %4448 = vmatmul.mubr.bf16.gmra.mrb[0].mxu0 %v4216
        %v4449 = vpop.f32.mrb[0].mxu0
        %v4450 = vadd.f32 0.0, %v4449
        %v4451 = vpop.f32.mrb[0].mxu0
        %v4452 = vadd.f32 0.0, %v4451
        %v4453 = vpop.f32.mrb[0].mxu0
        %v4454 = vadd.f32 0.0, %v4453
        %v4455 = vpop.f32.mrb[0].mxu0
        %v4456 = vadd.f32 0.0, %v4455
        %4457 = vmatprep.mubr.bf16.mxu0 %v4219
        %4458 = vmatmul.mubr.bf16.gmra.mrb[0].mxu0 %v4218
        %v4459 = vpop.f32.mrb[0].mxu0
        %v4460 = vadd.f32 0.0, %v4459
        %v4461 = vpop.f32.mrb[0].mxu0
        %v4462 = vadd.f32 0.0, %v4461
        %v4463 = vpop.f32.mrb[0].mxu0
        %v4464 = vadd.f32 0.0, %v4463
        %v4465 = vpop.f32.mrb[0].mxu0
        %v4466 = vadd.f32 0.0, %v4465
        %4467 = vmatprep.mubr.bf16.mxu0 %v4221
        %4468 = vmatmul.mubr.bf16.gmra.mrb[0].mxu0 %v4220
        %v4469 = vpop.f32.mrb[0].mxu0
        %v4470 = vadd.f32 0.0, %v4469
        %v4471 = vpop.f32.mrb[0].mxu0
        %v4472 = vadd.f32 0.0, %v4471
        %v4473 = vpop.f32.mrb[0].mxu0
        %v4474 = vadd.f32 0.0, %v4473
        %v4475 = vpop.f32.mrb[0].mxu0
        %v4476 = vadd.f32 0.0, %v4475
        %4477 = vdwg.mxu0
        %v4510 = vunpack.c.l.b16 %v4184
        %v4511 = vunpack.c.h.b16 %v4184
        %v4512 = vunpack.c.l.b16 %v4185
        %v4513 = vunpack.c.h.b16 %v4185
        %v4514 = vunpack.c.l.b16 %v4186
        %v4515 = vunpack.c.h.b16 %v4186
        %v4516 = vunpack.c.l.b16 %v4187
        %v4517 = vunpack.c.h.b16 %v4187
        %v4518 = vunpack.c.l.b16 %v4188
        %v4519 = vunpack.c.h.b16 %v4188
        %v4520 = vunpack.c.l.b16 %v4189
        %v4521 = vunpack.c.h.b16 %v4189
        %v4522 = vunpack.c.l.b16 %v4190
        %v4523 = vunpack.c.h.b16 %v4190
        %v4524 = vunpack.c.l.b16 %v4191
        %v4525 = vunpack.c.h.b16 %v4191
        %v4526 = vunpack.c.l.b16 %v4192
        %v4527 = vunpack.c.h.b16 %v4192
        %v4528 = vunpack.c.l.b16 %v4193
        %v4529 = vunpack.c.h.b16 %v4193
        %v4530 = vunpack.c.l.b16 %v4194
        %v4531 = vunpack.c.h.b16 %v4194
        %v4532 = vunpack.c.l.b16 %v4195
        %v4533 = vunpack.c.h.b16 %v4195
        %v4534 = vunpack.c.l.b16 %v4196
        %v4535 = vunpack.c.h.b16 %v4196
        %v4536 = vunpack.c.l.b16 %v4197
        %v4537 = vunpack.c.h.b16 %v4197
        %v4538 = vunpack.c.l.b16 %v4198
        %v4539 = vunpack.c.h.b16 %v4198
        %v4540 = vunpack.c.l.b16 %v4199
        %v4541 = vunpack.c.h.b16 %v4199
        %v4542 = vunpack.c.l.b16 %v4200
        %v4543 = vunpack.c.h.b16 %v4200
        %v4544 = vunpack.c.l.b16 %v4201
        %v4545 = vunpack.c.h.b16 %v4201
        %v4546 = vunpack.c.l.b16 %v4202
        %v4547 = vunpack.c.h.b16 %v4202
        %v4548 = vunpack.c.l.b16 %v4203
        %v4549 = vunpack.c.h.b16 %v4203
        %v4550 = vunpack.c.l.b16 %v4204
        %v4551 = vunpack.c.h.b16 %v4204
        %v4552 = vunpack.c.l.b16 %v4205
        %v4553 = vunpack.c.h.b16 %v4205
        %v4554 = vunpack.c.l.b16 %v4206
        %v4555 = vunpack.c.h.b16 %v4206
        %v4556 = vunpack.c.l.b16 %v4207
        %v4557 = vunpack.c.h.b16 %v4207
        %v4558 = vunpack.c.l.b16 %v4208
        %v4559 = vunpack.c.h.b16 %v4208
        %v4560 = vunpack.c.l.b16 %v4209
        %v4561 = vunpack.c.h.b16 %v4209
        %v4562 = vunpack.c.l.b16 %v4210
        %v4563 = vunpack.c.h.b16 %v4210
        %v4564 = vunpack.c.l.b16 %v4211
        %v4565 = vunpack.c.h.b16 %v4211
        %v4566 = vunpack.c.l.b16 %v4212
        %v4567 = vunpack.c.h.b16 %v4212
        %v4568 = vunpack.c.l.b16 %v4213
        %v4569 = vunpack.c.h.b16 %v4213
        %v4570 = vunpack.c.l.b16 %v4214
        %v4571 = vunpack.c.h.b16 %v4214
        %v4572 = vunpack.c.l.b16 %v4215
        %v4573 = vunpack.c.h.b16 %v4215
        %v4574 = vpack.c.b16 %v4512, %v4510
        %v4575 = vpack.c.b16 %v4513, %v4511
        %v4576 = vpack.c.b16 %v4516, %v4514
        %v4577 = vpack.c.b16 %v4517, %v4515
        %v4578 = vpack.c.b16 %v4520, %v4518
        %v4579 = vpack.c.b16 %v4521, %v4519
        %v4580 = vpack.c.b16 %v4524, %v4522
        %v4581 = vpack.c.b16 %v4525, %v4523
        %v4582 = vpack.c.b16 %v4528, %v4526
        %v4583 = vpack.c.b16 %v4529, %v4527
        %v4584 = vpack.c.b16 %v4532, %v4530
        %v4585 = vpack.c.b16 %v4533, %v4531
        %v4586 = vpack.c.b16 %v4536, %v4534
        %v4587 = vpack.c.b16 %v4537, %v4535
        %v4588 = vpack.c.b16 %v4540, %v4538
        %v4589 = vpack.c.b16 %v4541, %v4539
        %v4590 = vpack.c.b16 %v4544, %v4542
        %v4591 = vpack.c.b16 %v4545, %v4543
        %v4592 = vpack.c.b16 %v4548, %v4546
        %v4593 = vpack.c.b16 %v4549, %v4547
        %v4594 = vpack.c.b16 %v4552, %v4550
        %v4595 = vpack.c.b16 %v4553, %v4551
        %v4596 = vpack.c.b16 %v4556, %v4554
        %v4597 = vpack.c.b16 %v4557, %v4555
        %v4598 = vpack.c.b16 %v4560, %v4558
        %v4599 = vpack.c.b16 %v4561, %v4559
        %v4600 = vpack.c.b16 %v4564, %v4562
        %v4601 = vpack.c.b16 %v4565, %v4563
        %v4602 = vpack.c.b16 %v4568, %v4566
        %v4603 = vpack.c.b16 %v4569, %v4567
        %v4604 = vpack.c.b16 %v4572, %v4570
        %v4605 = vpack.c.b16 %v4573, %v4571
        %4638 = vmatprep.subr.bf16.mxu0 %v4575
        %4639 = vmatpush1.bf16.msra.mxu0 %v4574
        %4640 = vmatprep.subr.bf16.mxu0 %v4577
        %4641 = vmatpush1.bf16.msra.mxu0 %v4576
        %4642 = vmatprep.subr.bf16.mxu0 %v4579
        %4643 = vmatpush1.bf16.msra.mxu0 %v4578
        %4644 = vmatprep.subr.bf16.mxu0 %v4581
        %4645 = vmatpush1.bf16.msra.mxu0 %v4580
        %4646 = vmatprep.subr.bf16.mxu0 %v4583
        %4647 = vmatpush1.bf16.msra.mxu0 %v4582
        %4648 = vmatprep.subr.bf16.mxu0 %v4585
        %4649 = vmatpush1.bf16.msra.mxu0 %v4584
        %4650 = vmatprep.subr.bf16.mxu0 %v4587
        %4651 = vmatpush1.bf16.msra.mxu0 %v4586
        %4652 = vmatprep.subr.bf16.mxu0 %v4589
        %4653 = vmatpush1.bf16.msra.mxu0 %v4588
        %4654 = vmatprep.subr.bf16.mxu0 %v4591
        %4655 = vmatpush1.bf16.msra.mxu0 %v4590
        %4656 = vmatprep.subr.bf16.mxu0 %v4593
        %4657 = vmatpush1.bf16.msra.mxu0 %v4592
        %4658 = vmatprep.subr.bf16.mxu0 %v4595
        %4659 = vmatpush1.bf16.msra.mxu0 %v4594
        %4660 = vmatprep.subr.bf16.mxu0 %v4597
        %4661 = vmatpush1.bf16.msra.mxu0 %v4596
        %4662 = vmatprep.subr.bf16.mxu0 %v4599
        %4663 = vmatpush1.bf16.msra.mxu0 %v4598
        %4664 = vmatprep.subr.bf16.mxu0 %v4601
        %4665 = vmatpush1.bf16.msra.mxu0 %v4600
        %4666 = vmatprep.subr.bf16.mxu0 %v4603
        %4667 = vmatpush1.bf16.msra.mxu0 %v4602
        %4668 = vmatprep.subr.bf16.mxu0 %v4605
        %4669 = vmatpush1.bf16.msra.mxu0 %v4604
        %4670 = vmatprep.mubr.bf16.mxu0 %v4178
        %4671 = vmatmul.mubr.bf16.gmra.mrb[0].mxu0 %v4177
        %v4672 = vpop.f32.mrb[0].mxu0
        %v4673 = vadd.f32 %v4450, %v4672
        %v4674 = vpop.f32.mrb[0].mxu0
        %v4675 = vadd.f32 %v4452, %v4674
        %v4676 = vpop.f32.mrb[0].mxu0
        %v4677 = vadd.f32 %v4454, %v4676
        %v4678 = vpop.f32.mrb[0].mxu0
        %v4679 = vadd.f32 %v4456, %v4678
        %4680 = vmatprep.mubr.bf16.mxu0 %v4180
        %4681 = vmatmul.mubr.bf16.gmra.mrb[0].mxu0 %v4179
        %v4682 = vpop.f32.mrb[0].mxu0
        %v4683 = vadd.f32 %v4460, %v4682
        %v4684 = vpop.f32.mrb[0].mxu0
        %v4685 = vadd.f32 %v4462, %v4684
        %v4686 = vpop.f32.mrb[0].mxu0
        %v4687 = vadd.f32 %v4464, %v4686
        %v4688 = vpop.f32.mrb[0].mxu0
        %v4689 = vadd.f32 %v4466, %v4688
        %4690 = vmatprep.mubr.bf16.mxu0 %v4182
        %4691 = vmatmul.mubr.bf16.gmra.mrb[0].mxu0 %v4181
        %v4692 = vpop.f32.mrb[0].mxu0
        %v4693 = vadd.f32 %v4470, %v4692
        %v4694 = vpop.f32.mrb[0].mxu0
        %v4695 = vadd.f32 %v4472, %v4694
        %v4696 = vpop.f32.mrb[0].mxu0
        %v4697 = vadd.f32 %v4474, %v4696
        %v4698 = vpop.f32.mrb[0].mxu0
        %v4699 = vadd.f32 %v4476, %v4698
        %4700 = vdwg.mxu0
        %v4701 = vrot.slane %v4113, 1
        %v4702 = vrot.slane %v4115, 1
        %v4703 = vsel %vm1215, %v4701, %v4702
        %v4704 = vrot.slane %v4114, 1
        %v4705 = vrot.slane %v4116, 1
        %v4706 = vsel %vm1215, %v4704, %v4705
        %v4707 = vrot.slane %v4117, 1
        %v4708 = vsel %vm1215, %v4702, %v4707
        %v4709 = vrot.slane %v4118, 1
        %v4710 = vsel %vm1215, %v4705, %v4709
        %v4711 = vrot.slane %v4119, 1
        %v4712 = vsel %vm1215, %v4707, %v4711
        %v4713 = vrot.slane %v4120, 1
        %v4714 = vsel %vm1215, %v4709, %v4713
        %v4715 = vrot.slane %v4121, 1
        %v4716 = vsel %vm1215, %v4711, %v4715
        %v4717 = vrot.slane %v4122, 1
        %v4718 = vsel %vm1215, %v4713, %v4717
        %v4719 = vrot.slane %v4123, 1
        %v4720 = vsel %vm1215, %v4715, %v4719
        %v4721 = vrot.slane %v4124, 1
        %v4722 = vsel %vm1215, %v4717, %v4721
        %v4737 = vsel %vm1215, %v4719, %v4701
        %v4738 = vsel %vm1215, %v4721, %v4704
        %v4739 = vpack.c.bf16 %v4708, %v4703
        %v4740 = vpack.c.bf16 %v4710, %v4706
        %v4741 = vpack.c.bf16 %v4716, %v4712
        %v4742 = vpack.c.bf16 %v4718, %v4714
        %v4743 = vpack.c.bf16 %v4737, %v4720
        %v4744 = vpack.c.bf16 %v4738, %v4722
        %s4745 = scalar_lea.vmem [#allocation4], 1280
        %v4746 = vld [vmem:[%s4745] sm:$0xff]
        %v4747 = vld [vmem:[%s4745 + $0x8] sm:$0xff]
        %v4748 = vld [vmem:[%s4745 + $0x10] sm:$0xff]
        %v4749 = vld [vmem:[%s4745 + $0x18] sm:$0xff]
        %v4750 = vld [vmem:[%s4745 + $0x20] sm:$0xff]
        %v4751 = vld [vmem:[%s4745 + $0x28] sm:$0xff]
        %v4752 = vld [vmem:[%s4745 + $0x30] sm:$0xff]
        %v4753 = vld [vmem:[%s4745 + $0x38] sm:$0xff]
        %v4754 = vld [vmem:[%s4745 + $0x40] sm:$0xff]
        %v4755 = vld [vmem:[%s4745 + $0x48] sm:$0xff]
        %v4756 = vld [vmem:[%s4745 + $0x50] sm:$0xff]
        %v4757 = vld [vmem:[%s4745 + $0x58] sm:$0xff]
        %v4758 = vld [vmem:[%s4745 + $0x60] sm:$0xff]
        %v4759 = vld [vmem:[%s4745 + $0x68] sm:$0xff]
        %v4760 = vld [vmem:[%s4745 + $0x70] sm:$0xff]
        %v4761 = vld [vmem:[%s4745 + $0x78] sm:$0xff]
        %v4762 = vld [vmem:[%s4745 + $0x80] sm:$0xff]
        %v4763 = vld [vmem:[%s4745 + $0x88] sm:$0xff]
        %v4764 = vld [vmem:[%s4745 + $0x90] sm:$0xff]
        %v4765 = vld [vmem:[%s4745 + $0x98] sm:$0xff]
        %v4766 = vld [vmem:[%s4745 + $0xa0] sm:$0xff]
        %v4767 = vld [vmem:[%s4745 + $0xa8] sm:$0xff]
        %v4768 = vld [vmem:[%s4745 + $0xb0] sm:$0xff]
        %v4769 = vld [vmem:[%s4745 + $0xb8] sm:$0xff]
        %v4770 = vld [vmem:[%s4745 + $0xc0] sm:$0xff]
        %v4771 = vld [vmem:[%s4745 + $0xc8] sm:$0xff]
        %v4772 = vld [vmem:[%s4745 + $0xd0] sm:$0xff]
        %v4773 = vld [vmem:[%s4745 + $0xd8] sm:$0xff]
        %v4774 = vld [vmem:[%s4745 + $0xe0] sm:$0xff]
        %v4775 = vld [vmem:[%s4745 + $0xe8] sm:$0xff]
        %v4776 = vld [vmem:[%s4745 + $0xf0] sm:$0xff]
        %v4777 = vld [vmem:[%s4745 + $0xf8] sm:$0xff]
        %v4810 = vunpack.c.l.b16 %v4746
        %v4811 = vunpack.c.h.b16 %v4746
        %v4812 = vunpack.c.l.b16 %v4747
        %v4813 = vunpack.c.h.b16 %v4747
        %v4814 = vunpack.c.l.b16 %v4748
        %v4815 = vunpack.c.h.b16 %v4748
        %v4816 = vunpack.c.l.b16 %v4749
        %v4817 = vunpack.c.h.b16 %v4749
        %v4818 = vunpack.c.l.b16 %v4750
        %v4819 = vunpack.c.h.b16 %v4750
        %v4820 = vunpack.c.l.b16 %v4751
        %v4821 = vunpack.c.h.b16 %v4751
        %v4822 = vunpack.c.l.b16 %v4752
        %v4823 = vunpack.c.h.b16 %v4752
        %v4824 = vunpack.c.l.b16 %v4753
        %v4825 = vunpack.c.h.b16 %v4753
        %v4826 = vunpack.c.l.b16 %v4754
        %v4827 = vunpack.c.h.b16 %v4754
        %v4828 = vunpack.c.l.b16 %v4755
        %v4829 = vunpack.c.h.b16 %v4755
        %v4830 = vunpack.c.l.b16 %v4756
        %v4831 = vunpack.c.h.b16 %v4756
        %v4832 = vunpack.c.l.b16 %v4757
        %v4833 = vunpack.c.h.b16 %v4757
        %v4834 = vunpack.c.l.b16 %v4758
        %v4835 = vunpack.c.h.b16 %v4758
        %v4836 = vunpack.c.l.b16 %v4759
        %v4837 = vunpack.c.h.b16 %v4759
        %v4838 = vunpack.c.l.b16 %v4760
        %v4839 = vunpack.c.h.b16 %v4760
        %v4840 = vunpack.c.l.b16 %v4761
        %v4841 = vunpack.c.h.b16 %v4761
        %v4842 = vunpack.c.l.b16 %v4762
        %v4843 = vunpack.c.h.b16 %v4762
        %v4844 = vunpack.c.l.b16 %v4763
        %v4845 = vunpack.c.h.b16 %v4763
        %v4846 = vunpack.c.l.b16 %v4764
        %v4847 = vunpack.c.h.b16 %v4764
        %v4848 = vunpack.c.l.b16 %v4765
        %v4849 = vunpack.c.h.b16 %v4765
        %v4850 = vunpack.c.l.b16 %v4766
        %v4851 = vunpack.c.h.b16 %v4766
        %v4852 = vunpack.c.l.b16 %v4767
        %v4853 = vunpack.c.h.b16 %v4767
        %v4854 = vunpack.c.l.b16 %v4768
        %v4855 = vunpack.c.h.b16 %v4768
        %v4856 = vunpack.c.l.b16 %v4769
        %v4857 = vunpack.c.h.b16 %v4769
        %v4858 = vunpack.c.l.b16 %v4770
        %v4859 = vunpack.c.h.b16 %v4770
        %v4860 = vunpack.c.l.b16 %v4771
        %v4861 = vunpack.c.h.b16 %v4771
        %v4862 = vunpack.c.l.b16 %v4772
        %v4863 = vunpack.c.h.b16 %v4772
        %v4864 = vunpack.c.l.b16 %v4773
        %v4865 = vunpack.c.h.b16 %v4773
        %v4866 = vunpack.c.l.b16 %v4774
        %v4867 = vunpack.c.h.b16 %v4774
        %v4868 = vunpack.c.l.b16 %v4775
        %v4869 = vunpack.c.h.b16 %v4775
        %v4870 = vunpack.c.l.b16 %v4776
        %v4871 = vunpack.c.h.b16 %v4776
        %v4872 = vunpack.c.l.b16 %v4777
        %v4873 = vunpack.c.h.b16 %v4777
        %v4874 = vpack.c.b16 %v4812, %v4810
        %v4875 = vpack.c.b16 %v4813, %v4811
        %v4876 = vpack.c.b16 %v4816, %v4814
        %v4877 = vpack.c.b16 %v4817, %v4815
        %v4878 = vpack.c.b16 %v4820, %v4818
        %v4879 = vpack.c.b16 %v4821, %v4819
        %v4880 = vpack.c.b16 %v4824, %v4822
        %v4881 = vpack.c.b16 %v4825, %v4823
        %v4882 = vpack.c.b16 %v4828, %v4826
        %v4883 = vpack.c.b16 %v4829, %v4827
        %v4884 = vpack.c.b16 %v4832, %v4830
        %v4885 = vpack.c.b16 %v4833, %v4831
        %v4886 = vpack.c.b16 %v4836, %v4834
        %v4887 = vpack.c.b16 %v4837, %v4835
        %v4888 = vpack.c.b16 %v4840, %v4838
        %v4889 = vpack.c.b16 %v4841, %v4839
        %v4890 = vpack.c.b16 %v4844, %v4842
        %v4891 = vpack.c.b16 %v4845, %v4843
        %v4892 = vpack.c.b16 %v4848, %v4846
        %v4893 = vpack.c.b16 %v4849, %v4847
        %v4894 = vpack.c.b16 %v4852, %v4850
        %v4895 = vpack.c.b16 %v4853, %v4851
        %v4896 = vpack.c.b16 %v4856, %v4854
        %v4897 = vpack.c.b16 %v4857, %v4855
        %v4898 = vpack.c.b16 %v4860, %v4858
        %v4899 = vpack.c.b16 %v4861, %v4859
        %v4900 = vpack.c.b16 %v4864, %v4862
        %v4901 = vpack.c.b16 %v4865, %v4863
        %v4902 = vpack.c.b16 %v4868, %v4866
        %v4903 = vpack.c.b16 %v4869, %v4867
        %v4904 = vpack.c.b16 %v4872, %v4870
        %v4905 = vpack.c.b16 %v4873, %v4871
        %4938 = vmatprep.subr.bf16.mxu0 %v4875
        %4939 = vmatpush1.bf16.msra.mxu0 %v4874
        %4940 = vmatprep.subr.bf16.mxu0 %v4877
        %4941 = vmatpush1.bf16.msra.mxu0 %v4876
        %4942 = vmatprep.subr.bf16.mxu0 %v4879
        %4943 = vmatpush1.bf16.msra.mxu0 %v4878
        %4944 = vmatprep.subr.bf16.mxu0 %v4881
        %4945 = vmatpush1.bf16.msra.mxu0 %v4880
        %4946 = vmatprep.subr.bf16.mxu0 %v4883
        %4947 = vmatpush1.bf16.msra.mxu0 %v4882
        %4948 = vmatprep.subr.bf16.mxu0 %v4885
        %4949 = vmatpush1.bf16.msra.mxu0 %v4884
        %4950 = vmatprep.subr.bf16.mxu0 %v4887
        %4951 = vmatpush1.bf16.msra.mxu0 %v4886
        %4952 = vmatprep.subr.bf16.mxu0 %v4889
        %4953 = vmatpush1.bf16.msra.mxu0 %v4888
        %4954 = vmatprep.subr.bf16.mxu0 %v4891
        %4955 = vmatpush1.bf16.msra.mxu0 %v4890
        %4956 = vmatprep.subr.bf16.mxu0 %v4893
        %4957 = vmatpush1.bf16.msra.mxu0 %v4892
        %4958 = vmatprep.subr.bf16.mxu0 %v4895
        %4959 = vmatpush1.bf16.msra.mxu0 %v4894
        %4960 = vmatprep.subr.bf16.mxu0 %v4897
        %4961 = vmatpush1.bf16.msra.mxu0 %v4896
        %4962 = vmatprep.subr.bf16.mxu0 %v4899
        %4963 = vmatpush1.bf16.msra.mxu0 %v4898
        %4964 = vmatprep.subr.bf16.mxu0 %v4901
        %4965 = vmatpush1.bf16.msra.mxu0 %v4900
        %4966 = vmatprep.subr.bf16.mxu0 %v4903
        %4967 = vmatpush1.bf16.msra.mxu0 %v4902
        %4968 = vmatprep.subr.bf16.mxu0 %v4905
        %4969 = vmatpush1.bf16.msra.mxu0 %v4904
        %4970 = vmatprep.mubr.bf16.mxu0 %v4740
        %4971 = vmatmul.mubr.bf16.gmra.mrb[0].mxu0 %v4739
        %v4972 = vpop.f32.mrb[0].mxu0
        %v4973 = vadd.f32 0.0, %v4972
        %v4974 = vpop.f32.mrb[0].mxu0
        %v4975 = vadd.f32 0.0, %v4974
        %v4976 = vpop.f32.mrb[0].mxu0
        %v4977 = vadd.f32 0.0, %v4976
        %v4978 = vpop.f32.mrb[0].mxu0
        %v4979 = vadd.f32 0.0, %v4978
        %4980 = vmatprep.mubr.bf16.mxu0 %v4742
        %4981 = vmatmul.mubr.bf16.gmra.mrb[0].mxu0 %v4741
        %v4982 = vpop.f32.mrb[0].mxu0
        %v4983 = vadd.f32 0.0, %v4982
        %v4984 = vpop.f32.mrb[0].mxu0
        %v4985 = vadd.f32 0.0, %v4984
        %v4986 = vpop.f32.mrb[0].mxu0
        %v4987 = vadd.f32 0.0, %v4986
        %v4988 = vpop.f32.mrb[0].mxu0
        %v4989 = vadd.f32 0.0, %v4988
        %4990 = vmatprep.mubr.bf16.mxu0 %v4744
        %4991 = vmatmul.mubr.bf16.gmra.mrb[0].mxu0 %v4743
        %v4992 = vpop.f32.mrb[0].mxu0
        %v4993 = vadd.f32 0.0, %v4992
        %v4994 = vpop.f32.mrb[0].mxu0
        %v4995 = vadd.f32 0.0, %v4994
        %v4996 = vpop.f32.mrb[0].mxu0
        %v4997 = vadd.f32 0.0, %v4996
        %v4998 = vpop.f32.mrb[0].mxu0
        %v4999 = vadd.f32 0.0, %v4998
        %5000 = vdwg.mxu0
        %v5001 = vadd.f32 %v4673, %v4973
        %v5002 = vadd.f32 %v4675, %v4975
        %v5003 = vadd.f32 %v4677, %v4977
        %v5004 = vadd.f32 %v4679, %v4979
        %v5005 = vadd.f32 %v4683, %v4983
        %v5006 = vadd.f32 %v4685, %v4985
        %v5007 = vadd.f32 %v4687, %v4987
        %v5008 = vadd.f32 %v4689, %v4989
        %v5009 = vadd.f32 %v4693, %v4993
        %v5010 = vadd.f32 %v4695, %v4995
        %v5011 = vadd.f32 %v4697, %v4997
        %v5012 = vadd.f32 %v4699, %v4999
        %v5014 = vlaneseq
        %v5015 = vshrl.u32 %v5014, 7
        %v5016 = vsub.s32 0, %v5015
        %v5017 = vrot.slane %v4126, %v5016
        %v5018 = vlaneseq
        %v5019 = vshrl.u32 %v5018, 7
        %v5020 = vsub.s32 1, %v5019
        %v5021 = vrot.slane %v4126, %v5020
        %v5024 = vadd.f32 %v5001, %v5017
        %v5025 = vadd.f32 %v5002, %v5021
        %v5026 = vadd.f32 %v5003, %v5017
        %v5027 = vadd.f32 %v5004, %v5021
        %v5028 = vadd.f32 %v5005, %v5017
        %v5029 = vadd.f32 %v5006, %v5021
        %v5030 = vadd.f32 %v5007, %v5017
        %v5031 = vadd.f32 %v5008, %v5021
        %v5032 = vadd.f32 %v5009, %v5017
        %v5033 = vadd.f32 %v5010, %v5021
        %v5034 = vadd.f32 %v5011, %v5017
        %v5035 = vadd.f32 %v5012, %v5021
        %v5036 = vsel %vm1557, %v5024, 0.0
        %v5037 = vsel %vm1557, %v5025, 0.0
        %v5038 = vsel %vm1558, %v5026, 0.0
        %v5039 = vsel %vm1558, %v5027, 0.0
        %v5040 = vsel %vm1559, %v5028, 0.0
        %v5041 = vsel %vm1559, %v5029, 0.0
        %v5042 = vsel %vm1560, %v5030, 0.0
        %v5043 = vsel %vm1560, %v5031, 0.0
        %v5044 = vsel %vm1561, %v5032, 0.0
        %v5045 = vsel %vm1561, %v5033, 0.0
        %v5046 = vsel %vm1562, %v5034, 0.0
        %v5047 = vsel %vm1562, %v5035, 0.0
        %v5048 = vadd.f32 %v5036, %v5038
        %v5049 = vadd.f32 %v5048, %v5040
        %v5050 = vrot.slane %v5049, 4
        %v5051 = vadd.f32 %v5049, %v5050
        %v5052 = vrot.slane %v5051, 2
        %v5053 = vadd.f32 %v5051, %v5052
        %v5054 = vrot.slane %v5053, 1
        %v5055 = vadd.f32 %v5053, %v5054
        %v5056 = vadd.f32 %v5037, %v5039
        %v5057 = vadd.f32 %v5056, %v5041
        %v5058 = vrot.slane %v5057, 4
        %v5059 = vadd.f32 %v5057, %v5058
        %v5060 = vrot.slane %v5059, 2
        %v5061 = vadd.f32 %v5059, %v5060
        %v5062 = vrot.slane %v5061, 1
        %v5063 = vadd.f32 %v5061, %v5062
        %s5064 = scalar_lea.vmem %s5, 4
        %v5065 = vld [vmem:[%s5064] sm:$0xf]
        %v5068 = vunpack.c.l.s4 1983009808
        %v5069 = vunpack.c.0.s8 %v5068
        %v5070 = vlaneseq
        %v5071 = vshrl.u32 %v5070, 7
        %v5072 = vsub.s32 %v5069, %v5071
        %v5073 = vrot.slane %v5065, %v5072
        %v5074 = vcombine.high %v5073, %v5073
        %v5077 = vmul.f32 %v5055, %v5073
        %v5078 = vmul.f32 %v5063, %v5074
        %v5079 = vsel %vm2550, %v5077, 0.0
        %v5080 = vsel %vm2550, %v5078, 0.0
        %v5081 = vadd.f32 %v5079, %v5080
        %5082 = vadd.xlane.f32.xlu0 %v5081
        %v5083 = vpop.xlane.xlu0 %5082
        %s5084 = scalar_lea.vmem %s6, 2
        %v5085 = vld [vmem:[%s5084] sm:$0x3]
        %v5086 = vadd.f32 %v5083, %v5085
        %v5087 = vmax.f32 %v5086, 0.0
        %s5088 = scalar_lea.vmem %s7, 4
        %v5089 = vld [vmem:[%s5088] sm:$0xf]
        %5091 = vset.pattern.permute.xlu0 0
        %5092 = vperm.xlu0 %5091, %v5087
        %v5093 = vpop.permute.xlu0 %5092
        %v5097 = vunpack.c.l.s4 1983009808
        %v5098 = vunpack.c.0.s8 %v5097
        %v5099 = vlaneseq
        %v5100 = vshrl.u32 %v5099, 7
        %v5101 = vsub.s32 %v5098, %v5100
        %v5102 = vrot.slane %v5089, %v5101
        %v5103 = vcombine.high %v5102, %v5102
        %v5106 = vmul.f32 %v5093, %v5102
        %v5107 = vmul.f32 %v5093, %v5103
        %v5108 = vsel %vm2550, %v5106, 0.0
        %v5109 = vrot.slane %v5108, 4
        %v5110 = vadd.f32 %v5108, %v5109
        %v5111 = vrot.slane %v5110, 2
        %v5112 = vadd.f32 %v5110, %v5111
        %v5113 = vrot.slane %v5112, 1
        %v5114 = vadd.f32 %v5112, %v5113
        %v5115 = vsel %vm2550, %v5107, 0.0
        %v5116 = vrot.slane %v5115, 4
        %v5117 = vadd.f32 %v5115, %v5116
        %v5118 = vrot.slane %v5117, 2
        %v5119 = vadd.f32 %v5117, %v5118
        %v5120 = vrot.slane %v5119, 1
        %v5121 = vadd.f32 %v5119, %v5120
        %s5122 = scalar_lea.vmem %s8, 2
        %v5123 = vld [vmem:[%s5122] sm:$0x3]
        %v5125 = vlaneseq
        %v5126 = vshrl.u32 %v5125, 7
        %v5127 = vsub.s32 0, %v5126
        %v5128 = vrot.slane %v5123, %v5127
        %v5129 = vlaneseq
        %v5130 = vshrl.u32 %v5129, 7
        %v5131 = vsub.s32 1, %v5130
        %v5132 = vrot.slane %v5123, %v5131
        %v5135 = vadd.f32 %v5114, %v5128
        %v5136 = vadd.f32 %v5121, %v5132
        %v5137 = vxor.u32 %v5135, 2147483648
        %v5138 = vxor.u32 %v5136, 2147483648
        %v5139 = vmul.f32 %v5137, 1.442695
        %v5140 = vpow.pop %v5139
        %v5141 = vmul.f32 %v5138, 1.442695
        %v5142 = vpow.pop %v5141
        %v5143 = vadd.f32 %v5140, 1.0
        %v5144 = vadd.f32 %v5142, 1.0
        %v5145 = vrcp.pop %v5143
        %v5146 = vmul.f32 1.0, %v5145
        %v5147 = vrcp.pop %v5144
        %v5148 = vmul.f32 1.0, %v5147
        %v5149 = vlaneseq
        %v5150 = vshrl.u32 %v5149, 7
        %v5151 = vsub.s32 0, %v5150
        %v5152 = vrot.slane %v5146, %v5151
        %v5153 = vlaneseq
        %v5154 = vshrl.u32 %v5153, 7
        %v5155 = vsub.s32 0, %v5154
        %v5156 = vrot.slane %v5148, %v5155
        %v5157 = vadd.f32 %v5042, %v5044
        %v5158 = vadd.f32 %v5157, %v5046
        %v5159 = vrot.slane %v5158, 4
        %v5160 = vadd.f32 %v5158, %v5159
        %v5161 = vrot.slane %v5160, 2
        %v5162 = vadd.f32 %v5160, %v5161
        %v5163 = vrot.slane %v5162, 1
        %v5164 = vadd.f32 %v5162, %v5163
        %v5165 = vadd.f32 %v5043, %v5045
        %v5166 = vadd.f32 %v5165, %v5047
        %v5167 = vrot.slane %v5166, 4
        %v5168 = vadd.f32 %v5166, %v5167
        %v5169 = vrot.slane %v5168, 2
        %v5170 = vadd.f32 %v5168, %v5169
        %v5171 = vrot.slane %v5170, 1
        %v5172 = vadd.f32 %v5170, %v5171
        %v5173 = vmul.f32 %v5164, %v5073
        %v5174 = vmul.f32 %v5172, %v5074
        %v5175 = vsel %vm2550, %v5173, 0.0
        %v5176 = vsel %vm2550, %v5174, 0.0
        %v5177 = vadd.f32 %v5175, %v5176
        %5178 = vadd.xlane.f32.xlu0 %v5177
        %v5179 = vpop.xlane.xlu0 %5178
        %v5180 = vadd.f32 %v5179, %v5085
        %v5181 = vmax.f32 %v5180, 0.0
        %5183 = vset.pattern.permute.xlu0 0
        %5184 = vperm.xlu0 %5183, %v5181
        %v5185 = vpop.permute.xlu0 %5184
        %v5187 = vmul.f32 %v5185, %v5102
        %v5188 = vmul.f32 %v5185, %v5103
        %v5189 = vsel %vm2550, %v5187, 0.0
        %v5190 = vrot.slane %v5189, 4
        %v5191 = vadd.f32 %v5189, %v5190
        %v5192 = vrot.slane %v5191, 2
        %v5193 = vadd.f32 %v5191, %v5192
        %v5194 = vrot.slane %v5193, 1
        %v5195 = vadd.f32 %v5193, %v5194
        %v5196 = vsel %vm2550, %v5188, 0.0
        %v5197 = vrot.slane %v5196, 4
        %v5198 = vadd.f32 %v5196, %v5197
        %v5199 = vrot.slane %v5198, 2
        %v5200 = vadd.f32 %v5198, %v5199
        %v5201 = vrot.slane %v5200, 1
        %v5202 = vadd.f32 %v5200, %v5201
        %v5203 = vadd.f32 %v5195, %v5128
        %v5204 = vadd.f32 %v5202, %v5132
        %v5205 = vxor.u32 %v5203, 2147483648
        %v5206 = vxor.u32 %v5204, 2147483648
        %v5207 = vmul.f32 %v5205, 1.442695
        %v5208 = vpow.pop %v5207
        %v5209 = vmul.f32 %v5206, 1.442695
        %v5210 = vpow.pop %v5209
        %v5211 = vadd.f32 %v5208, 1.0
        %v5212 = vadd.f32 %v5210, 1.0
        %v5213 = vrcp.pop %v5211
        %v5214 = vmul.f32 1.0, %v5213
        %v5215 = vrcp.pop %v5212
        %v5216 = vmul.f32 1.0, %v5215
        %v5217 = vlaneseq
        %v5218 = vshrl.u32 %v5217, 7
        %v5219 = vsub.s32 0, %v5218
        %v5220 = vrot.slane %v5214, %v5219
        %v5221 = vlaneseq
        %v5222 = vshrl.u32 %v5221, 7
        %v5223 = vsub.s32 0, %v5222
        %v5224 = vrot.slane %v5216, %v5223
        %v5225 = vmul.f32 %v5036, %v5152
        %v5226 = vmul.f32 %v5037, %v5156
        %v5227 = vmul.f32 %v5038, %v5152
        %v5228 = vmul.f32 %v5039, %v5156
        %v5229 = vmul.f32 %v5040, %v5152
        %v5230 = vmul.f32 %v5041, %v5156
        %v5231 = vmul.f32 %v5042, %v5220
        %v5232 = vmul.f32 %v5043, %v5224
        %v5233 = vmul.f32 %v5044, %v5220
        %v5234 = vmul.f32 %v5045, %v5224
        %v5235 = vmul.f32 %v5046, %v5220
        %v5236 = vmul.f32 %v5047, %v5224
        %v5237 = vpack.c.bf16 %v5227, %v5225
        %v5238 = vpack.c.bf16 %v5228, %v5226
        %v5239 = vpack.c.bf16 %v5231, %v5229
        %v5240 = vpack.c.bf16 %v5232, %v5230
        %v5241 = vpack.c.bf16 %v5235, %v5233
        %v5242 = vpack.c.bf16 %v5236, %v5234
        %s5243 = scalar_lea.vmem %s9, 128
        %v5244 = vld [vmem:[%s5243] sm:$0xf]
        %v5245 = vld [vmem:[%s5243 + $0x4] sm:$0xf]
        %v5246 = vld [vmem:[%s5243 + $0x8] sm:$0xf]
        %v5247 = vld [vmem:[%s5243 + $0xc] sm:$0xf]
        %v5248 = vld [vmem:[%s5243 + $0x10] sm:$0xf]
        %v5249 = vld [vmem:[%s5243 + $0x14] sm:$0xf]
        %v5250 = vld [vmem:[%s5243 + $0x18] sm:$0xf]
        %v5251 = vld [vmem:[%s5243 + $0x1c] sm:$0xf]
        %v5252 = vld [vmem:[%s5243 + $0x20] sm:$0xf]
        %v5253 = vld [vmem:[%s5243 + $0x24] sm:$0xf]
        %v5254 = vld [vmem:[%s5243 + $0x28] sm:$0xf]
        %v5255 = vld [vmem:[%s5243 + $0x2c] sm:$0xf]
        %v5256 = vld [vmem:[%s5243 + $0x30] sm:$0xf]
        %v5257 = vld [vmem:[%s5243 + $0x34] sm:$0xf]
        %v5258 = vld [vmem:[%s5243 + $0x38] sm:$0xf]
        %v5259 = vld [vmem:[%s5243 + $0x3c] sm:$0xf]
        %v5260 = vld [vmem:[%s5243 + $0x40] sm:$0xf]
        %v5261 = vld [vmem:[%s5243 + $0x44] sm:$0xf]
        %v5262 = vld [vmem:[%s5243 + $0x48] sm:$0xf]
        %v5263 = vld [vmem:[%s5243 + $0x4c] sm:$0xf]
        %v5264 = vld [vmem:[%s5243 + $0x50] sm:$0xf]
        %v5265 = vld [vmem:[%s5243 + $0x54] sm:$0xf]
        %v5266 = vld [vmem:[%s5243 + $0x58] sm:$0xf]
        %v5267 = vld [vmem:[%s5243 + $0x5c] sm:$0xf]
        %v5268 = vld [vmem:[%s5243 + $0x60] sm:$0xf]
        %v5269 = vld [vmem:[%s5243 + $0x64] sm:$0xf]
        %v5270 = vld [vmem:[%s5243 + $0x68] sm:$0xf]
        %v5271 = vld [vmem:[%s5243 + $0x6c] sm:$0xf]
        %v5272 = vld [vmem:[%s5243 + $0x70] sm:$0xf]
        %v5273 = vld [vmem:[%s5243 + $0x74] sm:$0xf]
        %v5274 = vld [vmem:[%s5243 + $0x78] sm:$0xf]
        %v5275 = vld [vmem:[%s5243 + $0x7c] sm:$0xf]
        %s5276 = scalar_lea.vmem %s10, 1
        %v5277 = vld [vmem:[%s5276] sm:$0x1]
        %v5279 = vlaneseq
        %v5280 = vshrl.u32 %v5279, 7
        %v5281 = vsub.s32 0, %v5280
        %v5282 = vrot.slane %v5277, %v5281
        %v5316 = vunpack.c.l.b16 %v5244
        %v5317 = vunpack.c.l.b16 %v5245
        %v5318 = vunpack.c.l.b16 %v5246
        %v5319 = vunpack.c.l.b16 %v5247
        %v5320 = vunpack.c.l.b16 %v5248
        %v5321 = vunpack.c.l.b16 %v5249
        %v5322 = vunpack.c.l.b16 %v5250
        %v5323 = vunpack.c.l.b16 %v5251
        %v5324 = vunpack.c.l.b16 %v5252
        %v5325 = vunpack.c.l.b16 %v5253
        %v5326 = vunpack.c.l.b16 %v5254
        %v5327 = vunpack.c.l.b16 %v5255
        %v5328 = vunpack.c.l.b16 %v5256
        %v5329 = vunpack.c.l.b16 %v5257
        %v5330 = vunpack.c.l.b16 %v5258
        %v5331 = vunpack.c.l.b16 %v5259
        %v5332 = vunpack.c.l.b16 %v5260
        %v5333 = vunpack.c.l.b16 %v5261
        %v5334 = vunpack.c.l.b16 %v5262
        %v5335 = vunpack.c.l.b16 %v5263
        %v5336 = vunpack.c.l.b16 %v5264
        %v5337 = vunpack.c.l.b16 %v5265
        %v5338 = vunpack.c.l.b16 %v5266
        %v5339 = vunpack.c.l.b16 %v5267
        %v5340 = vunpack.c.l.b16 %v5268
        %v5341 = vunpack.c.l.b16 %v5269
        %v5342 = vunpack.c.l.b16 %v5270
        %v5343 = vunpack.c.l.b16 %v5271
        %v5344 = vunpack.c.l.b16 %v5272
        %v5345 = vunpack.c.l.b16 %v5273
        %v5346 = vunpack.c.l.b16 %v5274
        %v5347 = vunpack.c.l.b16 %v5275
        %v5348 = vpack.c.b16 %v5317, %v5316
        %v5349 = vpack.c.b16 %v5319, %v5318
        %v5350 = vpack.c.b16 %v5321, %v5320
        %v5351 = vpack.c.b16 %v5323, %v5322
        %v5352 = vpack.c.b16 %v5325, %v5324
        %v5353 = vpack.c.b16 %v5327, %v5326
        %v5354 = vpack.c.b16 %v5329, %v5328
        %v5355 = vpack.c.b16 %v5331, %v5330
        %v5356 = vpack.c.b16 %v5333, %v5332
        %v5357 = vpack.c.b16 %v5335, %v5334
        %v5358 = vpack.c.b16 %v5337, %v5336
        %v5359 = vpack.c.b16 %v5339, %v5338
        %v5360 = vpack.c.b16 %v5341, %v5340
        %v5361 = vpack.c.b16 %v5343, %v5342
        %v5362 = vpack.c.b16 %v5345, %v5344
        %v5363 = vpack.c.b16 %v5347, %v5346
        %5380 = vmatprep.subr.bf16.mxu0 0
        %5381 = vmatpush1.bf16.msra.mxu0 %v5348
        %5382 = vmatprep.subr.bf16.mxu0 0
        %5383 = vmatpush1.bf16.msra.mxu0 %v5349
        %5384 = vmatprep.subr.bf16.mxu0 0
        %5385 = vmatpush1.bf16.msra.mxu0 %v5350
        %5386 = vmatprep.subr.bf16.mxu0 0
        %5387 = vmatpush1.bf16.msra.mxu0 %v5351
        %5388 = vmatprep.subr.bf16.mxu0 0
        %5389 = vmatpush1.bf16.msra.mxu0 %v5352
        %5390 = vmatprep.subr.bf16.mxu0 0
        %5391 = vmatpush1.bf16.msra.mxu0 %v5353
        %5392 = vmatprep.subr.bf16.mxu0 0
        %5393 = vmatpush1.bf16.msra.mxu0 %v5354
        %5394 = vmatprep.subr.bf16.mxu0 0
        %5395 = vmatpush1.bf16.msra.mxu0 %v5355
        %5396 = vmatprep.subr.bf16.mxu0 0
        %5397 = vmatpush1.bf16.msra.mxu0 %v5356
        %5398 = vmatprep.subr.bf16.mxu0 0
        %5399 = vmatpush1.bf16.msra.mxu0 %v5357
        %5400 = vmatprep.subr.bf16.mxu0 0
        %5401 = vmatpush1.bf16.msra.mxu0 %v5358
        %5402 = vmatprep.subr.bf16.mxu0 0
        %5403 = vmatpush1.bf16.msra.mxu0 %v5359
        %5404 = vmatprep.subr.bf16.mxu0 0
        %5405 = vmatpush1.bf16.msra.mxu0 %v5360
        %5406 = vmatprep.subr.bf16.mxu0 0
        %5407 = vmatpush1.bf16.msra.mxu0 %v5361
        %5408 = vmatprep.subr.bf16.mxu0 0
        %5409 = vmatpush1.bf16.msra.mxu0 %v5362
        %5410 = vmatprep.subr.bf16.mxu0 0
        %5411 = vmatpush1.bf16.msra.mxu0 %v5363
        %5412 = vmatprep.mubr.bf16.mxu0 %v5238
        %5413 = vmatmul.mubr.bf16.gmra.mrb[0].mxu0 %v5237
        %v5414 = vpop.f32.mrb[0].mxu0
        %v5415 = vadd.f32 %v5282, %v5414
        %v5416 = vpop.f32.mrb[0].mxu0
        %v5417 = vpop.f32.mrb[0].mxu0
        %v5418 = vadd.f32 %v5282, %v5417
        %v5419 = vpop.f32.mrb[0].mxu0
        %5420 = vmatprep.mubr.bf16.mxu0 %v5240
        %5421 = vmatmul.mubr.bf16.gmra.mrb[0].mxu0 %v5239
        %v5422 = vpop.f32.mrb[0].mxu0
        %v5423 = vadd.f32 %v5282, %v5422
        %v5424 = vpop.f32.mrb[0].mxu0
        %v5425 = vpop.f32.mrb[0].mxu0
        %v5426 = vadd.f32 %v5282, %v5425
        %v5427 = vpop.f32.mrb[0].mxu0
        %5428 = vmatprep.mubr.bf16.mxu0 %v5242
        %5429 = vmatmul.mubr.bf16.gmra.mrb[0].mxu0 %v5241
        %v5430 = vpop.f32.mrb[0].mxu0
        %v5431 = vadd.f32 %v5282, %v5430
        %v5432 = vpop.f32.mrb[0].mxu0
        %v5433 = vpop.f32.mrb[0].mxu0
        %v5434 = vadd.f32 %v5282, %v5433
        %v5435 = vpop.f32.mrb[0].mxu0
        %5436 = vdwg.mxu0
        %v5437 = vmax.f32 %v5415, 0.0
        %v5438 = vmax.f32 %v5418, 0.0
        %v5439 = vmax.f32 %v5423, 0.0
        %v5440 = vmax.f32 %v5426, 0.0
        %v5441 = vmax.f32 %v5431, 0.0
        %v5442 = vmax.f32 %v5434, 0.0
        %v5443 = vpack.c.bf16 %v5438, %v5437
        %v5444 = vpack.c.bf16 %v5440, %v5439
        %v5445 = vpack.c.bf16 %v5442, %v5441
        %s5446 = scalar_lea.vmem %s11, 128
        %v5447 = vld [vmem:[%s5446] sm:$0xff]
        %v5448 = vld [vmem:[%s5446 + $0x8] sm:$0xff]
        %v5449 = vld [vmem:[%s5446 + $0x10] sm:$0xff]
        %v5450 = vld [vmem:[%s5446 + $0x18] sm:$0xff]
        %v5451 = vld [vmem:[%s5446 + $0x20] sm:$0xff]
        %v5452 = vld [vmem:[%s5446 + $0x28] sm:$0xff]
        %v5453 = vld [vmem:[%s5446 + $0x30] sm:$0xff]
        %v5454 = vld [vmem:[%s5446 + $0x38] sm:$0xff]
        %v5455 = vld [vmem:[%s5446 + $0x40] sm:$0xff]
        %v5456 = vld [vmem:[%s5446 + $0x48] sm:$0xff]
        %v5457 = vld [vmem:[%s5446 + $0x50] sm:$0xff]
        %v5458 = vld [vmem:[%s5446 + $0x58] sm:$0xff]
        %v5459 = vld [vmem:[%s5446 + $0x60] sm:$0xff]
        %v5460 = vld [vmem:[%s5446 + $0x68] sm:$0xff]
        %v5461 = vld [vmem:[%s5446 + $0x70] sm:$0xff]
        %v5462 = vld [vmem:[%s5446 + $0x78] sm:$0xff]
        %s5463 = scalar_lea.vmem %s12, 1
        %v5464 = vld [vmem:[%s5463] sm:$0x1]
        %v5466 = vlaneseq
        %v5467 = vshrl.u32 %v5466, 7
        %v5468 = vsub.s32 0, %v5467
        %v5469 = vrot.slane %v5464, %v5468
        %5470 = vset.pattern.permute.xlu0 0
        %5471 = vperm.xlu0 %5470, %v5469
        %v5472 = vpop.permute.xlu0 %5471
        %v5490 = vunpack.c.l.b16 %v5447
        %v5491 = vunpack.c.h.b16 %v5447
        %v5492 = vunpack.c.l.b16 %v5448
        %v5493 = vunpack.c.h.b16 %v5448
        %v5494 = vunpack.c.l.b16 %v5449
        %v5495 = vunpack.c.h.b16 %v5449
        %v5496 = vunpack.c.l.b16 %v5450
        %v5497 = vunpack.c.h.b16 %v5450
        %v5498 = vunpack.c.l.b16 %v5451
        %v5499 = vunpack.c.h.b16 %v5451
        %v5500 = vunpack.c.l.b16 %v5452
        %v5501 = vunpack.c.h.b16 %v5452
        %v5502 = vunpack.c.l.b16 %v5453
        %v5503 = vunpack.c.h.b16 %v5453
        %v5504 = vunpack.c.l.b16 %v5454
        %v5505 = vunpack.c.h.b16 %v5454
        %v5506 = vunpack.c.l.b16 %v5455
        %v5507 = vunpack.c.h.b16 %v5455
        %v5508 = vunpack.c.l.b16 %v5456
        %v5509 = vunpack.c.h.b16 %v5456
        %v5510 = vunpack.c.l.b16 %v5457
        %v5511 = vunpack.c.h.b16 %v5457
        %v5512 = vunpack.c.l.b16 %v5458
        %v5513 = vunpack.c.h.b16 %v5458
        %v5514 = vunpack.c.l.b16 %v5459
        %v5515 = vunpack.c.h.b16 %v5459
        %v5516 = vunpack.c.l.b16 %v5460
        %v5517 = vunpack.c.h.b16 %v5460
        %v5518 = vunpack.c.l.b16 %v5461
        %v5519 = vunpack.c.h.b16 %v5461
        %v5520 = vunpack.c.l.b16 %v5462
        %v5521 = vunpack.c.h.b16 %v5462
        %v5522 = vpack.c.b16 %v5492, %v5490
        %v5523 = vpack.c.b16 %v5493, %v5491
        %v5524 = vpack.c.b16 %v5496, %v5494
        %v5525 = vpack.c.b16 %v5497, %v5495
        %v5526 = vpack.c.b16 %v5500, %v5498
        %v5527 = vpack.c.b16 %v5501, %v5499
        %v5528 = vpack.c.b16 %v5504, %v5502
        %v5529 = vpack.c.b16 %v5505, %v5503
        %v5530 = vpack.c.b16 %v5508, %v5506
        %v5531 = vpack.c.b16 %v5509, %v5507
        %v5532 = vpack.c.b16 %v5512, %v5510
        %v5533 = vpack.c.b16 %v5513, %v5511
        %v5534 = vpack.c.b16 %v5516, %v5514
        %v5535 = vpack.c.b16 %v5517, %v5515
        %v5536 = vpack.c.b16 %v5520, %v5518
        %v5537 = vpack.c.b16 %v5521, %v5519
        %5554 = vmatprep.subr.bf16.mxu0 %v5523
        %5555 = vmatpush1.bf16.msra.mxu0 %v5522
        %5556 = vmatprep.subr.bf16.mxu0 %v5525
        %5557 = vmatpush1.bf16.msra.mxu0 %v5524
        %5558 = vmatprep.subr.bf16.mxu0 %v5527
        %5559 = vmatpush1.bf16.msra.mxu0 %v5526
        %5560 = vmatprep.subr.bf16.mxu0 %v5529
        %5561 = vmatpush1.bf16.msra.mxu0 %v5528
        %5562 = vmatprep.subr.bf16.mxu0 %v5531
        %5563 = vmatpush1.bf16.msra.mxu0 %v5530
        %5564 = vmatprep.subr.bf16.mxu0 %v5533
        %5565 = vmatpush1.bf16.msra.mxu0 %v5532
        %5566 = vmatprep.subr.bf16.mxu0 %v5535
        %5567 = vmatpush1.bf16.msra.mxu0 %v5534
        %5568 = vmatprep.subr.bf16.mxu0 %v5537
        %5569 = vmatpush1.bf16.msra.mxu0 %v5536
        %5570 = vmatprep.subr.bf16.mxu0 0
        %5571 = vmatpush1.bf16.msra.mxu0 0
        %5572 = vmatprep.subr.bf16.mxu0 0
        %5573 = vmatpush1.bf16.msra.mxu0 0
        %5574 = vmatprep.subr.bf16.mxu0 0
        %5575 = vmatpush1.bf16.msra.mxu0 0
        %5576 = vmatprep.subr.bf16.mxu0 0
        %5577 = vmatpush1.bf16.msra.mxu0 0
        %5578 = vmatprep.subr.bf16.mxu0 0
        %5579 = vmatpush1.bf16.msra.mxu0 0
        %5580 = vmatprep.subr.bf16.mxu0 0
        %5581 = vmatpush1.bf16.msra.mxu0 0
        %5582 = vmatprep.subr.bf16.mxu0 0
        %5583 = vmatpush1.bf16.msra.mxu0 0
        %5584 = vmatprep.subr.bf16.mxu0 0
        %5585 = vmatpush1.bf16.msra.mxu0 0
        %5586 = vmatprep.mubr.bf16.mxu0 0
        %5587 = vmatmul.mubr.bf16.gmra.mrb[0].mxu0 %v5443
        %v5588 = vpop.f32.mrb[0].mxu0
        %v5589 = vadd.f32 %v5472, %v5588
        %v5590 = vpop.f32.mrb[0].mxu0
        %v5591 = vadd.f32 %v5472, %v5590
        %v5592 = vpop.f32.mrb[0].mxu0
        %v5593 = vadd.f32 %v5472, %v5592
        %v5594 = vpop.f32.mrb[0].mxu0
        %v5595 = vadd.f32 %v5472, %v5594
        %5596 = vmatprep.mubr.bf16.mxu0 0
        %5597 = vmatmul.mubr.bf16.gmra.mrb[0].mxu0 %v5444
        %v5598 = vpop.f32.mrb[0].mxu0
        %v5599 = vadd.f32 %v5472, %v5598
        %v5600 = vpop.f32.mrb[0].mxu0
        %v5601 = vadd.f32 %v5472, %v5600
        %v5602 = vpop.f32.mrb[0].mxu0
        %v5603 = vadd.f32 %v5472, %v5602
        %v5604 = vpop.f32.mrb[0].mxu0
        %v5605 = vadd.f32 %v5472, %v5604
        %5606 = vmatprep.mubr.bf16.mxu0 0
        %5607 = vmatmul.mubr.bf16.gmra.mrb[0].mxu0 %v5445
        %v5608 = vpop.f32.mrb[0].mxu0
        %v5609 = vadd.f32 %v5472, %v5608
        %v5610 = vpop.f32.mrb[0].mxu0
        %v5611 = vadd.f32 %v5472, %v5610
        %v5612 = vpop.f32.mrb[0].mxu0
        %v5613 = vadd.f32 %v5472, %v5612
        %v5614 = vpop.f32.mrb[0].mxu0
        %v5615 = vadd.f32 %v5472, %v5614
        %5616 = vdwg.mxu0
        %v5617 = vxor.u32 %v5589, 2147483648
        %v5618 = vxor.u32 %v5591, 2147483648
        %v5619 = vxor.u32 %v5593, 2147483648
        %v5620 = vxor.u32 %v5595, 2147483648
        %v5621 = vxor.u32 %v5599, 2147483648
        %v5622 = vxor.u32 %v5601, 2147483648
        %v5623 = vxor.u32 %v5603, 2147483648
        %v5624 = vxor.u32 %v5605, 2147483648
        %v5625 = vxor.u32 %v5609, 2147483648
        %v5626 = vxor.u32 %v5611, 2147483648
        %v5627 = vxor.u32 %v5613, 2147483648
        %v5628 = vxor.u32 %v5615, 2147483648
        %v5629 = vmul.f32 %v5617, 1.442695
        %v5630 = vpow.pop %v5629
        %v5631 = vmul.f32 %v5618, 1.442695
        %v5632 = vpow.pop %v5631
        %v5633 = vmul.f32 %v5619, 1.442695
        %v5634 = vpow.pop %v5633
        %v5635 = vmul.f32 %v5620, 1.442695
        %v5636 = vpow.pop %v5635
        %v5637 = vmul.f32 %v5621, 1.442695
        %v5638 = vpow.pop %v5637
        %v5639 = vmul.f32 %v5622, 1.442695
        %v5640 = vpow.pop %v5639
        %v5641 = vmul.f32 %v5623, 1.442695
        %v5642 = vpow.pop %v5641
        %v5643 = vmul.f32 %v5624, 1.442695
        %v5644 = vpow.pop %v5643
        %v5645 = vmul.f32 %v5625, 1.442695
        %v5646 = vpow.pop %v5645
        %v5647 = vmul.f32 %v5626, 1.442695
        %v5648 = vpow.pop %v5647
        %v5649 = vmul.f32 %v5627, 1.442695
        %v5650 = vpow.pop %v5649
        %v5651 = vmul.f32 %v5628, 1.442695
        %v5652 = vpow.pop %v5651
        %v5653 = vadd.f32 %v5630, 1.0
        %v5654 = vadd.f32 %v5632, 1.0
        %v5655 = vadd.f32 %v5634, 1.0
        %v5656 = vadd.f32 %v5636, 1.0
        %v5657 = vadd.f32 %v5638, 1.0
        %v5658 = vadd.f32 %v5640, 1.0
        %v5659 = vadd.f32 %v5642, 1.0
        %v5660 = vadd.f32 %v5644, 1.0
        %v5661 = vadd.f32 %v5646, 1.0
        %v5662 = vadd.f32 %v5648, 1.0
        %v5663 = vadd.f32 %v5650, 1.0
        %v5664 = vadd.f32 %v5652, 1.0
        %v5665 = vrcp.pop %v5653
        %v5666 = vmul.f32 1.0, %v5665
        %v5667 = vrcp.pop %v5654
        %v5668 = vmul.f32 1.0, %v5667
        %v5669 = vrcp.pop %v5655
        %v5670 = vmul.f32 1.0, %v5669
        %v5671 = vrcp.pop %v5656
        %v5672 = vmul.f32 1.0, %v5671
        %v5673 = vrcp.pop %v5657
        %v5674 = vmul.f32 1.0, %v5673
        %v5675 = vrcp.pop %v5658
        %v5676 = vmul.f32 1.0, %v5675
        %v5677 = vrcp.pop %v5659
        %v5678 = vmul.f32 1.0, %v5677
        %v5679 = vrcp.pop %v5660
        %v5680 = vmul.f32 1.0, %v5679
        %v5681 = vrcp.pop %v5661
        %v5682 = vmul.f32 1.0, %v5681
        %v5683 = vrcp.pop %v5662
        %v5684 = vmul.f32 1.0, %v5683
        %v5685 = vrcp.pop %v5663
        %v5686 = vmul.f32 1.0, %v5685
        %v5687 = vrcp.pop %v5664
        %v5688 = vmul.f32 1.0, %v5687
        %v5689 = vmul.f32 %v5225, %v5666
        %v5690 = vmul.f32 %v5226, %v5668
        %v5691 = vmul.f32 %v5227, %v5670
        %v5692 = vmul.f32 %v5228, %v5672
        %v5693 = vmul.f32 %v5229, %v5674
        %v5694 = vmul.f32 %v5230, %v5676
        %v5695 = vmul.f32 %v5231, %v5678
        %v5696 = vmul.f32 %v5232, %v5680
        %v5697 = vmul.f32 %v5233, %v5682
        %v5698 = vmul.f32 %v5234, %v5684
        %v5699 = vmul.f32 %v5235, %v5686
        %v5700 = vmul.f32 %v5236, %v5688
        %v5701 = vadd.f32 %v5689, %v3166
        %v5702 = vadd.f32 %v5690, %v3167
        %v5703 = vadd.f32 %v5691, %v3168
        %v5704 = vadd.f32 %v5692, %v3169
        %v5705 = vadd.f32 %v5693, %v3170
        %v5706 = vadd.f32 %v5694, %v3171
        %v5707 = vadd.f32 %v5695, %v3172
        %v5708 = vadd.f32 %v5696, %v3173
        %v5709 = vadd.f32 %v5697, %v3174
        %v5710 = vadd.f32 %v5698, %v3175
        %v5711 = vadd.f32 %v5699, %v3176
        %v5712 = vadd.f32 %v5700, %v3177
        %v5715 = vrot.slane %v5711, 7
        %v5716 = vrot.slane %v5712, 7
        %v5729 = vrot.slane %v5701, 7
        %v5730 = vrot.slane %v5702, 7
        %v5731 = vrot.slane %v5703, 7
        %v5732 = vsel %vm657, %v5729, %v5731
        %v5733 = vrot.slane %v5704, 7
        %v5734 = vsel %vm657, %v5730, %v5733
        %v5735 = vrot.slane %v5705, 7
        %v5736 = vsel %vm657, %v5731, %v5735
        %v5737 = vrot.slane %v5706, 7
        %v5738 = vsel %vm657, %v5733, %v5737
        %v5739 = vrot.slane %v5707, 7
        %v5740 = vsel %vm657, %v5735, %v5739
        %v5741 = vrot.slane %v5708, 7
        %v5742 = vsel %vm657, %v5737, %v5741
        %v5743 = vrot.slane %v5709, 7
        %v5744 = vsel %vm657, %v5739, %v5743
        %v5745 = vrot.slane %v5710, 7
        %v5746 = vsel %vm657, %v5741, %v5745
        %v5747 = vsel %vm657, %v5743, %v5715
        %v5748 = vsel %vm657, %v5745, %v5716
        %v5761 = vsel %vm657, %v5715, %v5729
        %v5762 = vsel %vm657, %v5716, %v5730
        %v5763 = vpack.c.bf16 %v5732, %v5761
        %v5764 = vpack.c.bf16 %v5734, %v5762
        %v5765 = vpack.c.bf16 %v5740, %v5736
        %v5766 = vpack.c.bf16 %v5742, %v5738
        %v5767 = vpack.c.bf16 %v5747, %v5744
        %v5768 = vpack.c.bf16 %v5748, %v5746
        %v5769 = vld [vmem:[%s13] sm:$0xff]
        %v5770 = vld [vmem:[%s13 + $0x8] sm:$0xff]
        %v5771 = vld [vmem:[%s13 + $0x10] sm:$0xff]
        %v5772 = vld [vmem:[%s13 + $0x18] sm:$0xff]
        %v5773 = vld [vmem:[%s13 + $0x20] sm:$0xff]
        %v5774 = vld [vmem:[%s13 + $0x28] sm:$0xff]
        %v5775 = vld [vmem:[%s13 + $0x30] sm:$0xff]
        %v5776 = vld [vmem:[%s13 + $0x38] sm:$0xff]
        %v5777 = vld [vmem:[%s13 + $0x40] sm:$0xff]
        %v5778 = vld [vmem:[%s13 + $0x48] sm:$0xff]
        %v5779 = vld [vmem:[%s13 + $0x50] sm:$0xff]
        %v5780 = vld [vmem:[%s13 + $0x58] sm:$0xff]
        %v5781 = vld [vmem:[%s13 + $0x60] sm:$0xff]
        %v5782 = vld [vmem:[%s13 + $0x68] sm:$0xff]
        %v5783 = vld [vmem:[%s13 + $0x70] sm:$0xff]
        %v5784 = vld [vmem:[%s13 + $0x78] sm:$0xff]
        %v5785 = vld [vmem:[%s13 + $0x80] sm:$0xff]
        %v5786 = vld [vmem:[%s13 + $0x88] sm:$0xff]
        %v5787 = vld [vmem:[%s13 + $0x90] sm:$0xff]
        %v5788 = vld [vmem:[%s13 + $0x98] sm:$0xff]
        %v5789 = vld [vmem:[%s13 + $0xa0] sm:$0xff]
        %v5790 = vld [vmem:[%s13 + $0xa8] sm:$0xff]
        %v5791 = vld [vmem:[%s13 + $0xb0] sm:$0xff]
        %v5792 = vld [vmem:[%s13 + $0xb8] sm:$0xff]
        %v5793 = vld [vmem:[%s13 + $0xc0] sm:$0xff]
        %v5794 = vld [vmem:[%s13 + $0xc8] sm:$0xff]
        %v5795 = vld [vmem:[%s13 + $0xd0] sm:$0xff]
        %v5796 = vld [vmem:[%s13 + $0xd8] sm:$0xff]
        %v5797 = vld [vmem:[%s13 + $0xe0] sm:$0xff]
        %v5798 = vld [vmem:[%s13 + $0xe8] sm:$0xff]
        %v5799 = vld [vmem:[%s13 + $0xf0] sm:$0xff]
        %v5800 = vld [vmem:[%s13 + $0xf8] sm:$0xff]
        %v5801 = vpack.c.bf16 %v5703, %v5701
        %v5802 = vpack.c.bf16 %v5704, %v5702
        %v5803 = vpack.c.bf16 %v5707, %v5705
        %v5804 = vpack.c.bf16 %v5708, %v5706
        %v5805 = vpack.c.bf16 %v5711, %v5709
        %v5806 = vpack.c.bf16 %v5712, %v5710
        %s5807 = scalar_lea.vmem %s13, 256
        %v5808 = vld [vmem:[%s5807] sm:$0xff]
        %v5809 = vld [vmem:[%s5807 + $0x8] sm:$0xff]
        %v5810 = vld [vmem:[%s5807 + $0x10] sm:$0xff]
        %v5811 = vld [vmem:[%s5807 + $0x18] sm:$0xff]
        %v5812 = vld [vmem:[%s5807 + $0x20] sm:$0xff]
        %v5813 = vld [vmem:[%s5807 + $0x28] sm:$0xff]
        %v5814 = vld [vmem:[%s5807 + $0x30] sm:$0xff]
        %v5815 = vld [vmem:[%s5807 + $0x38] sm:$0xff]
        %v5816 = vld [vmem:[%s5807 + $0x40] sm:$0xff]
        %v5817 = vld [vmem:[%s5807 + $0x48] sm:$0xff]
        %v5818 = vld [vmem:[%s5807 + $0x50] sm:$0xff]
        %v5819 = vld [vmem:[%s5807 + $0x58] sm:$0xff]
        %v5820 = vld [vmem:[%s5807 + $0x60] sm:$0xff]
        %v5821 = vld [vmem:[%s5807 + $0x68] sm:$0xff]
        %v5822 = vld [vmem:[%s5807 + $0x70] sm:$0xff]
        %v5823 = vld [vmem:[%s5807 + $0x78] sm:$0xff]
        %v5824 = vld [vmem:[%s5807 + $0x80] sm:$0xff]
        %v5825 = vld [vmem:[%s5807 + $0x88] sm:$0xff]
        %v5826 = vld [vmem:[%s5807 + $0x90] sm:$0xff]
        %v5827 = vld [vmem:[%s5807 + $0x98] sm:$0xff]
        %v5828 = vld [vmem:[%s5807 + $0xa0] sm:$0xff]
        %v5829 = vld [vmem:[%s5807 + $0xa8] sm:$0xff]
        %v5830 = vld [vmem:[%s5807 + $0xb0] sm:$0xff]
        %v5831 = vld [vmem:[%s5807 + $0xb8] sm:$0xff]
        %v5832 = vld [vmem:[%s5807 + $0xc0] sm:$0xff]
        %v5833 = vld [vmem:[%s5807 + $0xc8] sm:$0xff]
        %v5834 = vld [vmem:[%s5807 + $0xd0] sm:$0xff]
        %v5835 = vld [vmem:[%s5807 + $0xd8] sm:$0xff]
        %v5836 = vld [vmem:[%s5807 + $0xe0] sm:$0xff]
        %v5837 = vld [vmem:[%s5807 + $0xe8] sm:$0xff]
        %v5838 = vld [vmem:[%s5807 + $0xf0] sm:$0xff]
        %v5839 = vld [vmem:[%s5807 + $0xf8] sm:$0xff]
        %v5872 = vunpack.c.l.b16 %v5808
        %v5873 = vunpack.c.h.b16 %v5808
        %v5874 = vunpack.c.l.b16 %v5809
        %v5875 = vunpack.c.h.b16 %v5809
        %v5876 = vunpack.c.l.b16 %v5810
        %v5877 = vunpack.c.h.b16 %v5810
        %v5878 = vunpack.c.l.b16 %v5811
        %v5879 = vunpack.c.h.b16 %v5811
        %v5880 = vunpack.c.l.b16 %v5812
        %v5881 = vunpack.c.h.b16 %v5812
        %v5882 = vunpack.c.l.b16 %v5813
        %v5883 = vunpack.c.h.b16 %v5813
        %v5884 = vunpack.c.l.b16 %v5814
        %v5885 = vunpack.c.h.b16 %v5814
        %v5886 = vunpack.c.l.b16 %v5815
        %v5887 = vunpack.c.h.b16 %v5815
        %v5888 = vunpack.c.l.b16 %v5816
        %v5889 = vunpack.c.h.b16 %v5816
        %v5890 = vunpack.c.l.b16 %v5817
        %v5891 = vunpack.c.h.b16 %v5817
        %v5892 = vunpack.c.l.b16 %v5818
        %v5893 = vunpack.c.h.b16 %v5818
        %v5894 = vunpack.c.l.b16 %v5819
        %v5895 = vunpack.c.h.b16 %v5819
        %v5896 = vunpack.c.l.b16 %v5820
        %v5897 = vunpack.c.h.b16 %v5820
        %v5898 = vunpack.c.l.b16 %v5821
        %v5899 = vunpack.c.h.b16 %v5821
        %v5900 = vunpack.c.l.b16 %v5822
        %v5901 = vunpack.c.h.b16 %v5822
        %v5902 = vunpack.c.l.b16 %v5823
        %v5903 = vunpack.c.h.b16 %v5823
        %v5904 = vunpack.c.l.b16 %v5824
        %v5905 = vunpack.c.h.b16 %v5824
        %v5906 = vunpack.c.l.b16 %v5825
        %v5907 = vunpack.c.h.b16 %v5825
        %v5908 = vunpack.c.l.b16 %v5826
        %v5909 = vunpack.c.h.b16 %v5826
        %v5910 = vunpack.c.l.b16 %v5827
        %v5911 = vunpack.c.h.b16 %v5827
        %v5912 = vunpack.c.l.b16 %v5828
        %v5913 = vunpack.c.h.b16 %v5828
        %v5914 = vunpack.c.l.b16 %v5829
        %v5915 = vunpack.c.h.b16 %v5829
        %v5916 = vunpack.c.l.b16 %v5830
        %v5917 = vunpack.c.h.b16 %v5830
        %v5918 = vunpack.c.l.b16 %v5831
        %v5919 = vunpack.c.h.b16 %v5831
        %v5920 = vunpack.c.l.b16 %v5832
        %v5921 = vunpack.c.h.b16 %v5832
        %v5922 = vunpack.c.l.b16 %v5833
        %v5923 = vunpack.c.h.b16 %v5833
        %v5924 = vunpack.c.l.b16 %v5834
        %v5925 = vunpack.c.h.b16 %v5834
        %v5926 = vunpack.c.l.b16 %v5835
        %v5927 = vunpack.c.h.b16 %v5835
        %v5928 = vunpack.c.l.b16 %v5836
        %v5929 = vunpack.c.h.b16 %v5836
        %v5930 = vunpack.c.l.b16 %v5837
        %v5931 = vunpack.c.h.b16 %v5837
        %v5932 = vunpack.c.l.b16 %v5838
        %v5933 = vunpack.c.h.b16 %v5838
        %v5934 = vunpack.c.l.b16 %v5839
        %v5935 = vunpack.c.h.b16 %v5839
        %v5936 = vpack.c.b16 %v5874, %v5872
        %v5937 = vpack.c.b16 %v5875, %v5873
        %v5938 = vpack.c.b16 %v5878, %v5876
        %v5939 = vpack.c.b16 %v5879, %v5877
        %v5940 = vpack.c.b16 %v5882, %v5880
        %v5941 = vpack.c.b16 %v5883, %v5881
        %v5942 = vpack.c.b16 %v5886, %v5884
        %v5943 = vpack.c.b16 %v5887, %v5885
        %v5944 = vpack.c.b16 %v5890, %v5888
        %v5945 = vpack.c.b16 %v5891, %v5889
        %v5946 = vpack.c.b16 %v5894, %v5892
        %v5947 = vpack.c.b16 %v5895, %v5893
        %v5948 = vpack.c.b16 %v5898, %v5896
        %v5949 = vpack.c.b16 %v5899, %v5897
        %v5950 = vpack.c.b16 %v5902, %v5900
        %v5951 = vpack.c.b16 %v5903, %v5901
        %v5952 = vpack.c.b16 %v5906, %v5904
        %v5953 = vpack.c.b16 %v5907, %v5905
        %v5954 = vpack.c.b16 %v5910, %v5908
        %v5955 = vpack.c.b16 %v5911, %v5909
        %v5956 = vpack.c.b16 %v5914, %v5912
        %v5957 = vpack.c.b16 %v5915, %v5913
        %v5958 = vpack.c.b16 %v5918, %v5916
        %v5959 = vpack.c.b16 %v5919, %v5917
        %v5960 = vpack.c.b16 %v5922, %v5920
        %v5961 = vpack.c.b16 %v5923, %v5921
        %v5962 = vpack.c.b16 %v5926, %v5924
        %v5963 = vpack.c.b16 %v5927, %v5925
        %v5964 = vpack.c.b16 %v5930, %v5928
        %v5965 = vpack.c.b16 %v5931, %v5929
        %v5966 = vpack.c.b16 %v5934, %v5932
        %v5967 = vpack.c.b16 %v5935, %v5933
        %6000 = vmatprep.subr.bf16.mxu0 %v5937
        %6001 = vmatpush1.bf16.msra.mxu0 %v5936
        %6002 = vmatprep.subr.bf16.mxu0 %v5939
        %6003 = vmatpush1.bf16.msra.mxu0 %v5938
        %6004 = vmatprep.subr.bf16.mxu0 %v5941
        %6005 = vmatpush1.bf16.msra.mxu0 %v5940
        %6006 = vmatprep.subr.bf16.mxu0 %v5943
        %6007 = vmatpush1.bf16.msra.mxu0 %v5942
        %6008 = vmatprep.subr.bf16.mxu0 %v5945
        %6009 = vmatpush1.bf16.msra.mxu0 %v5944
        %6010 = vmatprep.subr.bf16.mxu0 %v5947
        %6011 = vmatpush1.bf16.msra.mxu0 %v5946
        %6012 = vmatprep.subr.bf16.mxu0 %v5949
        %6013 = vmatpush1.bf16.msra.mxu0 %v5948
        %6014 = vmatprep.subr.bf16.mxu0 %v5951
        %6015 = vmatpush1.bf16.msra.mxu0 %v5950
        %6016 = vmatprep.subr.bf16.mxu0 %v5953
        %6017 = vmatpush1.bf16.msra.mxu0 %v5952
        %6018 = vmatprep.subr.bf16.mxu0 %v5955
        %6019 = vmatpush1.bf16.msra.mxu0 %v5954
        %6020 = vmatprep.subr.bf16.mxu0 %v5957
        %6021 = vmatpush1.bf16.msra.mxu0 %v5956
        %6022 = vmatprep.subr.bf16.mxu0 %v5959
        %6023 = vmatpush1.bf16.msra.mxu0 %v5958
        %6024 = vmatprep.subr.bf16.mxu0 %v5961
        %6025 = vmatpush1.bf16.msra.mxu0 %v5960
        %6026 = vmatprep.subr.bf16.mxu0 %v5963
        %6027 = vmatpush1.bf16.msra.mxu0 %v5962
        %6028 = vmatprep.subr.bf16.mxu0 %v5965
        %6029 = vmatpush1.bf16.msra.mxu0 %v5964
        %6030 = vmatprep.subr.bf16.mxu0 %v5967
        %6031 = vmatpush1.bf16.msra.mxu0 %v5966
        %6032 = vmatprep.mubr.bf16.mxu0 %v5802
        %6033 = vmatmul.mubr.bf16.gmra.mrb[0].mxu0 %v5801
        %v6034 = vpop.f32.mrb[0].mxu0
        %v6035 = vadd.f32 0.0, %v6034
        %v6036 = vpop.f32.mrb[0].mxu0
        %v6037 = vadd.f32 0.0, %v6036
        %v6038 = vpop.f32.mrb[0].mxu0
        %v6039 = vadd.f32 0.0, %v6038
        %v6040 = vpop.f32.mrb[0].mxu0
        %v6041 = vadd.f32 0.0, %v6040
        %6042 = vmatprep.mubr.bf16.mxu0 %v5804
        %6043 = vmatmul.mubr.bf16.gmra.mrb[0].mxu0 %v5803
        %v6044 = vpop.f32.mrb[0].mxu0
        %v6045 = vadd.f32 0.0, %v6044
        %v6046 = vpop.f32.mrb[0].mxu0
        %v6047 = vadd.f32 0.0, %v6046
        %v6048 = vpop.f32.mrb[0].mxu0
        %v6049 = vadd.f32 0.0, %v6048
        %v6050 = vpop.f32.mrb[0].mxu0
        %v6051 = vadd.f32 0.0, %v6050
        %6052 = vmatprep.mubr.bf16.mxu0 %v5806
        %6053 = vmatmul.mubr.bf16.gmra.mrb[0].mxu0 %v5805
        %v6054 = vpop.f32.mrb[0].mxu0
        %v6055 = vadd.f32 0.0, %v6054
        %v6056 = vpop.f32.mrb[0].mxu0
        %v6057 = vadd.f32 0.0, %v6056
        %v6058 = vpop.f32.mrb[0].mxu0
        %v6059 = vadd.f32 0.0, %v6058
        %v6060 = vpop.f32.mrb[0].mxu0
        %v6061 = vadd.f32 0.0, %v6060
        %6062 = vdwg.mxu0
        %v6095 = vunpack.c.l.b16 %v5769
        %v6096 = vunpack.c.h.b16 %v5769
        %v6097 = vunpack.c.l.b16 %v5770
        %v6098 = vunpack.c.h.b16 %v5770
        %v6099 = vunpack.c.l.b16 %v5771
        %v6100 = vunpack.c.h.b16 %v5771
        %v6101 = vunpack.c.l.b16 %v5772
        %v6102 = vunpack.c.h.b16 %v5772
        %v6103 = vunpack.c.l.b16 %v5773
        %v6104 = vunpack.c.h.b16 %v5773
        %v6105 = vunpack.c.l.b16 %v5774
        %v6106 = vunpack.c.h.b16 %v5774
        %v6107 = vunpack.c.l.b16 %v5775
        %v6108 = vunpack.c.h.b16 %v5775
        %v6109 = vunpack.c.l.b16 %v5776
        %v6110 = vunpack.c.h.b16 %v5776
        %v6111 = vunpack.c.l.b16 %v5777
        %v6112 = vunpack.c.h.b16 %v5777
        %v6113 = vunpack.c.l.b16 %v5778
        %v6114 = vunpack.c.h.b16 %v5778
        %v6115 = vunpack.c.l.b16 %v5779
        %v6116 = vunpack.c.h.b16 %v5779
        %v6117 = vunpack.c.l.b16 %v5780
        %v6118 = vunpack.c.h.b16 %v5780
        %v6119 = vunpack.c.l.b16 %v5781
        %v6120 = vunpack.c.h.b16 %v5781
        %v6121 = vunpack.c.l.b16 %v5782
        %v6122 = vunpack.c.h.b16 %v5782
        %v6123 = vunpack.c.l.b16 %v5783
        %v6124 = vunpack.c.h.b16 %v5783
        %v6125 = vunpack.c.l.b16 %v5784
        %v6126 = vunpack.c.h.b16 %v5784
        %v6127 = vunpack.c.l.b16 %v5785
        %v6128 = vunpack.c.h.b16 %v5785
        %v6129 = vunpack.c.l.b16 %v5786
        %v6130 = vunpack.c.h.b16 %v5786
        %v6131 = vunpack.c.l.b16 %v5787
        %v6132 = vunpack.c.h.b16 %v5787
        %v6133 = vunpack.c.l.b16 %v5788
        %v6134 = vunpack.c.h.b16 %v5788
        %v6135 = vunpack.c.l.b16 %v5789
        %v6136 = vunpack.c.h.b16 %v5789
        %v6137 = vunpack.c.l.b16 %v5790
        %v6138 = vunpack.c.h.b16 %v5790
        %v6139 = vunpack.c.l.b16 %v5791
        %v6140 = vunpack.c.h.b16 %v5791
        %v6141 = vunpack.c.l.b16 %v5792
        %v6142 = vunpack.c.h.b16 %v5792
        %v6143 = vunpack.c.l.b16 %v5793
        %v6144 = vunpack.c.h.b16 %v5793
        %v6145 = vunpack.c.l.b16 %v5794
        %v6146 = vunpack.c.h.b16 %v5794
        %v6147 = vunpack.c.l.b16 %v5795
        %v6148 = vunpack.c.h.b16 %v5795
        %v6149 = vunpack.c.l.b16 %v5796
        %v6150 = vunpack.c.h.b16 %v5796
        %v6151 = vunpack.c.l.b16 %v5797
        %v6152 = vunpack.c.h.b16 %v5797
        %v6153 = vunpack.c.l.b16 %v5798
        %v6154 = vunpack.c.h.b16 %v5798
        %v6155 = vunpack.c.l.b16 %v5799
        %v6156 = vunpack.c.h.b16 %v5799
        %v6157 = vunpack.c.l.b16 %v5800
        %v6158 = vunpack.c.h.b16 %v5800
        %v6159 = vpack.c.b16 %v6097, %v6095
        %v6160 = vpack.c.b16 %v6098, %v6096
        %v6161 = vpack.c.b16 %v6101, %v6099
        %v6162 = vpack.c.b16 %v6102, %v6100
        %v6163 = vpack.c.b16 %v6105, %v6103
        %v6164 = vpack.c.b16 %v6106, %v6104
        %v6165 = vpack.c.b16 %v6109, %v6107
        %v6166 = vpack.c.b16 %v6110, %v6108
        %v6167 = vpack.c.b16 %v6113, %v6111
        %v6168 = vpack.c.b16 %v6114, %v6112
        %v6169 = vpack.c.b16 %v6117, %v6115
        %v6170 = vpack.c.b16 %v6118, %v6116
        %v6171 = vpack.c.b16 %v6121, %v6119
        %v6172 = vpack.c.b16 %v6122, %v6120
        %v6173 = vpack.c.b16 %v6125, %v6123
        %v6174 = vpack.c.b16 %v6126, %v6124
        %v6175 = vpack.c.b16 %v6129, %v6127
        %v6176 = vpack.c.b16 %v6130, %v6128
        %v6177 = vpack.c.b16 %v6133, %v6131
        %v6178 = vpack.c.b16 %v6134, %v6132
        %v6179 = vpack.c.b16 %v6137, %v6135
        %v6180 = vpack.c.b16 %v6138, %v6136
        %v6181 = vpack.c.b16 %v6141, %v6139
        %v6182 = vpack.c.b16 %v6142, %v6140
        %v6183 = vpack.c.b16 %v6145, %v6143
        %v6184 = vpack.c.b16 %v6146, %v6144
        %v6185 = vpack.c.b16 %v6149, %v6147
        %v6186 = vpack.c.b16 %v6150, %v6148
        %v6187 = vpack.c.b16 %v6153, %v6151
        %v6188 = vpack.c.b16 %v6154, %v6152
        %v6189 = vpack.c.b16 %v6157, %v6155
        %v6190 = vpack.c.b16 %v6158, %v6156
        %6223 = vmatprep.subr.bf16.mxu0 %v6160
        %6224 = vmatpush1.bf16.msra.mxu0 %v6159
        %6225 = vmatprep.subr.bf16.mxu0 %v6162
        %6226 = vmatpush1.bf16.msra.mxu0 %v6161
        %6227 = vmatprep.subr.bf16.mxu0 %v6164
        %6228 = vmatpush1.bf16.msra.mxu0 %v6163
        %6229 = vmatprep.subr.bf16.mxu0 %v6166
        %6230 = vmatpush1.bf16.msra.mxu0 %v6165
        %6231 = vmatprep.subr.bf16.mxu0 %v6168
        %6232 = vmatpush1.bf16.msra.mxu0 %v6167
        %6233 = vmatprep.subr.bf16.mxu0 %v6170
        %6234 = vmatpush1.bf16.msra.mxu0 %v6169
        %6235 = vmatprep.subr.bf16.mxu0 %v6172
        %6236 = vmatpush1.bf16.msra.mxu0 %v6171
        %6237 = vmatprep.subr.bf16.mxu0 %v6174
        %6238 = vmatpush1.bf16.msra.mxu0 %v6173
        %6239 = vmatprep.subr.bf16.mxu0 %v6176
        %6240 = vmatpush1.bf16.msra.mxu0 %v6175
        %6241 = vmatprep.subr.bf16.mxu0 %v6178
        %6242 = vmatpush1.bf16.msra.mxu0 %v6177
        %6243 = vmatprep.subr.bf16.mxu0 %v6180
        %6244 = vmatpush1.bf16.msra.mxu0 %v6179
        %6245 = vmatprep.subr.bf16.mxu0 %v6182
        %6246 = vmatpush1.bf16.msra.mxu0 %v6181
        %6247 = vmatprep.subr.bf16.mxu0 %v6184
        %6248 = vmatpush1.bf16.msra.mxu0 %v6183
        %6249 = vmatprep.subr.bf16.mxu0 %v6186
        %6250 = vmatpush1.bf16.msra.mxu0 %v6185
        %6251 = vmatprep.subr.bf16.mxu0 %v6188
        %6252 = vmatpush1.bf16.msra.mxu0 %v6187
        %6253 = vmatprep.subr.bf16.mxu0 %v6190
        %6254 = vmatpush1.bf16.msra.mxu0 %v6189
        %6255 = vmatprep.mubr.bf16.mxu0 %v5764
        %6256 = vmatmul.mubr.bf16.gmra.mrb[0].mxu0 %v5763
        %v6257 = vpop.f32.mrb[0].mxu0
        %v6258 = vadd.f32 %v6035, %v6257
        %v6259 = vpop.f32.mrb[0].mxu0
        %v6260 = vadd.f32 %v6037, %v6259
        %v6261 = vpop.f32.mrb[0].mxu0
        %v6262 = vadd.f32 %v6039, %v6261
        %v6263 = vpop.f32.mrb[0].mxu0
        %v6264 = vadd.f32 %v6041, %v6263
        %6265 = vmatprep.mubr.bf16.mxu0 %v5766
        %6266 = vmatmul.mubr.bf16.gmra.mrb[0].mxu0 %v5765
        %v6267 = vpop.f32.mrb[0].mxu0
        %v6268 = vadd.f32 %v6045, %v6267
        %v6269 = vpop.f32.mrb[0].mxu0
        %v6270 = vadd.f32 %v6047, %v6269
        %v6271 = vpop.f32.mrb[0].mxu0
        %v6272 = vadd.f32 %v6049, %v6271
        %v6273 = vpop.f32.mrb[0].mxu0
        %v6274 = vadd.f32 %v6051, %v6273
        %6275 = vmatprep.mubr.bf16.mxu0 %v5768
        %6276 = vmatmul.mubr.bf16.gmra.mrb[0].mxu0 %v5767
        %v6277 = vpop.f32.mrb[0].mxu0
        %v6278 = vadd.f32 %v6055, %v6277
        %v6279 = vpop.f32.mrb[0].mxu0
        %v6280 = vadd.f32 %v6057, %v6279
        %v6281 = vpop.f32.mrb[0].mxu0
        %v6282 = vadd.f32 %v6059, %v6281
        %v6283 = vpop.f32.mrb[0].mxu0
        %v6284 = vadd.f32 %v6061, %v6283
        %6285 = vdwg.mxu0
        %v6286 = vrot.slane %v5701, 1
        %v6287 = vrot.slane %v5703, 1
        %v6288 = vsel %vm1215, %v6286, %v6287
        %v6289 = vrot.slane %v5702, 1
        %v6290 = vrot.slane %v5704, 1
        %v6291 = vsel %vm1215, %v6289, %v6290
        %v6292 = vrot.slane %v5705, 1
        %v6293 = vsel %vm1215, %v6287, %v6292
        %v6294 = vrot.slane %v5706, 1
        %v6295 = vsel %vm1215, %v6290, %v6294
        %v6296 = vrot.slane %v5707, 1
        %v6297 = vsel %vm1215, %v6292, %v6296
        %v6298 = vrot.slane %v5708, 1
        %v6299 = vsel %vm1215, %v6294, %v6298
        %v6300 = vrot.slane %v5709, 1
        %v6301 = vsel %vm1215, %v6296, %v6300
        %v6302 = vrot.slane %v5710, 1
        %v6303 = vsel %vm1215, %v6298, %v6302
        %v6304 = vrot.slane %v5711, 1
        %v6305 = vsel %vm1215, %v6300, %v6304
        %v6306 = vrot.slane %v5712, 1
        %v6307 = vsel %vm1215, %v6302, %v6306
        %v6322 = vsel %vm1215, %v6304, %v6286
        %v6323 = vsel %vm1215, %v6306, %v6289
        %v6324 = vpack.c.bf16 %v6293, %v6288
        %v6325 = vpack.c.bf16 %v6295, %v6291
        %v6326 = vpack.c.bf16 %v6301, %v6297
        %v6327 = vpack.c.bf16 %v6303, %v6299
        %v6328 = vpack.c.bf16 %v6322, %v6305
        %v6329 = vpack.c.bf16 %v6323, %v6307
        %s6330 = scalar_lea.vmem %s13, 512
        %v6331 = vld [vmem:[%s6330] sm:$0xff]
        %v6332 = vld [vmem:[%s6330 + $0x8] sm:$0xff]
        %v6333 = vld [vmem:[%s6330 + $0x10] sm:$0xff]
        %v6334 = vld [vmem:[%s6330 + $0x18] sm:$0xff]
        %v6335 = vld [vmem:[%s6330 + $0x20] sm:$0xff]
        %v6336 = vld [vmem:[%s6330 + $0x28] sm:$0xff]
        %v6337 = vld [vmem:[%s6330 + $0x30] sm:$0xff]
        %v6338 = vld [vmem:[%s6330 + $0x38] sm:$0xff]
        %v6339 = vld [vmem:[%s6330 + $0x40] sm:$0xff]
        %v6340 = vld [vmem:[%s6330 + $0x48] sm:$0xff]
        %v6341 = vld [vmem:[%s6330 + $0x50] sm:$0xff]
        %v6342 = vld [vmem:[%s6330 + $0x58] sm:$0xff]
        %v6343 = vld [vmem:[%s6330 + $0x60] sm:$0xff]
        %v6344 = vld [vmem:[%s6330 + $0x68] sm:$0xff]
        %v6345 = vld [vmem:[%s6330 + $0x70] sm:$0xff]
        %v6346 = vld [vmem:[%s6330 + $0x78] sm:$0xff]
        %v6347 = vld [vmem:[%s6330 + $0x80] sm:$0xff]
        %v6348 = vld [vmem:[%s6330 + $0x88] sm:$0xff]
        %v6349 = vld [vmem:[%s6330 + $0x90] sm:$0xff]
        %v6350 = vld [vmem:[%s6330 + $0x98] sm:$0xff]
        %v6351 = vld [vmem:[%s6330 + $0xa0] sm:$0xff]
        %v6352 = vld [vmem:[%s6330 + $0xa8] sm:$0xff]
        %v6353 = vld [vmem:[%s6330 + $0xb0] sm:$0xff]
        %v6354 = vld [vmem:[%s6330 + $0xb8] sm:$0xff]
        %v6355 = vld [vmem:[%s6330 + $0xc0] sm:$0xff]
        %v6356 = vld [vmem:[%s6330 + $0xc8] sm:$0xff]
        %v6357 = vld [vmem:[%s6330 + $0xd0] sm:$0xff]
        %v6358 = vld [vmem:[%s6330 + $0xd8] sm:$0xff]
        %v6359 = vld [vmem:[%s6330 + $0xe0] sm:$0xff]
        %v6360 = vld [vmem:[%s6330 + $0xe8] sm:$0xff]
        %v6361 = vld [vmem:[%s6330 + $0xf0] sm:$0xff]
        %v6362 = vld [vmem:[%s6330 + $0xf8] sm:$0xff]
        %v6395 = vunpack.c.l.b16 %v6331
        %v6396 = vunpack.c.h.b16 %v6331
        %v6397 = vunpack.c.l.b16 %v6332
        %v6398 = vunpack.c.h.b16 %v6332
        %v6399 = vunpack.c.l.b16 %v6333
        %v6400 = vunpack.c.h.b16 %v6333
        %v6401 = vunpack.c.l.b16 %v6334
        %v6402 = vunpack.c.h.b16 %v6334
        %v6403 = vunpack.c.l.b16 %v6335
        %v6404 = vunpack.c.h.b16 %v6335
        %v6405 = vunpack.c.l.b16 %v6336
        %v6406 = vunpack.c.h.b16 %v6336
        %v6407 = vunpack.c.l.b16 %v6337
        %v6408 = vunpack.c.h.b16 %v6337
        %v6409 = vunpack.c.l.b16 %v6338
        %v6410 = vunpack.c.h.b16 %v6338
        %v6411 = vunpack.c.l.b16 %v6339
        %v6412 = vunpack.c.h.b16 %v6339
        %v6413 = vunpack.c.l.b16 %v6340
        %v6414 = vunpack.c.h.b16 %v6340
        %v6415 = vunpack.c.l.b16 %v6341
        %v6416 = vunpack.c.h.b16 %v6341
        %v6417 = vunpack.c.l.b16 %v6342
        %v6418 = vunpack.c.h.b16 %v6342
        %v6419 = vunpack.c.l.b16 %v6343
        %v6420 = vunpack.c.h.b16 %v6343
        %v6421 = vunpack.c.l.b16 %v6344
        %v6422 = vunpack.c.h.b16 %v6344
        %v6423 = vunpack.c.l.b16 %v6345
        %v6424 = vunpack.c.h.b16 %v6345
        %v6425 = vunpack.c.l.b16 %v6346
        %v6426 = vunpack.c.h.b16 %v6346
        %v6427 = vunpack.c.l.b16 %v6347
        %v6428 = vunpack.c.h.b16 %v6347
        %v6429 = vunpack.c.l.b16 %v6348
        %v6430 = vunpack.c.h.b16 %v6348
        %v6431 = vunpack.c.l.b16 %v6349
        %v6432 = vunpack.c.h.b16 %v6349
        %v6433 = vunpack.c.l.b16 %v6350
        %v6434 = vunpack.c.h.b16 %v6350
        %v6435 = vunpack.c.l.b16 %v6351
        %v6436 = vunpack.c.h.b16 %v6351
        %v6437 = vunpack.c.l.b16 %v6352
        %v6438 = vunpack.c.h.b16 %v6352
        %v6439 = vunpack.c.l.b16 %v6353
        %v6440 = vunpack.c.h.b16 %v6353
        %v6441 = vunpack.c.l.b16 %v6354
        %v6442 = vunpack.c.h.b16 %v6354
        %v6443 = vunpack.c.l.b16 %v6355
        %v6444 = vunpack.c.h.b16 %v6355
        %v6445 = vunpack.c.l.b16 %v6356
        %v6446 = vunpack.c.h.b16 %v6356
        %v6447 = vunpack.c.l.b16 %v6357
        %v6448 = vunpack.c.h.b16 %v6357
        %v6449 = vunpack.c.l.b16 %v6358
        %v6450 = vunpack.c.h.b16 %v6358
        %v6451 = vunpack.c.l.b16 %v6359
        %v6452 = vunpack.c.h.b16 %v6359
        %v6453 = vunpack.c.l.b16 %v6360
        %v6454 = vunpack.c.h.b16 %v6360
        %v6455 = vunpack.c.l.b16 %v6361
        %v6456 = vunpack.c.h.b16 %v6361
        %v6457 = vunpack.c.l.b16 %v6362
        %v6458 = vunpack.c.h.b16 %v6362
        %v6459 = vpack.c.b16 %v6397, %v6395
        %v6460 = vpack.c.b16 %v6398, %v6396
        %v6461 = vpack.c.b16 %v6401, %v6399
        %v6462 = vpack.c.b16 %v6402, %v6400
        %v6463 = vpack.c.b16 %v6405, %v6403
        %v6464 = vpack.c.b16 %v6406, %v6404
        %v6465 = vpack.c.b16 %v6409, %v6407
        %v6466 = vpack.c.b16 %v6410, %v6408
        %v6467 = vpack.c.b16 %v6413, %v6411
        %v6468 = vpack.c.b16 %v6414, %v6412
        %v6469 = vpack.c.b16 %v6417, %v6415
        %v6470 = vpack.c.b16 %v6418, %v6416
        %v6471 = vpack.c.b16 %v6421, %v6419
        %v6472 = vpack.c.b16 %v6422, %v6420
        %v6473 = vpack.c.b16 %v6425, %v6423
        %v6474 = vpack.c.b16 %v6426, %v6424
        %v6475 = vpack.c.b16 %v6429, %v6427
        %v6476 = vpack.c.b16 %v6430, %v6428
        %v6477 = vpack.c.b16 %v6433, %v6431
        %v6478 = vpack.c.b16 %v6434, %v6432
        %v6479 = vpack.c.b16 %v6437, %v6435
        %v6480 = vpack.c.b16 %v6438, %v6436
        %v6481 = vpack.c.b16 %v6441, %v6439
        %v6482 = vpack.c.b16 %v6442, %v6440
        %v6483 = vpack.c.b16 %v6445, %v6443
        %v6484 = vpack.c.b16 %v6446, %v6444
        %v6485 = vpack.c.b16 %v6449, %v6447
        %v6486 = vpack.c.b16 %v6450, %v6448
        %v6487 = vpack.c.b16 %v6453, %v6451
        %v6488 = vpack.c.b16 %v6454, %v6452
        %v6489 = vpack.c.b16 %v6457, %v6455
        %v6490 = vpack.c.b16 %v6458, %v6456
        %6523 = vmatprep.subr.bf16.mxu0 %v6460
        %6524 = vmatpush1.bf16.msra.mxu0 %v6459
        %6525 = vmatprep.subr.bf16.mxu0 %v6462
        %6526 = vmatpush1.bf16.msra.mxu0 %v6461
        %6527 = vmatprep.subr.bf16.mxu0 %v6464
        %6528 = vmatpush1.bf16.msra.mxu0 %v6463
        %6529 = vmatprep.subr.bf16.mxu0 %v6466
        %6530 = vmatpush1.bf16.msra.mxu0 %v6465
        %6531 = vmatprep.subr.bf16.mxu0 %v6468
        %6532 = vmatpush1.bf16.msra.mxu0 %v6467
        %6533 = vmatprep.subr.bf16.mxu0 %v6470
        %6534 = vmatpush1.bf16.msra.mxu0 %v6469
        %6535 = vmatprep.subr.bf16.mxu0 %v6472
        %6536 = vmatpush1.bf16.msra.mxu0 %v6471
        %6537 = vmatprep.subr.bf16.mxu0 %v6474
        %6538 = vmatpush1.bf16.msra.mxu0 %v6473
        %6539 = vmatprep.subr.bf16.mxu0 %v6476
        %6540 = vmatpush1.bf16.msra.mxu0 %v6475
        %6541 = vmatprep.subr.bf16.mxu0 %v6478
        %6542 = vmatpush1.bf16.msra.mxu0 %v6477
        %6543 = vmatprep.subr.bf16.mxu0 %v6480
        %6544 = vmatpush1.bf16.msra.mxu0 %v6479
        %6545 = vmatprep.subr.bf16.mxu0 %v6482
        %6546 = vmatpush1.bf16.msra.mxu0 %v6481
        %6547 = vmatprep.subr.bf16.mxu0 %v6484
        %6548 = vmatpush1.bf16.msra.mxu0 %v6483
        %6549 = vmatprep.subr.bf16.mxu0 %v6486
        %6550 = vmatpush1.bf16.msra.mxu0 %v6485
        %6551 = vmatprep.subr.bf16.mxu0 %v6488
        %6552 = vmatpush1.bf16.msra.mxu0 %v6487
        %6553 = vmatprep.subr.bf16.mxu0 %v6490
        %6554 = vmatpush1.bf16.msra.mxu0 %v6489
        %6555 = vmatprep.mubr.bf16.mxu0 %v6325
        %6556 = vmatmul.mubr.bf16.gmra.mrb[0].mxu0 %v6324
        %v6557 = vpop.f32.mrb[0].mxu0
        %v6558 = vadd.f32 0.0, %v6557
        %v6559 = vpop.f32.mrb[0].mxu0
        %v6560 = vadd.f32 0.0, %v6559
        %v6561 = vpop.f32.mrb[0].mxu0
        %v6562 = vadd.f32 0.0, %v6561
        %v6563 = vpop.f32.mrb[0].mxu0
        %v6564 = vadd.f32 0.0, %v6563
        %6565 = vmatprep.mubr.bf16.mxu0 %v6327
        %6566 = vmatmul.mubr.bf16.gmra.mrb[0].mxu0 %v6326
        %v6567 = vpop.f32.mrb[0].mxu0
        %v6568 = vadd.f32 0.0, %v6567
        %v6569 = vpop.f32.mrb[0].mxu0
        %v6570 = vadd.f32 0.0, %v6569
        %v6571 = vpop.f32.mrb[0].mxu0
        %v6572 = vadd.f32 0.0, %v6571
        %v6573 = vpop.f32.mrb[0].mxu0
        %v6574 = vadd.f32 0.0, %v6573
        %6575 = vmatprep.mubr.bf16.mxu0 %v6329
        %6576 = vmatmul.mubr.bf16.gmra.mrb[0].mxu0 %v6328
        %v6577 = vpop.f32.mrb[0].mxu0
        %v6578 = vadd.f32 0.0, %v6577
        %v6579 = vpop.f32.mrb[0].mxu0
        %v6580 = vadd.f32 0.0, %v6579
        %v6581 = vpop.f32.mrb[0].mxu0
        %v6582 = vadd.f32 0.0, %v6581
        %v6583 = vpop.f32.mrb[0].mxu0
        %v6584 = vadd.f32 0.0, %v6583
        %6585 = vdwg.mxu0
        %v6586 = vadd.f32 %v6258, %v6558
        %v6587 = vadd.f32 %v6260, %v6560
        %v6588 = vadd.f32 %v6262, %v6562
        %v6589 = vadd.f32 %v6264, %v6564
        %v6590 = vadd.f32 %v6268, %v6568
        %v6591 = vadd.f32 %v6270, %v6570
        %v6592 = vadd.f32 %v6272, %v6572
        %v6593 = vadd.f32 %v6274, %v6574
        %v6594 = vadd.f32 %v6278, %v6578
        %v6595 = vadd.f32 %v6280, %v6580
        %v6596 = vadd.f32 %v6282, %v6582
        %v6597 = vadd.f32 %v6284, %v6584
        %v6598 = vsel %vm1557, %v6586, 0.0
        %v6599 = vsel %vm1557, %v6587, 0.0
        %v6600 = vsel %vm1558, %v6588, 0.0
        %v6601 = vsel %vm1558, %v6589, 0.0
        %v6602 = vsel %vm1559, %v6590, 0.0
        %v6603 = vsel %vm1559, %v6591, 0.0
        %v6604 = vsel %vm1560, %v6592, 0.0
        %v6605 = vsel %vm1560, %v6593, 0.0
        %v6606 = vsel %vm1561, %v6594, 0.0
        %v6607 = vsel %vm1561, %v6595, 0.0
        %v6608 = vsel %vm1562, %v6596, 0.0
        %v6609 = vsel %vm1562, %v6597, 0.0
        %v6610 = vadd.f32 %v6598, %v628
        %v6611 = vadd.f32 %v6599, %v629
        %v6612 = vadd.f32 %v6600, %v630
        %v6613 = vadd.f32 %v6601, %v631
        %v6614 = vadd.f32 %v6602, %v632
        %v6615 = vadd.f32 %v6603, %v633
        %v6616 = vadd.f32 %v6604, %v634
        %v6617 = vadd.f32 %v6605, %v635
        %v6618 = vadd.f32 %v6606, %v636
        %v6619 = vadd.f32 %v6607, %v637
        %v6620 = vadd.f32 %v6608, %v638
        %v6621 = vadd.f32 %v6609, %v639
        %6622 = vst [vmem:[%s504] sm:$0xff] %v6610
        %6623 = vst [vmem:[%s504 + $0x8] sm:$0xff] %v6611
        %6624 = vst [vmem:[%s504 + $0x10] sm:$0xff] %v6612
        %6625 = vst [vmem:[%s504 + $0x18] sm:$0xff] %v6613
        %6626 = vst [vmem:[%s504 + $0x20] sm:$0xff] %v6614
        %6627 = vst [vmem:[%s504 + $0x28] sm:$0xff] %v6615
        %6628 = vst [vmem:[%s504 + $0x30] sm:$0xff] %v6616
        %6629 = vst [vmem:[%s504 + $0x38] sm:$0xff] %v6617
        %6630 = vst [vmem:[%s504 + $0x40] sm:$0xff] %v6618
        %6631 = vst [vmem:[%s504 + $0x48] sm:$0xff] %v6619
        %6632 = vst [vmem:[%s504 + $0x50] sm:$0xff] %v6620
        %6633 = vst [vmem:[%s504 + $0x58] sm:$0xff] %v6621
        %s6634 = smul.u32 6, %s27
        %p6635 = scmp.lt.s32.totalorder %s6634, 11
        %s6636 = scalar_select %p6635, %s6634, 11
        %s6637 = smul.addr %s6636, 2
        %s6638 = smul.addr %s6637, 8
        %s6639 = scalar_lea.vmem %s14, %s6638
        // Predicated region
        $region85: #{_group_forward_packed.1} parent=75 // pred_check
          %p6640 = pneg %p344
        $region86: #{_group_forward_packed.1} parent=75 // pred_check_branch
          %6642 = sbr.rel (%p6640) target = $region88
        $region87: #{_group_forward_packed.1} parent=75 // pred_region
          %s6643 = smul.u32 6, %s27
        $region88: #{_group_forward_packed.1} parent=75 // pred_fallthru
          _
      $region76: #{_group_forward_packed.1} parent=5 // pred_fallthru
        _
      %p6644 = scmp.le.s32.totalorder 2, %s22
      // Predicated region
      $region89: #{_group_forward_packed.1} parent=5 // pred_check
        %p6645 = pneg %p6644
      $region90: #{_group_forward_packed.1} parent=5 // pred_check_branch
        %6647 = sbr.rel (%p6645) target = $region92
      $region91: #{_group_forward_packed.1} parent=5 // pred_region
        %s6648 = ssub.s32 %s22, 2
        // Predicated region
        $region93: #{_group_forward_packed.1} parent=91 // pred_check
          %p6649 = pneg %p350
        $region94: #{_group_forward_packed.1} parent=91 // pred_check_branch
          %6651 = sbr.rel (%p6649) target = $region96
        $region95: #{_group_forward_packed.1} parent=91 // pred_region
          %s6652 = smul.u32 6, %s28
          %p6653 = scmp.lt.s32.totalorder %s6652, 11
          %s6654 = scalar_select %p6653, %s6652, 11
          %s6655 = smul.addr %s6654, 2
          %s6656 = smul.addr %s6655, 8
          %s6657 = scalar_lea.vmem %s14, %s6656
        $region96: #{_group_forward_packed.1} parent=91 // pred_fallthru
          _
      $region92: #{_group_forward_packed.1} parent=5 // pred_fallthru
        _
    $region6: #{_group_forward_packed.1} parent=1 // loop_footer
      %s26 = sadd.s32 1, %s22
    $region7: #{_group_forward_packed.1} parent=1 // loop_footer_branch
      %21 = sbr.rel target = $region3
    $region8: #{_group_forward_packed.1} parent=1 // loop_exit
      _
    %6658 = vsyncpa [#allocation3], 1
    %s6659 = scalar_lea.sflag [#allocation3], 1
    %6660 = vsyncpa %s6659, 1
    %6661 = vsyncpa [#allocation5], 1

</llo_original>
